<compile_context>
chip_gen: v5e
topology: v5e:2x2
jax: 0.10.0
libtpu: 0.0.40
codegen_flags: <defaults>
</compile_context>

<pallas_src>
import functools
import numpy as np
import jax
import jax.numpy as jnp
from jax import lax
from jax.experimental import pallas as pl
from jax.experimental.pallas import tpu as pltpu


_VMEM_LIMIT = 48 * 1024 * 1024


def _cp(dims):
    return pltpu.CompilerParams(dimension_semantics=dims,
                                vmem_limit_bytes=_VMEM_LIMIT)


# -------------------- bilinear interpolation (PyTorch rule) ------------------

def _interp_plan(out_size, in_size):
    """Per output index: (i0, i1, w0, w1), PyTorch half-pixel, align_corners=False."""
    plan = []
    if out_size == in_size:
        return [(i, i, 1.0, 0.0) for i in range(out_size)]
    scale = in_size / out_size
    for i in range(out_size):
        src = max(scale * (i + 0.5) - 0.5, 0.0)
        i0 = min(int(np.floor(src)), in_size - 1)
        i1 = min(i0 + 1, in_size - 1)
        lam = float(src - i0)
        if i1 == i0 or lam == 0.0:
            plan.append((i0, i0, 1.0, 0.0))
        else:
            plan.append((i0, i1, 1.0 - lam, lam))
    return plan


def _interp_matrix(out_size, in_size):
    A = np.zeros((out_size, in_size), dtype=np.float32)
    for i, (i0, i1, w0, w1) in enumerate(_interp_plan(out_size, in_size)):
        A[i, i0] += w0
        A[i, i1] += w1
    return A


# ----------------------------- Pallas kernels --------------------------------

def _conv1x1_kernel(x_ref, w_ref, b_ref, o_ref):
    # x: (R, Cin) bf16   w: (Cin, Cout) bf16   b: (1, Cout) f32   o: (R, Cout) f32
    y = jnp.dot(x_ref[...], w_ref[...], preferred_element_type=jnp.float32)
    o_ref[...] = (y + b_ref[...]).astype(o_ref.dtype)


def _up_add_lat_kernel(p_ref, aw_ref, c_ref, w_ref, b_ref, o_ref, *, h_plan, out_w):
    # p_ref : (1, hp, wp, C) f32   coarser pyramid level
    # aw_ref: (W, wp)        bf16  width interpolation matrix
    # c_ref : (1, H*W, Cin)  bf16  lateral backbone feature
    # w_ref : (Cin, C) bf16  b_ref: (1, C) f32   o_ref: (1, H*W, C) f32
    hp = p_ref.shape[1]
    W = out_w

    # lateral 1x1 conv (single whole-plane MXU matmul) + bias
    lat = jnp.dot(c_ref[0], w_ref[...], preferred_element_type=jnp.float32)
    o_ref[0] = (lat + b_ref[...]).astype(o_ref.dtype)

    # separable bilinear upsample, step 1 (width): hp matmuls (W,wp)@(wp,C)
    aw = aw_ref[...]
    u = [jnp.dot(aw, p_ref[0, i].astype(jnp.bfloat16),
                 preferred_element_type=jnp.float32) for i in range(hp)]

    # step 2 (height): each output row is a <=2-tap blend, accumulated into o_ref
    for h, (i0, i1, w0, w1) in enumerate(h_plan):
        row = w0 * u[i0]
        if w1 != 0.0:
            row = row + w1 * u[i1]
        sl = pl.ds(h * W, W)
        o_ref[0, sl, :] = o_ref[0, sl, :] + row


def _conv3x3_kernel(xp_ref, w_ref, b_ref, o_ref, *, out_h, padded_w):
    # xp_ref: (1, (H+3)*(W+2), C) bf16  zero-padded image, rows flattened
    # w_ref : (9, C, Co) bf16 (tap = dy*3+dx)   b_ref: (1, Co) f32
    # o_ref : (1, H*(W+2), Co) f32  (width-padded output; cols >= W are junk)
    H, Wp = out_h, padded_w
    M = H * Wp
    acc = None
    for dy in range(3):
        for dx in range(3):
            start = dy * Wp + dx
            x = xp_ref[0, pl.ds(start, M), :]
            t = jnp.dot(x, w_ref[dy * 3 + dx], preferred_element_type=jnp.float32)
            acc = t if acc is None else acc + t
    o_ref[0] = (acc + b_ref[...]).astype(o_ref.dtype)


# ------------------------------ wrappers --------------------------------------

def conv1x1_flat(x_flat, w_mat, b):
    # x_flat: (R, Cin) bf16 (batch folded into rows), w_mat: (Cin, Cout) bf16
    R, Cin = x_flat.shape
    Cout = w_mat.shape[1]
    return pl.pallas_call(
        _conv1x1_kernel,
        out_shape=jax.ShapeDtypeStruct((R, Cout), jnp.float32),
        grid=(1,),
        in_specs=[
            pl.BlockSpec((R, Cin), lambda i: (0, 0)),
            pl.BlockSpec((Cin, Cout), lambda i: (0, 0)),
            pl.BlockSpec((1, Cout), lambda i: (0, 0)),
        ],
        out_specs=pl.BlockSpec((R, Cout), lambda i: (0, 0)),
        compiler_params=_cp(("arbitrary",)),
    )(x_flat, w_mat, b.reshape(1, Cout))


def upsample_add_lateral(p_nhwc, c_flat, w_mat, b, out_hw):
    # out = bilinear_upsample(p, size=out_hw) + conv1x1(c) ; returns (N, H*W, C) f32
    N, hp, wp, C = p_nhwc.shape
    H, W = out_hw
    Cin = c_flat.shape[-1]
    aw = jnp.asarray(_interp_matrix(W, wp), jnp.bfloat16)
    h_plan = tuple(_interp_plan(H, hp))
    kernel = functools.partial(_up_add_lat_kernel, h_plan=h_plan, out_w=W)
    return pl.pallas_call(
        kernel,
        out_shape=jax.ShapeDtypeStruct((N, H * W, C), jnp.float32),
        grid=(N,),
        in_specs=[
            pl.BlockSpec((1, hp, wp, C), lambda n: (n, 0, 0, 0)),
            pl.BlockSpec((W, wp), lambda n: (0, 0)),
            pl.BlockSpec((1, H * W, Cin), lambda n: (n, 0, 0)),
            pl.BlockSpec((Cin, C), lambda n: (0, 0)),
            pl.BlockSpec((1, C), lambda n: (0, 0)),
        ],
        out_specs=pl.BlockSpec((1, H * W, C), lambda n: (n, 0, 0)),
        compiler_params=_cp(("parallel",)),
    )(p_nhwc, aw, c_flat, w_mat, b.reshape(1, C))


def conv3x3(p_flat, hw, w_taps, b):
    # p_flat: (N, H*W, C) f32 ; w_taps: (9, C, Co) bf16 ; padding=1, stride=1
    N, _, C = p_flat.shape
    H, W = hw
    Co = w_taps.shape[-1]
    Wp = W + 2
    x = p_flat.reshape(N, H, W, C)
    # height padded by (1, 2): one extra bottom row keeps all 9 tap slices in
    # bounds; it only feeds the discarded junk columns.
    xp = jnp.pad(x, ((0, 0), (1, 2), (1, 1), (0, 0))).astype(jnp.bfloat16)
    xp = xp.reshape(N, (H + 3) * Wp, C)
    kernel = functools.partial(_conv3x3_kernel, out_h=H, padded_w=Wp)
    out = pl.pallas_call(
        kernel,
        out_shape=jax.ShapeDtypeStruct((N, H * Wp, Co), jnp.float32),
        grid=(N,),
        in_specs=[
            pl.BlockSpec((1, (H + 3) * Wp, C), lambda n: (n, 0, 0)),
            pl.BlockSpec((9, C, Co), lambda n: (0, 0, 0)),
            pl.BlockSpec((1, Co), lambda n: (0, 0)),
        ],
        out_specs=pl.BlockSpec((1, H * Wp, Co), lambda n: (n, 0, 0)),
        compiler_params=_cp(("parallel",)),
    )(xp, w_taps, b.reshape(1, Co))
    return out.reshape(N, H, Wp, Co)[:, :, :W, :]   # drop the 2 junk columns


# ------------------------------ FPN forward -----------------------------------

def fpn_forward_pallas(c2, c3, c4, c5, p):
    """Inputs / outputs NCHW (PyTorch convention); kernels run channels-last."""
    to_nhwc = lambda x: jnp.transpose(x, (0, 2, 3, 1)).astype(jnp.bfloat16)
    to_nchw = lambda x: jnp.transpose(x, (0, 3, 1, 2))
    c2h, c3h, c4h, c5h = map(to_nhwc, (c2, c3, c4, c5))
    flat = lambda x: x.reshape(x.shape[0], -1, x.shape[-1])

    N = c2.shape[0]
    C = p["top_w"].shape[1]
    s2, s3, s4, s5 = (c2.shape[-2:], c3.shape[-2:], c4.shape[-2:], c5.shape[-2:])

    # p5 = toplayer(c5): batch folded into matmul rows (single launch).
    p5_flat = conv1x1_flat(c5h.reshape(N * s5[0] * s5[1], c5h.shape[-1]),
                           p["top_w"], p["top_b"])
    p5 = p5_flat.reshape(N, s5[0], s5[1], C)

    p4 = upsample_add_lateral(p5, flat(c4h), p["lat1_w"], p["lat1_b"], s4)
    p3 = upsample_add_lateral(p4.reshape(N, s4[0], s4[1], C), flat(c3h),
                              p["lat2_w"], p["lat2_b"], s3)
    p2 = upsample_add_lateral(p3.reshape(N, s3[0], s3[1], C), flat(c2h),
                              p["lat3_w"], p["lat3_b"], s2)

    p4s = conv3x3(p4, s4, p["sm1_w"], p["sm1_b"])
    p3s = conv3x3(p3, s3, p["sm2_w"], p["sm2_b"])
    p2s = conv3x3(p2, s2, p["sm3_w"], p["sm3_b"])

    return [to_nchw(p2s), to_nchw(p3s), to_nchw(p4s), to_nchw(p5)]


# -------------------------- pure-JAX reference ---------------------------------

def _ref_conv(x, w_oihw, b, pad):
    y = lax.conv_general_dilated(x, w_oihw, (1, 1), [(pad, pad), (pad, pad)],
                                 dimension_numbers=("NCHW", "OIHW", "NCHW"))
    return y + b[None, :, None, None]


def _ref_up(x, out_hw):
    Ah = jnp.asarray(_interp_matrix(out_hw[0], x.shape[-2]))
    Aw = jnp.asarray(_interp_matrix(out_hw[1], x.shape[-1]))
    return jnp.einsum("HI,WJ,ncIJ->ncHW", Ah, Aw, x)


def fpn_forward_ref(c2, c3, c4, c5, raw):
    p5 = _ref_conv(c5, *raw["top"], 0)
    p4 = _ref_up(p5, c4.shape[-2:]) + _ref_conv(c4, *raw["lat1"], 0)
    p3 = _ref_up(p4, c3.shape[-2:]) + _ref_conv(c3, *raw["lat2"], 0)
    p2 = _ref_up(p3, c2.shape[-2:]) + _ref_conv(c2, *raw["lat3"], 0)
    p4 = _ref_conv(p4, *raw["sm1"], 1)
    p3 = _ref_conv(p3, *raw["sm2"], 1)
    p2 = _ref_conv(p2, *raw["sm3"], 1)
    return [p2, p3, p4, p5]


# ---------------------------------- main ----------------------------------------

if __name__ == "__main__":
    key = jax.random.PRNGKey(0)
    keys = jax.random.split(key, 20)

    # scaled-down FPN config (PyTorch default is [256, 512, 1024, 2048])
    in_channel = [32, 64, 128, 256]
    C = in_channel[0]
    N = 2

    # round inputs / weights to bf16-representable f32 so the Pallas (bf16 MXU)
    # path and the f32 reference start from identical values.
    rt = lambda x: x.astype(jnp.bfloat16).astype(jnp.float32)

    c2 = rt(jax.random.normal(keys[0], (N, in_channel[0], 16, 16), jnp.float32))
    c3 = rt(jax.random.normal(keys[1], (N, in_channel[1], 8, 8), jnp.float32))
    c4 = rt(jax.random.normal(keys[2], (N, in_channel[2], 4, 4), jnp.float32))
    c5 = rt(jax.random.normal(keys[3], (N, in_channel[3], 2, 2), jnp.float32))

    def mkconv(kw, kb, cin, cout, ksz):
        w = jax.random.normal(kw, (cout, cin, ksz, ksz), jnp.float32) / np.sqrt(cin * ksz * ksz)
        b = jax.random.normal(kb, (cout,), jnp.float32) * 0.01
        return rt(w), b

    raw = {
        "top":  mkconv(keys[4],  keys[5],  in_channel[3], C, 1),
        "lat1": mkconv(keys[6],  keys[7],  in_channel[2], C, 1),
        "lat2": mkconv(keys[8],  keys[9],  in_channel[1], C, 1),
        "lat3": mkconv(keys[10], keys[11], in_channel[0], C, 1),
        "sm1":  mkconv(keys[12], keys[13], C, C, 3),
        "sm2":  mkconv(keys[14], keys[15], C, C, 3),
        "sm3":  mkconv(keys[16], keys[17], C, C, 3),
    }

    def as_mat(w_oihw):          # (Cout, Cin, 1, 1) -> (Cin, Cout) bf16
        return jnp.transpose(w_oihw[:, :, 0, 0], (1, 0)).astype(jnp.bfloat16)

    def as_taps(w_oihw):         # (Cout, Cin, 3, 3) -> (9, Cin, Cout) bf16, tap=dy*3+dx
        t = jnp.transpose(w_oihw, (2, 3, 1, 0)).reshape(9, w_oihw.shape[1], w_oihw.shape[0])
        return t.astype(jnp.bfloat16)

    params = {
        "top_w": as_mat(raw["top"][0]),   "top_b": raw["top"][1],
        "lat1_w": as_mat(raw["lat1"][0]), "lat1_b": raw["lat1"][1],
        "lat2_w": as_mat(raw["lat2"][0]), "lat2_b": raw["lat2"][1],
        "lat3_w": as_mat(raw["lat3"][0]), "lat3_b": raw["lat3"][1],
        "sm1_w": as_taps(raw["sm1"][0]),  "sm1_b": raw["sm1"][1],
        "sm2_w": as_taps(raw["sm2"][0]),  "sm2_b": raw["sm2"][1],
        "sm3_w": as_taps(raw["sm3"][0]),  "sm3_b": raw["sm3"][1],
    }

    outs = jax.jit(fpn_forward_pallas)(c2, c3, c4, c5, params)
    outs = [jax.block_until_ready(o) for o in outs]

    refs = fpn_forward_ref(c2, c3, c4, c5, raw)
    refs = [jax.block_until_ready(r) for r in refs]

    for o, r in zip(outs, refs):
        assert o.shape == r.shape and o.dtype == r.dtype
        # bf16 operands (f32 accumulation) -> slightly relaxed tolerance
        assert np.allclose(np.asarray(o), np.asarray(r), atol=5e-2, rtol=5e-2)

    print("KERNEL_OK")
</pallas_src>

<mosaic_0001>
module attributes {stable_mosaic.version = 11 : i64} {
  func.func @_conv1x1_kernel(%arg0: i32, %arg1: memref<8x256xbf16, #tpu.memory_space<vmem>>, %arg2: memref<256x32xbf16, #tpu.memory_space<vmem>>, %arg3: memref<1x32xf32, #tpu.memory_space<vmem>>, %arg4: memref<8x32xf32, #tpu.memory_space<vmem>>) attributes {dimension_semantics = [#tpu.dimension_semantics<arbitrary>], iteration_bounds = array<i64: 1>, scalar_prefetch = 0 : i64, scratch_operands = 0 : i64, tpu.core_type = #tpu.core_type<tc>, window_params = [{pipeline_mode = #tpu.pipeline_mode<synchronous>, transform_indices = @transform_0, window_bounds = array<i64: 8, 256>}, {pipeline_mode = #tpu.pipeline_mode<synchronous>, transform_indices = @transform_1, window_bounds = array<i64: 256, 32>}, {pipeline_mode = #tpu.pipeline_mode<synchronous>, transform_indices = @transform_2, window_bounds = array<i64: 1, 32>}, {pipeline_mode = #tpu.pipeline_mode<synchronous>, transform_indices = @transform_3, window_bounds = array<i64: 8, 32>}]} {
    %c0 = arith.constant 0 : index
    %c0_0 = arith.constant 0 : index
    %0 = vector.load %arg1[%c0, %c0_0] : memref<8x256xbf16, #tpu.memory_space<vmem>>, vector<8x256xbf16>
    %c0_1 = arith.constant 0 : index
    %c0_2 = arith.constant 0 : index
    %1 = vector.load %arg2[%c0_1, %c0_2] : memref<256x32xbf16, #tpu.memory_space<vmem>>, vector<256x32xbf16>
    %cst = arith.constant dense<0.000000e+00> : vector<8x32xf32>
    %2 = tpu.matmul %0, %1, %cst {dimension_numbers = #tpu.dot_dimension_numbers<[1], [0], [0], [1], [0, 0, 1, 1], [], []>} : vector<8x256xbf16>, vector<256x32xbf16>, vector<8x32xf32> -> vector<8x32xf32>
    %c0_3 = arith.constant 0 : index
    %c0_4 = arith.constant 0 : index
    %3 = vector.load %arg3[%c0_3, %c0_4] : memref<1x32xf32, #tpu.memory_space<vmem>>, vector<1x32xf32>
    %4 = vector.broadcast %3 : vector<1x32xf32> to vector<8x32xf32>
    %5 = arith.addf %2, %4 : vector<8x32xf32>
    %c0_5 = arith.constant 0 : index
    %c0_6 = arith.constant 0 : index
    %6 = vector.load %arg4[%c0_5, %c0_6] : memref<8x32xf32, #tpu.memory_space<vmem>>, vector<8x32xf32>
    tpu.vector_store %arg4[%c0_5, %c0_6], %5 {strides = array<i32>} : memref<8x32xf32, #tpu.memory_space<vmem>>, vector<8x32xf32>,
    return
  }
  func.func @transform_0(%arg0: i32) -> (i32, i32) {
    %c0_i32 = arith.constant 0 : i32
    %c0_i32_0 = arith.constant 0 : i32
    %c0_i32_1 = arith.constant 0 : i32
    return %c0_i32, %c0_i32_0 : i32, i32
  }
  func.func @transform_1(%arg0: i32) -> (i32, i32) {
    %c0_i32 = arith.constant 0 : i32
    %c0_i32_0 = arith.constant 0 : i32
    %c0_i32_1 = arith.constant 0 : i32
    return %c0_i32, %c0_i32_0 : i32, i32
  }
  func.func @transform_2(%arg0: i32) -> (i32, i32) {
    %c0_i32 = arith.constant 0 : i32
    %c0_i32_0 = arith.constant 0 : i32
    %c0_i32_1 = arith.constant 0 : i32
    return %c0_i32, %c0_i32_0 : i32, i32
  }
  func.func @transform_3(%arg0: i32) -> (i32, i32) {
    %c0_i32 = arith.constant 0 : i32
    %c0_i32_0 = arith.constant 0 : i32
    %c0_i32_1 = arith.constant 0 : i32
    return %c0_i32, %c0_i32_0 : i32, i32
  }
}

module attributes {stable_mosaic.version = 11 : i64} {
  func.func @_up_add_lat_kernel(%arg0: i32, %arg1: memref<1x2x2x32xf32, #tpu.memory_space<vmem>>, %arg2: memref<4x2xbf16, #tpu.memory_space<vmem>>, %arg3: memref<1x16x128xbf16, #tpu.memory_space<vmem>>, %arg4: memref<128x32xbf16, #tpu.memory_space<vmem>>, %arg5: memref<1x32xf32, #tpu.memory_space<vmem>>, %arg6: memref<1x16x32xf32, #tpu.memory_space<vmem>>) attributes {dimension_semantics = [#tpu.dimension_semantics<parallel>], iteration_bounds = array<i64: 2>, scalar_prefetch = 0 : i64, scratch_operands = 0 : i64, tpu.core_type = #tpu.core_type<tc>, window_params = [{transform_indices = @transform_0, window_bounds = array<i64: 1, 2, 2, 32>}, {pipeline_mode = #tpu.pipeline_mode<synchronous>, transform_indices = @transform_1, window_bounds = array<i64: 4, 2>}, {transform_indices = @transform_2, window_bounds = array<i64: 1, 16, 128>}, {pipeline_mode = #tpu.pipeline_mode<synchronous>, transform_indices = @transform_3, window_bounds = array<i64: 128, 32>}, {pipeline_mode = #tpu.pipeline_mode<synchronous>, transform_indices = @transform_4, window_bounds = array<i64: 1, 32>}, {transform_indices = @transform_5, window_bounds = array<i64: 1, 16, 32>}]} {
    %c0 = arith.constant 0 : index
    %c0_0 = arith.constant 0 : index
    %c0_1 = arith.constant 0 : index
    %0 = vector.load %arg3[%c0, %c0_0, %c0_1] : memref<1x16x128xbf16, #tpu.memory_space<vmem>>, vector<1x16x128xbf16>
    %1 = vector.shape_cast %0 : vector<1x16x128xbf16> to vector<16x128xbf16>
    %c0_2 = arith.constant 0 : index
    %c0_3 = arith.constant 0 : index
    %2 = vector.load %arg4[%c0_2, %c0_3] : memref<128x32xbf16, #tpu.memory_space<vmem>>, vector<128x32xbf16>
    %cst = arith.constant dense<0.000000e+00> : vector<16x32xf32>
    %3 = tpu.matmul %1, %2, %cst {dimension_numbers = #tpu.dot_dimension_numbers<[1], [0], [0], [1], [0, 0, 1, 1], [], []>} : vector<16x128xbf16>, vector<128x32xbf16>, vector<16x32xf32> -> vector<16x32xf32>
    %c0_4 = arith.constant 0 : index
    %c0_5 = arith.constant 0 : index
    %4 = vector.load %arg5[%c0_4, %c0_5] : memref<1x32xf32, #tpu.memory_space<vmem>>, vector<1x32xf32>
    %5 = vector.broadcast %4 : vector<1x32xf32> to vector<16x32xf32>
    %6 = arith.addf %3, %5 : vector<16x32xf32>
    %c0_6 = arith.constant 0 : index
    %c0_7 = arith.constant 0 : index
    %c0_8 = arith.constant 0 : index
    %7 = vector.load %arg6[%c0_6, %c0_7, %c0_8] : memref<1x16x32xf32, #tpu.memory_space<vmem>>, vector<1x16x32xf32>
    %8 = vector.shape_cast %7 : vector<1x16x32xf32> to vector<16x32xf32>
    %9 = vector.shape_cast %6 : vector<16x32xf32> to vector<1x16x32xf32>
    tpu.vector_store %arg6[%c0_6, %c0_7, %c0_8], %9 {strides = array<i32>} : memref<1x16x32xf32, #tpu.memory_space<vmem>>, vector<1x16x32xf32>,
    %c0_9 = arith.constant 0 : index
    %c0_10 = arith.constant 0 : index
    %10 = vector.load %arg2[%c0_9, %c0_10] : memref<4x2xbf16, #tpu.memory_space<vmem>>, vector<4x2xbf16>
    %c0_11 = arith.constant 0 : index
    %c0_12 = arith.constant 0 : index
    %c0_13 = arith.constant 0 : index
    %c0_14 = arith.constant 0 : index
    %11 = vector.load %arg1[%c0_11, %c0_12, %c0_13, %c0_14] : memref<1x2x2x32xf32, #tpu.memory_space<vmem>>, vector<1x1x2x32xf32>
    %12 = vector.shape_cast %11 : vector<1x1x2x32xf32> to vector<2x32xf32>
    %13 = arith.truncf %12 : vector<2x32xf32> to vector<2x32xbf16>
    %cst_15 = arith.constant dense<0.000000e+00> : vector<4x32xf32>
    %14 = tpu.matmul %10, %13, %cst_15 {dimension_numbers = #tpu.dot_dimension_numbers<[1], [0], [0], [1], [0, 0, 1, 1], [], []>} : vector<4x2xbf16>, vector<2x32xbf16>, vector<4x32xf32> -> vector<4x32xf32>
    %c0_16 = arith.constant 0 : index
    %c1 = arith.constant 1 : index
    %c0_17 = arith.constant 0 : index
    %c0_18 = arith.constant 0 : index
    %15 = vector.load %arg1[%c0_16, %c1, %c0_17, %c0_18] : memref<1x2x2x32xf32, #tpu.memory_space<vmem>>, vector<1x1x2x32xf32>
    %16 = vector.shape_cast %15 : vector<1x1x2x32xf32> to vector<2x32xf32>
    %17 = arith.truncf %16 : vector<2x32xf32> to vector<2x32xbf16>
    %cst_19 = arith.constant dense<0.000000e+00> : vector<4x32xf32>
    %18 = tpu.matmul %10, %17, %cst_19 {dimension_numbers = #tpu.dot_dimension_numbers<[1], [0], [0], [1], [0, 0, 1, 1], [], []>} : vector<4x2xbf16>, vector<2x32xbf16>, vector<4x32xf32> -> vector<4x32xf32>
    %cst_20 = arith.constant 1.000000e+00 : f32
    %19 = vector.broadcast %cst_20 : f32 to vector<4x32xf32>
    %20 = arith.mulf %19, %14 : vector<4x32xf32>
    %c0_21 = arith.constant 0 : index
    %c0_22 = arith.constant 0 : index
    %c0_23 = arith.constant 0 : index
    %21 = vector.load %arg6[%c0_21, %c0_22, %c0_23] : memref<1x16x32xf32, #tpu.memory_space<vmem>>, vector<1x4x32xf32>
    %22 = vector.shape_cast %21 : vector<1x4x32xf32> to vector<4x32xf32>
    %23 = arith.addf %22, %20 : vector<4x32xf32>
    %c0_24 = arith.constant 0 : index
    %c0_25 = arith.constant 0 : index
    %c0_26 = arith.constant 0 : index
    %24 = vector.load %arg6[%c0_24, %c0_25, %c0_26] : memref<1x16x32xf32, #tpu.memory_space<vmem>>, vector<1x4x32xf32>
    %25 = vector.shape_cast %24 : vector<1x4x32xf32> to vector<4x32xf32>
    %26 = vector.shape_cast %23 : vector<4x32xf32> to vector<1x4x32xf32>
    tpu.vector_store %arg6[%c0_24, %c0_25, %c0_26], %26 {strides = array<i32>} : memref<1x16x32xf32, #tpu.memory_space<vmem>>, vector<1x4x32xf32>,
    %cst_27 = arith.constant 7.500000e-01 : f32
    %27 = vector.broadcast %cst_27 : f32 to vector<4x32xf32>
    %28 = arith.mulf %27, %14 : vector<4x32xf32>
    %cst_28 = arith.constant 2.500000e-01 : f32
    %29 = vector.broadcast %cst_28 : f32 to vector<4x32xf32>
    %30 = arith.mulf %29, %18 : vector<4x32xf32>
    %31 = arith.addf %28, %30 : vector<4x32xf32>
    %c0_29 = arith.constant 0 : index
    %c4 = arith.constant 4 : index
    %c0_30 = arith.constant 0 : index
    %32 = vector.load %arg6[%c0_29, %c4, %c0_30] : memref<1x16x32xf32, #tpu.memory_space<vmem>>, vector<1x4x32xf32>
    %33 = vector.shape_cast %32 : vector<1x4x32xf32> to vector<4x32xf32>
    %34 = arith.addf %33, %31 : vector<4x32xf32>
    %c0_31 = arith.constant 0 : index
    %c4_32 = arith.constant 4 : index
    %c0_33 = arith.constant 0 : index
    %35 = vector.load %arg6[%c0_31, %c4_32, %c0_33] : memref<1x16x32xf32, #tpu.memory_space<vmem>>, vector<1x4x32xf32>
    %36 = vector.shape_cast %35 : vector<1x4x32xf32> to vector<4x32xf32>
    %37 = vector.shape_cast %34 : vector<4x32xf32> to vector<1x4x32xf32>
    tpu.vector_store %arg6[%c0_31, %c4_32, %c0_33], %37 {strides = array<i32>} : memref<1x16x32xf32, #tpu.memory_space<vmem>>, vector<1x4x32xf32>,
    %cst_34 = arith.constant 2.500000e-01 : f32
    %38 = vector.broadcast %cst_34 : f32 to vector<4x32xf32>
    %39 = arith.mulf %38, %14 : vector<4x32xf32>
    %cst_35 = arith.constant 7.500000e-01 : f32
    %40 = vector.broadcast %cst_35 : f32 to vector<4x32xf32>
    %41 = arith.mulf %40, %18 : vector<4x32xf32>
    %42 = arith.addf %39, %41 : vector<4x32xf32>
    %c0_36 = arith.constant 0 : index
    %c8 = arith.constant 8 : index
    %c0_37 = arith.constant 0 : index
    %43 = vector.load %arg6[%c0_36, %c8, %c0_37] : memref<1x16x32xf32, #tpu.memory_space<vmem>>, vector<1x4x32xf32>
    %44 = vector.shape_cast %43 : vector<1x4x32xf32> to vector<4x32xf32>
    %45 = arith.addf %44, %42 : vector<4x32xf32>
    %c0_38 = arith.constant 0 : index
    %c8_39 = arith.constant 8 : index
    %c0_40 = arith.constant 0 : index
    %46 = vector.load %arg6[%c0_38, %c8_39, %c0_40] : memref<1x16x32xf32, #tpu.memory_space<vmem>>, vector<1x4x32xf32>
    %47 = vector.shape_cast %46 : vector<1x4x32xf32> to vector<4x32xf32>
    %48 = vector.shape_cast %45 : vector<4x32xf32> to vector<1x4x32xf32>
    tpu.vector_store %arg6[%c0_38, %c8_39, %c0_40], %48 {strides = array<i32>} : memref<1x16x32xf32, #tpu.memory_space<vmem>>, vector<1x4x32xf32>,
    %cst_41 = arith.constant 1.000000e+00 : f32
    %49 = vector.broadcast %cst_41 : f32 to vector<4x32xf32>
    %50 = arith.mulf %49, %18 : vector<4x32xf32>
    %c0_42 = arith.constant 0 : index
    %c12 = arith.constant 12 : index
    %c0_43 = arith.constant 0 : index
    %51 = vector.load %arg6[%c0_42, %c12, %c0_43] : memref<1x16x32xf32, #tpu.memory_space<vmem>>, vector<1x4x32xf32>
    %52 = vector.shape_cast %51 : vector<1x4x32xf32> to vector<4x32xf32>
    %53 = arith.addf %52, %50 : vector<4x32xf32>
    %c0_44 = arith.constant 0 : index
    %c12_45 = arith.constant 12 : index
    %c0_46 = arith.constant 0 : index
    %54 = vector.load %arg6[%c0_44, %c12_45, %c0_46] : memref<1x16x32xf32, #tpu.memory_space<vmem>>, vector<1x4x32xf32>
    %55 = vector.shape_cast %54 : vector<1x4x32xf32> to vector<4x32xf32>
    %56 = vector.shape_cast %53 : vector<4x32xf32> to vector<1x4x32xf32>
    tpu.vector_store %arg6[%c0_44, %c12_45, %c0_46], %56 {strides = array<i32>} : memref<1x16x32xf32, #tpu.memory_space<vmem>>, vector<1x4x32xf32>,
    return
  }
  func.func @transform_0(%arg0: i32) -> (i32, i32, i32, i32) {
    %c0_i32 = arith.constant 0 : i32
    %c0_i32_0 = arith.constant 0 : i32
    %c0_i32_1 = arith.constant 0 : i32
    %c0_i32_2 = arith.constant 0 : i32
    return %arg0, %c0_i32, %c0_i32_0, %c0_i32_1 : i32, i32, i32, i32
  }
  func.func @transform_1(%arg0: i32) -> (i32, i32) {
    %c0_i32 = arith.constant 0 : i32
    %c0_i32_0 = arith.constant 0 : i32
    %c0_i32_1 = arith.constant 0 : i32
    return %c0_i32, %c0_i32_0 : i32, i32
  }
  func.func @transform_2(%arg0: i32) -> (i32, i32, i32) {
    %c0_i32 = arith.constant 0 : i32
    %c0_i32_0 = arith.constant 0 : i32
    %c0_i32_1 = arith.constant 0 : i32
    return %arg0, %c0_i32, %c0_i32_0 : i32, i32, i32
  }
  func.func @transform_3(%arg0: i32) -> (i32, i32) {
    %c0_i32 = arith.constant 0 : i32
    %c0_i32_0 = arith.constant 0 : i32
    %c0_i32_1 = arith.constant 0 : i32
    return %c0_i32, %c0_i32_0 : i32, i32
  }
  func.func @transform_4(%arg0: i32) -> (i32, i32) {
    %c0_i32 = arith.constant 0 : i32
    %c0_i32_0 = arith.constant 0 : i32
    %c0_i32_1 = arith.constant 0 : i32
    return %c0_i32, %c0_i32_0 : i32, i32
  }
  func.func @transform_5(%arg0: i32) -> (i32, i32, i32) {
    %c0_i32 = arith.constant 0 : i32
    %c0_i32_0 = arith.constant 0 : i32
    %c0_i32_1 = arith.constant 0 : i32
    return %arg0, %c0_i32, %c0_i32_0 : i32, i32, i32
  }
}

module attributes {stable_mosaic.version = 11 : i64} {
  func.func @_up_add_lat_kernel(%arg0: i32, %arg1: memref<1x4x4x32xf32, #tpu.memory_space<vmem>>, %arg2: memref<8x4xbf16, #tpu.memory_space<vmem>>, %arg3: memref<1x64x64xbf16, #tpu.memory_space<vmem>>, %arg4: memref<64x32xbf16, #tpu.memory_space<vmem>>, %arg5: memref<1x32xf32, #tpu.memory_space<vmem>>, %arg6: memref<1x64x32xf32, #tpu.memory_space<vmem>>) attributes {dimension_semantics = [#tpu.dimension_semantics<parallel>], iteration_bounds = array<i64: 2>, scalar_prefetch = 0 : i64, scratch_operands = 0 : i64, tpu.core_type = #tpu.core_type<tc>, window_params = [{transform_indices = @transform_0, window_bounds = array<i64: 1, 4, 4, 32>}, {pipeline_mode = #tpu.pipeline_mode<synchronous>, transform_indices = @transform_1, window_bounds = array<i64: 8, 4>}, {transform_indices = @transform_2, window_bounds = array<i64: 1, 64, 64>}, {pipeline_mode = #tpu.pipeline_mode<synchronous>, transform_indices = @transform_3, window_bounds = array<i64: 64, 32>}, {pipeline_mode = #tpu.pipeline_mode<synchronous>, transform_indices = @transform_4, window_bounds = array<i64: 1, 32>}, {transform_indices = @transform_5, window_bounds = array<i64: 1, 64, 32>}]} {
    %c0 = arith.constant 0 : index
    %c0_0 = arith.constant 0 : index
    %c0_1 = arith.constant 0 : index
    %0 = vector.load %arg3[%c0, %c0_0, %c0_1] : memref<1x64x64xbf16, #tpu.memory_space<vmem>>, vector<1x64x64xbf16>
    %1 = vector.shape_cast %0 : vector<1x64x64xbf16> to vector<64x64xbf16>
    %c0_2 = arith.constant 0 : index
    %c0_3 = arith.constant 0 : index
    %2 = vector.load %arg4[%c0_2, %c0_3] : memref<64x32xbf16, #tpu.memory_space<vmem>>, vector<64x32xbf16>
    %cst = arith.constant dense<0.000000e+00> : vector<64x32xf32>
    %3 = tpu.matmul %1, %2, %cst {dimension_numbers = #tpu.dot_dimension_numbers<[1], [0], [0], [1], [0, 0, 1, 1], [], []>} : vector<64x64xbf16>, vector<64x32xbf16>, vector<64x32xf32> -> vector<64x32xf32>
    %c0_4 = arith.constant 0 : index
    %c0_5 = arith.constant 0 : index
    %4 = vector.load %arg5[%c0_4, %c0_5] : memref<1x32xf32, #tpu.memory_space<vmem>>, vector<1x32xf32>
    %5 = vector.broadcast %4 : vector<1x32xf32> to vector<64x32xf32>
    %6 = arith.addf %3, %5 : vector<64x32xf32>
    %c0_6 = arith.constant 0 : index
    %c0_7 = arith.constant 0 : index
    %c0_8 = arith.constant 0 : index
    %7 = vector.load %arg6[%c0_6, %c0_7, %c0_8] : memref<1x64x32xf32, #tpu.memory_space<vmem>>, vector<1x64x32xf32>
    %8 = vector.shape_cast %7 : vector<1x64x32xf32> to vector<64x32xf32>
    %9 = vector.shape_cast %6 : vector<64x32xf32> to vector<1x64x32xf32>
    tpu.vector_store %arg6[%c0_6, %c0_7, %c0_8], %9 {strides = array<i32>} : memref<1x64x32xf32, #tpu.memory_space<vmem>>, vector<1x64x32xf32>,
    %c0_9 = arith.constant 0 : index
    %c0_10 = arith.constant 0 : index
    %10 = vector.load %arg2[%c0_9, %c0_10] : memref<8x4xbf16, #tpu.memory_space<vmem>>, vector<8x4xbf16>
    %c0_11 = arith.constant 0 : index
    %c0_12 = arith.constant 0 : index
    %c0_13 = arith.constant 0 : index
    %c0_14 = arith.constant 0 : index
    %11 = vector.load %arg1[%c0_11, %c0_12, %c0_13, %c0_14] : memref<1x4x4x32xf32, #tpu.memory_space<vmem>>, vector<1x1x4x32xf32>
    %12 = vector.shape_cast %11 : vector<1x1x4x32xf32> to vector<4x32xf32>
    %13 = arith.truncf %12 : vector<4x32xf32> to vector<4x32xbf16>
    %cst_15 = arith.constant dense<0.000000e+00> : vector<8x32xf32>
    %14 = tpu.matmul %10, %13, %cst_15 {dimension_numbers = #tpu.dot_dimension_numbers<[1], [0], [0], [1], [0, 0, 1, 1], [], []>} : vector<8x4xbf16>, vector<4x32xbf16>, vector<8x32xf32> -> vector<8x32xf32>
    %c0_16 = arith.constant 0 : index
    %c1 = arith.constant 1 : index
    %c0_17 = arith.constant 0 : index
    %c0_18 = arith.constant 0 : index
    %15 = vector.load %arg1[%c0_16, %c1, %c0_17, %c0_18] : memref<1x4x4x32xf32, #tpu.memory_space<vmem>>, vector<1x1x4x32xf32>
    %16 = vector.shape_cast %15 : vector<1x1x4x32xf32> to vector<4x32xf32>
    %17 = arith.truncf %16 : vector<4x32xf32> to vector<4x32xbf16>
    %cst_19 = arith.constant dense<0.000000e+00> : vector<8x32xf32>
    %18 = tpu.matmul %10, %17, %cst_19 {dimension_numbers = #tpu.dot_dimension_numbers<[1], [0], [0], [1], [0, 0, 1, 1], [], []>} : vector<8x4xbf16>, vector<4x32xbf16>, vector<8x32xf32> -> vector<8x32xf32>
    %c0_20 = arith.constant 0 : index
    %c2 = arith.constant 2 : index
    %c0_21 = arith.constant 0 : index
    %c0_22 = arith.constant 0 : index
    %19 = vector.load %arg1[%c0_20, %c2, %c0_21, %c0_22] : memref<1x4x4x32xf32, #tpu.memory_space<vmem>>, vector<1x1x4x32xf32>
    %20 = vector.shape_cast %19 : vector<1x1x4x32xf32> to vector<4x32xf32>
    %21 = arith.truncf %20 : vector<4x32xf32> to vector<4x32xbf16>
    %cst_23 = arith.constant dense<0.000000e+00> : vector<8x32xf32>
    %22 = tpu.matmul %10, %21, %cst_23 {dimension_numbers = #tpu.dot_dimension_numbers<[1], [0], [0], [1], [0, 0, 1, 1], [], []>} : vector<8x4xbf16>, vector<4x32xbf16>, vector<8x32xf32> -> vector<8x32xf32>
    %c0_24 = arith.constant 0 : index
    %c3 = arith.constant 3 : index
    %c0_25 = arith.constant 0 : index
    %c0_26 = arith.constant 0 : index
    %23 = vector.load %arg1[%c0_24, %c3, %c0_25, %c0_26] : memref<1x4x4x32xf32, #tpu.memory_space<vmem>>, vector<1x1x4x32xf32>
    %24 = vector.shape_cast %23 : vector<1x1x4x32xf32> to vector<4x32xf32>
    %25 = arith.truncf %24 : vector<4x32xf32> to vector<4x32xbf16>
    %cst_27 = arith.constant dense<0.000000e+00> : vector<8x32xf32>
    %26 = tpu.matmul %10, %25, %cst_27 {dimension_numbers = #tpu.dot_dimension_numbers<[1], [0], [0], [1], [0, 0, 1, 1], [], []>} : vector<8x4xbf16>, vector<4x32xbf16>, vector<8x32xf32> -> vector<8x32xf32>
    %cst_28 = arith.constant 1.000000e+00 : f32
    %27 = vector.broadcast %cst_28 : f32 to vector<8x32xf32>
    %28 = arith.mulf %27, %14 : vector<8x32xf32>
    %c0_29 = arith.constant 0 : index
    %c0_30 = arith.constant 0 : index
    %c0_31 = arith.constant 0 : index
    %29 = vector.load %arg6[%c0_29, %c0_30, %c0_31] : memref<1x64x32xf32, #tpu.memory_space<vmem>>, vector<1x8x32xf32>
    %30 = vector.shape_cast %29 : vector<1x8x32xf32> to vector<8x32xf32>
    %31 = arith.addf %30, %28 : vector<8x32xf32>
    %c0_32 = arith.constant 0 : index
    %c0_33 = arith.constant 0 : index
    %c0_34 = arith.constant 0 : index
    %32 = vector.load %arg6[%c0_32, %c0_33, %c0_34] : memref<1x64x32xf32, #tpu.memory_space<vmem>>, vector<1x8x32xf32>
    %33 = vector.shape_cast %32 : vector<1x8x32xf32> to vector<8x32xf32>
    %34 = vector.shape_cast %31 : vector<8x32xf32> to vector<1x8x32xf32>
    tpu.vector_store %arg6[%c0_32, %c0_33, %c0_34], %34 {strides = array<i32>} : memref<1x64x32xf32, #tpu.memory_space<vmem>>, vector<1x8x32xf32>,
    %cst_35 = arith.constant 7.500000e-01 : f32
    %35 = vector.broadcast %cst_35 : f32 to vector<8x32xf32>
    %36 = arith.mulf %35, %14 : vector<8x32xf32>
    %cst_36 = arith.constant 2.500000e-01 : f32
    %37 = vector.broadcast %cst_36 : f32 to vector<8x32xf32>
    %38 = arith.mulf %37, %18 : vector<8x32xf32>
    %39 = arith.addf %36, %38 : vector<8x32xf32>
    %c0_37 = arith.constant 0 : index
    %c8 = arith.constant 8 : index
    %c0_38 = arith.constant 0 : index
    %40 = vector.load %arg6[%c0_37, %c8, %c0_38] : memref<1x64x32xf32, #tpu.memory_space<vmem>>, vector<1x8x32xf32>
    %41 = vector.shape_cast %40 : vector<1x8x32xf32> to vector<8x32xf32>
    %42 = arith.addf %41, %39 : vector<8x32xf32>
    %c0_39 = arith.constant 0 : index
    %c8_40 = arith.constant 8 : index
    %c0_41 = arith.constant 0 : index
    %43 = vector.load %arg6[%c0_39, %c8_40, %c0_41] : memref<1x64x32xf32, #tpu.memory_space<vmem>>, vector<1x8x32xf32>
    %44 = vector.shape_cast %43 : vector<1x8x32xf32> to vector<8x32xf32>
    %45 = vector.shape_cast %42 : vector<8x32xf32> to vector<1x8x32xf32>
    tpu.vector_store %arg6[%c0_39, %c8_40, %c0_41], %45 {strides = array<i32>} : memref<1x64x32xf32, #tpu.memory_space<vmem>>, vector<1x8x32xf32>,
    %cst_42 = arith.constant 2.500000e-01 : f32
    %46 = vector.broadcast %cst_42 : f32 to vector<8x32xf32>
    %47 = arith.mulf %46, %14 : vector<8x32xf32>
    %cst_43 = arith.constant 7.500000e-01 : f32
    %48 = vector.broadcast %cst_43 : f32 to vector<8x32xf32>
    %49 = arith.mulf %48, %18 : vector<8x32xf32>
    %50 = arith.addf %47, %49 : vector<8x32xf32>
    %c0_44 = arith.constant 0 : index
    %c16 = arith.constant 16 : index
    %c0_45 = arith.constant 0 : index
    %51 = vector.load %arg6[%c0_44, %c16, %c0_45] : memref<1x64x32xf32, #tpu.memory_space<vmem>>, vector<1x8x32xf32>
    %52 = vector.shape_cast %51 : vector<1x8x32xf32> to vector<8x32xf32>
    %53 = arith.addf %52, %50 : vector<8x32xf32>
    %c0_46 = arith.constant 0 : index
    %c16_47 = arith.constant 16 : index
    %c0_48 = arith.constant 0 : index
    %54 = vector.load %arg6[%c0_46, %c16_47, %c0_48] : memref<1x64x32xf32, #tpu.memory_space<vmem>>, vector<1x8x32xf32>
    %55 = vector.shape_cast %54 : vector<1x8x32xf32> to vector<8x32xf32>
    %56 = vector.shape_cast %53 : vector<8x32xf32> to vector<1x8x32xf32>
    tpu.vector_store %arg6[%c0_46, %c16_47, %c0_48], %56 {strides = array<i32>} : memref<1x64x32xf32, #tpu.memory_space<vmem>>, vector<1x8x32xf32>,
    %cst_49 = arith.constant 7.500000e-01 : f32
    %57 = vector.broadcast %cst_49 : f32 to vector<8x32xf32>
    %58 = arith.mulf %57, %18 : vector<8x32xf32>
    %cst_50 = arith.constant 2.500000e-01 : f32
    %59 = vector.broadcast %cst_50 : f32 to vector<8x32xf32>
    %60 = arith.mulf %59, %22 : vector<8x32xf32>
    %61 = arith.addf %58, %60 : vector<8x32xf32>
    %c0_51 = arith.constant 0 : index
    %c24 = arith.constant 24 : index
    %c0_52 = arith.constant 0 : index
    %62 = vector.load %arg6[%c0_51, %c24, %c0_52] : memref<1x64x32xf32, #tpu.memory_space<vmem>>, vector<1x8x32xf32>
    %63 = vector.shape_cast %62 : vector<1x8x32xf32> to vector<8x32xf32>
    %64 = arith.addf %63, %61 : vector<8x32xf32>
    %c0_53 = arith.constant 0 : index
    %c24_54 = arith.constant 24 : index
    %c0_55 = arith.constant 0 : index
    %65 = vector.load %arg6[%c0_53, %c24_54, %c0_55] : memref<1x64x32xf32, #tpu.memory_space<vmem>>, vector<1x8x32xf32>
    %66 = vector.shape_cast %65 : vector<1x8x32xf32> to vector<8x32xf32>
    %67 = vector.shape_cast %64 : vector<8x32xf32> to vector<1x8x32xf32>
    tpu.vector_store %arg6[%c0_53, %c24_54, %c0_55], %67 {strides = array<i32>} : memref<1x64x32xf32, #tpu.memory_space<vmem>>, vector<1x8x32xf32>,
    %cst_56 = arith.constant 2.500000e-01 : f32
    %68 = vector.broadcast %cst_56 : f32 to vector<8x32xf32>
    %69 = arith.mulf %68, %18 : vector<8x32xf32>
    %cst_57 = arith.constant 7.500000e-01 : f32
    %70 = vector.broadcast %cst_57 : f32 to vector<8x32xf32>
    %71 = arith.mulf %70, %22 : vector<8x32xf32>
    %72 = arith.addf %69, %71 : vector<8x32xf32>
    %c0_58 = arith.constant 0 : index
    %c32 = arith.constant 32 : index
    %c0_59 = arith.constant 0 : index
    %73 = vector.load %arg6[%c0_58, %c32, %c0_59] : memref<1x64x32xf32, #tpu.memory_space<vmem>>, vector<1x8x32xf32>
    %74 = vector.shape_cast %73 : vector<1x8x32xf32> to vector<8x32xf32>
    %75 = arith.addf %74, %72 : vector<8x32xf32>
    %c0_60 = arith.constant 0 : index
    %c32_61 = arith.constant 32 : index
    %c0_62 = arith.constant 0 : index
    %76 = vector.load %arg6[%c0_60, %c32_61, %c0_62] : memref<1x64x32xf32, #tpu.memory_space<vmem>>, vector<1x8x32xf32>
    %77 = vector.shape_cast %76 : vector<1x8x32xf32> to vector<8x32xf32>
    %78 = vector.shape_cast %75 : vector<8x32xf32> to vector<1x8x32xf32>
    tpu.vector_store %arg6[%c0_60, %c32_61, %c0_62], %78 {strides = array<i32>} : memref<1x64x32xf32, #tpu.memory_space<vmem>>, vector<1x8x32xf32>,
    %cst_63 = arith.constant 7.500000e-01 : f32
    %79 = vector.broadcast %cst_63 : f32 to vector<8x32xf32>
    %80 = arith.mulf %79, %22 : vector<8x32xf32>
    %cst_64 = arith.constant 2.500000e-01 : f32
    %81 = vector.broadcast %cst_64 : f32 to vector<8x32xf32>
    %82 = arith.mulf %81, %26 : vector<8x32xf32>
    %83 = arith.addf %80, %82 : vector<8x32xf32>
    %c0_65 = arith.constant 0 : index
    %c40 = arith.constant 40 : index
    %c0_66 = arith.constant 0 : index
    %84 = vector.load %arg6[%c0_65, %c40, %c0_66] : memref<1x64x32xf32, #tpu.memory_space<vmem>>, vector<1x8x32xf32>
    %85 = vector.shape_cast %84 : vector<1x8x32xf32> to vector<8x32xf32>
    %86 = arith.addf %85, %83 : vector<8x32xf32>
    %c0_67 = arith.constant 0 : index
    %c40_68 = arith.constant 40 : index
    %c0_69 = arith.constant 0 : index
    %87 = vector.load %arg6[%c0_67, %c40_68, %c0_69] : memref<1x64x32xf32, #tpu.memory_space<vmem>>, vector<1x8x32xf32>
    %88 = vector.shape_cast %87 : vector<1x8x32xf32> to vector<8x32xf32>
    %89 = vector.shape_cast %86 : vector<8x32xf32> to vector<1x8x32xf32>
    tpu.vector_store %arg6[%c0_67, %c40_68, %c0_69], %89 {strides = array<i32>} : memref<1x64x32xf32, #tpu.memory_space<vmem>>, vector<1x8x32xf32>,
    %cst_70 = arith.constant 2.500000e-01 : f32
    %90 = vector.broadcast %cst_70 : f32 to vector<8x32xf32>
    %91 = arith.mulf %90, %22 : vector<8x32xf32>
    %cst_71 = arith.constant 7.500000e-01 : f32
    %92 = vector.broadcast %cst_71 : f32 to vector<8x32xf32>
    %93 = arith.mulf %92, %26 : vector<8x32xf32>
    %94 = arith.addf %91, %93 : vector<8x32xf32>
    %c0_72 = arith.constant 0 : index
    %c48 = arith.constant 48 : index
    %c0_73 = arith.constant 0 : index
    %95 = vector.load %arg6[%c0_72, %c48, %c0_73] : memref<1x64x32xf32, #tpu.memory_space<vmem>>, vector<1x8x32xf32>
    %96 = vector.shape_cast %95 : vector<1x8x32xf32> to vector<8x32xf32>
    %97 = arith.addf %96, %94 : vector<8x32xf32>
    %c0_74 = arith.constant 0 : index
    %c48_75 = arith.constant 48 : index
    %c0_76 = arith.constant 0 : index
    %98 = vector.load %arg6[%c0_74, %c48_75, %c0_76] : memref<1x64x32xf32, #tpu.memory_space<vmem>>, vector<1x8x32xf32>
    %99 = vector.shape_cast %98 : vector<1x8x32xf32> to vector<8x32xf32>
    %100 = vector.shape_cast %97 : vector<8x32xf32> to vector<1x8x32xf32>
    tpu.vector_store %arg6[%c0_74, %c48_75, %c0_76], %100 {strides = array<i32>} : memref<1x64x32xf32, #tpu.memory_space<vmem>>, vector<1x8x32xf32>,
    %cst_77 = arith.constant 1.000000e+00 : f32
    %101 = vector.broadcast %cst_77 : f32 to vector<8x32xf32>
    %102 = arith.mulf %101, %26 : vector<8x32xf32>
    %c0_78 = arith.constant 0 : index
    %c56 = arith.constant 56 : index
    %c0_79 = arith.constant 0 : index
    %103 = vector.load %arg6[%c0_78, %c56, %c0_79] : memref<1x64x32xf32, #tpu.memory_space<vmem>>, vector<1x8x32xf32>
    %104 = vector.shape_cast %103 : vector<1x8x32xf32> to vector<8x32xf32>
    %105 = arith.addf %104, %102 : vector<8x32xf32>
    %c0_80 = arith.constant 0 : index
    %c56_81 = arith.constant 56 : index
    %c0_82 = arith.constant 0 : index
    %106 = vector.load %arg6[%c0_80, %c56_81, %c0_82] : memref<1x64x32xf32, #tpu.memory_space<vmem>>, vector<1x8x32xf32>
    %107 = vector.shape_cast %106 : vector<1x8x32xf32> to vector<8x32xf32>
    %108 = vector.shape_cast %105 : vector<8x32xf32> to vector<1x8x32xf32>
    tpu.vector_store %arg6[%c0_80, %c56_81, %c0_82], %108 {strides = array<i32>} : memref<1x64x32xf32, #tpu.memory_space<vmem>>, vector<1x8x32xf32>,
    return
  }
  func.func @transform_0(%arg0: i32) -> (i32, i32, i32, i32) {
    %c0_i32 = arith.constant 0 : i32
    %c0_i32_0 = arith.constant 0 : i32
    %c0_i32_1 = arith.constant 0 : i32
    %c0_i32_2 = arith.constant 0 : i32
    return %arg0, %c0_i32, %c0_i32_0, %c0_i32_1 : i32, i32, i32, i32
  }
  func.func @transform_1(%arg0: i32) -> (i32, i32) {
    %c0_i32 = arith.constant 0 : i32
    %c0_i32_0 = arith.constant 0 : i32
    %c0_i32_1 = arith.constant 0 : i32
    return %c0_i32, %c0_i32_0 : i32, i32
  }
  func.func @transform_2(%arg0: i32) -> (i32, i32, i32) {
    %c0_i32 = arith.constant 0 : i32
    %c0_i32_0 = arith.constant 0 : i32
    %c0_i32_1 = arith.constant 0 : i32
    return %arg0, %c0_i32, %c0_i32_0 : i32, i32, i32
  }
  func.func @transform_3(%arg0: i32) -> (i32, i32) {
    %c0_i32 = arith.constant 0 : i32
    %c0_i32_0 = arith.constant 0 : i32
    %c0_i32_1 = arith.constant 0 : i32
    return %c0_i32, %c0_i32_0 : i32, i32
  }
  func.func @transform_4(%arg0: i32) -> (i32, i32) {
    %c0_i32 = arith.constant 0 : i32
    %c0_i32_0 = arith.constant 0 : i32
    %c0_i32_1 = arith.constant 0 : i32
    return %c0_i32, %c0_i32_0 : i32, i32
  }
  func.func @transform_5(%arg0: i32) -> (i32, i32, i32) {
    %c0_i32 = arith.constant 0 : i32
    %c0_i32_0 = arith.constant 0 : i32
    %c0_i32_1 = arith.constant 0 : i32
    return %arg0, %c0_i32, %c0_i32_0 : i32, i32, i32
  }
}

module attributes {stable_mosaic.version = 11 : i64} {
  func.func @_conv3x3_kernel(%arg0: i32, %arg1: memref<1x42x32xbf16, #tpu.memory_space<vmem>>, %arg2: memref<9x32x32xbf16, #tpu.memory_space<vmem>>, %arg3: memref<1x32xf32, #tpu.memory_space<vmem>>, %arg4: memref<1x24x32xf32, #tpu.memory_space<vmem>>) attributes {dimension_semantics = [#tpu.dimension_semantics<parallel>], iteration_bounds = array<i64: 2>, scalar_prefetch = 0 : i64, scratch_operands = 0 : i64, tpu.core_type = #tpu.core_type<tc>, window_params = [{transform_indices = @transform_0, window_bounds = array<i64: 1, 42, 32>}, {pipeline_mode = #tpu.pipeline_mode<synchronous>, transform_indices = @transform_1, window_bounds = array<i64: 9, 32, 32>}, {pipeline_mode = #tpu.pipeline_mode<synchronous>, transform_indices = @transform_2, window_bounds = array<i64: 1, 32>}, {transform_indices = @transform_3, window_bounds = array<i64: 1, 24, 32>}]} {
    %c0 = arith.constant 0 : index
    %c0_0 = arith.constant 0 : index
    %c0_1 = arith.constant 0 : index
    %0 = vector.load %arg1[%c0, %c0_0, %c0_1] : memref<1x42x32xbf16, #tpu.memory_space<vmem>>, vector<1x24x32xbf16>
    %1 = vector.shape_cast %0 : vector<1x24x32xbf16> to vector<24x32xbf16>
    %c0_2 = arith.constant 0 : index
    %c0_3 = arith.constant 0 : index
    %c0_4 = arith.constant 0 : index
    %2 = vector.load %arg2[%c0_2, %c0_3, %c0_4] : memref<9x32x32xbf16, #tpu.memory_space<vmem>>, vector<1x32x32xbf16>
    %3 = vector.shape_cast %2 : vector<1x32x32xbf16> to vector<32x32xbf16>
    %cst = arith.constant dense<0.000000e+00> : vector<24x32xf32>
    %4 = tpu.matmul %1, %3, %cst {dimension_numbers = #tpu.dot_dimension_numbers<[1], [0], [0], [1], [0, 0, 1, 1], [], []>} : vector<24x32xbf16>, vector<32x32xbf16>, vector<24x32xf32> -> vector<24x32xf32>
    %c0_5 = arith.constant 0 : index
    %c1 = arith.constant 1 : index
    %c0_6 = arith.constant 0 : index
    %5 = vector.load %arg1[%c0_5, %c1, %c0_6] : memref<1x42x32xbf16, #tpu.memory_space<vmem>>, vector<1x24x32xbf16>
    %6 = vector.shape_cast %5 : vector<1x24x32xbf16> to vector<24x32xbf16>
    %c1_7 = arith.constant 1 : index
    %c0_8 = arith.constant 0 : index
    %c0_9 = arith.constant 0 : index
    %7 = vector.load %arg2[%c1_7, %c0_8, %c0_9] : memref<9x32x32xbf16, #tpu.memory_space<vmem>>, vector<1x32x32xbf16>
    %8 = vector.shape_cast %7 : vector<1x32x32xbf16> to vector<32x32xbf16>
    %cst_10 = arith.constant dense<0.000000e+00> : vector<24x32xf32>
    %9 = tpu.matmul %6, %8, %cst_10 {dimension_numbers = #tpu.dot_dimension_numbers<[1], [0], [0], [1], [0, 0, 1, 1], [], []>} : vector<24x32xbf16>, vector<32x32xbf16>, vector<24x32xf32> -> vector<24x32xf32>
    %10 = arith.addf %4, %9 : vector<24x32xf32>
    %c0_11 = arith.constant 0 : index
    %c2 = arith.constant 2 : index
    %c0_12 = arith.constant 0 : index
    %11 = vector.load %arg1[%c0_11, %c2, %c0_12] : memref<1x42x32xbf16, #tpu.memory_space<vmem>>, vector<1x24x32xbf16>
    %12 = vector.shape_cast %11 : vector<1x24x32xbf16> to vector<24x32xbf16>
    %c2_13 = arith.constant 2 : index
    %c0_14 = arith.constant 0 : index
    %c0_15 = arith.constant 0 : index
    %13 = vector.load %arg2[%c2_13, %c0_14, %c0_15] : memref<9x32x32xbf16, #tpu.memory_space<vmem>>, vector<1x32x32xbf16>
    %14 = vector.shape_cast %13 : vector<1x32x32xbf16> to vector<32x32xbf16>
    %cst_16 = arith.constant dense<0.000000e+00> : vector<24x32xf32>
    %15 = tpu.matmul %12, %14, %cst_16 {dimension_numbers = #tpu.dot_dimension_numbers<[1], [0], [0], [1], [0, 0, 1, 1], [], []>} : vector<24x32xbf16>, vector<32x32xbf16>, vector<24x32xf32> -> vector<24x32xf32>
    %16 = arith.addf %10, %15 : vector<24x32xf32>
    %c0_17 = arith.constant 0 : index
    %c6 = arith.constant 6 : index
    %c0_18 = arith.constant 0 : index
    %17 = vector.load %arg1[%c0_17, %c6, %c0_18] : memref<1x42x32xbf16, #tpu.memory_space<vmem>>, vector<1x24x32xbf16>
    %18 = vector.shape_cast %17 : vector<1x24x32xbf16> to vector<24x32xbf16>
    %c3 = arith.constant 3 : index
    %c0_19 = arith.constant 0 : index
    %c0_20 = arith.constant 0 : index
    %19 = vector.load %arg2[%c3, %c0_19, %c0_20] : memref<9x32x32xbf16, #tpu.memory_space<vmem>>, vector<1x32x32xbf16>
    %20 = vector.shape_cast %19 : vector<1x32x32xbf16> to vector<32x32xbf16>
    %cst_21 = arith.constant dense<0.000000e+00> : vector<24x32xf32>
    %21 = tpu.matmul %18, %20, %cst_21 {dimension_numbers = #tpu.dot_dimension_numbers<[1], [0], [0], [1], [0, 0, 1, 1], [], []>} : vector<24x32xbf16>, vector<32x32xbf16>, vector<24x32xf32> -> vector<24x32xf32>
    %22 = arith.addf %16, %21 : vector<24x32xf32>
    %c0_22 = arith.constant 0 : index
    %c7 = arith.constant 7 : index
    %c0_23 = arith.constant 0 : index
    %23 = vector.load %arg1[%c0_22, %c7, %c0_23] : memref<1x42x32xbf16, #tpu.memory_space<vmem>>, vector<1x24x32xbf16>
    %24 = vector.shape_cast %23 : vector<1x24x32xbf16> to vector<24x32xbf16>
    %c4 = arith.constant 4 : index
    %c0_24 = arith.constant 0 : index
    %c0_25 = arith.constant 0 : index
    %25 = vector.load %arg2[%c4, %c0_24, %c0_25] : memref<9x32x32xbf16, #tpu.memory_space<vmem>>, vector<1x32x32xbf16>
    %26 = vector.shape_cast %25 : vector<1x32x32xbf16> to vector<32x32xbf16>
    %cst_26 = arith.constant dense<0.000000e+00> : vector<24x32xf32>
    %27 = tpu.matmul %24, %26, %cst_26 {dimension_numbers = #tpu.dot_dimension_numbers<[1], [0], [0], [1], [0, 0, 1, 1], [], []>} : vector<24x32xbf16>, vector<32x32xbf16>, vector<24x32xf32> -> vector<24x32xf32>
    %28 = arith.addf %22, %27 : vector<24x32xf32>
    %c0_27 = arith.constant 0 : index
    %c8 = arith.constant 8 : index
    %c0_28 = arith.constant 0 : index
    %29 = vector.load %arg1[%c0_27, %c8, %c0_28] : memref<1x42x32xbf16, #tpu.memory_space<vmem>>, vector<1x24x32xbf16>
    %30 = vector.shape_cast %29 : vector<1x24x32xbf16> to vector<24x32xbf16>
    %c5 = arith.constant 5 : index
    %c0_29 = arith.constant 0 : index
    %c0_30 = arith.constant 0 : index
    %31 = vector.load %arg2[%c5, %c0_29, %c0_30] : memref<9x32x32xbf16, #tpu.memory_space<vmem>>, vector<1x32x32xbf16>
    %32 = vector.shape_cast %31 : vector<1x32x32xbf16> to vector<32x32xbf16>
    %cst_31 = arith.constant dense<0.000000e+00> : vector<24x32xf32>
    %33 = tpu.matmul %30, %32, %cst_31 {dimension_numbers = #tpu.dot_dimension_numbers<[1], [0], [0], [1], [0, 0, 1, 1], [], []>} : vector<24x32xbf16>, vector<32x32xbf16>, vector<24x32xf32> -> vector<24x32xf32>
    %34 = arith.addf %28, %33 : vector<24x32xf32>
    %c0_32 = arith.constant 0 : index
    %c12 = arith.constant 12 : index
    %c0_33 = arith.constant 0 : index
    %35 = vector.load %arg1[%c0_32, %c12, %c0_33] : memref<1x42x32xbf16, #tpu.memory_space<vmem>>, vector<1x24x32xbf16>
    %36 = vector.shape_cast %35 : vector<1x24x32xbf16> to vector<24x32xbf16>
    %c6_34 = arith.constant 6 : index
    %c0_35 = arith.constant 0 : index
    %c0_36 = arith.constant 0 : index
    %37 = vector.load %arg2[%c6_34, %c0_35, %c0_36] : memref<9x32x32xbf16, #tpu.memory_space<vmem>>, vector<1x32x32xbf16>
    %38 = vector.shape_cast %37 : vector<1x32x32xbf16> to vector<32x32xbf16>
    %cst_37 = arith.constant dense<0.000000e+00> : vector<24x32xf32>
    %39 = tpu.matmul %36, %38, %cst_37 {dimension_numbers = #tpu.dot_dimension_numbers<[1], [0], [0], [1], [0, 0, 1, 1], [], []>} : vector<24x32xbf16>, vector<32x32xbf16>, vector<24x32xf32> -> vector<24x32xf32>
    %40 = arith.addf %34, %39 : vector<24x32xf32>
    %c0_38 = arith.constant 0 : index
    %c13 = arith.constant 13 : index
    %c0_39 = arith.constant 0 : index
    %41 = vector.load %arg1[%c0_38, %c13, %c0_39] : memref<1x42x32xbf16, #tpu.memory_space<vmem>>, vector<1x24x32xbf16>
    %42 = vector.shape_cast %41 : vector<1x24x32xbf16> to vector<24x32xbf16>
    %c7_40 = arith.constant 7 : index
    %c0_41 = arith.constant 0 : index
    %c0_42 = arith.constant 0 : index
    %43 = vector.load %arg2[%c7_40, %c0_41, %c0_42] : memref<9x32x32xbf16, #tpu.memory_space<vmem>>, vector<1x32x32xbf16>
    %44 = vector.shape_cast %43 : vector<1x32x32xbf16> to vector<32x32xbf16>
    %cst_43 = arith.constant dense<0.000000e+00> : vector<24x32xf32>
    %45 = tpu.matmul %42, %44, %cst_43 {dimension_numbers = #tpu.dot_dimension_numbers<[1], [0], [0], [1], [0, 0, 1, 1], [], []>} : vector<24x32xbf16>, vector<32x32xbf16>, vector<24x32xf32> -> vector<24x32xf32>
    %46 = arith.addf %40, %45 : vector<24x32xf32>
    %c0_44 = arith.constant 0 : index
    %c14 = arith.constant 14 : index
    %c0_45 = arith.constant 0 : index
    %47 = vector.load %arg1[%c0_44, %c14, %c0_45] : memref<1x42x32xbf16, #tpu.memory_space<vmem>>, vector<1x24x32xbf16>
    %48 = vector.shape_cast %47 : vector<1x24x32xbf16> to vector<24x32xbf16>
    %c8_46 = arith.constant 8 : index
    %c0_47 = arith.constant 0 : index
    %c0_48 = arith.constant 0 : index
    %49 = vector.load %arg2[%c8_46, %c0_47, %c0_48] : memref<9x32x32xbf16, #tpu.memory_space<vmem>>, vector<1x32x32xbf16>
    %50 = vector.shape_cast %49 : vector<1x32x32xbf16> to vector<32x32xbf16>
    %cst_49 = arith.constant dense<0.000000e+00> : vector<24x32xf32>
    %51 = tpu.matmul %48, %50, %cst_49 {dimension_numbers = #tpu.dot_dimension_numbers<[1], [0], [0], [1], [0, 0, 1, 1], [], []>} : vector<24x32xbf16>, vector<32x32xbf16>, vector<24x32xf32> -> vector<24x32xf32>
    %52 = arith.addf %46, %51 : vector<24x32xf32>
    %c0_50 = arith.constant 0 : index
    %c0_51 = arith.constant 0 : index
    %53 = vector.load %arg3[%c0_50, %c0_51] : memref<1x32xf32, #tpu.memory_space<vmem>>, vector<1x32xf32>
    %54 = vector.broadcast %53 : vector<1x32xf32> to vector<24x32xf32>
    %55 = arith.addf %52, %54 : vector<24x32xf32>
    %c0_52 = arith.constant 0 : index
    %c0_53 = arith.constant 0 : index
    %c0_54 = arith.constant 0 : index
    %56 = vector.load %arg4[%c0_52, %c0_53, %c0_54] : memref<1x24x32xf32, #tpu.memory_space<vmem>>, vector<1x24x32xf32>
    %57 = vector.shape_cast %56 : vector<1x24x32xf32> to vector<24x32xf32>
    %58 = vector.shape_cast %55 : vector<24x32xf32> to vector<1x24x32xf32>
    tpu.vector_store %arg4[%c0_52, %c0_53, %c0_54], %58 {strides = array<i32>} : memref<1x24x32xf32, #tpu.memory_space<vmem>>, vector<1x24x32xf32>,
    return
  }
  func.func @transform_0(%arg0: i32) -> (i32, i32, i32) {
    %c0_i32 = arith.constant 0 : i32
    %c0_i32_0 = arith.constant 0 : i32
    %c0_i32_1 = arith.constant 0 : i32
    return %arg0, %c0_i32, %c0_i32_0 : i32, i32, i32
  }
  func.func @transform_1(%arg0: i32) -> (i32, i32, i32) {
    %c0_i32 = arith.constant 0 : i32
    %c0_i32_0 = arith.constant 0 : i32
    %c0_i32_1 = arith.constant 0 : i32
    %c0_i32_2 = arith.constant 0 : i32
    return %c0_i32, %c0_i32_0, %c0_i32_1 : i32, i32, i32
  }
  func.func @transform_2(%arg0: i32) -> (i32, i32) {
    %c0_i32 = arith.constant 0 : i32
    %c0_i32_0 = arith.constant 0 : i32
    %c0_i32_1 = arith.constant 0 : i32
    return %c0_i32, %c0_i32_0 : i32, i32
  }
  func.func @transform_3(%arg0: i32) -> (i32, i32, i32) {
    %c0_i32 = arith.constant 0 : i32
    %c0_i32_0 = arith.constant 0 : i32
    %c0_i32_1 = arith.constant 0 : i32
    return %arg0, %c0_i32, %c0_i32_0 : i32, i32, i32
  }
}

module attributes {stable_mosaic.version = 11 : i64} {
  func.func @_conv3x3_kernel(%arg0: i32, %arg1: memref<1x110x32xbf16, #tpu.memory_space<vmem>>, %arg2: memref<9x32x32xbf16, #tpu.memory_space<vmem>>, %arg3: memref<1x32xf32, #tpu.memory_space<vmem>>, %arg4: memref<1x80x32xf32, #tpu.memory_space<vmem>>) attributes {dimension_semantics = [#tpu.dimension_semantics<parallel>], iteration_bounds = array<i64: 2>, scalar_prefetch = 0 : i64, scratch_operands = 0 : i64, tpu.core_type = #tpu.core_type<tc>, window_params = [{transform_indices = @transform_0, window_bounds = array<i64: 1, 110, 32>}, {pipeline_mode = #tpu.pipeline_mode<synchronous>, transform_indices = @transform_1, window_bounds = array<i64: 9, 32, 32>}, {pipeline_mode = #tpu.pipeline_mode<synchronous>, transform_indices = @transform_2, window_bounds = array<i64: 1, 32>}, {transform_indices = @transform_3, window_bounds = array<i64: 1, 80, 32>}]} {
    %c0 = arith.constant 0 : index
    %c0_0 = arith.constant 0 : index
    %c0_1 = arith.constant 0 : index
    %0 = vector.load %arg1[%c0, %c0_0, %c0_1] : memref<1x110x32xbf16, #tpu.memory_space<vmem>>, vector<1x80x32xbf16>
    %1 = vector.shape_cast %0 : vector<1x80x32xbf16> to vector<80x32xbf16>
    %c0_2 = arith.constant 0 : index
    %c0_3 = arith.constant 0 : index
    %c0_4 = arith.constant 0 : index
    %2 = vector.load %arg2[%c0_2, %c0_3, %c0_4] : memref<9x32x32xbf16, #tpu.memory_space<vmem>>, vector<1x32x32xbf16>
    %3 = vector.shape_cast %2 : vector<1x32x32xbf16> to vector<32x32xbf16>
    %cst = arith.constant dense<0.000000e+00> : vector<80x32xf32>
    %4 = tpu.matmul %1, %3, %cst {dimension_numbers = #tpu.dot_dimension_numbers<[1], [0], [0], [1], [0, 0, 1, 1], [], []>} : vector<80x32xbf16>, vector<32x32xbf16>, vector<80x32xf32> -> vector<80x32xf32>
    %c0_5 = arith.constant 0 : index
    %c1 = arith.constant 1 : index
    %c0_6 = arith.constant 0 : index
    %5 = vector.load %arg1[%c0_5, %c1, %c0_6] : memref<1x110x32xbf16, #tpu.memory_space<vmem>>, vector<1x80x32xbf16>
    %6 = vector.shape_cast %5 : vector<1x80x32xbf16> to vector<80x32xbf16>
    %c1_7 = arith.constant 1 : index
    %c0_8 = arith.constant 0 : index
    %c0_9 = arith.constant 0 : index
    %7 = vector.load %arg2[%c1_7, %c0_8, %c0_9] : memref<9x32x32xbf16, #tpu.memory_space<vmem>>, vector<1x32x32xbf16>
    %8 = vector.shape_cast %7 : vector<1x32x32xbf16> to vector<32x32xbf16>
    %cst_10 = arith.constant dense<0.000000e+00> : vector<80x32xf32>
    %9 = tpu.matmul %6, %8, %cst_10 {dimension_numbers = #tpu.dot_dimension_numbers<[1], [0], [0], [1], [0, 0, 1, 1], [], []>} : vector<80x32xbf16>, vector<32x32xbf16>, vector<80x32xf32> -> vector<80x32xf32>
    %10 = arith.addf %4, %9 : vector<80x32xf32>
    %c0_11 = arith.constant 0 : index
    %c2 = arith.constant 2 : index
    %c0_12 = arith.constant 0 : index
    %11 = vector.load %arg1[%c0_11, %c2, %c0_12] : memref<1x110x32xbf16, #tpu.memory_space<vmem>>, vector<1x80x32xbf16>
    %12 = vector.shape_cast %11 : vector<1x80x32xbf16> to vector<80x32xbf16>
    %c2_13 = arith.constant 2 : index
    %c0_14 = arith.constant 0 : index
    %c0_15 = arith.constant 0 : index
    %13 = vector.load %arg2[%c2_13, %c0_14, %c0_15] : memref<9x32x32xbf16, #tpu.memory_space<vmem>>, vector<1x32x32xbf16>
    %14 = vector.shape_cast %13 : vector<1x32x32xbf16> to vector<32x32xbf16>
    %cst_16 = arith.constant dense<0.000000e+00> : vector<80x32xf32>
    %15 = tpu.matmul %12, %14, %cst_16 {dimension_numbers = #tpu.dot_dimension_numbers<[1], [0], [0], [1], [0, 0, 1, 1], [], []>} : vector<80x32xbf16>, vector<32x32xbf16>, vector<80x32xf32> -> vector<80x32xf32>
    %16 = arith.addf %10, %15 : vector<80x32xf32>
    %c0_17 = arith.constant 0 : index
    %c10 = arith.constant 10 : index
    %c0_18 = arith.constant 0 : index
    %17 = vector.load %arg1[%c0_17, %c10, %c0_18] : memref<1x110x32xbf16, #tpu.memory_space<vmem>>, vector<1x80x32xbf16>
    %18 = vector.shape_cast %17 : vector<1x80x32xbf16> to vector<80x32xbf16>
    %c3 = arith.constant 3 : index
    %c0_19 = arith.constant 0 : index
    %c0_20 = arith.constant 0 : index
    %19 = vector.load %arg2[%c3, %c0_19, %c0_20] : memref<9x32x32xbf16, #tpu.memory_space<vmem>>, vector<1x32x32xbf16>
    %20 = vector.shape_cast %19 : vector<1x32x32xbf16> to vector<32x32xbf16>
    %cst_21 = arith.constant dense<0.000000e+00> : vector<80x32xf32>
    %21 = tpu.matmul %18, %20, %cst_21 {dimension_numbers = #tpu.dot_dimension_numbers<[1], [0], [0], [1], [0, 0, 1, 1], [], []>} : vector<80x32xbf16>, vector<32x32xbf16>, vector<80x32xf32> -> vector<80x32xf32>
    %22 = arith.addf %16, %21 : vector<80x32xf32>
    %c0_22 = arith.constant 0 : index
    %c11 = arith.constant 11 : index
    %c0_23 = arith.constant 0 : index
    %23 = vector.load %arg1[%c0_22, %c11, %c0_23] : memref<1x110x32xbf16, #tpu.memory_space<vmem>>, vector<1x80x32xbf16>
    %24 = vector.shape_cast %23 : vector<1x80x32xbf16> to vector<80x32xbf16>
    %c4 = arith.constant 4 : index
    %c0_24 = arith.constant 0 : index
    %c0_25 = arith.constant 0 : index
    %25 = vector.load %arg2[%c4, %c0_24, %c0_25] : memref<9x32x32xbf16, #tpu.memory_space<vmem>>, vector<1x32x32xbf16>
    %26 = vector.shape_cast %25 : vector<1x32x32xbf16> to vector<32x32xbf16>
    %cst_26 = arith.constant dense<0.000000e+00> : vector<80x32xf32>
    %27 = tpu.matmul %24, %26, %cst_26 {dimension_numbers = #tpu.dot_dimension_numbers<[1], [0], [0], [1], [0, 0, 1, 1], [], []>} : vector<80x32xbf16>, vector<32x32xbf16>, vector<80x32xf32> -> vector<80x32xf32>
    %28 = arith.addf %22, %27 : vector<80x32xf32>
    %c0_27 = arith.constant 0 : index
    %c12 = arith.constant 12 : index
    %c0_28 = arith.constant 0 : index
    %29 = vector.load %arg1[%c0_27, %c12, %c0_28] : memref<1x110x32xbf16, #tpu.memory_space<vmem>>, vector<1x80x32xbf16>
    %30 = vector.shape_cast %29 : vector<1x80x32xbf16> to vector<80x32xbf16>
    %c5 = arith.constant 5 : index
    %c0_29 = arith.constant 0 : index
    %c0_30 = arith.constant 0 : index
    %31 = vector.load %arg2[%c5, %c0_29, %c0_30] : memref<9x32x32xbf16, #tpu.memory_space<vmem>>, vector<1x32x32xbf16>
    %32 = vector.shape_cast %31 : vector<1x32x32xbf16> to vector<32x32xbf16>
    %cst_31 = arith.constant dense<0.000000e+00> : vector<80x32xf32>
    %33 = tpu.matmul %30, %32, %cst_31 {dimension_numbers = #tpu.dot_dimension_numbers<[1], [0], [0], [1], [0, 0, 1, 1], [], []>} : vector<80x32xbf16>, vector<32x32xbf16>, vector<80x32xf32> -> vector<80x32xf32>
    %34 = arith.addf %28, %33 : vector<80x32xf32>
    %c0_32 = arith.constant 0 : index
    %c20 = arith.constant 20 : index
    %c0_33 = arith.constant 0 : index
    %35 = vector.load %arg1[%c0_32, %c20, %c0_33] : memref<1x110x32xbf16, #tpu.memory_space<vmem>>, vector<1x80x32xbf16>
    %36 = vector.shape_cast %35 : vector<1x80x32xbf16> to vector<80x32xbf16>
    %c6 = arith.constant 6 : index
    %c0_34 = arith.constant 0 : index
    %c0_35 = arith.constant 0 : index
    %37 = vector.load %arg2[%c6, %c0_34, %c0_35] : memref<9x32x32xbf16, #tpu.memory_space<vmem>>, vector<1x32x32xbf16>
    %38 = vector.shape_cast %37 : vector<1x32x32xbf16> to vector<32x32xbf16>
    %cst_36 = arith.constant dense<0.000000e+00> : vector<80x32xf32>
    %39 = tpu.matmul %36, %38, %cst_36 {dimension_numbers = #tpu.dot_dimension_numbers<[1], [0], [0], [1], [0, 0, 1, 1], [], []>} : vector<80x32xbf16>, vector<32x32xbf16>, vector<80x32xf32> -> vector<80x32xf32>
    %40 = arith.addf %34, %39 : vector<80x32xf32>
    %c0_37 = arith.constant 0 : index
    %c21 = arith.constant 21 : index
    %c0_38 = arith.constant 0 : index
    %41 = vector.load %arg1[%c0_37, %c21, %c0_38] : memref<1x110x32xbf16, #tpu.memory_space<vmem>>, vector<1x80x32xbf16>
    %42 = vector.shape_cast %41 : vector<1x80x32xbf16> to vector<80x32xbf16>
    %c7 = arith.constant 7 : index
    %c0_39 = arith.constant 0 : index
    %c0_40 = arith.constant 0 : index
    %43 = vector.load %arg2[%c7, %c0_39, %c0_40] : memref<9x32x32xbf16, #tpu.memory_space<vmem>>, vector<1x32x32xbf16>
    %44 = vector.shape_cast %43 : vector<1x32x32xbf16> to vector<32x32xbf16>
    %cst_41 = arith.constant dense<0.000000e+00> : vector<80x32xf32>
    %45 = tpu.matmul %42, %44, %cst_41 {dimension_numbers = #tpu.dot_dimension_numbers<[1], [0], [0], [1], [0, 0, 1, 1], [], []>} : vector<80x32xbf16>, vector<32x32xbf16>, vector<80x32xf32> -> vector<80x32xf32>
    %46 = arith.addf %40, %45 : vector<80x32xf32>
    %c0_42 = arith.constant 0 : index
    %c22 = arith.constant 22 : index
    %c0_43 = arith.constant 0 : index
    %47 = vector.load %arg1[%c0_42, %c22, %c0_43] : memref<1x110x32xbf16, #tpu.memory_space<vmem>>, vector<1x80x32xbf16>
    %48 = vector.shape_cast %47 : vector<1x80x32xbf16> to vector<80x32xbf16>
    %c8 = arith.constant 8 : index
    %c0_44 = arith.constant 0 : index
    %c0_45 = arith.constant 0 : index
    %49 = vector.load %arg2[%c8, %c0_44, %c0_45] : memref<9x32x32xbf16, #tpu.memory_space<vmem>>, vector<1x32x32xbf16>
    %50 = vector.shape_cast %49 : vector<1x32x32xbf16> to vector<32x32xbf16>
    %cst_46 = arith.constant dense<0.000000e+00> : vector<80x32xf32>
    %51 = tpu.matmul %48, %50, %cst_46 {dimension_numbers = #tpu.dot_dimension_numbers<[1], [0], [0], [1], [0, 0, 1, 1], [], []>} : vector<80x32xbf16>, vector<32x32xbf16>, vector<80x32xf32> -> vector<80x32xf32>
    %52 = arith.addf %46, %51 : vector<80x32xf32>
    %c0_47 = arith.constant 0 : index
    %c0_48 = arith.constant 0 : index
    %53 = vector.load %arg3[%c0_47, %c0_48] : memref<1x32xf32, #tpu.memory_space<vmem>>, vector<1x32xf32>
    %54 = vector.broadcast %53 : vector<1x32xf32> to vector<80x32xf32>
    %55 = arith.addf %52, %54 : vector<80x32xf32>
    %c0_49 = arith.constant 0 : index
    %c0_50 = arith.constant 0 : index
    %c0_51 = arith.constant 0 : index
    %56 = vector.load %arg4[%c0_49, %c0_50, %c0_51] : memref<1x80x32xf32, #tpu.memory_space<vmem>>, vector<1x80x32xf32>
    %57 = vector.shape_cast %56 : vector<1x80x32xf32> to vector<80x32xf32>
    %58 = vector.shape_cast %55 : vector<80x32xf32> to vector<1x80x32xf32>
    tpu.vector_store %arg4[%c0_49, %c0_50, %c0_51], %58 {strides = array<i32>} : memref<1x80x32xf32, #tpu.memory_space<vmem>>, vector<1x80x32xf32>,
    return
  }
  func.func @transform_0(%arg0: i32) -> (i32, i32, i32) {
    %c0_i32 = arith.constant 0 : i32
    %c0_i32_0 = arith.constant 0 : i32
    %c0_i32_1 = arith.constant 0 : i32
    return %arg0, %c0_i32, %c0_i32_0 : i32, i32, i32
  }
  func.func @transform_1(%arg0: i32) -> (i32, i32, i32) {
    %c0_i32 = arith.constant 0 : i32
    %c0_i32_0 = arith.constant 0 : i32
    %c0_i32_1 = arith.constant 0 : i32
    %c0_i32_2 = arith.constant 0 : i32
    return %c0_i32, %c0_i32_0, %c0_i32_1 : i32, i32, i32
  }
  func.func @transform_2(%arg0: i32) -> (i32, i32) {
    %c0_i32 = arith.constant 0 : i32
    %c0_i32_0 = arith.constant 0 : i32
    %c0_i32_1 = arith.constant 0 : i32
    return %c0_i32, %c0_i32_0 : i32, i32
  }
  func.func @transform_3(%arg0: i32) -> (i32, i32, i32) {
    %c0_i32 = arith.constant 0 : i32
    %c0_i32_0 = arith.constant 0 : i32
    %c0_i32_1 = arith.constant 0 : i32
    return %arg0, %c0_i32, %c0_i32_0 : i32, i32, i32
  }
}

module attributes {stable_mosaic.version = 11 : i64} {
  func.func @_up_add_lat_kernel(%arg0: i32, %arg1: memref<1x8x8x32xf32, #tpu.memory_space<vmem>>, %arg2: memref<16x8xbf16, #tpu.memory_space<vmem>>, %arg3: memref<1x256x32xbf16, #tpu.memory_space<vmem>>, %arg4: memref<32x32xbf16, #tpu.memory_space<vmem>>, %arg5: memref<1x32xf32, #tpu.memory_space<vmem>>, %arg6: memref<1x256x32xf32, #tpu.memory_space<vmem>>) attributes {dimension_semantics = [#tpu.dimension_semantics<parallel>], iteration_bounds = array<i64: 2>, scalar_prefetch = 0 : i64, scratch_operands = 0 : i64, tpu.core_type = #tpu.core_type<tc>, window_params = [{transform_indices = @transform_0, window_bounds = array<i64: 1, 8, 8, 32>}, {pipeline_mode = #tpu.pipeline_mode<synchronous>, transform_indices = @transform_1, window_bounds = array<i64: 16, 8>}, {transform_indices = @transform_2, window_bounds = array<i64: 1, 256, 32>}, {pipeline_mode = #tpu.pipeline_mode<synchronous>, transform_indices = @transform_3, window_bounds = array<i64: 32, 32>}, {pipeline_mode = #tpu.pipeline_mode<synchronous>, transform_indices = @transform_4, window_bounds = array<i64: 1, 32>}, {transform_indices = @transform_5, window_bounds = array<i64: 1, 256, 32>}]} {
    %c0 = arith.constant 0 : index
    %c0_0 = arith.constant 0 : index
    %c0_1 = arith.constant 0 : index
    %0 = vector.load %arg3[%c0, %c0_0, %c0_1] : memref<1x256x32xbf16, #tpu.memory_space<vmem>>, vector<1x256x32xbf16>
    %1 = vector.shape_cast %0 : vector<1x256x32xbf16> to vector<256x32xbf16>
    %c0_2 = arith.constant 0 : index
    %c0_3 = arith.constant 0 : index
    %2 = vector.load %arg4[%c0_2, %c0_3] : memref<32x32xbf16, #tpu.memory_space<vmem>>, vector<32x32xbf16>
    %cst = arith.constant dense<0.000000e+00> : vector<256x32xf32>
    %3 = tpu.matmul %1, %2, %cst {dimension_numbers = #tpu.dot_dimension_numbers<[1], [0], [0], [1], [0, 0, 1, 1], [], []>} : vector<256x32xbf16>, vector<32x32xbf16>, vector<256x32xf32> -> vector<256x32xf32>
    %c0_4 = arith.constant 0 : index
    %c0_5 = arith.constant 0 : index
    %4 = vector.load %arg5[%c0_4, %c0_5] : memref<1x32xf32, #tpu.memory_space<vmem>>, vector<1x32xf32>
    %5 = vector.broadcast %4 : vector<1x32xf32> to vector<256x32xf32>
    %6 = arith.addf %3, %5 : vector<256x32xf32>
    %c0_6 = arith.constant 0 : index
    %c0_7 = arith.constant 0 : index
    %c0_8 = arith.constant 0 : index
    %7 = vector.load %arg6[%c0_6, %c0_7, %c0_8] : memref<1x256x32xf32, #tpu.memory_space<vmem>>, vector<1x256x32xf32>
    %8 = vector.shape_cast %7 : vector<1x256x32xf32> to vector<256x32xf32>
    %9 = vector.shape_cast %6 : vector<256x32xf32> to vector<1x256x32xf32>
    tpu.vector_store %arg6[%c0_6, %c0_7, %c0_8], %9 {strides = array<i32>} : memref<1x256x32xf32, #tpu.memory_space<vmem>>, vector<1x256x32xf32>,
    %c0_9 = arith.constant 0 : index
    %c0_10 = arith.constant 0 : index
    %10 = vector.load %arg2[%c0_9, %c0_10] : memref<16x8xbf16, #tpu.memory_space<vmem>>, vector<16x8xbf16>
    %c0_11 = arith.constant 0 : index
    %c0_12 = arith.constant 0 : index
    %c0_13 = arith.constant 0 : index
    %c0_14 = arith.constant 0 : index
    %11 = vector.load %arg1[%c0_11, %c0_12, %c0_13, %c0_14] : memref<1x8x8x32xf32, #tpu.memory_space<vmem>>, vector<1x1x8x32xf32>
    %12 = vector.shape_cast %11 : vector<1x1x8x32xf32> to vector<8x32xf32>
    %13 = arith.truncf %12 : vector<8x32xf32> to vector<8x32xbf16>
    %cst_15 = arith.constant dense<0.000000e+00> : vector<16x32xf32>
    %14 = tpu.matmul %10, %13, %cst_15 {dimension_numbers = #tpu.dot_dimension_numbers<[1], [0], [0], [1], [0, 0, 1, 1], [], []>} : vector<16x8xbf16>, vector<8x32xbf16>, vector<16x32xf32> -> vector<16x32xf32>
    %c0_16 = arith.constant 0 : index
    %c1 = arith.constant 1 : index
    %c0_17 = arith.constant 0 : index
    %c0_18 = arith.constant 0 : index
    %15 = vector.load %arg1[%c0_16, %c1, %c0_17, %c0_18] : memref<1x8x8x32xf32, #tpu.memory_space<vmem>>, vector<1x1x8x32xf32>
    %16 = vector.shape_cast %15 : vector<1x1x8x32xf32> to vector<8x32xf32>
    %17 = arith.truncf %16 : vector<8x32xf32> to vector<8x32xbf16>
    %cst_19 = arith.constant dense<0.000000e+00> : vector<16x32xf32>
    %18 = tpu.matmul %10, %17, %cst_19 {dimension_numbers = #tpu.dot_dimension_numbers<[1], [0], [0], [1], [0, 0, 1, 1], [], []>} : vector<16x8xbf16>, vector<8x32xbf16>, vector<16x32xf32> -> vector<16x32xf32>
    %c0_20 = arith.constant 0 : index
    %c2 = arith.constant 2 : index
    %c0_21 = arith.constant 0 : index
    %c0_22 = arith.constant 0 : index
    %19 = vector.load %arg1[%c0_20, %c2, %c0_21, %c0_22] : memref<1x8x8x32xf32, #tpu.memory_space<vmem>>, vector<1x1x8x32xf32>
    %20 = vector.shape_cast %19 : vector<1x1x8x32xf32> to vector<8x32xf32>
    %21 = arith.truncf %20 : vector<8x32xf32> to vector<8x32xbf16>
    %cst_23 = arith.constant dense<0.000000e+00> : vector<16x32xf32>
    %22 = tpu.matmul %10, %21, %cst_23 {dimension_numbers = #tpu.dot_dimension_numbers<[1], [0], [0], [1], [0, 0, 1, 1], [], []>} : vector<16x8xbf16>, vector<8x32xbf16>, vector<16x32xf32> -> vector<16x32xf32>
    %c0_24 = arith.constant 0 : index
    %c3 = arith.constant 3 : index
    %c0_25 = arith.constant 0 : index
    %c0_26 = arith.constant 0 : index
    %23 = vector.load %arg1[%c0_24, %c3, %c0_25, %c0_26] : memref<1x8x8x32xf32, #tpu.memory_space<vmem>>, vector<1x1x8x32xf32>
    %24 = vector.shape_cast %23 : vector<1x1x8x32xf32> to vector<8x32xf32>
    %25 = arith.truncf %24 : vector<8x32xf32> to vector<8x32xbf16>
    %cst_27 = arith.constant dense<0.000000e+00> : vector<16x32xf32>
    %26 = tpu.matmul %10, %25, %cst_27 {dimension_numbers = #tpu.dot_dimension_numbers<[1], [0], [0], [1], [0, 0, 1, 1], [], []>} : vector<16x8xbf16>, vector<8x32xbf16>, vector<16x32xf32> -> vector<16x32xf32>
    %c0_28 = arith.constant 0 : index
    %c4 = arith.constant 4 : index
    %c0_29 = arith.constant 0 : index
    %c0_30 = arith.constant 0 : index
    %27 = vector.load %arg1[%c0_28, %c4, %c0_29, %c0_30] : memref<1x8x8x32xf32, #tpu.memory_space<vmem>>, vector<1x1x8x32xf32>
    %28 = vector.shape_cast %27 : vector<1x1x8x32xf32> to vector<8x32xf32>
    %29 = arith.truncf %28 : vector<8x32xf32> to vector<8x32xbf16>
    %cst_31 = arith.constant dense<0.000000e+00> : vector<16x32xf32>
    %30 = tpu.matmul %10, %29, %cst_31 {dimension_numbers = #tpu.dot_dimension_numbers<[1], [0], [0], [1], [0, 0, 1, 1], [], []>} : vector<16x8xbf16>, vector<8x32xbf16>, vector<16x32xf32> -> vector<16x32xf32>
    %c0_32 = arith.constant 0 : index
    %c5 = arith.constant 5 : index
    %c0_33 = arith.constant 0 : index
    %c0_34 = arith.constant 0 : index
    %31 = vector.load %arg1[%c0_32, %c5, %c0_33, %c0_34] : memref<1x8x8x32xf32, #tpu.memory_space<vmem>>, vector<1x1x8x32xf32>
    %32 = vector.shape_cast %31 : vector<1x1x8x32xf32> to vector<8x32xf32>
    %33 = arith.truncf %32 : vector<8x32xf32> to vector<8x32xbf16>
    %cst_35 = arith.constant dense<0.000000e+00> : vector<16x32xf32>
    %34 = tpu.matmul %10, %33, %cst_35 {dimension_numbers = #tpu.dot_dimension_numbers<[1], [0], [0], [1], [0, 0, 1, 1], [], []>} : vector<16x8xbf16>, vector<8x32xbf16>, vector<16x32xf32> -> vector<16x32xf32>
    %c0_36 = arith.constant 0 : index
    %c6 = arith.constant 6 : index
    %c0_37 = arith.constant 0 : index
    %c0_38 = arith.constant 0 : index
    %35 = vector.load %arg1[%c0_36, %c6, %c0_37, %c0_38] : memref<1x8x8x32xf32, #tpu.memory_space<vmem>>, vector<1x1x8x32xf32>
    %36 = vector.shape_cast %35 : vector<1x1x8x32xf32> to vector<8x32xf32>
    %37 = arith.truncf %36 : vector<8x32xf32> to vector<8x32xbf16>
    %cst_39 = arith.constant dense<0.000000e+00> : vector<16x32xf32>
    %38 = tpu.matmul %10, %37, %cst_39 {dimension_numbers = #tpu.dot_dimension_numbers<[1], [0], [0], [1], [0, 0, 1, 1], [], []>} : vector<16x8xbf16>, vector<8x32xbf16>, vector<16x32xf32> -> vector<16x32xf32>
    %c0_40 = arith.constant 0 : index
    %c7 = arith.constant 7 : index
    %c0_41 = arith.constant 0 : index
    %c0_42 = arith.constant 0 : index
    %39 = vector.load %arg1[%c0_40, %c7, %c0_41, %c0_42] : memref<1x8x8x32xf32, #tpu.memory_space<vmem>>, vector<1x1x8x32xf32>
    %40 = vector.shape_cast %39 : vector<1x1x8x32xf32> to vector<8x32xf32>
    %41 = arith.truncf %40 : vector<8x32xf32> to vector<8x32xbf16>
    %cst_43 = arith.constant dense<0.000000e+00> : vector<16x32xf32>
    %42 = tpu.matmul %10, %41, %cst_43 {dimension_numbers = #tpu.dot_dimension_numbers<[1], [0], [0], [1], [0, 0, 1, 1], [], []>} : vector<16x8xbf16>, vector<8x32xbf16>, vector<16x32xf32> -> vector<16x32xf32>
    %cst_44 = arith.constant 1.000000e+00 : f32
    %43 = vector.broadcast %cst_44 : f32 to vector<16x32xf32>
    %44 = arith.mulf %43, %14 : vector<16x32xf32>
    %c0_45 = arith.constant 0 : index
    %c0_46 = arith.constant 0 : index
    %c0_47 = arith.constant 0 : index
    %45 = vector.load %arg6[%c0_45, %c0_46, %c0_47] : memref<1x256x32xf32, #tpu.memory_space<vmem>>, vector<1x16x32xf32>
    %46 = vector.shape_cast %45 : vector<1x16x32xf32> to vector<16x32xf32>
    %47 = arith.addf %46, %44 : vector<16x32xf32>
    %c0_48 = arith.constant 0 : index
    %c0_49 = arith.constant 0 : index
    %c0_50 = arith.constant 0 : index
    %48 = vector.load %arg6[%c0_48, %c0_49, %c0_50] : memref<1x256x32xf32, #tpu.memory_space<vmem>>, vector<1x16x32xf32>
    %49 = vector.shape_cast %48 : vector<1x16x32xf32> to vector<16x32xf32>
    %50 = vector.shape_cast %47 : vector<16x32xf32> to vector<1x16x32xf32>
    tpu.vector_store %arg6[%c0_48, %c0_49, %c0_50], %50 {strides = array<i32>} : memref<1x256x32xf32, #tpu.memory_space<vmem>>, vector<1x16x32xf32>,
    %cst_51 = arith.constant 7.500000e-01 : f32
    %51 = vector.broadcast %cst_51 : f32 to vector<16x32xf32>
    %52 = arith.mulf %51, %14 : vector<16x32xf32>
    %cst_52 = arith.constant 2.500000e-01 : f32
    %53 = vector.broadcast %cst_52 : f32 to vector<16x32xf32>
    %54 = arith.mulf %53, %18 : vector<16x32xf32>
    %55 = arith.addf %52, %54 : vector<16x32xf32>
    %c0_53 = arith.constant 0 : index
    %c16 = arith.constant 16 : index
    %c0_54 = arith.constant 0 : index
    %56 = vector.load %arg6[%c0_53, %c16, %c0_54] : memref<1x256x32xf32, #tpu.memory_space<vmem>>, vector<1x16x32xf32>
    %57 = vector.shape_cast %56 : vector<1x16x32xf32> to vector<16x32xf32>
    %58 = arith.addf %57, %55 : vector<16x32xf32>
    %c0_55 = arith.constant 0 : index
    %c16_56 = arith.constant 16 : index
    %c0_57 = arith.constant 0 : index
    %59 = vector.load %arg6[%c0_55, %c16_56, %c0_57] : memref<1x256x32xf32, #tpu.memory_space<vmem>>, vector<1x16x32xf32>
    %60 = vector.shape_cast %59 : vector<1x16x32xf32> to vector<16x32xf32>
    %61 = vector.shape_cast %58 : vector<16x32xf32> to vector<1x16x32xf32>
    tpu.vector_store %arg6[%c0_55, %c16_56, %c0_57], %61 {strides = array<i32>} : memref<1x256x32xf32, #tpu.memory_space<vmem>>, vector<1x16x32xf32>,
    %cst_58 = arith.constant 2.500000e-01 : f32
    %62 = vector.broadcast %cst_58 : f32 to vector<16x32xf32>
    %63 = arith.mulf %62, %14 : vector<16x32xf32>
    %cst_59 = arith.constant 7.500000e-01 : f32
    %64 = vector.broadcast %cst_59 : f32 to vector<16x32xf32>
    %65 = arith.mulf %64, %18 : vector<16x32xf32>
    %66 = arith.addf %63, %65 : vector<16x32xf32>
    %c0_60 = arith.constant 0 : index
    %c32 = arith.constant 32 : index
    %c0_61 = arith.constant 0 : index
    %67 = vector.load %arg6[%c0_60, %c32, %c0_61] : memref<1x256x32xf32, #tpu.memory_space<vmem>>, vector<1x16x32xf32>
    %68 = vector.shape_cast %67 : vector<1x16x32xf32> to vector<16x32xf32>
    %69 = arith.addf %68, %66 : vector<16x32xf32>
    %c0_62 = arith.constant 0 : index
    %c32_63 = arith.constant 32 : index
    %c0_64 = arith.constant 0 : index
    %70 = vector.load %arg6[%c0_62, %c32_63, %c0_64] : memref<1x256x32xf32, #tpu.memory_space<vmem>>, vector<1x16x32xf32>
    %71 = vector.shape_cast %70 : vector<1x16x32xf32> to vector<16x32xf32>
    %72 = vector.shape_cast %69 : vector<16x32xf32> to vector<1x16x32xf32>
    tpu.vector_store %arg6[%c0_62, %c32_63, %c0_64], %72 {strides = array<i32>} : memref<1x256x32xf32, #tpu.memory_space<vmem>>, vector<1x16x32xf32>,
    %cst_65 = arith.constant 7.500000e-01 : f32
    %73 = vector.broadcast %cst_65 : f32 to vector<16x32xf32>
    %74 = arith.mulf %73, %18 : vector<16x32xf32>
    %cst_66 = arith.constant 2.500000e-01 : f32
    %75 = vector.broadcast %cst_66 : f32 to vector<16x32xf32>
    %76 = arith.mulf %75, %22 : vector<16x32xf32>
    %77 = arith.addf %74, %76 : vector<16x32xf32>
    %c0_67 = arith.constant 0 : index
    %c48 = arith.constant 48 : index
    %c0_68 = arith.constant 0 : index
    %78 = vector.load %arg6[%c0_67, %c48, %c0_68] : memref<1x256x32xf32, #tpu.memory_space<vmem>>, vector<1x16x32xf32>
    %79 = vector.shape_cast %78 : vector<1x16x32xf32> to vector<16x32xf32>
    %80 = arith.addf %79, %77 : vector<16x32xf32>
    %c0_69 = arith.constant 0 : index
    %c48_70 = arith.constant 48 : index
    %c0_71 = arith.constant 0 : index
    %81 = vector.load %arg6[%c0_69, %c48_70, %c0_71] : memref<1x256x32xf32, #tpu.memory_space<vmem>>, vector<1x16x32xf32>
    %82 = vector.shape_cast %81 : vector<1x16x32xf32> to vector<16x32xf32>
    %83 = vector.shape_cast %80 : vector<16x32xf32> to vector<1x16x32xf32>
    tpu.vector_store %arg6[%c0_69, %c48_70, %c0_71], %83 {strides = array<i32>} : memref<1x256x32xf32, #tpu.memory_space<vmem>>, vector<1x16x32xf32>,
    %cst_72 = arith.constant 2.500000e-01 : f32
    %84 = vector.broadcast %cst_72 : f32 to vector<16x32xf32>
    %85 = arith.mulf %84, %18 : vector<16x32xf32>
    %cst_73 = arith.constant 7.500000e-01 : f32
    %86 = vector.broadcast %cst_73 : f32 to vector<16x32xf32>
    %87 = arith.mulf %86, %22 : vector<16x32xf32>
    %88 = arith.addf %85, %87 : vector<16x32xf32>
    %c0_74 = arith.constant 0 : index
    %c64 = arith.constant 64 : index
    %c0_75 = arith.constant 0 : index
    %89 = vector.load %arg6[%c0_74, %c64, %c0_75] : memref<1x256x32xf32, #tpu.memory_space<vmem>>, vector<1x16x32xf32>
    %90 = vector.shape_cast %89 : vector<1x16x32xf32> to vector<16x32xf32>
    %91 = arith.addf %90, %88 : vector<16x32xf32>
    %c0_76 = arith.constant 0 : index
    %c64_77 = arith.constant 64 : index
    %c0_78 = arith.constant 0 : index
    %92 = vector.load %arg6[%c0_76, %c64_77, %c0_78] : memref<1x256x32xf32, #tpu.memory_space<vmem>>, vector<1x16x32xf32>
    %93 = vector.shape_cast %92 : vector<1x16x32xf32> to vector<16x32xf32>
    %94 = vector.shape_cast %91 : vector<16x32xf32> to vector<1x16x32xf32>
    tpu.vector_store %arg6[%c0_76, %c64_77, %c0_78], %94 {strides = array<i32>} : memref<1x256x32xf32, #tpu.memory_space<vmem>>, vector<1x16x32xf32>,
    %cst_79 = arith.constant 7.500000e-01 : f32
    %95 = vector.broadcast %cst_79 : f32 to vector<16x32xf32>
    %96 = arith.mulf %95, %22 : vector<16x32xf32>
    %cst_80 = arith.constant 2.500000e-01 : f32
    %97 = vector.broadcast %cst_80 : f32 to vector<16x32xf32>
    %98 = arith.mulf %97, %26 : vector<16x32xf32>
    %99 = arith.addf %96, %98 : vector<16x32xf32>
    %c0_81 = arith.constant 0 : index
    %c80 = arith.constant 80 : index
    %c0_82 = arith.constant 0 : index
    %100 = vector.load %arg6[%c0_81, %c80, %c0_82] : memref<1x256x32xf32, #tpu.memory_space<vmem>>, vector<1x16x32xf32>
    %101 = vector.shape_cast %100 : vector<1x16x32xf32> to vector<16x32xf32>
    %102 = arith.addf %101, %99 : vector<16x32xf32>
    %c0_83 = arith.constant 0 : index
    %c80_84 = arith.constant 80 : index
    %c0_85 = arith.constant 0 : index
    %103 = vector.load %arg6[%c0_83, %c80_84, %c0_85] : memref<1x256x32xf32, #tpu.memory_space<vmem>>, vector<1x16x32xf32>
    %104 = vector.shape_cast %103 : vector<1x16x32xf32> to vector<16x32xf32>
    %105 = vector.shape_cast %102 : vector<16x32xf32> to vector<1x16x32xf32>
    tpu.vector_store %arg6[%c0_83, %c80_84, %c0_85], %105 {strides = array<i32>} : memref<1x256x32xf32, #tpu.memory_space<vmem>>, vector<1x16x32xf32>,
    %cst_86 = arith.constant 2.500000e-01 : f32
    %106 = vector.broadcast %cst_86 : f32 to vector<16x32xf32>
    %107 = arith.mulf %106, %22 : vector<16x32xf32>
    %cst_87 = arith.constant 7.500000e-01 : f32
    %108 = vector.broadcast %cst_87 : f32 to vector<16x32xf32>
    %109 = arith.mulf %108, %26 : vector<16x32xf32>
    %110 = arith.addf %107, %109 : vector<16x32xf32>
    %c0_88 = arith.constant 0 : index
    %c96 = arith.constant 96 : index
    %c0_89 = arith.constant 0 : index
    %111 = vector.load %arg6[%c0_88, %c96, %c0_89] : memref<1x256x32xf32, #tpu.memory_space<vmem>>, vector<1x16x32xf32>
    %112 = vector.shape_cast %111 : vector<1x16x32xf32> to vector<16x32xf32>
    %113 = arith.addf %112, %110 : vector<16x32xf32>
    %c0_90 = arith.constant 0 : index
    %c96_91 = arith.constant 96 : index
    %c0_92 = arith.constant 0 : index
    %114 = vector.load %arg6[%c0_90, %c96_91, %c0_92] : memref<1x256x32xf32, #tpu.memory_space<vmem>>, vector<1x16x32xf32>
    %115 = vector.shape_cast %114 : vector<1x16x32xf32> to vector<16x32xf32>
    %116 = vector.shape_cast %113 : vector<16x32xf32> to vector<1x16x32xf32>
    tpu.vector_store %arg6[%c0_90, %c96_91, %c0_92], %116 {strides = array<i32>} : memref<1x256x32xf32, #tpu.memory_space<vmem>>, vector<1x16x32xf32>,
    %cst_93 = arith.constant 7.500000e-01 : f32
    %117 = vector.broadcast %cst_93 : f32 to vector<16x32xf32>
    %118 = arith.mulf %117, %26 : vector<16x32xf32>
    %cst_94 = arith.constant 2.500000e-01 : f32
    %119 = vector.broadcast %cst_94 : f32 to vector<16x32xf32>
    %120 = arith.mulf %119, %30 : vector<16x32xf32>
    %121 = arith.addf %118, %120 : vector<16x32xf32>
    %c0_95 = arith.constant 0 : index
    %c112 = arith.constant 112 : index
    %c0_96 = arith.constant 0 : index
    %122 = vector.load %arg6[%c0_95, %c112, %c0_96] : memref<1x256x32xf32, #tpu.memory_space<vmem>>, vector<1x16x32xf32>
    %123 = vector.shape_cast %122 : vector<1x16x32xf32> to vector<16x32xf32>
    %124 = arith.addf %123, %121 : vector<16x32xf32>
    %c0_97 = arith.constant 0 : index
    %c112_98 = arith.constant 112 : index
    %c0_99 = arith.constant 0 : index
    %125 = vector.load %arg6[%c0_97, %c112_98, %c0_99] : memref<1x256x32xf32, #tpu.memory_space<vmem>>, vector<1x16x32xf32>
    %126 = vector.shape_cast %125 : vector<1x16x32xf32> to vector<16x32xf32>
    %127 = vector.shape_cast %124 : vector<16x32xf32> to vector<1x16x32xf32>
    tpu.vector_store %arg6[%c0_97, %c112_98, %c0_99], %127 {strides = array<i32>} : memref<1x256x32xf32, #tpu.memory_space<vmem>>, vector<1x16x32xf32>,
    %cst_100 = arith.constant 2.500000e-01 : f32
    %128 = vector.broadcast %cst_100 : f32 to vector<16x32xf32>
    %129 = arith.mulf %128, %26 : vector<16x32xf32>
    %cst_101 = arith.constant 7.500000e-01 : f32
    %130 = vector.broadcast %cst_101 : f32 to vector<16x32xf32>
    %131 = arith.mulf %130, %30 : vector<16x32xf32>
    %132 = arith.addf %129, %131 : vector<16x32xf32>
    %c0_102 = arith.constant 0 : index
    %c128 = arith.constant 128 : index
    %c0_103 = arith.constant 0 : index
    %133 = vector.load %arg6[%c0_102, %c128, %c0_103] : memref<1x256x32xf32, #tpu.memory_space<vmem>>, vector<1x16x32xf32>
    %134 = vector.shape_cast %133 : vector<1x16x32xf32> to vector<16x32xf32>
    %135 = arith.addf %134, %132 : vector<16x32xf32>
    %c0_104 = arith.constant 0 : index
    %c128_105 = arith.constant 128 : index
    %c0_106 = arith.constant 0 : index
    %136 = vector.load %arg6[%c0_104, %c128_105, %c0_106] : memref<1x256x32xf32, #tpu.memory_space<vmem>>, vector<1x16x32xf32>
    %137 = vector.shape_cast %136 : vector<1x16x32xf32> to vector<16x32xf32>
    %138 = vector.shape_cast %135 : vector<16x32xf32> to vector<1x16x32xf32>
    tpu.vector_store %arg6[%c0_104, %c128_105, %c0_106], %138 {strides = array<i32>} : memref<1x256x32xf32, #tpu.memory_space<vmem>>, vector<1x16x32xf32>,
    %cst_107 = arith.constant 7.500000e-01 : f32
    %139 = vector.broadcast %cst_107 : f32 to vector<16x32xf32>
    %140 = arith.mulf %139, %30 : vector<16x32xf32>
    %cst_108 = arith.constant 2.500000e-01 : f32
    %141 = vector.broadcast %cst_108 : f32 to vector<16x32xf32>
    %142 = arith.mulf %141, %34 : vector<16x32xf32>
    %143 = arith.addf %140, %142 : vector<16x32xf32>
    %c0_109 = arith.constant 0 : index
    %c144 = arith.constant 144 : index
    %c0_110 = arith.constant 0 : index
    %144 = vector.load %arg6[%c0_109, %c144, %c0_110] : memref<1x256x32xf32, #tpu.memory_space<vmem>>, vector<1x16x32xf32>
    %145 = vector.shape_cast %144 : vector<1x16x32xf32> to vector<16x32xf32>
    %146 = arith.addf %145, %143 : vector<16x32xf32>
    %c0_111 = arith.constant 0 : index
    %c144_112 = arith.constant 144 : index
    %c0_113 = arith.constant 0 : index
    %147 = vector.load %arg6[%c0_111, %c144_112, %c0_113] : memref<1x256x32xf32, #tpu.memory_space<vmem>>, vector<1x16x32xf32>
    %148 = vector.shape_cast %147 : vector<1x16x32xf32> to vector<16x32xf32>
    %149 = vector.shape_cast %146 : vector<16x32xf32> to vector<1x16x32xf32>
    tpu.vector_store %arg6[%c0_111, %c144_112, %c0_113], %149 {strides = array<i32>} : memref<1x256x32xf32, #tpu.memory_space<vmem>>, vector<1x16x32xf32>,
    %cst_114 = arith.constant 2.500000e-01 : f32
    %150 = vector.broadcast %cst_114 : f32 to vector<16x32xf32>
    %151 = arith.mulf %150, %30 : vector<16x32xf32>
    %cst_115 = arith.constant 7.500000e-01 : f32
    %152 = vector.broadcast %cst_115 : f32 to vector<16x32xf32>
    %153 = arith.mulf %152, %34 : vector<16x32xf32>
    %154 = arith.addf %151, %153 : vector<16x32xf32>
    %c0_116 = arith.constant 0 : index
    %c160 = arith.constant 160 : index
    %c0_117 = arith.constant 0 : index
    %155 = vector.load %arg6[%c0_116, %c160, %c0_117] : memref<1x256x32xf32, #tpu.memory_space<vmem>>, vector<1x16x32xf32>
    %156 = vector.shape_cast %155 : vector<1x16x32xf32> to vector<16x32xf32>
    %157 = arith.addf %156, %154 : vector<16x32xf32>
    %c0_118 = arith.constant 0 : index
    %c160_119 = arith.constant 160 : index
    %c0_120 = arith.constant 0 : index
    %158 = vector.load %arg6[%c0_118, %c160_119, %c0_120] : memref<1x256x32xf32, #tpu.memory_space<vmem>>, vector<1x16x32xf32>
    %159 = vector.shape_cast %158 : vector<1x16x32xf32> to vector<16x32xf32>
    %160 = vector.shape_cast %157 : vector<16x32xf32> to vector<1x16x32xf32>
    tpu.vector_store %arg6[%c0_118, %c160_119, %c0_120], %160 {strides = array<i32>} : memref<1x256x32xf32, #tpu.memory_space<vmem>>, vector<1x16x32xf32>,
    %cst_121 = arith.constant 7.500000e-01 : f32
    %161 = vector.broadcast %cst_121 : f32 to vector<16x32xf32>
    %162 = arith.mulf %161, %34 : vector<16x32xf32>
    %cst_122 = arith.constant 2.500000e-01 : f32
    %163 = vector.broadcast %cst_122 : f32 to vector<16x32xf32>
    %164 = arith.mulf %163, %38 : vector<16x32xf32>
    %165 = arith.addf %162, %164 : vector<16x32xf32>
    %c0_123 = arith.constant 0 : index
    %c176 = arith.constant 176 : index
    %c0_124 = arith.constant 0 : index
    %166 = vector.load %arg6[%c0_123, %c176, %c0_124] : memref<1x256x32xf32, #tpu.memory_space<vmem>>, vector<1x16x32xf32>
    %167 = vector.shape_cast %166 : vector<1x16x32xf32> to vector<16x32xf32>
    %168 = arith.addf %167, %165 : vector<16x32xf32>
    %c0_125 = arith.constant 0 : index
    %c176_126 = arith.constant 176 : index
    %c0_127 = arith.constant 0 : index
    %169 = vector.load %arg6[%c0_125, %c176_126, %c0_127] : memref<1x256x32xf32, #tpu.memory_space<vmem>>, vector<1x16x32xf32>
    %170 = vector.shape_cast %169 : vector<1x16x32xf32> to vector<16x32xf32>
    %171 = vector.shape_cast %168 : vector<16x32xf32> to vector<1x16x32xf32>
    tpu.vector_store %arg6[%c0_125, %c176_126, %c0_127], %171 {strides = array<i32>} : memref<1x256x32xf32, #tpu.memory_space<vmem>>, vector<1x16x32xf32>,
    %cst_128 = arith.constant 2.500000e-01 : f32
    %172 = vector.broadcast %cst_128 : f32 to vector<16x32xf32>
    %173 = arith.mulf %172, %34 : vector<16x32xf32>
    %cst_129 = arith.constant 7.500000e-01 : f32
    %174 = vector.broadcast %cst_129 : f32 to vector<16x32xf32>
    %175 = arith.mulf %174, %38 : vector<16x32xf32>
    %176 = arith.addf %173, %175 : vector<16x32xf32>
    %c0_130 = arith.constant 0 : index
    %c192 = arith.constant 192 : index
    %c0_131 = arith.constant 0 : index
    %177 = vector.load %arg6[%c0_130, %c192, %c0_131] : memref<1x256x32xf32, #tpu.memory_space<vmem>>, vector<1x16x32xf32>
    %178 = vector.shape_cast %177 : vector<1x16x32xf32> to vector<16x32xf32>
    %179 = arith.addf %178, %176 : vector<16x32xf32>
    %c0_132 = arith.constant 0 : index
    %c192_133 = arith.constant 192 : index
    %c0_134 = arith.constant 0 : index
    %180 = vector.load %arg6[%c0_132, %c192_133, %c0_134] : memref<1x256x32xf32, #tpu.memory_space<vmem>>, vector<1x16x32xf32>
    %181 = vector.shape_cast %180 : vector<1x16x32xf32> to vector<16x32xf32>
    %182 = vector.shape_cast %179 : vector<16x32xf32> to vector<1x16x32xf32>
    tpu.vector_store %arg6[%c0_132, %c192_133, %c0_134], %182 {strides = array<i32>} : memref<1x256x32xf32, #tpu.memory_space<vmem>>, vector<1x16x32xf32>,
    %cst_135 = arith.constant 7.500000e-01 : f32
    %183 = vector.broadcast %cst_135 : f32 to vector<16x32xf32>
    %184 = arith.mulf %183, %38 : vector<16x32xf32>
    %cst_136 = arith.constant 2.500000e-01 : f32
    %185 = vector.broadcast %cst_136 : f32 to vector<16x32xf32>
    %186 = arith.mulf %185, %42 : vector<16x32xf32>
    %187 = arith.addf %184, %186 : vector<16x32xf32>
    %c0_137 = arith.constant 0 : index
    %c208 = arith.constant 208 : index
    %c0_138 = arith.constant 0 : index
    %188 = vector.load %arg6[%c0_137, %c208, %c0_138] : memref<1x256x32xf32, #tpu.memory_space<vmem>>, vector<1x16x32xf32>
    %189 = vector.shape_cast %188 : vector<1x16x32xf32> to vector<16x32xf32>
    %190 = arith.addf %189, %187 : vector<16x32xf32>
    %c0_139 = arith.constant 0 : index
    %c208_140 = arith.constant 208 : index
    %c0_141 = arith.constant 0 : index
    %191 = vector.load %arg6[%c0_139, %c208_140, %c0_141] : memref<1x256x32xf32, #tpu.memory_space<vmem>>, vector<1x16x32xf32>
    %192 = vector.shape_cast %191 : vector<1x16x32xf32> to vector<16x32xf32>
    %193 = vector.shape_cast %190 : vector<16x32xf32> to vector<1x16x32xf32>
    tpu.vector_store %arg6[%c0_139, %c208_140, %c0_141], %193 {strides = array<i32>} : memref<1x256x32xf32, #tpu.memory_space<vmem>>, vector<1x16x32xf32>,
    %cst_142 = arith.constant 2.500000e-01 : f32
    %194 = vector.broadcast %cst_142 : f32 to vector<16x32xf32>
    %195 = arith.mulf %194, %38 : vector<16x32xf32>
    %cst_143 = arith.constant 7.500000e-01 : f32
    %196 = vector.broadcast %cst_143 : f32 to vector<16x32xf32>
    %197 = arith.mulf %196, %42 : vector<16x32xf32>
    %198 = arith.addf %195, %197 : vector<16x32xf32>
    %c0_144 = arith.constant 0 : index
    %c224 = arith.constant 224 : index
    %c0_145 = arith.constant 0 : index
    %199 = vector.load %arg6[%c0_144, %c224, %c0_145] : memref<1x256x32xf32, #tpu.memory_space<vmem>>, vector<1x16x32xf32>
    %200 = vector.shape_cast %199 : vector<1x16x32xf32> to vector<16x32xf32>
    %201 = arith.addf %200, %198 : vector<16x32xf32>
    %c0_146 = arith.constant 0 : index
    %c224_147 = arith.constant 224 : index
    %c0_148 = arith.constant 0 : index
    %202 = vector.load %arg6[%c0_146, %c224_147, %c0_148] : memref<1x256x32xf32, #tpu.memory_space<vmem>>, vector<1x16x32xf32>
    %203 = vector.shape_cast %202 : vector<1x16x32xf32> to vector<16x32xf32>
    %204 = vector.shape_cast %201 : vector<16x32xf32> to vector<1x16x32xf32>
    tpu.vector_store %arg6[%c0_146, %c224_147, %c0_148], %204 {strides = array<i32>} : memref<1x256x32xf32, #tpu.memory_space<vmem>>, vector<1x16x32xf32>,
    %cst_149 = arith.constant 1.000000e+00 : f32
    %205 = vector.broadcast %cst_149 : f32 to vector<16x32xf32>
    %206 = arith.mulf %205, %42 : vector<16x32xf32>
    %c0_150 = arith.constant 0 : index
    %c240 = arith.constant 240 : index
    %c0_151 = arith.constant 0 : index
    %207 = vector.load %arg6[%c0_150, %c240, %c0_151] : memref<1x256x32xf32, #tpu.memory_space<vmem>>, vector<1x16x32xf32>
    %208 = vector.shape_cast %207 : vector<1x16x32xf32> to vector<16x32xf32>
    %209 = arith.addf %208, %206 : vector<16x32xf32>
    %c0_152 = arith.constant 0 : index
    %c240_153 = arith.constant 240 : index
    %c0_154 = arith.constant 0 : index
    %210 = vector.load %arg6[%c0_152, %c240_153, %c0_154] : memref<1x256x32xf32, #tpu.memory_space<vmem>>, vector<1x16x32xf32>
    %211 = vector.shape_cast %210 : vector<1x16x32xf32> to vector<16x32xf32>
    %212 = vector.shape_cast %209 : vector<16x32xf32> to vector<1x16x32xf32>
    tpu.vector_store %arg6[%c0_152, %c240_153, %c0_154], %212 {strides = array<i32>} : memref<1x256x32xf32, #tpu.memory_space<vmem>>, vector<1x16x32xf32>,
    return
  }
  func.func @transform_0(%arg0: i32) -> (i32, i32, i32, i32) {
    %c0_i32 = arith.constant 0 : i32
    %c0_i32_0 = arith.constant 0 : i32
    %c0_i32_1 = arith.constant 0 : i32
    %c0_i32_2 = arith.constant 0 : i32
    return %arg0, %c0_i32, %c0_i32_0, %c0_i32_1 : i32, i32, i32, i32
  }
  func.func @transform_1(%arg0: i32) -> (i32, i32) {
    %c0_i32 = arith.constant 0 : i32
    %c0_i32_0 = arith.constant 0 : i32
    %c0_i32_1 = arith.constant 0 : i32
    return %c0_i32, %c0_i32_0 : i32, i32
  }
  func.func @transform_2(%arg0: i32) -> (i32, i32, i32) {
    %c0_i32 = arith.constant 0 : i32
    %c0_i32_0 = arith.constant 0 : i32
    %c0_i32_1 = arith.constant 0 : i32
    return %arg0, %c0_i32, %c0_i32_0 : i32, i32, i32
  }
  func.func @transform_3(%arg0: i32) -> (i32, i32) {
    %c0_i32 = arith.constant 0 : i32
    %c0_i32_0 = arith.constant 0 : i32
    %c0_i32_1 = arith.constant 0 : i32
    return %c0_i32, %c0_i32_0 : i32, i32
  }
  func.func @transform_4(%arg0: i32) -> (i32, i32) {
    %c0_i32 = arith.constant 0 : i32
    %c0_i32_0 = arith.constant 0 : i32
    %c0_i32_1 = arith.constant 0 : i32
    return %c0_i32, %c0_i32_0 : i32, i32
  }
  func.func @transform_5(%arg0: i32) -> (i32, i32, i32) {
    %c0_i32 = arith.constant 0 : i32
    %c0_i32_0 = arith.constant 0 : i32
    %c0_i32_1 = arith.constant 0 : i32
    return %arg0, %c0_i32, %c0_i32_0 : i32, i32, i32
  }
}

module attributes {stable_mosaic.version = 11 : i64} {
  func.func @_conv3x3_kernel(%arg0: i32, %arg1: memref<1x342x32xbf16, #tpu.memory_space<vmem>>, %arg2: memref<9x32x32xbf16, #tpu.memory_space<vmem>>, %arg3: memref<1x32xf32, #tpu.memory_space<vmem>>, %arg4: memref<1x288x32xf32, #tpu.memory_space<vmem>>) attributes {dimension_semantics = [#tpu.dimension_semantics<parallel>], iteration_bounds = array<i64: 2>, scalar_prefetch = 0 : i64, scratch_operands = 0 : i64, tpu.core_type = #tpu.core_type<tc>, window_params = [{transform_indices = @transform_0, window_bounds = array<i64: 1, 342, 32>}, {pipeline_mode = #tpu.pipeline_mode<synchronous>, transform_indices = @transform_1, window_bounds = array<i64: 9, 32, 32>}, {pipeline_mode = #tpu.pipeline_mode<synchronous>, transform_indices = @transform_2, window_bounds = array<i64: 1, 32>}, {transform_indices = @transform_3, window_bounds = array<i64: 1, 288, 32>}]} {
    %c0 = arith.constant 0 : index
    %c0_0 = arith.constant 0 : index
    %c0_1 = arith.constant 0 : index
    %0 = vector.load %arg1[%c0, %c0_0, %c0_1] : memref<1x342x32xbf16, #tpu.memory_space<vmem>>, vector<1x288x32xbf16>
    %1 = vector.shape_cast %0 : vector<1x288x32xbf16> to vector<288x32xbf16>
    %c0_2 = arith.constant 0 : index
    %c0_3 = arith.constant 0 : index
    %c0_4 = arith.constant 0 : index
    %2 = vector.load %arg2[%c0_2, %c0_3, %c0_4] : memref<9x32x32xbf16, #tpu.memory_space<vmem>>, vector<1x32x32xbf16>
    %3 = vector.shape_cast %2 : vector<1x32x32xbf16> to vector<32x32xbf16>
    %cst = arith.constant dense<0.000000e+00> : vector<288x32xf32>
    %4 = tpu.matmul %1, %3, %cst {dimension_numbers = #tpu.dot_dimension_numbers<[1], [0], [0], [1], [0, 0, 1, 1], [], []>} : vector<288x32xbf16>, vector<32x32xbf16>, vector<288x32xf32> -> vector<288x32xf32>
    %c0_5 = arith.constant 0 : index
    %c1 = arith.constant 1 : index
    %c0_6 = arith.constant 0 : index
    %5 = vector.load %arg1[%c0_5, %c1, %c0_6] : memref<1x342x32xbf16, #tpu.memory_space<vmem>>, vector<1x288x32xbf16>
    %6 = vector.shape_cast %5 : vector<1x288x32xbf16> to vector<288x32xbf16>
    %c1_7 = arith.constant 1 : index
    %c0_8 = arith.constant 0 : index
    %c0_9 = arith.constant 0 : index
    %7 = vector.load %arg2[%c1_7, %c0_8, %c0_9] : memref<9x32x32xbf16, #tpu.memory_space<vmem>>, vector<1x32x32xbf16>
    %8 = vector.shape_cast %7 : vector<1x32x32xbf16> to vector<32x32xbf16>
    %cst_10 = arith.constant dense<0.000000e+00> : vector<288x32xf32>
    %9 = tpu.matmul %6, %8, %cst_10 {dimension_numbers = #tpu.dot_dimension_numbers<[1], [0], [0], [1], [0, 0, 1, 1], [], []>} : vector<288x32xbf16>, vector<32x32xbf16>, vector<288x32xf32> -> vector<288x32xf32>
    %10 = arith.addf %4, %9 : vector<288x32xf32>
    %c0_11 = arith.constant 0 : index
    %c2 = arith.constant 2 : index
    %c0_12 = arith.constant 0 : index
    %11 = vector.load %arg1[%c0_11, %c2, %c0_12] : memref<1x342x32xbf16, #tpu.memory_space<vmem>>, vector<1x288x32xbf16>
    %12 = vector.shape_cast %11 : vector<1x288x32xbf16> to vector<288x32xbf16>
    %c2_13 = arith.constant 2 : index
    %c0_14 = arith.constant 0 : index
    %c0_15 = arith.constant 0 : index
    %13 = vector.load %arg2[%c2_13, %c0_14, %c0_15] : memref<9x32x32xbf16, #tpu.memory_space<vmem>>, vector<1x32x32xbf16>
    %14 = vector.shape_cast %13 : vector<1x32x32xbf16> to vector<32x32xbf16>
    %cst_16 = arith.constant dense<0.000000e+00> : vector<288x32xf32>
    %15 = tpu.matmul %12, %14, %cst_16 {dimension_numbers = #tpu.dot_dimension_numbers<[1], [0], [0], [1], [0, 0, 1, 1], [], []>} : vector<288x32xbf16>, vector<32x32xbf16>, vector<288x32xf32> -> vector<288x32xf32>
    %16 = arith.addf %10, %15 : vector<288x32xf32>
    %c0_17 = arith.constant 0 : index
    %c18 = arith.constant 18 : index
    %c0_18 = arith.constant 0 : index
    %17 = vector.load %arg1[%c0_17, %c18, %c0_18] : memref<1x342x32xbf16, #tpu.memory_space<vmem>>, vector<1x288x32xbf16>
    %18 = vector.shape_cast %17 : vector<1x288x32xbf16> to vector<288x32xbf16>
    %c3 = arith.constant 3 : index
    %c0_19 = arith.constant 0 : index
    %c0_20 = arith.constant 0 : index
    %19 = vector.load %arg2[%c3, %c0_19, %c0_20] : memref<9x32x32xbf16, #tpu.memory_space<vmem>>, vector<1x32x32xbf16>
    %20 = vector.shape_cast %19 : vector<1x32x32xbf16> to vector<32x32xbf16>
    %cst_21 = arith.constant dense<0.000000e+00> : vector<288x32xf32>
    %21 = tpu.matmul %18, %20, %cst_21 {dimension_numbers = #tpu.dot_dimension_numbers<[1], [0], [0], [1], [0, 0, 1, 1], [], []>} : vector<288x32xbf16>, vector<32x32xbf16>, vector<288x32xf32> -> vector<288x32xf32>
    %22 = arith.addf %16, %21 : vector<288x32xf32>
    %c0_22 = arith.constant 0 : index
    %c19 = arith.constant 19 : index
    %c0_23 = arith.constant 0 : index
    %23 = vector.load %arg1[%c0_22, %c19, %c0_23] : memref<1x342x32xbf16, #tpu.memory_space<vmem>>, vector<1x288x32xbf16>
    %24 = vector.shape_cast %23 : vector<1x288x32xbf16> to vector<288x32xbf16>
    %c4 = arith.constant 4 : index
    %c0_24 = arith.constant 0 : index
    %c0_25 = arith.constant 0 : index
    %25 = vector.load %arg2[%c4, %c0_24, %c0_25] : memref<9x32x32xbf16, #tpu.memory_space<vmem>>, vector<1x32x32xbf16>
    %26 = vector.shape_cast %25 : vector<1x32x32xbf16> to vector<32x32xbf16>
    %cst_26 = arith.constant dense<0.000000e+00> : vector<288x32xf32>
    %27 = tpu.matmul %24, %26, %cst_26 {dimension_numbers = #tpu.dot_dimension_numbers<[1], [0], [0], [1], [0, 0, 1, 1], [], []>} : vector<288x32xbf16>, vector<32x32xbf16>, vector<288x32xf32> -> vector<288x32xf32>
    %28 = arith.addf %22, %27 : vector<288x32xf32>
    %c0_27 = arith.constant 0 : index
    %c20 = arith.constant 20 : index
    %c0_28 = arith.constant 0 : index
    %29 = vector.load %arg1[%c0_27, %c20, %c0_28] : memref<1x342x32xbf16, #tpu.memory_space<vmem>>, vector<1x288x32xbf16>
    %30 = vector.shape_cast %29 : vector<1x288x32xbf16> to vector<288x32xbf16>
    %c5 = arith.constant 5 : index
    %c0_29 = arith.constant 0 : index
    %c0_30 = arith.constant 0 : index
    %31 = vector.load %arg2[%c5, %c0_29, %c0_30] : memref<9x32x32xbf16, #tpu.memory_space<vmem>>, vector<1x32x32xbf16>
    %32 = vector.shape_cast %31 : vector<1x32x32xbf16> to vector<32x32xbf16>
    %cst_31 = arith.constant dense<0.000000e+00> : vector<288x32xf32>
    %33 = tpu.matmul %30, %32, %cst_31 {dimension_numbers = #tpu.dot_dimension_numbers<[1], [0], [0], [1], [0, 0, 1, 1], [], []>} : vector<288x32xbf16>, vector<32x32xbf16>, vector<288x32xf32> -> vector<288x32xf32>
    %34 = arith.addf %28, %33 : vector<288x32xf32>
    %c0_32 = arith.constant 0 : index
    %c36 = arith.constant 36 : index
    %c0_33 = arith.constant 0 : index
    %35 = vector.load %arg1[%c0_32, %c36, %c0_33] : memref<1x342x32xbf16, #tpu.memory_space<vmem>>, vector<1x288x32xbf16>
    %36 = vector.shape_cast %35 : vector<1x288x32xbf16> to vector<288x32xbf16>
    %c6 = arith.constant 6 : index
    %c0_34 = arith.constant 0 : index
    %c0_35 = arith.constant 0 : index
    %37 = vector.load %arg2[%c6, %c0_34, %c0_35] : memref<9x32x32xbf16, #tpu.memory_space<vmem>>, vector<1x32x32xbf16>
    %38 = vector.shape_cast %37 : vector<1x32x32xbf16> to vector<32x32xbf16>
    %cst_36 = arith.constant dense<0.000000e+00> : vector<288x32xf32>
    %39 = tpu.matmul %36, %38, %cst_36 {dimension_numbers = #tpu.dot_dimension_numbers<[1], [0], [0], [1], [0, 0, 1, 1], [], []>} : vector<288x32xbf16>, vector<32x32xbf16>, vector<288x32xf32> -> vector<288x32xf32>
    %40 = arith.addf %34, %39 : vector<288x32xf32>
    %c0_37 = arith.constant 0 : index
    %c37 = arith.constant 37 : index
    %c0_38 = arith.constant 0 : index
    %41 = vector.load %arg1[%c0_37, %c37, %c0_38] : memref<1x342x32xbf16, #tpu.memory_space<vmem>>, vector<1x288x32xbf16>
    %42 = vector.shape_cast %41 : vector<1x288x32xbf16> to vector<288x32xbf16>
    %c7 = arith.constant 7 : index
    %c0_39 = arith.constant 0 : index
    %c0_40 = arith.constant 0 : index
    %43 = vector.load %arg2[%c7, %c0_39, %c0_40] : memref<9x32x32xbf16, #tpu.memory_space<vmem>>, vector<1x32x32xbf16>
    %44 = vector.shape_cast %43 : vector<1x32x32xbf16> to vector<32x32xbf16>
    %cst_41 = arith.constant dense<0.000000e+00> : vector<288x32xf32>
    %45 = tpu.matmul %42, %44, %cst_41 {dimension_numbers = #tpu.dot_dimension_numbers<[1], [0], [0], [1], [0, 0, 1, 1], [], []>} : vector<288x32xbf16>, vector<32x32xbf16>, vector<288x32xf32> -> vector<288x32xf32>
    %46 = arith.addf %40, %45 : vector<288x32xf32>
    %c0_42 = arith.constant 0 : index
    %c38 = arith.constant 38 : index
    %c0_43 = arith.constant 0 : index
    %47 = vector.load %arg1[%c0_42, %c38, %c0_43] : memref<1x342x32xbf16, #tpu.memory_space<vmem>>, vector<1x288x32xbf16>
    %48 = vector.shape_cast %47 : vector<1x288x32xbf16> to vector<288x32xbf16>
    %c8 = arith.constant 8 : index
    %c0_44 = arith.constant 0 : index
    %c0_45 = arith.constant 0 : index
    %49 = vector.load %arg2[%c8, %c0_44, %c0_45] : memref<9x32x32xbf16, #tpu.memory_space<vmem>>, vector<1x32x32xbf16>
    %50 = vector.shape_cast %49 : vector<1x32x32xbf16> to vector<32x32xbf16>
    %cst_46 = arith.constant dense<0.000000e+00> : vector<288x32xf32>
    %51 = tpu.matmul %48, %50, %cst_46 {dimension_numbers = #tpu.dot_dimension_numbers<[1], [0], [0], [1], [0, 0, 1, 1], [], []>} : vector<288x32xbf16>, vector<32x32xbf16>, vector<288x32xf32> -> vector<288x32xf32>
    %52 = arith.addf %46, %51 : vector<288x32xf32>
    %c0_47 = arith.constant 0 : index
    %c0_48 = arith.constant 0 : index
    %53 = vector.load %arg3[%c0_47, %c0_48] : memref<1x32xf32, #tpu.memory_space<vmem>>, vector<1x32xf32>
    %54 = vector.broadcast %53 : vector<1x32xf32> to vector<288x32xf32>
    %55 = arith.addf %52, %54 : vector<288x32xf32>
    %c0_49 = arith.constant 0 : index
    %c0_50 = arith.constant 0 : index
    %c0_51 = arith.constant 0 : index
    %56 = vector.load %arg4[%c0_49, %c0_50, %c0_51] : memref<1x288x32xf32, #tpu.memory_space<vmem>>, vector<1x288x32xf32>
    %57 = vector.shape_cast %56 : vector<1x288x32xf32> to vector<288x32xf32>
    %58 = vector.shape_cast %55 : vector<288x32xf32> to vector<1x288x32xf32>
    tpu.vector_store %arg4[%c0_49, %c0_50, %c0_51], %58 {strides = array<i32>} : memref<1x288x32xf32, #tpu.memory_space<vmem>>, vector<1x288x32xf32>,
    return
  }
  func.func @transform_0(%arg0: i32) -> (i32, i32, i32) {
    %c0_i32 = arith.constant 0 : i32
    %c0_i32_0 = arith.constant 0 : i32
    %c0_i32_1 = arith.constant 0 : i32
    return %arg0, %c0_i32, %c0_i32_0 : i32, i32, i32
  }
  func.func @transform_1(%arg0: i32) -> (i32, i32, i32) {
    %c0_i32 = arith.constant 0 : i32
    %c0_i32_0 = arith.constant 0 : i32
    %c0_i32_1 = arith.constant 0 : i32
    %c0_i32_2 = arith.constant 0 : i32
    return %c0_i32, %c0_i32_0, %c0_i32_1 : i32, i32, i32
  }
  func.func @transform_2(%arg0: i32) -> (i32, i32) {
    %c0_i32 = arith.constant 0 : i32
    %c0_i32_0 = arith.constant 0 : i32
    %c0_i32_1 = arith.constant 0 : i32
    return %c0_i32, %c0_i32_0 : i32, i32
  }
  func.func @transform_3(%arg0: i32) -> (i32, i32, i32) {
    %c0_i32 = arith.constant 0 : i32
    %c0_i32_0 = arith.constant 0 : i32
    %c0_i32_1 = arith.constant 0 : i32
    return %arg0, %c0_i32, %c0_i32_0 : i32, i32, i32
  }
}

</mosaic_0001>

<llo_original>
// kernel: fpn_forward_pallas.8
$region0: #{fpn_forward_pallas.8}
  #allocation0 [shape = 'u32[]', space=smem, size = 0x4, offset = 0x4, fixed_abs, tag = 'smem constant byte address 0x4 - core index']
  #allocation1 [shape = 'u32[72,128]{1,0:T(1,128)}', space=vmem, size = 0x9000, scoped, tag = 'internal scratch']
  %s0 = inlined_call_operand.vmem [shape: f32[2,2,2,32], index: 0, kind: input, shape index: {}]
  %s1 = inlined_call_operand.vmem [shape: bf16[4,2], index: 1, kind: input, shape index: {}]
  %s2 = inlined_call_operand.vmem [shape: bf16[2,16,128], index: 2, kind: input, shape index: {}]
  %s3 = inlined_call_operand.vmem [shape: bf16[128,32], index: 3, kind: input, shape index: {}]
  %s4 = inlined_call_operand.vmem [shape: f32[1,32], index: 4, kind: input, shape index: {}]
  %s5 = inlined_call_operand.vmem [shape: f32[2,16,32], index: 5, kind: output, shape index: {}]
  %s6 = sld [smem:[#allocation0]]
  $region53: #{fpn_forward_pallas.8} parent=0
    _
  %s8 = ssub.s32 1, %s6
  %s9 = scalar_select 0, %s8, %s6
  loop: start=0, step=1, limit=4
  $region2: #{fpn_forward_pallas.8} parent=0 // loop_pre_header
    _
  $region3: #{fpn_forward_pallas.8} parent=0 // loop_header
    %s11 = sphi 0, %s15
    %p12 = scmp.ge.s32.totalorder %s11, 4
    %s21 = sphi 0, %s23
    %s24 = sphi 0, %s21
    %s25 = sphi 0, %s24
    %s41 = sphi 0, %s25
    %s45 = sphi 0, %s45
    %s47 = sphi 0, %s45
    %s48 = sphi 0, %s47
    %s62 = sphi 0, %s48
    %s68 = sphi 0, %s70
    %s71 = sphi 0, %s68
    %s72 = sphi 0, %s71
    %s88 = sphi 0, %s72
    %s92 = sphi 0, %s92
    %s94 = sphi 0, %s92
    %s95 = sphi 0, %s94
    %s109 = sphi 0, %s95
    %s113 = sphi 0, %s113
    %s115 = sphi 0, %s113
    %s116 = sphi 0, %s115
    %s130 = sphi 0, %s116
    %s136 = sphi 0, %s138
    %s139 = sphi 0, %s136
    %s140 = sphi 0, %s139
    %s156 = sphi 0, %s140
  $region4: #{fpn_forward_pallas.8} parent=0 // loop_header_branch
    %14 = sbr.rel (%p12) target = $region8
  $region5: #{fpn_forward_pallas.8} parent=0 // loop_body
    %s16 = ssub.s32 %s11, 1
    %s17 = ssub.s32 %s11, 2
    %s18 = sadd.s32 %s11, 1
    %s19 = ssub.s32 %s11, %s18
    %p20 = scmp.eq.s32.totalorder %s19, 0
    %s22 = sadd.s32 %s21, 1
    %s23 = scalar_select %p20, %s21, %s22
    %p26 = pneg %p20
    %p27 = scmp.eq.s32.totalorder %s11, 1
    %p28 = por %p26, %p27
    %p29 = scmp.ne.s32.totalorder %s21, %s24
    %p30 = scmp.eq.s32.totalorder %s11, 0
    %p31 = por %p29, %p30
    %p32 = scmp.ne.s32.totalorder %s21, %s24
    %p33 = scmp.eq.s32.totalorder %s16, 1
    %p34 = por %p32, %p33
    %p35 = scmp.ne.s32.totalorder %s24, %s25
    %p36 = scmp.eq.s32.totalorder %s16, 0
    %p37 = por %p35, %p36
    %p38 = scmp.ne.s32.totalorder %s24, %s25
    %p39 = scmp.eq.s32.totalorder %s17, 1
    %p40 = por %p38, %p39
    %p42 = scmp.ne.s32.totalorder %s25, %s41
    %p43 = scmp.eq.s32.totalorder %s17, 0
    %p44 = por %p42, %p43
    %s46 = sadd.s32 %s45, 1
    %p49 = scmp.eq.s32.totalorder %s11, 1
    %p50 = scmp.ne.s32.totalorder %s45, %s47
    %p51 = scmp.eq.s32.totalorder %s11, 0
    %p52 = por %p50, %p51
    %p53 = scmp.ne.s32.totalorder %s45, %s47
    %p54 = scmp.eq.s32.totalorder %s16, 1
    %p55 = por %p53, %p54
    %p56 = scmp.ne.s32.totalorder %s47, %s48
    %p57 = scmp.eq.s32.totalorder %s16, 0
    %p58 = por %p56, %p57
    %p59 = scmp.ne.s32.totalorder %s47, %s48
    %p60 = scmp.eq.s32.totalorder %s17, 1
    %p61 = por %p59, %p60
    %p63 = scmp.ne.s32.totalorder %s48, %s62
    %p64 = scmp.eq.s32.totalorder %s17, 0
    %p65 = por %p63, %p64
    %s66 = ssub.s32 %s11, %s18
    %p67 = scmp.eq.s32.totalorder %s66, 0
    %s69 = sadd.s32 %s68, 1
    %s70 = scalar_select %p67, %s68, %s69
    %p73 = pneg %p67
    %p74 = scmp.eq.s32.totalorder %s11, 1
    %p75 = por %p73, %p74
    %p76 = scmp.ne.s32.totalorder %s68, %s71
    %p77 = scmp.eq.s32.totalorder %s11, 0
    %p78 = por %p76, %p77
    %p79 = scmp.ne.s32.totalorder %s68, %s71
    %p80 = scmp.eq.s32.totalorder %s16, 1
    %p81 = por %p79, %p80
    %p82 = scmp.ne.s32.totalorder %s71, %s72
    %p83 = scmp.eq.s32.totalorder %s16, 0
    %p84 = por %p82, %p83
    %p85 = scmp.ne.s32.totalorder %s71, %s72
    %p86 = scmp.eq.s32.totalorder %s17, 1
    %p87 = por %p85, %p86
    %p89 = scmp.ne.s32.totalorder %s72, %s88
    %p90 = scmp.eq.s32.totalorder %s17, 0
    %p91 = por %p89, %p90
    %s93 = sadd.s32 %s92, 1
    %p96 = scmp.eq.s32.totalorder %s11, 1
    %p97 = scmp.ne.s32.totalorder %s92, %s94
    %p98 = scmp.eq.s32.totalorder %s11, 0
    %p99 = por %p97, %p98
    %p100 = scmp.ne.s32.totalorder %s92, %s94
    %p101 = scmp.eq.s32.totalorder %s16, 1
    %p102 = por %p100, %p101
    %p103 = scmp.ne.s32.totalorder %s94, %s95
    %p104 = scmp.eq.s32.totalorder %s16, 0
    %p105 = por %p103, %p104
    %p106 = scmp.ne.s32.totalorder %s94, %s95
    %p107 = scmp.eq.s32.totalorder %s17, 1
    %p108 = por %p106, %p107
    %p110 = scmp.ne.s32.totalorder %s95, %s109
    %p111 = scmp.eq.s32.totalorder %s17, 0
    %p112 = por %p110, %p111
    %s114 = sadd.s32 %s113, 1
    %p117 = scmp.eq.s32.totalorder %s11, 1
    %p118 = scmp.ne.s32.totalorder %s113, %s115
    %p119 = scmp.eq.s32.totalorder %s11, 0
    %p120 = por %p118, %p119
    %p121 = scmp.ne.s32.totalorder %s113, %s115
    %p122 = scmp.eq.s32.totalorder %s16, 1
    %p123 = por %p121, %p122
    %p124 = scmp.ne.s32.totalorder %s115, %s116
    %p125 = scmp.eq.s32.totalorder %s16, 0
    %p126 = por %p124, %p125
    %p127 = scmp.ne.s32.totalorder %s115, %s116
    %p128 = scmp.eq.s32.totalorder %s17, 1
    %p129 = por %p127, %p128
    %p131 = scmp.ne.s32.totalorder %s116, %s130
    %p132 = scmp.eq.s32.totalorder %s17, 0
    %p133 = por %p131, %p132
    %s134 = ssub.s32 %s11, %s18
    %p135 = scmp.eq.s32.totalorder %s134, 0
    %s137 = sadd.s32 %s136, 1
    %s138 = scalar_select %p135, %s136, %s137
    %p141 = pneg %p135
    %p142 = scmp.eq.s32.totalorder %s11, 1
    %p143 = por %p141, %p142
    %p144 = scmp.ne.s32.totalorder %s136, %s139
    %p145 = scmp.eq.s32.totalorder %s11, 0
    %p146 = por %p144, %p145
    %p147 = scmp.ne.s32.totalorder %s136, %s139
    %p148 = scmp.eq.s32.totalorder %s16, 1
    %p149 = por %p147, %p148
    %p150 = scmp.ne.s32.totalorder %s139, %s140
    %p151 = scmp.eq.s32.totalorder %s16, 0
    %p152 = por %p150, %p151
    %p153 = scmp.ne.s32.totalorder %s139, %s140
    %p154 = scmp.eq.s32.totalorder %s17, 1
    %p155 = por %p153, %p154
    %p157 = scmp.ne.s32.totalorder %s140, %s156
    %p158 = scmp.eq.s32.totalorder %s17, 0
    %p159 = por %p157, %p158
    %p160 = scmp.le.s32.totalorder 1, %s11
    %p161 = scmp.lt.s32.totalorder %s11, 3
    %p162 = pnand %p160, %p161
    %p163 = pneg %p162
    // Predicated region
    $region9: #{fpn_forward_pallas.8} parent=5 // pred_check
      _
    $region10: #{fpn_forward_pallas.8} parent=5 // pred_check_branch
      %165 = sbr.rel (%p162) target = $region12
    $region11: #{fpn_forward_pallas.8} parent=5 // pred_region
      %s166 = ssub.s32 %s11, 1
      // Predicated region
      $region13: #{fpn_forward_pallas.8} parent=11 // pred_check
        %p167 = pneg %p58
      $region14: #{fpn_forward_pallas.8} parent=11 // pred_check_branch
        %169 = sbr.rel (%p167) target = $region16
      $region15: #{fpn_forward_pallas.8} parent=11 // pred_region
        _
      $region16: #{fpn_forward_pallas.8} parent=11 // pred_fallthru
        _
      // Predicated region
      $region17: #{fpn_forward_pallas.8} parent=11 // pred_check
        %p170 = pneg %p105
      $region18: #{fpn_forward_pallas.8} parent=11 // pred_check_branch
        %172 = sbr.rel (%p170) target = $region20
      $region19: #{fpn_forward_pallas.8} parent=11 // pred_region
        _
      $region20: #{fpn_forward_pallas.8} parent=11 // pred_fallthru
        _
      // Predicated region
      $region21: #{fpn_forward_pallas.8} parent=11 // pred_check
        %p173 = pneg %p126
      $region22: #{fpn_forward_pallas.8} parent=11 // pred_check_branch
        %175 = sbr.rel (%p173) target = $region24
      $region23: #{fpn_forward_pallas.8} parent=11 // pred_region
        _
      $region24: #{fpn_forward_pallas.8} parent=11 // pred_fallthru
        _
    $region12: #{fpn_forward_pallas.8} parent=5 // pred_fallthru
      _
    %p176 = scmp.lt.s32.totalorder %s11, 2
    // Predicated region
    $region25: #{fpn_forward_pallas.8} parent=5 // pred_check
      %p177 = pneg %p176
    $region26: #{fpn_forward_pallas.8} parent=5 // pred_check_branch
      %179 = sbr.rel (%p177) target = $region28
    $region27: #{fpn_forward_pallas.8} parent=5 // pred_region
      // Predicated region
      $region29: #{fpn_forward_pallas.8} parent=27 // pred_check
        %p180 = pneg %p31
      $region30: #{fpn_forward_pallas.8} parent=27 // pred_check_branch
        %182 = sbr.rel (%p180) target = $region32
      $region31: #{fpn_forward_pallas.8} parent=27 // pred_region
        %p183 = scmp.lt.s32.totalorder %s11, 1
        %s184 = scalar_select %p183, %s11, 1
        %s185 = smul.addr %s184, 2
        %s186 = smul.addr %s185, 2
        %s187 = scalar_lea.vmem %s0, %s186
      $region32: #{fpn_forward_pallas.8} parent=27 // pred_fallthru
        _
      // Predicated region
      $region33: #{fpn_forward_pallas.8} parent=27 // pred_check
        %p188 = pneg %p78
      $region34: #{fpn_forward_pallas.8} parent=27 // pred_check_branch
        %190 = sbr.rel (%p188) target = $region36
      $region35: #{fpn_forward_pallas.8} parent=27 // pred_region
        %p191 = scmp.lt.s32.totalorder %s11, 1
        %s192 = scalar_select %p191, %s11, 1
        %s193 = smul.addr %s192, 2
        %s194 = smul.addr %s193, 4
        %s195 = scalar_lea.vmem %s2, %s194
      $region36: #{fpn_forward_pallas.8} parent=27 // pred_fallthru
        _
    $region28: #{fpn_forward_pallas.8} parent=5 // pred_fallthru
      _
    %p196 = scmp.le.s32.totalorder 1, %s11
    %p197 = scmp.lt.s32.totalorder %s11, 3
    %p198 = pnand %p196, %p197
    %p199 = pneg %p198
    // Predicated region
    $region37: #{fpn_forward_pallas.8} parent=5 // pred_check
      _
    $region38: #{fpn_forward_pallas.8} parent=5 // pred_check_branch
      %201 = sbr.rel (%p198) target = $region40
    $region39: #{fpn_forward_pallas.8} parent=5 // pred_region
      %s202 = ssub.s32 %s11, 1
      %p203 = scmp.lt.s32.totalorder %s16, 1
      %s204 = scalar_select %p203, %s16, 1
      %s205 = smul.addr %s204, 2
      %s206 = smul.addr %s205, 2
      %s207 = scalar_lea.vmem %s0, %s206
      %p208 = pneg %p37
      %p209 = pneg %p34
      %p210 = pneg %p58
      %p211 = pneg %p55
      %p212 = scmp.lt.s32.totalorder %s16, 1
      %s213 = scalar_select %p212, %s16, 1
      %s214 = smul.addr %s213, 2
      %s215 = smul.addr %s214, 4
      %s216 = scalar_lea.vmem %s2, %s215
      %p217 = pneg %p84
      %p218 = pneg %p81
      %p219 = pneg %p105
      %p220 = pneg %p102
      %p221 = pneg %p126
      %p222 = pneg %p123
      %p223 = pneg %p152
      %p224 = pneg %p149
      %p225 = scmp.lt.s32.totalorder %s16, 1
      %s226 = scalar_select %p225, %s16, 1
      %s227 = smul.addr %s226, 2
      %s228 = smul.addr %s227, 8
      %s229 = scalar_lea.vmem %s5, %s228
      %p230 = scmp.lt.s32.totalorder %s16, 1
      %s231 = scalar_select %p230, %s16, 1
      %s232 = smul.addr %s231, 2
      %s233 = smul.addr %s232, 2
      %s234 = scalar_lea.vmem %s0, %s233
      %p235 = scmp.lt.s32.totalorder %s16, 1
      %s236 = scalar_select %p235, %s16, 1
      %s237 = smul.addr %s236, 2
      %s238 = smul.addr %s237, 4
      %s239 = scalar_lea.vmem %s2, %s238
      %p240 = scmp.lt.s32.totalorder %s16, 1
      %s241 = scalar_select %p240, %s16, 1
      %s242 = smul.addr %s241, 2
      %s243 = smul.addr %s242, 8
      %s244 = scalar_lea.vmem %s5, %s243
      %v246 = vld [vmem:[%s239] sm:$0xf]
      %v247 = vld [vmem:[%s239 + $0x4] sm:$0xf]
      %v248 = vld [vmem:[%s3] sm:$0xf]
      %v249 = vld [vmem:[%s3 + $0x4] sm:$0xf]
      %v250 = vld [vmem:[%s3 + $0x8] sm:$0xf]
      %v251 = vld [vmem:[%s3 + $0xc] sm:$0xf]
      %v252 = vld [vmem:[%s3 + $0x10] sm:$0xf]
      %v253 = vld [vmem:[%s3 + $0x14] sm:$0xf]
      %v254 = vld [vmem:[%s3 + $0x18] sm:$0xf]
      %v255 = vld [vmem:[%s3 + $0x1c] sm:$0xf]
      %v256 = vld [vmem:[%s3 + $0x20] sm:$0xf]
      %v257 = vld [vmem:[%s3 + $0x24] sm:$0xf]
      %v258 = vld [vmem:[%s3 + $0x28] sm:$0xf]
      %v259 = vld [vmem:[%s3 + $0x2c] sm:$0xf]
      %v260 = vld [vmem:[%s3 + $0x30] sm:$0xf]
      %v261 = vld [vmem:[%s3 + $0x34] sm:$0xf]
      %v262 = vld [vmem:[%s3 + $0x38] sm:$0xf]
      %v263 = vld [vmem:[%s3 + $0x3c] sm:$0xf]
      %v264 = vld [vmem:[%s4] sm:$0x1]
      %v266 = vperm.slane %v264, 0
      %v270 = vunpack.c.l.b16 %v246
      %v271 = vunpack.c.l.b16 %v247
      %v272 = vpack.c.b16 %v271, %v270
      %v290 = vunpack.c.l.b16 %v248
      %v291 = vunpack.c.l.b16 %v249
      %v292 = vunpack.c.l.b16 %v250
      %v293 = vunpack.c.l.b16 %v251
      %v294 = vunpack.c.l.b16 %v252
      %v295 = vunpack.c.l.b16 %v253
      %v296 = vunpack.c.l.b16 %v254
      %v297 = vunpack.c.l.b16 %v255
      %v298 = vunpack.c.l.b16 %v256
      %v299 = vunpack.c.l.b16 %v257
      %v300 = vunpack.c.l.b16 %v258
      %v301 = vunpack.c.l.b16 %v259
      %v302 = vunpack.c.l.b16 %v260
      %v303 = vunpack.c.l.b16 %v261
      %v304 = vunpack.c.l.b16 %v262
      %v305 = vunpack.c.l.b16 %v263
      %v306 = vpack.c.b16 %v291, %v290
      %v307 = vpack.c.b16 %v293, %v292
      %v308 = vpack.c.b16 %v295, %v294
      %v309 = vpack.c.b16 %v297, %v296
      %v310 = vpack.c.b16 %v299, %v298
      %v311 = vpack.c.b16 %v301, %v300
      %v312 = vpack.c.b16 %v303, %v302
      %v313 = vpack.c.b16 %v305, %v304
      %322 = vmatpush.bf16.msra.mxu0 %v313
      %323 = vmatpush.bf16.msra.mxu0 %v312
      %324 = vmatpush.bf16.msra.mxu0 %v311
      %325 = vmatpush.bf16.msra.mxu0 %v310
      %326 = vmatpush.bf16.msra.mxu0 %v309
      %327 = vmatpush.bf16.msra.mxu0 %v308
      %328 = vmatpush.bf16.msra.mxu0 %v307
      %329 = vmatpush.bf16.msra.mxu0 %v306
      %330 = vmatmul.bf16.gmra.mxu0 %v272
      %v331 = vpop.f32.mrf.mxu0
      %v332 = vadd.f32 %v266, %v331
      %v333 = vpop.f32.mrf.mxu0
      %v334 = vadd.f32 %v266, %v333
      %335 = vdwg.mxu0
      %vm336 = vcmask 261120
      %337 = vst.msk [vmem:[%s244] sm:$0xff] %vm336, %v332
      %338 = vst.msk [vmem:[%s244 + $0x8] sm:$0xff] %vm336, %v334
      %v339 = vld [vmem:[%s1] sm:$0x3]
      %v340 = vld [vmem:[%s234] sm:$0x3]
      %v341 = vpack.c.bf16 %v340, %v340
      %vm342 = vcmask 15360
      %v344 = vsel %vm342, %v339, 0
      %vm346 = vcmask 1040384
      %v348 = vsel %vm346, %v341, 0
      %350 = vmatpush.bf16.msra.mxu0 0
      %351 = vmatpush.bf16.msra.mxu0 0
      %352 = vmatpush.bf16.msra.mxu0 0
      %353 = vmatpush.bf16.msra.mxu0 0
      %354 = vmatpush.bf16.msra.mxu0 0
      %355 = vmatpush.bf16.msra.mxu0 0
      %356 = vmatpush.bf16.msra.mxu0 0
      %357 = vmatpush.bf16.msra.mxu0 %v348
      %358 = vmatmul.bf16.gmra.mxu0 %v344
      %v359 = vpop.f32.mrf.mxu0
      %v360 = vadd.f32 0.0, %v359
      %v361 = vpop.f32.mrf.mxu0
      %362 = vdwg.mxu0
      %s363 = scalar_lea.vmem %s234, 2
      %v364 = vld [vmem:[%s363] sm:$0x3]
      %v365 = vpack.c.bf16 %v364, %v364
      %v367 = vsel %vm346, %v365, 0
      %369 = vmatpush.bf16.msra.mxu0 0
      %370 = vmatpush.bf16.msra.mxu0 0
      %371 = vmatpush.bf16.msra.mxu0 0
      %372 = vmatpush.bf16.msra.mxu0 0
      %373 = vmatpush.bf16.msra.mxu0 0
      %374 = vmatpush.bf16.msra.mxu0 0
      %375 = vmatpush.bf16.msra.mxu0 0
      %376 = vmatpush.bf16.msra.mxu0 %v367
      %377 = vmatmul.bf16.gmra.mxu0 %v344
      %v378 = vpop.f32.mrf.mxu0
      %v379 = vadd.f32 0.0, %v378
      %v380 = vpop.f32.mrf.mxu0
      %381 = vdwg.mxu0
      %v382 = vld [vmem:[%s244] sm:$0xf]
      %v383 = vadd.f32 %v382, %v360
      %vm384 = vcmask 257024
      %385 = vst.msk [vmem:[%s244] sm:$0xf] %vm384, %v383
      %v386 = vmul.f32 %v360, 0.75
      %v387 = vmul.f32 %v379, 0.25
      %v388 = vadd.f32 %v386, %v387
      %v389 = vld [vmem:[%s244 + $0x4] sm:$0xf]
      %v390 = vadd.f32 %v389, %v388
      %391 = vst.msk [vmem:[%s244 + $0x4] sm:$0xf] %vm384, %v390
      %v392 = vmul.f32 %v360, 0.25
      %v393 = vmul.f32 %v379, 0.75
      %v394 = vadd.f32 %v392, %v393
      %v395 = vld [vmem:[%s244 + $0x8] sm:$0xf]
      %v396 = vadd.f32 %v395, %v394
      %397 = vst.msk [vmem:[%s244 + $0x8] sm:$0xf] %vm384, %v396
      %v398 = vld [vmem:[%s244 + $0xc] sm:$0xf]
      %v399 = vadd.f32 %v398, %v379
      %400 = vst.msk [vmem:[%s244 + $0xc] sm:$0xf] %vm384, %v399
      %p401 = scmp.lt.s32.totalorder %s16, 1
      %s402 = scalar_select %p401, %s16, 1
      %s403 = smul.addr %s402, 2
      %s404 = smul.addr %s403, 8
      %s405 = scalar_lea.vmem %s5, %s404
      // Predicated region
      $region41: #{fpn_forward_pallas.8} parent=39 // pred_check
        %p406 = pneg %p149
      $region42: #{fpn_forward_pallas.8} parent=39 // pred_check_branch
        %408 = sbr.rel (%p406) target = $region44
      $region43: #{fpn_forward_pallas.8} parent=39 // pred_region
        _
      $region44: #{fpn_forward_pallas.8} parent=39 // pred_fallthru
        _
    $region40: #{fpn_forward_pallas.8} parent=5 // pred_fallthru
      _
    %p409 = scmp.le.s32.totalorder 2, %s11
    // Predicated region
    $region45: #{fpn_forward_pallas.8} parent=5 // pred_check
      %p410 = pneg %p409
    $region46: #{fpn_forward_pallas.8} parent=5 // pred_check_branch
      %412 = sbr.rel (%p410) target = $region48
    $region47: #{fpn_forward_pallas.8} parent=5 // pred_region
      %s413 = ssub.s32 %s11, 2
      // Predicated region
      $region49: #{fpn_forward_pallas.8} parent=47 // pred_check
        %p414 = pneg %p155
      $region50: #{fpn_forward_pallas.8} parent=47 // pred_check_branch
        %416 = sbr.rel (%p414) target = $region52
      $region51: #{fpn_forward_pallas.8} parent=47 // pred_region
        %p417 = scmp.lt.s32.totalorder %s17, 1
        %s418 = scalar_select %p417, %s17, 1
        %s419 = smul.addr %s418, 2
        %s420 = smul.addr %s419, 8
        %s421 = scalar_lea.vmem %s5, %s420
      $region52: #{fpn_forward_pallas.8} parent=47 // pred_fallthru
        _
    $region48: #{fpn_forward_pallas.8} parent=5 // pred_fallthru
      _
  $region6: #{fpn_forward_pallas.8} parent=0 // loop_footer
    %s15 = sadd.s32 1, %s11
  $region7: #{fpn_forward_pallas.8} parent=0 // loop_footer_branch
    %10 = sbr.rel target = $region3
  $region8: #{fpn_forward_pallas.8} parent=0 // loop_exit
    _

// kernel: fpn_forward_pallas.7
$region0: #{fpn_forward_pallas.7}
  #allocation0 [shape = 'u32[]', space=smem, size = 0x4, offset = 0x4, fixed_abs, tag = 'smem constant byte address 0x4 - core index']
  #allocation1 [shape = 'u32[72,128]{1,0:T(1,128)}', space=vmem, size = 0x9000, scoped, tag = 'internal scratch']
  %s0 = inlined_call_operand.vmem [shape: bf16[8,256], index: 0, kind: input, shape index: {}]
  %s1 = inlined_call_operand.vmem [shape: bf16[256,32], index: 1, kind: input, shape index: {}]
  %s2 = inlined_call_operand.vmem [shape: f32[1,32], index: 2, kind: input, shape index: {}]
  %s3 = inlined_call_operand.vmem [shape: f32[8,32], index: 3, kind: output, shape index: {}]
  %s4 = sld [smem:[#allocation0]]
  $region22: #{fpn_forward_pallas.7} parent=0
    _
  %s6 = ssub.s32 1, %s4
  %s7 = scalar_select 0, %s6, %s4
  // Predicated region
  $region2: #{fpn_forward_pallas.7} parent=0 // pred_check
    _
  $region3: #{fpn_forward_pallas.7} parent=0 // pred_check_branch
    %9 = sbr.rel (0) target = $region5
  $region4: #{fpn_forward_pallas.7} parent=0 // pred_region
    _
  $region5: #{fpn_forward_pallas.7} parent=0 // pred_fallthru
    _
  // Predicated region
  $region6: #{fpn_forward_pallas.7} parent=0 // pred_check
    _
  $region7: #{fpn_forward_pallas.7} parent=0 // pred_check_branch
    %11 = sbr.rel (0) target = $region9
  $region8: #{fpn_forward_pallas.7} parent=0 // pred_region
    _
  $region9: #{fpn_forward_pallas.7} parent=0 // pred_fallthru
    _
  // Predicated region
  $region10: #{fpn_forward_pallas.7} parent=0 // pred_check
    _
  $region11: #{fpn_forward_pallas.7} parent=0 // pred_check_branch
    %13 = sbr.rel (0) target = $region13
  $region12: #{fpn_forward_pallas.7} parent=0 // pred_region
    _
  $region13: #{fpn_forward_pallas.7} parent=0 // pred_fallthru
    _
  %v14 = vld [vmem:[%s0] sm:$0xff]
  %v15 = vld [vmem:[%s1] sm:$0xf]
  %v16 = vld [vmem:[%s1 + $0x4] sm:$0xf]
  %v17 = vld [vmem:[%s1 + $0x8] sm:$0xf]
  %v18 = vld [vmem:[%s1 + $0xc] sm:$0xf]
  %v19 = vld [vmem:[%s1 + $0x10] sm:$0xf]
  %v20 = vld [vmem:[%s1 + $0x14] sm:$0xf]
  %v21 = vld [vmem:[%s1 + $0x18] sm:$0xf]
  %v22 = vld [vmem:[%s1 + $0x1c] sm:$0xf]
  %v23 = vld [vmem:[%s1 + $0x20] sm:$0xf]
  %v24 = vld [vmem:[%s1 + $0x24] sm:$0xf]
  %v25 = vld [vmem:[%s1 + $0x28] sm:$0xf]
  %v26 = vld [vmem:[%s1 + $0x2c] sm:$0xf]
  %v27 = vld [vmem:[%s1 + $0x30] sm:$0xf]
  %v28 = vld [vmem:[%s1 + $0x34] sm:$0xf]
  %v29 = vld [vmem:[%s1 + $0x38] sm:$0xf]
  %v30 = vld [vmem:[%s1 + $0x3c] sm:$0xf]
  %v31 = vld [vmem:[%s1 + $0x40] sm:$0xf]
  %v32 = vld [vmem:[%s1 + $0x44] sm:$0xf]
  %v33 = vld [vmem:[%s1 + $0x48] sm:$0xf]
  %v34 = vld [vmem:[%s1 + $0x4c] sm:$0xf]
  %v35 = vld [vmem:[%s1 + $0x50] sm:$0xf]
  %v36 = vld [vmem:[%s1 + $0x54] sm:$0xf]
  %v37 = vld [vmem:[%s1 + $0x58] sm:$0xf]
  %v38 = vld [vmem:[%s1 + $0x5c] sm:$0xf]
  %v39 = vld [vmem:[%s1 + $0x60] sm:$0xf]
  %v40 = vld [vmem:[%s1 + $0x64] sm:$0xf]
  %v41 = vld [vmem:[%s1 + $0x68] sm:$0xf]
  %v42 = vld [vmem:[%s1 + $0x6c] sm:$0xf]
  %v43 = vld [vmem:[%s1 + $0x70] sm:$0xf]
  %v44 = vld [vmem:[%s1 + $0x74] sm:$0xf]
  %v45 = vld [vmem:[%s1 + $0x78] sm:$0xf]
  %v46 = vld [vmem:[%s1 + $0x7c] sm:$0xf]
  %v47 = vld [vmem:[%s2] sm:$0x1]
  %v49 = vperm.slane %v47, 0
  %v52 = vunpack.c.l.b16 %v14
  %v53 = vunpack.c.h.b16 %v14
  %v54 = vpack.c.b16 %v52, %v52
  %v55 = vpack.c.b16 %v53, %v53
  %v90 = vunpack.c.l.b16 %v15
  %v91 = vunpack.c.l.b16 %v16
  %v92 = vunpack.c.l.b16 %v17
  %v93 = vunpack.c.l.b16 %v18
  %v94 = vunpack.c.l.b16 %v19
  %v95 = vunpack.c.l.b16 %v20
  %v96 = vunpack.c.l.b16 %v21
  %v97 = vunpack.c.l.b16 %v22
  %v98 = vunpack.c.l.b16 %v23
  %v99 = vunpack.c.l.b16 %v24
  %v100 = vunpack.c.l.b16 %v25
  %v101 = vunpack.c.l.b16 %v26
  %v102 = vunpack.c.l.b16 %v27
  %v103 = vunpack.c.l.b16 %v28
  %v104 = vunpack.c.l.b16 %v29
  %v105 = vunpack.c.l.b16 %v30
  %v106 = vunpack.c.l.b16 %v31
  %v107 = vunpack.c.l.b16 %v32
  %v108 = vunpack.c.l.b16 %v33
  %v109 = vunpack.c.l.b16 %v34
  %v110 = vunpack.c.l.b16 %v35
  %v111 = vunpack.c.l.b16 %v36
  %v112 = vunpack.c.l.b16 %v37
  %v113 = vunpack.c.l.b16 %v38
  %v114 = vunpack.c.l.b16 %v39
  %v115 = vunpack.c.l.b16 %v40
  %v116 = vunpack.c.l.b16 %v41
  %v117 = vunpack.c.l.b16 %v42
  %v118 = vunpack.c.l.b16 %v43
  %v119 = vunpack.c.l.b16 %v44
  %v120 = vunpack.c.l.b16 %v45
  %v121 = vunpack.c.l.b16 %v46
  %v122 = vpack.c.b16 %v91, %v90
  %v123 = vpack.c.b16 %v93, %v92
  %v124 = vpack.c.b16 %v95, %v94
  %v125 = vpack.c.b16 %v97, %v96
  %v126 = vpack.c.b16 %v99, %v98
  %v127 = vpack.c.b16 %v101, %v100
  %v128 = vpack.c.b16 %v103, %v102
  %v129 = vpack.c.b16 %v105, %v104
  %v130 = vpack.c.b16 %v107, %v106
  %v131 = vpack.c.b16 %v109, %v108
  %v132 = vpack.c.b16 %v111, %v110
  %v133 = vpack.c.b16 %v113, %v112
  %v134 = vpack.c.b16 %v115, %v114
  %v135 = vpack.c.b16 %v117, %v116
  %v136 = vpack.c.b16 %v119, %v118
  %v137 = vpack.c.b16 %v121, %v120
  %154 = vmatpush.bf16.msra.mxu0 %v129
  %155 = vmatpush.bf16.msra.mxu0 %v128
  %156 = vmatpush.bf16.msra.mxu0 %v127
  %157 = vmatpush.bf16.msra.mxu0 %v126
  %158 = vmatpush.bf16.msra.mxu0 %v125
  %159 = vmatpush.bf16.msra.mxu0 %v124
  %160 = vmatpush.bf16.msra.mxu0 %v123
  %161 = vmatpush.bf16.msra.mxu0 %v122
  %162 = vmatmul.bf16.gmra.mxu0 %v54
  %v163 = vpop.f32.mrf.mxu0
  %v164 = vadd.f32 %v49, %v163
  %v165 = vpop.f32.mrf.mxu0
  %166 = vdwg.mxu0
  %167 = vmatpush.bf16.msra.mxu0 %v137
  %168 = vmatpush.bf16.msra.mxu0 %v136
  %169 = vmatpush.bf16.msra.mxu0 %v135
  %170 = vmatpush.bf16.msra.mxu0 %v134
  %171 = vmatpush.bf16.msra.mxu0 %v133
  %172 = vmatpush.bf16.msra.mxu0 %v132
  %173 = vmatpush.bf16.msra.mxu0 %v131
  %174 = vmatpush.bf16.msra.mxu0 %v130
  %175 = vmatmul.bf16.gmra.mxu0 %v55
  %v176 = vpop.f32.mrf.mxu0
  %v177 = vadd.f32 %v164, %v176
  %v178 = vpop.f32.mrf.mxu0
  %179 = vdwg.mxu0
  %vm180 = vcmask 261120
  %181 = vst.msk [vmem:[%s3] sm:$0xff] %vm180, %v177
  // Predicated region
  $region14: #{fpn_forward_pallas.7} parent=0 // pred_check
    _
  $region15: #{fpn_forward_pallas.7} parent=0 // pred_check_branch
    %183 = sbr.rel (0) target = $region17
  $region16: #{fpn_forward_pallas.7} parent=0 // pred_region
    _
  $region17: #{fpn_forward_pallas.7} parent=0 // pred_fallthru
    _
  // Predicated region
  $region18: #{fpn_forward_pallas.7} parent=0 // pred_check
    _
  $region19: #{fpn_forward_pallas.7} parent=0 // pred_check_branch
    %185 = sbr.rel (0) target = $region21
  $region20: #{fpn_forward_pallas.7} parent=0 // pred_region
    _
  $region21: #{fpn_forward_pallas.7} parent=0 // pred_fallthru
    _

// kernel: fpn_forward_pallas.9
$region0: #{fpn_forward_pallas.9}
  #allocation0 [shape = 'u32[]', space=smem, size = 0x4, offset = 0x4, fixed_abs, tag = 'smem constant byte address 0x4 - core index']
  #allocation1 [shape = 'u32[72,128]{1,0:T(1,128)}', space=vmem, size = 0x9000, scoped, tag = 'internal scratch']
  %s0 = inlined_call_operand.vmem [shape: f32[2,4,4,32], index: 0, kind: input, shape index: {}]
  %s1 = inlined_call_operand.vmem [shape: bf16[8,4], index: 1, kind: input, shape index: {}]
  %s2 = inlined_call_operand.vmem [shape: bf16[2,64,64], index: 2, kind: input, shape index: {}]
  %s3 = inlined_call_operand.vmem [shape: bf16[64,32], index: 3, kind: input, shape index: {}]
  %s4 = inlined_call_operand.vmem [shape: f32[1,32], index: 4, kind: input, shape index: {}]
  %s5 = inlined_call_operand.vmem [shape: f32[2,64,32], index: 5, kind: output, shape index: {}]
  %s6 = sld [smem:[#allocation0]]
  $region53: #{fpn_forward_pallas.9} parent=0
    _
  %s8 = ssub.s32 1, %s6
  %s9 = scalar_select 0, %s8, %s6
  loop: start=0, step=1, limit=4
  $region2: #{fpn_forward_pallas.9} parent=0 // loop_pre_header
    _
  $region3: #{fpn_forward_pallas.9} parent=0 // loop_header
    %s11 = sphi 0, %s15
    %p12 = scmp.ge.s32.totalorder %s11, 4
    %s21 = sphi 0, %s23
    %s24 = sphi 0, %s21
    %s25 = sphi 0, %s24
    %s41 = sphi 0, %s25
    %s45 = sphi 0, %s45
    %s47 = sphi 0, %s45
    %s48 = sphi 0, %s47
    %s62 = sphi 0, %s48
    %s68 = sphi 0, %s70
    %s71 = sphi 0, %s68
    %s72 = sphi 0, %s71
    %s88 = sphi 0, %s72
    %s92 = sphi 0, %s92
    %s94 = sphi 0, %s92
    %s95 = sphi 0, %s94
    %s109 = sphi 0, %s95
    %s113 = sphi 0, %s113
    %s115 = sphi 0, %s113
    %s116 = sphi 0, %s115
    %s130 = sphi 0, %s116
    %s136 = sphi 0, %s138
    %s139 = sphi 0, %s136
    %s140 = sphi 0, %s139
    %s156 = sphi 0, %s140
  $region4: #{fpn_forward_pallas.9} parent=0 // loop_header_branch
    %14 = sbr.rel (%p12) target = $region8
  $region5: #{fpn_forward_pallas.9} parent=0 // loop_body
    %s16 = ssub.s32 %s11, 1
    %s17 = ssub.s32 %s11, 2
    %s18 = sadd.s32 %s11, 1
    %s19 = ssub.s32 %s11, %s18
    %p20 = scmp.eq.s32.totalorder %s19, 0
    %s22 = sadd.s32 %s21, 1
    %s23 = scalar_select %p20, %s21, %s22
    %p26 = pneg %p20
    %p27 = scmp.eq.s32.totalorder %s11, 1
    %p28 = por %p26, %p27
    %p29 = scmp.ne.s32.totalorder %s21, %s24
    %p30 = scmp.eq.s32.totalorder %s11, 0
    %p31 = por %p29, %p30
    %p32 = scmp.ne.s32.totalorder %s21, %s24
    %p33 = scmp.eq.s32.totalorder %s16, 1
    %p34 = por %p32, %p33
    %p35 = scmp.ne.s32.totalorder %s24, %s25
    %p36 = scmp.eq.s32.totalorder %s16, 0
    %p37 = por %p35, %p36
    %p38 = scmp.ne.s32.totalorder %s24, %s25
    %p39 = scmp.eq.s32.totalorder %s17, 1
    %p40 = por %p38, %p39
    %p42 = scmp.ne.s32.totalorder %s25, %s41
    %p43 = scmp.eq.s32.totalorder %s17, 0
    %p44 = por %p42, %p43
    %s46 = sadd.s32 %s45, 1
    %p49 = scmp.eq.s32.totalorder %s11, 1
    %p50 = scmp.ne.s32.totalorder %s45, %s47
    %p51 = scmp.eq.s32.totalorder %s11, 0
    %p52 = por %p50, %p51
    %p53 = scmp.ne.s32.totalorder %s45, %s47
    %p54 = scmp.eq.s32.totalorder %s16, 1
    %p55 = por %p53, %p54
    %p56 = scmp.ne.s32.totalorder %s47, %s48
    %p57 = scmp.eq.s32.totalorder %s16, 0
    %p58 = por %p56, %p57
    %p59 = scmp.ne.s32.totalorder %s47, %s48
    %p60 = scmp.eq.s32.totalorder %s17, 1
    %p61 = por %p59, %p60
    %p63 = scmp.ne.s32.totalorder %s48, %s62
    %p64 = scmp.eq.s32.totalorder %s17, 0
    %p65 = por %p63, %p64
    %s66 = ssub.s32 %s11, %s18
    %p67 = scmp.eq.s32.totalorder %s66, 0
    %s69 = sadd.s32 %s68, 1
    %s70 = scalar_select %p67, %s68, %s69
    %p73 = pneg %p67
    %p74 = scmp.eq.s32.totalorder %s11, 1
    %p75 = por %p73, %p74
    %p76 = scmp.ne.s32.totalorder %s68, %s71
    %p77 = scmp.eq.s32.totalorder %s11, 0
    %p78 = por %p76, %p77
    %p79 = scmp.ne.s32.totalorder %s68, %s71
    %p80 = scmp.eq.s32.totalorder %s16, 1
    %p81 = por %p79, %p80
    %p82 = scmp.ne.s32.totalorder %s71, %s72
    %p83 = scmp.eq.s32.totalorder %s16, 0
    %p84 = por %p82, %p83
    %p85 = scmp.ne.s32.totalorder %s71, %s72
    %p86 = scmp.eq.s32.totalorder %s17, 1
    %p87 = por %p85, %p86
    %p89 = scmp.ne.s32.totalorder %s72, %s88
    %p90 = scmp.eq.s32.totalorder %s17, 0
    %p91 = por %p89, %p90
    %s93 = sadd.s32 %s92, 1
    %p96 = scmp.eq.s32.totalorder %s11, 1
    %p97 = scmp.ne.s32.totalorder %s92, %s94
    %p98 = scmp.eq.s32.totalorder %s11, 0
    %p99 = por %p97, %p98
    %p100 = scmp.ne.s32.totalorder %s92, %s94
    %p101 = scmp.eq.s32.totalorder %s16, 1
    %p102 = por %p100, %p101
    %p103 = scmp.ne.s32.totalorder %s94, %s95
    %p104 = scmp.eq.s32.totalorder %s16, 0
    %p105 = por %p103, %p104
    %p106 = scmp.ne.s32.totalorder %s94, %s95
    %p107 = scmp.eq.s32.totalorder %s17, 1
    %p108 = por %p106, %p107
    %p110 = scmp.ne.s32.totalorder %s95, %s109
    %p111 = scmp.eq.s32.totalorder %s17, 0
    %p112 = por %p110, %p111
    %s114 = sadd.s32 %s113, 1
    %p117 = scmp.eq.s32.totalorder %s11, 1
    %p118 = scmp.ne.s32.totalorder %s113, %s115
    %p119 = scmp.eq.s32.totalorder %s11, 0
    %p120 = por %p118, %p119
    %p121 = scmp.ne.s32.totalorder %s113, %s115
    %p122 = scmp.eq.s32.totalorder %s16, 1
    %p123 = por %p121, %p122
    %p124 = scmp.ne.s32.totalorder %s115, %s116
    %p125 = scmp.eq.s32.totalorder %s16, 0
    %p126 = por %p124, %p125
    %p127 = scmp.ne.s32.totalorder %s115, %s116
    %p128 = scmp.eq.s32.totalorder %s17, 1
    %p129 = por %p127, %p128
    %p131 = scmp.ne.s32.totalorder %s116, %s130
    %p132 = scmp.eq.s32.totalorder %s17, 0
    %p133 = por %p131, %p132
    %s134 = ssub.s32 %s11, %s18
    %p135 = scmp.eq.s32.totalorder %s134, 0
    %s137 = sadd.s32 %s136, 1
    %s138 = scalar_select %p135, %s136, %s137
    %p141 = pneg %p135
    %p142 = scmp.eq.s32.totalorder %s11, 1
    %p143 = por %p141, %p142
    %p144 = scmp.ne.s32.totalorder %s136, %s139
    %p145 = scmp.eq.s32.totalorder %s11, 0
    %p146 = por %p144, %p145
    %p147 = scmp.ne.s32.totalorder %s136, %s139
    %p148 = scmp.eq.s32.totalorder %s16, 1
    %p149 = por %p147, %p148
    %p150 = scmp.ne.s32.totalorder %s139, %s140
    %p151 = scmp.eq.s32.totalorder %s16, 0
    %p152 = por %p150, %p151
    %p153 = scmp.ne.s32.totalorder %s139, %s140
    %p154 = scmp.eq.s32.totalorder %s17, 1
    %p155 = por %p153, %p154
    %p157 = scmp.ne.s32.totalorder %s140, %s156
    %p158 = scmp.eq.s32.totalorder %s17, 0
    %p159 = por %p157, %p158
    %p160 = scmp.le.s32.totalorder 1, %s11
    %p161 = scmp.lt.s32.totalorder %s11, 3
    %p162 = pnand %p160, %p161
    %p163 = pneg %p162
    // Predicated region
    $region9: #{fpn_forward_pallas.9} parent=5 // pred_check
      _
    $region10: #{fpn_forward_pallas.9} parent=5 // pred_check_branch
      %165 = sbr.rel (%p162) target = $region12
    $region11: #{fpn_forward_pallas.9} parent=5 // pred_region
      %s166 = ssub.s32 %s11, 1
      // Predicated region
      $region13: #{fpn_forward_pallas.9} parent=11 // pred_check
        %p167 = pneg %p58
      $region14: #{fpn_forward_pallas.9} parent=11 // pred_check_branch
        %169 = sbr.rel (%p167) target = $region16
      $region15: #{fpn_forward_pallas.9} parent=11 // pred_region
        _
      $region16: #{fpn_forward_pallas.9} parent=11 // pred_fallthru
        _
      // Predicated region
      $region17: #{fpn_forward_pallas.9} parent=11 // pred_check
        %p170 = pneg %p105
      $region18: #{fpn_forward_pallas.9} parent=11 // pred_check_branch
        %172 = sbr.rel (%p170) target = $region20
      $region19: #{fpn_forward_pallas.9} parent=11 // pred_region
        _
      $region20: #{fpn_forward_pallas.9} parent=11 // pred_fallthru
        _
      // Predicated region
      $region21: #{fpn_forward_pallas.9} parent=11 // pred_check
        %p173 = pneg %p126
      $region22: #{fpn_forward_pallas.9} parent=11 // pred_check_branch
        %175 = sbr.rel (%p173) target = $region24
      $region23: #{fpn_forward_pallas.9} parent=11 // pred_region
        _
      $region24: #{fpn_forward_pallas.9} parent=11 // pred_fallthru
        _
    $region12: #{fpn_forward_pallas.9} parent=5 // pred_fallthru
      _
    %p176 = scmp.lt.s32.totalorder %s11, 2
    // Predicated region
    $region25: #{fpn_forward_pallas.9} parent=5 // pred_check
      %p177 = pneg %p176
    $region26: #{fpn_forward_pallas.9} parent=5 // pred_check_branch
      %179 = sbr.rel (%p177) target = $region28
    $region27: #{fpn_forward_pallas.9} parent=5 // pred_region
      // Predicated region
      $region29: #{fpn_forward_pallas.9} parent=27 // pred_check
        %p180 = pneg %p31
      $region30: #{fpn_forward_pallas.9} parent=27 // pred_check_branch
        %182 = sbr.rel (%p180) target = $region32
      $region31: #{fpn_forward_pallas.9} parent=27 // pred_region
        %p183 = scmp.lt.s32.totalorder %s11, 1
        %s184 = scalar_select %p183, %s11, 1
        %s185 = smul.addr %s184, 4
        %s186 = smul.addr %s185, 4
        %s187 = scalar_lea.vmem %s0, %s186
      $region32: #{fpn_forward_pallas.9} parent=27 // pred_fallthru
        _
      // Predicated region
      $region33: #{fpn_forward_pallas.9} parent=27 // pred_check
        %p188 = pneg %p78
      $region34: #{fpn_forward_pallas.9} parent=27 // pred_check_branch
        %190 = sbr.rel (%p188) target = $region36
      $region35: #{fpn_forward_pallas.9} parent=27 // pred_region
        %p191 = scmp.lt.s32.totalorder %s11, 1
        %s192 = scalar_select %p191, %s11, 1
        %s193 = smul.addr %s192, 8
        %s194 = smul.addr %s193, 4
        %s195 = scalar_lea.vmem %s2, %s194
      $region36: #{fpn_forward_pallas.9} parent=27 // pred_fallthru
        _
    $region28: #{fpn_forward_pallas.9} parent=5 // pred_fallthru
      _
    %p196 = scmp.le.s32.totalorder 1, %s11
    %p197 = scmp.lt.s32.totalorder %s11, 3
    %p198 = pnand %p196, %p197
    %p199 = pneg %p198
    // Predicated region
    $region37: #{fpn_forward_pallas.9} parent=5 // pred_check
      _
    $region38: #{fpn_forward_pallas.9} parent=5 // pred_check_branch
      %201 = sbr.rel (%p198) target = $region40
    $region39: #{fpn_forward_pallas.9} parent=5 // pred_region
      %s202 = ssub.s32 %s11, 1
      %p203 = scmp.lt.s32.totalorder %s16, 1
      %s204 = scalar_select %p203, %s16, 1
      %s205 = smul.addr %s204, 4
      %s206 = smul.addr %s205, 4
      %s207 = scalar_lea.vmem %s0, %s206
      %p208 = pneg %p37
      %p209 = pneg %p34
      %p210 = pneg %p58
      %p211 = pneg %p55
      %p212 = scmp.lt.s32.totalorder %s16, 1
      %s213 = scalar_select %p212, %s16, 1
      %s214 = smul.addr %s213, 8
      %s215 = smul.addr %s214, 4
      %s216 = scalar_lea.vmem %s2, %s215
      %p217 = pneg %p84
      %p218 = pneg %p81
      %p219 = pneg %p105
      %p220 = pneg %p102
      %p221 = pneg %p126
      %p222 = pneg %p123
      %p223 = pneg %p152
      %p224 = pneg %p149
      %p225 = scmp.lt.s32.totalorder %s16, 1
      %s226 = scalar_select %p225, %s16, 1
      %s227 = smul.addr %s226, 8
      %s228 = smul.addr %s227, 8
      %s229 = scalar_lea.vmem %s5, %s228
      %p230 = scmp.lt.s32.totalorder %s16, 1
      %s231 = scalar_select %p230, %s16, 1
      %s232 = smul.addr %s231, 4
      %s233 = smul.addr %s232, 4
      %s234 = scalar_lea.vmem %s0, %s233
      %p235 = scmp.lt.s32.totalorder %s16, 1
      %s236 = scalar_select %p235, %s16, 1
      %s237 = smul.addr %s236, 8
      %s238 = smul.addr %s237, 4
      %s239 = scalar_lea.vmem %s2, %s238
      %p240 = scmp.lt.s32.totalorder %s16, 1
      %s241 = scalar_select %p240, %s16, 1
      %s242 = smul.addr %s241, 8
      %s243 = smul.addr %s242, 8
      %s244 = scalar_lea.vmem %s5, %s243
      %v246 = vld [vmem:[%s239] sm:$0xf]
      %v247 = vld [vmem:[%s239 + $0x4] sm:$0xf]
      %v248 = vld [vmem:[%s239 + $0x8] sm:$0xf]
      %v249 = vld [vmem:[%s239 + $0xc] sm:$0xf]
      %v250 = vld [vmem:[%s239 + $0x10] sm:$0xf]
      %v251 = vld [vmem:[%s239 + $0x14] sm:$0xf]
      %v252 = vld [vmem:[%s239 + $0x18] sm:$0xf]
      %v253 = vld [vmem:[%s239 + $0x1c] sm:$0xf]
      %v254 = vld [vmem:[%s3] sm:$0xf]
      %v255 = vld [vmem:[%s3 + $0x4] sm:$0xf]
      %v256 = vld [vmem:[%s3 + $0x8] sm:$0xf]
      %v257 = vld [vmem:[%s3 + $0xc] sm:$0xf]
      %v258 = vld [vmem:[%s3 + $0x10] sm:$0xf]
      %v259 = vld [vmem:[%s3 + $0x14] sm:$0xf]
      %v260 = vld [vmem:[%s3 + $0x18] sm:$0xf]
      %v261 = vld [vmem:[%s3 + $0x1c] sm:$0xf]
      %v262 = vld [vmem:[%s4] sm:$0x1]
      %v264 = vperm.slane %v262, 0
      %v274 = vunpack.c.l.b16 %v246
      %v275 = vunpack.c.l.b16 %v247
      %v276 = vunpack.c.l.b16 %v248
      %v277 = vunpack.c.l.b16 %v249
      %v278 = vunpack.c.l.b16 %v250
      %v279 = vunpack.c.l.b16 %v251
      %v280 = vunpack.c.l.b16 %v252
      %v281 = vunpack.c.l.b16 %v253
      %v282 = vpack.c.b16 %v275, %v274
      %v283 = vpack.c.b16 %v277, %v276
      %v284 = vpack.c.b16 %v279, %v278
      %v285 = vpack.c.b16 %v281, %v280
      %v294 = vunpack.c.l.b16 %v254
      %v295 = vunpack.c.l.b16 %v255
      %v296 = vunpack.c.l.b16 %v256
      %v297 = vunpack.c.l.b16 %v257
      %v298 = vunpack.c.l.b16 %v258
      %v299 = vunpack.c.l.b16 %v259
      %v300 = vunpack.c.l.b16 %v260
      %v301 = vunpack.c.l.b16 %v261
      %v302 = vpack.c.b16 %v295, %v294
      %v303 = vpack.c.b16 %v297, %v296
      %v304 = vpack.c.b16 %v299, %v298
      %v305 = vpack.c.b16 %v301, %v300
      %vm310 = vcmask 523264
      %v312 = vsel %vm310, %v282, 0
      %v315 = vsel %vm310, %v283, 0
      %v318 = vsel %vm310, %v284, 0
      %v321 = vsel %vm310, %v285, 0
      %323 = vmatpush.bf16.msra.mxu0 0
      %324 = vmatpush.bf16.msra.mxu0 0
      %325 = vmatpush.bf16.msra.mxu0 0
      %326 = vmatpush.bf16.msra.mxu0 0
      %327 = vmatpush.bf16.msra.mxu0 %v305
      %328 = vmatpush.bf16.msra.mxu0 %v304
      %329 = vmatpush.bf16.msra.mxu0 %v303
      %330 = vmatpush.bf16.msra.mxu0 %v302
      %331 = vmatmul.bf16.gmra.mxu0 %v312
      %v332 = vpop.f32.mrf.mxu0
      %v333 = vadd.f32 %v264, %v332
      %v334 = vpop.f32.mrf.mxu0
      %v335 = vadd.f32 %v264, %v334
      %336 = vmatmul.bf16.gmra.mxu0 %v315
      %v337 = vpop.f32.mrf.mxu0
      %v338 = vadd.f32 %v264, %v337
      %v339 = vpop.f32.mrf.mxu0
      %v340 = vadd.f32 %v264, %v339
      %341 = vmatmul.bf16.gmra.mxu0 %v318
      %v342 = vpop.f32.mrf.mxu0
      %v343 = vadd.f32 %v264, %v342
      %v344 = vpop.f32.mrf.mxu0
      %v345 = vadd.f32 %v264, %v344
      %346 = vmatmul.bf16.gmra.mxu0 %v321
      %v347 = vpop.f32.mrf.mxu0
      %v348 = vadd.f32 %v264, %v347
      %v349 = vpop.f32.mrf.mxu0
      %v350 = vadd.f32 %v264, %v349
      %351 = vdwg.mxu0
      %vm352 = vcmask 261120
      %353 = vst.msk [vmem:[%s244] sm:$0xff] %vm352, %v333
      %354 = vst.msk [vmem:[%s244 + $0x8] sm:$0xff] %vm352, %v335
      %355 = vst.msk [vmem:[%s244 + $0x10] sm:$0xff] %vm352, %v338
      %356 = vst.msk [vmem:[%s244 + $0x18] sm:$0xff] %vm352, %v340
      %357 = vst.msk [vmem:[%s244 + $0x20] sm:$0xff] %vm352, %v343
      %358 = vst.msk [vmem:[%s244 + $0x28] sm:$0xff] %vm352, %v345
      %359 = vst.msk [vmem:[%s244 + $0x30] sm:$0xff] %vm352, %v348
      %360 = vst.msk [vmem:[%s244 + $0x38] sm:$0xff] %vm352, %v350
      %v361 = vld [vmem:[%s1] sm:$0xf]
      %v362 = vld [vmem:[%s234] sm:$0xf]
      %v363 = vpack.c.bf16 %v362, %v362
      %vm364 = vcmask 31744
      %v366 = vsel %vm364, %v361, 0
      %vm368 = vcmask 1041408
      %v370 = vsel %vm368, %v363, 0
      %372 = vmatpush.bf16.msra.mxu0 0
      %373 = vmatpush.bf16.msra.mxu0 0
      %374 = vmatpush.bf16.msra.mxu0 0
      %375 = vmatpush.bf16.msra.mxu0 0
      %376 = vmatpush.bf16.msra.mxu0 0
      %377 = vmatpush.bf16.msra.mxu0 0
      %378 = vmatpush.bf16.msra.mxu0 0
      %379 = vmatpush.bf16.msra.mxu0 %v370
      %380 = vmatmul.bf16.gmra.mxu0 %v366
      %v381 = vpop.f32.mrf.mxu0
      %v382 = vadd.f32 0.0, %v381
      %v383 = vpop.f32.mrf.mxu0
      %384 = vdwg.mxu0
      %s385 = scalar_lea.vmem %s234, 4
      %v386 = vld [vmem:[%s385] sm:$0xf]
      %v387 = vpack.c.bf16 %v386, %v386
      %v389 = vsel %vm368, %v387, 0
      %391 = vmatpush.bf16.msra.mxu0 0
      %392 = vmatpush.bf16.msra.mxu0 0
      %393 = vmatpush.bf16.msra.mxu0 0
      %394 = vmatpush.bf16.msra.mxu0 0
      %395 = vmatpush.bf16.msra.mxu0 0
      %396 = vmatpush.bf16.msra.mxu0 0
      %397 = vmatpush.bf16.msra.mxu0 0
      %398 = vmatpush.bf16.msra.mxu0 %v389
      %399 = vmatmul.bf16.gmra.mxu0 %v366
      %v400 = vpop.f32.mrf.mxu0
      %v401 = vadd.f32 0.0, %v400
      %v402 = vpop.f32.mrf.mxu0
      %403 = vdwg.mxu0
      %s404 = scalar_lea.vmem %s234, 8
      %v405 = vld [vmem:[%s404] sm:$0xf]
      %v406 = vpack.c.bf16 %v405, %v405
      %v408 = vsel %vm368, %v406, 0
      %410 = vmatpush.bf16.msra.mxu0 0
      %411 = vmatpush.bf16.msra.mxu0 0
      %412 = vmatpush.bf16.msra.mxu0 0
      %413 = vmatpush.bf16.msra.mxu0 0
      %414 = vmatpush.bf16.msra.mxu0 0
      %415 = vmatpush.bf16.msra.mxu0 0
      %416 = vmatpush.bf16.msra.mxu0 0
      %417 = vmatpush.bf16.msra.mxu0 %v408
      %418 = vmatmul.bf16.gmra.mxu0 %v366
      %v419 = vpop.f32.mrf.mxu0
      %v420 = vadd.f32 0.0, %v419
      %v421 = vpop.f32.mrf.mxu0
      %422 = vdwg.mxu0
      %s423 = scalar_lea.vmem %s234, 12
      %v424 = vld [vmem:[%s423] sm:$0xf]
      %v425 = vpack.c.bf16 %v424, %v424
      %v427 = vsel %vm368, %v425, 0
      %429 = vmatpush.bf16.msra.mxu0 0
      %430 = vmatpush.bf16.msra.mxu0 0
      %431 = vmatpush.bf16.msra.mxu0 0
      %432 = vmatpush.bf16.msra.mxu0 0
      %433 = vmatpush.bf16.msra.mxu0 0
      %434 = vmatpush.bf16.msra.mxu0 0
      %435 = vmatpush.bf16.msra.mxu0 0
      %436 = vmatpush.bf16.msra.mxu0 %v427
      %437 = vmatmul.bf16.gmra.mxu0 %v366
      %v438 = vpop.f32.mrf.mxu0
      %v439 = vadd.f32 0.0, %v438
      %v440 = vpop.f32.mrf.mxu0
      %441 = vdwg.mxu0
      %v442 = vld [vmem:[%s244] sm:$0xff]
      %v443 = vadd.f32 %v442, %v382
      %444 = vst.msk [vmem:[%s244] sm:$0xff] %vm352, %v443
      %v445 = vmul.f32 %v382, 0.75
      %v446 = vmul.f32 %v401, 0.25
      %v447 = vadd.f32 %v445, %v446
      %v448 = vld [vmem:[%s244 + $0x8] sm:$0xff]
      %v449 = vadd.f32 %v448, %v447
      %450 = vst.msk [vmem:[%s244 + $0x8] sm:$0xff] %vm352, %v449
      %v451 = vmul.f32 %v382, 0.25
      %v452 = vmul.f32 %v401, 0.75
      %v453 = vadd.f32 %v451, %v452
      %v454 = vld [vmem:[%s244 + $0x10] sm:$0xff]
      %v455 = vadd.f32 %v454, %v453
      %456 = vst.msk [vmem:[%s244 + $0x10] sm:$0xff] %vm352, %v455
      %v457 = vmul.f32 %v420, 0.25
      %v458 = vadd.f32 %v452, %v457
      %v459 = vld [vmem:[%s244 + $0x18] sm:$0xff]
      %v460 = vadd.f32 %v459, %v458
      %461 = vst.msk [vmem:[%s244 + $0x18] sm:$0xff] %vm352, %v460
      %v462 = vmul.f32 %v420, 0.75
      %v463 = vadd.f32 %v446, %v462
      %v464 = vld [vmem:[%s244 + $0x20] sm:$0xff]
      %v465 = vadd.f32 %v464, %v463
      %466 = vst.msk [vmem:[%s244 + $0x20] sm:$0xff] %vm352, %v465
      %v467 = vmul.f32 %v439, 0.25
      %v468 = vadd.f32 %v462, %v467
      %v469 = vld [vmem:[%s244 + $0x28] sm:$0xff]
      %v470 = vadd.f32 %v469, %v468
      %471 = vst.msk [vmem:[%s244 + $0x28] sm:$0xff] %vm352, %v470
      %v472 = vmul.f32 %v439, 0.75
      %v473 = vadd.f32 %v457, %v472
      %v474 = vld [vmem:[%s244 + $0x30] sm:$0xff]
      %v475 = vadd.f32 %v474, %v473
      %476 = vst.msk [vmem:[%s244 + $0x30] sm:$0xff] %vm352, %v475
      %v477 = vld [vmem:[%s244 + $0x38] sm:$0xff]
      %v478 = vadd.f32 %v477, %v439
      %479 = vst.msk [vmem:[%s244 + $0x38] sm:$0xff] %vm352, %v478
      %p480 = scmp.lt.s32.totalorder %s16, 1
      %s481 = scalar_select %p480, %s16, 1
      %s482 = smul.addr %s481, 8
      %s483 = smul.addr %s482, 8
      %s484 = scalar_lea.vmem %s5, %s483
      // Predicated region
      $region41: #{fpn_forward_pallas.9} parent=39 // pred_check
        %p485 = pneg %p149
      $region42: #{fpn_forward_pallas.9} parent=39 // pred_check_branch
        %487 = sbr.rel (%p485) target = $region44
      $region43: #{fpn_forward_pallas.9} parent=39 // pred_region
        _
      $region44: #{fpn_forward_pallas.9} parent=39 // pred_fallthru
        _
    $region40: #{fpn_forward_pallas.9} parent=5 // pred_fallthru
      _
    %p488 = scmp.le.s32.totalorder 2, %s11
    // Predicated region
    $region45: #{fpn_forward_pallas.9} parent=5 // pred_check
      %p489 = pneg %p488
    $region46: #{fpn_forward_pallas.9} parent=5 // pred_check_branch
      %491 = sbr.rel (%p489) target = $region48
    $region47: #{fpn_forward_pallas.9} parent=5 // pred_region
      %s492 = ssub.s32 %s11, 2
      // Predicated region
      $region49: #{fpn_forward_pallas.9} parent=47 // pred_check
        %p493 = pneg %p155
      $region50: #{fpn_forward_pallas.9} parent=47 // pred_check_branch
        %495 = sbr.rel (%p493) target = $region52
      $region51: #{fpn_forward_pallas.9} parent=47 // pred_region
        %p496 = scmp.lt.s32.totalorder %s17, 1
        %s497 = scalar_select %p496, %s17, 1
        %s498 = smul.addr %s497, 8
        %s499 = smul.addr %s498, 8
        %s500 = scalar_lea.vmem %s5, %s499
      $region52: #{fpn_forward_pallas.9} parent=47 // pred_fallthru
        _
    $region48: #{fpn_forward_pallas.9} parent=5 // pred_fallthru
      _
  $region6: #{fpn_forward_pallas.9} parent=0 // loop_footer
    %s15 = sadd.s32 1, %s11
  $region7: #{fpn_forward_pallas.9} parent=0 // loop_footer_branch
    %10 = sbr.rel target = $region3
  $region8: #{fpn_forward_pallas.9} parent=0 // loop_exit
    _

// kernel: fpn_forward_pallas.11
$region0: #{fpn_forward_pallas.11}
  #allocation0 [shape = 'u32[]', space=smem, size = 0x4, offset = 0x4, fixed_abs, tag = 'smem constant byte address 0x4 - core index']
  #allocation1 [shape = 'u32[72,128]{1,0:T(1,128)}', space=vmem, size = 0x9000, scoped, tag = 'internal scratch']
  %s0 = inlined_call_operand.vmem [shape: bf16[2,42,32], index: 0, kind: input, shape index: {}]
  %s1 = inlined_call_operand.vmem [shape: bf16[9,32,32], index: 1, kind: input, shape index: {}]
  %s2 = inlined_call_operand.vmem [shape: f32[1,32], index: 2, kind: input, shape index: {}]
  %s3 = inlined_call_operand.vmem [shape: f32[2,24,32], index: 3, kind: output, shape index: {}]
  %s4 = sld [smem:[#allocation0]]
  $region45: #{fpn_forward_pallas.11} parent=0
    _
  %s6 = ssub.s32 1, %s4
  %s7 = scalar_select 0, %s6, %s4
  loop: start=0, step=1, limit=4
  $region2: #{fpn_forward_pallas.11} parent=0 // loop_pre_header
    _
  $region3: #{fpn_forward_pallas.11} parent=0 // loop_header
    %s9 = sphi 0, %s13
    %p10 = scmp.ge.s32.totalorder %s9, 4
    %s19 = sphi 0, %s21
    %s22 = sphi 0, %s19
    %s23 = sphi 0, %s22
    %s39 = sphi 0, %s23
    %s43 = sphi 0, %s43
    %s45 = sphi 0, %s43
    %s46 = sphi 0, %s45
    %s60 = sphi 0, %s46
    %s64 = sphi 0, %s64
    %s66 = sphi 0, %s64
    %s67 = sphi 0, %s66
    %s81 = sphi 0, %s67
    %s87 = sphi 0, %s89
    %s90 = sphi 0, %s87
    %s91 = sphi 0, %s90
    %s107 = sphi 0, %s91
  $region4: #{fpn_forward_pallas.11} parent=0 // loop_header_branch
    %12 = sbr.rel (%p10) target = $region8
  $region5: #{fpn_forward_pallas.11} parent=0 // loop_body
    %s14 = ssub.s32 %s9, 1
    %s15 = ssub.s32 %s9, 2
    %s16 = sadd.s32 %s9, 1
    %s17 = ssub.s32 %s9, %s16
    %p18 = scmp.eq.s32.totalorder %s17, 0
    %s20 = sadd.s32 %s19, 1
    %s21 = scalar_select %p18, %s19, %s20
    %p24 = pneg %p18
    %p25 = scmp.eq.s32.totalorder %s9, 1
    %p26 = por %p24, %p25
    %p27 = scmp.ne.s32.totalorder %s19, %s22
    %p28 = scmp.eq.s32.totalorder %s9, 0
    %p29 = por %p27, %p28
    %p30 = scmp.ne.s32.totalorder %s19, %s22
    %p31 = scmp.eq.s32.totalorder %s14, 1
    %p32 = por %p30, %p31
    %p33 = scmp.ne.s32.totalorder %s22, %s23
    %p34 = scmp.eq.s32.totalorder %s14, 0
    %p35 = por %p33, %p34
    %p36 = scmp.ne.s32.totalorder %s22, %s23
    %p37 = scmp.eq.s32.totalorder %s15, 1
    %p38 = por %p36, %p37
    %p40 = scmp.ne.s32.totalorder %s23, %s39
    %p41 = scmp.eq.s32.totalorder %s15, 0
    %p42 = por %p40, %p41
    %s44 = sadd.s32 %s43, 1
    %p47 = scmp.eq.s32.totalorder %s9, 1
    %p48 = scmp.ne.s32.totalorder %s43, %s45
    %p49 = scmp.eq.s32.totalorder %s9, 0
    %p50 = por %p48, %p49
    %p51 = scmp.ne.s32.totalorder %s43, %s45
    %p52 = scmp.eq.s32.totalorder %s14, 1
    %p53 = por %p51, %p52
    %p54 = scmp.ne.s32.totalorder %s45, %s46
    %p55 = scmp.eq.s32.totalorder %s14, 0
    %p56 = por %p54, %p55
    %p57 = scmp.ne.s32.totalorder %s45, %s46
    %p58 = scmp.eq.s32.totalorder %s15, 1
    %p59 = por %p57, %p58
    %p61 = scmp.ne.s32.totalorder %s46, %s60
    %p62 = scmp.eq.s32.totalorder %s15, 0
    %p63 = por %p61, %p62
    %s65 = sadd.s32 %s64, 1
    %p68 = scmp.eq.s32.totalorder %s9, 1
    %p69 = scmp.ne.s32.totalorder %s64, %s66
    %p70 = scmp.eq.s32.totalorder %s9, 0
    %p71 = por %p69, %p70
    %p72 = scmp.ne.s32.totalorder %s64, %s66
    %p73 = scmp.eq.s32.totalorder %s14, 1
    %p74 = por %p72, %p73
    %p75 = scmp.ne.s32.totalorder %s66, %s67
    %p76 = scmp.eq.s32.totalorder %s14, 0
    %p77 = por %p75, %p76
    %p78 = scmp.ne.s32.totalorder %s66, %s67
    %p79 = scmp.eq.s32.totalorder %s15, 1
    %p80 = por %p78, %p79
    %p82 = scmp.ne.s32.totalorder %s67, %s81
    %p83 = scmp.eq.s32.totalorder %s15, 0
    %p84 = por %p82, %p83
    %s85 = ssub.s32 %s9, %s16
    %p86 = scmp.eq.s32.totalorder %s85, 0
    %s88 = sadd.s32 %s87, 1
    %s89 = scalar_select %p86, %s87, %s88
    %p92 = pneg %p86
    %p93 = scmp.eq.s32.totalorder %s9, 1
    %p94 = por %p92, %p93
    %p95 = scmp.ne.s32.totalorder %s87, %s90
    %p96 = scmp.eq.s32.totalorder %s9, 0
    %p97 = por %p95, %p96
    %p98 = scmp.ne.s32.totalorder %s87, %s90
    %p99 = scmp.eq.s32.totalorder %s14, 1
    %p100 = por %p98, %p99
    %p101 = scmp.ne.s32.totalorder %s90, %s91
    %p102 = scmp.eq.s32.totalorder %s14, 0
    %p103 = por %p101, %p102
    %p104 = scmp.ne.s32.totalorder %s90, %s91
    %p105 = scmp.eq.s32.totalorder %s15, 1
    %p106 = por %p104, %p105
    %p108 = scmp.ne.s32.totalorder %s91, %s107
    %p109 = scmp.eq.s32.totalorder %s15, 0
    %p110 = por %p108, %p109
    %p111 = scmp.le.s32.totalorder 1, %s9
    %p112 = scmp.lt.s32.totalorder %s9, 3
    %p113 = pnand %p111, %p112
    %p114 = pneg %p113
    // Predicated region
    $region9: #{fpn_forward_pallas.11} parent=5 // pred_check
      _
    $region10: #{fpn_forward_pallas.11} parent=5 // pred_check_branch
      %116 = sbr.rel (%p113) target = $region12
    $region11: #{fpn_forward_pallas.11} parent=5 // pred_region
      %s117 = ssub.s32 %s9, 1
      // Predicated region
      $region13: #{fpn_forward_pallas.11} parent=11 // pred_check
        %p118 = pneg %p56
      $region14: #{fpn_forward_pallas.11} parent=11 // pred_check_branch
        %120 = sbr.rel (%p118) target = $region16
      $region15: #{fpn_forward_pallas.11} parent=11 // pred_region
        _
      $region16: #{fpn_forward_pallas.11} parent=11 // pred_fallthru
        _
      // Predicated region
      $region17: #{fpn_forward_pallas.11} parent=11 // pred_check
        %p121 = pneg %p77
      $region18: #{fpn_forward_pallas.11} parent=11 // pred_check_branch
        %123 = sbr.rel (%p121) target = $region20
      $region19: #{fpn_forward_pallas.11} parent=11 // pred_region
        _
      $region20: #{fpn_forward_pallas.11} parent=11 // pred_fallthru
        _
    $region12: #{fpn_forward_pallas.11} parent=5 // pred_fallthru
      _
    %p124 = scmp.lt.s32.totalorder %s9, 2
    // Predicated region
    $region21: #{fpn_forward_pallas.11} parent=5 // pred_check
      %p125 = pneg %p124
    $region22: #{fpn_forward_pallas.11} parent=5 // pred_check_branch
      %127 = sbr.rel (%p125) target = $region24
    $region23: #{fpn_forward_pallas.11} parent=5 // pred_region
      // Predicated region
      $region25: #{fpn_forward_pallas.11} parent=23 // pred_check
        %p128 = pneg %p29
      $region26: #{fpn_forward_pallas.11} parent=23 // pred_check_branch
        %130 = sbr.rel (%p128) target = $region28
      $region27: #{fpn_forward_pallas.11} parent=23 // pred_region
        %p131 = scmp.lt.s32.totalorder %s9, 1
        %s132 = scalar_select %p131, %s9, 1
        %s133 = smul.addr %s132, 6
        %s134 = smul.addr %s133, 4
        %s135 = scalar_lea.vmem %s0, %s134
      $region28: #{fpn_forward_pallas.11} parent=23 // pred_fallthru
        _
    $region24: #{fpn_forward_pallas.11} parent=5 // pred_fallthru
      _
    %p136 = scmp.le.s32.totalorder 1, %s9
    %p137 = scmp.lt.s32.totalorder %s9, 3
    %p138 = pnand %p136, %p137
    %p139 = pneg %p138
    // Predicated region
    $region29: #{fpn_forward_pallas.11} parent=5 // pred_check
      _
    $region30: #{fpn_forward_pallas.11} parent=5 // pred_check_branch
      %141 = sbr.rel (%p138) target = $region32
    $region31: #{fpn_forward_pallas.11} parent=5 // pred_region
      %s142 = ssub.s32 %s9, 1
      %p143 = scmp.lt.s32.totalorder %s14, 1
      %s144 = scalar_select %p143, %s14, 1
      %s145 = smul.addr %s144, 6
      %s146 = smul.addr %s145, 4
      %s147 = scalar_lea.vmem %s0, %s146
      %p148 = pneg %p35
      %p149 = pneg %p32
      %p150 = pneg %p56
      %p151 = pneg %p53
      %p152 = pneg %p77
      %p153 = pneg %p74
      %p154 = pneg %p103
      %p155 = pneg %p100
      %p156 = scmp.lt.s32.totalorder %s14, 1
      %s157 = scalar_select %p156, %s14, 1
      %s158 = smul.addr %s157, 3
      %s159 = smul.addr %s158, 8
      %s160 = scalar_lea.vmem %s3, %s159
      %p161 = scmp.lt.s32.totalorder %s14, 1
      %s162 = scalar_select %p161, %s14, 1
      %s163 = smul.addr %s162, 6
      %s164 = smul.addr %s163, 4
      %s165 = scalar_lea.vmem %s0, %s164
      %p166 = scmp.lt.s32.totalorder %s14, 1
      %s167 = scalar_select %p166, %s14, 1
      %s168 = smul.addr %s167, 3
      %s169 = smul.addr %s168, 8
      %s170 = scalar_lea.vmem %s3, %s169
      %v172 = vld [vmem:[%s165] sm:$0xf]
      %v173 = vld [vmem:[%s165 + $0x4] sm:$0xf]
      %v174 = vld [vmem:[%s165 + $0x8] sm:$0xf]
      %v175 = vld [vmem:[%s1] sm:$0xf]
      %v176 = vld [vmem:[%s1 + $0x4] sm:$0xf]
      %v177 = vld [vmem:[%s1 + $0x8] sm:$0xf]
      %v178 = vld [vmem:[%s1 + $0xc] sm:$0xf]
      %v179 = vld [vmem:[%s165 + $0xc] sm:$0x1]
      %s180 = scalar_lea.vmem %s1, 16
      %v181 = vld [vmem:[%s180] sm:$0xf]
      %v182 = vld [vmem:[%s180 + $0x4] sm:$0xf]
      %v183 = vld [vmem:[%s180 + $0x8] sm:$0xf]
      %v184 = vld [vmem:[%s180 + $0xc] sm:$0xf]
      %v189 = vunpack.c.l.b16 %v172
      %v190 = vunpack.c.l.b16 %v173
      %v191 = vunpack.c.l.b16 %v174
      %v192 = vunpack.c.l.b16 %v179
      %v193 = vpack.c.b16 %v190, %v189
      %v194 = vpack.c.b16 %v192, %v191
      %vm195 = vsmask.f32 7424
      %v197 = vshrl.u32 %v193, 16
      %v199 = vshll.u32 %v193, 16
      %v201 = vrot.slane %v199, 1
      %v202 = vor.u32 %v197, %v201
      %v204 = vshll.u32 %v194, 16
      %v206 = vrot.slane %v204, 1
      %v207 = vsel %vm195, %v202, %v206
      %v208 = vshrl.u32 %v194, 16
      %v210 = vor.u32 %v208, %v206
      %v215 = vunpack.c.l.b16 %v181
      %v216 = vunpack.c.l.b16 %v182
      %v217 = vunpack.c.l.b16 %v183
      %v218 = vunpack.c.l.b16 %v184
      %v219 = vpack.c.b16 %v216, %v215
      %v220 = vpack.c.b16 %v218, %v217
      %vm223 = vcmask 261120
      %v225 = vsel %vm223, %v207, 0
      %v228 = vsel %vm223, %v210, 0
      %230 = vmatpush.bf16.msra.mxu0 0
      %231 = vmatpush.bf16.msra.mxu0 0
      %232 = vmatpush.bf16.msra.mxu0 0
      %233 = vmatpush.bf16.msra.mxu0 0
      %234 = vmatpush.bf16.msra.mxu0 0
      %235 = vmatpush.bf16.msra.mxu0 0
      %236 = vmatpush.bf16.msra.mxu0 %v220
      %237 = vmatpush.bf16.msra.mxu0 %v219
      %238 = vmatmul.bf16.gmra.mxu0 %v225
      %v239 = vpop.f32.mrf.mxu0
      %v240 = vadd.f32 0.0, %v239
      %v241 = vpop.f32.mrf.mxu0
      %v242 = vadd.f32 0.0, %v241
      %243 = vmatmul.bf16.gmra.mxu0 %v228
      %v244 = vpop.f32.mrf.mxu0
      %v245 = vadd.f32 0.0, %v244
      %v246 = vpop.f32.mrf.mxu0
      %247 = vdwg.mxu0
      %v248 = vpack.c.b16 %v191, %v191
      %v253 = vunpack.c.l.b16 %v175
      %v254 = vunpack.c.l.b16 %v176
      %v255 = vunpack.c.l.b16 %v177
      %v256 = vunpack.c.l.b16 %v178
      %v257 = vpack.c.b16 %v254, %v253
      %v258 = vpack.c.b16 %v256, %v255
      %v261 = vsel %vm223, %v193, 0
      %v264 = vsel %vm223, %v248, 0
      %266 = vmatpush.bf16.msra.mxu0 0
      %267 = vmatpush.bf16.msra.mxu0 0
      %268 = vmatpush.bf16.msra.mxu0 0
      %269 = vmatpush.bf16.msra.mxu0 0
      %270 = vmatpush.bf16.msra.mxu0 0
      %271 = vmatpush.bf16.msra.mxu0 0
      %272 = vmatpush.bf16.msra.mxu0 %v258
      %273 = vmatpush.bf16.msra.mxu0 %v257
      %274 = vmatmul.bf16.gmra.mxu0 %v261
      %v275 = vpop.f32.mrf.mxu0
      %v276 = vadd.f32 %v240, %v275
      %v277 = vpop.f32.mrf.mxu0
      %v278 = vadd.f32 %v242, %v277
      %279 = vmatmul.bf16.gmra.mxu0 %v264
      %v280 = vpop.f32.mrf.mxu0
      %v281 = vadd.f32 %v245, %v280
      %v282 = vpop.f32.mrf.mxu0
      %283 = vdwg.mxu0
      %v284 = vld [vmem:[%s165] sm:$0xe]
      %s285 = scalar_lea.vmem %s1, 32
      %v286 = vld [vmem:[%s285] sm:$0xf]
      %v287 = vld [vmem:[%s285 + $0x4] sm:$0xf]
      %v288 = vld [vmem:[%s285 + $0x8] sm:$0xf]
      %v289 = vld [vmem:[%s285 + $0xc] sm:$0xf]
      %v291 = vunpack.c.l.b16 %v284
      %v292 = vpack.c.b16 %v190, %v291
      %vm293 = vcmask 1046528
      %v294 = vrot.slane %v292, 1
      %v295 = vrot.slane %v194, 1
      %v296 = vsel %vm293, %v294, %v295
      %v301 = vunpack.c.l.b16 %v286
      %v302 = vunpack.c.l.b16 %v287
      %v303 = vunpack.c.l.b16 %v288
      %v304 = vunpack.c.l.b16 %v289
      %v305 = vpack.c.b16 %v302, %v301
      %v306 = vpack.c.b16 %v304, %v303
      %v310 = vsel %vm223, %v296, 0
      %v313 = vsel %vm223, %v295, 0
      %315 = vmatpush.bf16.msra.mxu0 0
      %316 = vmatpush.bf16.msra.mxu0 0
      %317 = vmatpush.bf16.msra.mxu0 0
      %318 = vmatpush.bf16.msra.mxu0 0
      %319 = vmatpush.bf16.msra.mxu0 0
      %320 = vmatpush.bf16.msra.mxu0 0
      %321 = vmatpush.bf16.msra.mxu0 %v306
      %322 = vmatpush.bf16.msra.mxu0 %v305
      %323 = vmatmul.bf16.gmra.mxu0 %v310
      %v324 = vpop.f32.mrf.mxu0
      %v325 = vadd.f32 0.0, %v324
      %v326 = vpop.f32.mrf.mxu0
      %v327 = vadd.f32 0.0, %v326
      %328 = vmatmul.bf16.gmra.mxu0 %v313
      %v329 = vpop.f32.mrf.mxu0
      %v330 = vadd.f32 0.0, %v329
      %v331 = vpop.f32.mrf.mxu0
      %332 = vdwg.mxu0
      %v333 = vadd.f32 %v276, %v325
      %v334 = vadd.f32 %v278, %v327
      %v335 = vadd.f32 %v281, %v330
      %v336 = vld [vmem:[%s165] sm:$0x8]
      %v337 = vld [vmem:[%s165 + $0xc] sm:$0x7]
      %s338 = scalar_lea.vmem %s1, 48
      %v339 = vld [vmem:[%s338] sm:$0xf]
      %v340 = vld [vmem:[%s338 + $0x4] sm:$0xf]
      %v341 = vld [vmem:[%s338 + $0x8] sm:$0xf]
      %v342 = vld [vmem:[%s338 + $0xc] sm:$0xf]
      %v345 = vunpack.c.l.b16 %v336
      %v346 = vunpack.c.l.b16 %v337
      %v347 = vpack.c.b16 %v190, %v345
      %v348 = vpack.c.b16 %v346, %v191
      %vm349 = vcmask 1044480
      %v350 = vrot.slane %v347, 3
      %v351 = vrot.slane %v348, 3
      %v352 = vsel %vm349, %v350, %v351
      %v357 = vunpack.c.l.b16 %v339
      %v358 = vunpack.c.l.b16 %v340
      %v359 = vunpack.c.l.b16 %v341
      %v360 = vunpack.c.l.b16 %v342
      %v361 = vpack.c.b16 %v358, %v357
      %v362 = vpack.c.b16 %v360, %v359
      %v366 = vsel %vm223, %v352, 0
      %v369 = vsel %vm223, %v351, 0
      %371 = vmatpush.bf16.msra.mxu0 0
      %372 = vmatpush.bf16.msra.mxu0 0
      %373 = vmatpush.bf16.msra.mxu0 0
      %374 = vmatpush.bf16.msra.mxu0 0
      %375 = vmatpush.bf16.msra.mxu0 0
      %376 = vmatpush.bf16.msra.mxu0 0
      %377 = vmatpush.bf16.msra.mxu0 %v362
      %378 = vmatpush.bf16.msra.mxu0 %v361
      %379 = vmatmul.bf16.gmra.mxu0 %v366
      %v380 = vpop.f32.mrf.mxu0
      %v381 = vadd.f32 0.0, %v380
      %v382 = vpop.f32.mrf.mxu0
      %v383 = vadd.f32 0.0, %v382
      %384 = vmatmul.bf16.gmra.mxu0 %v369
      %v385 = vpop.f32.mrf.mxu0
      %v386 = vadd.f32 0.0, %v385
      %v387 = vpop.f32.mrf.mxu0
      %388 = vdwg.mxu0
      %v389 = vadd.f32 %v333, %v381
      %v390 = vadd.f32 %v334, %v383
      %v391 = vadd.f32 %v335, %v386
      %v392 = vld [vmem:[%s165 + $0xc] sm:$0xf]
      %s393 = scalar_lea.vmem %s1, 64
      %v394 = vld [vmem:[%s393] sm:$0xf]
      %v395 = vld [vmem:[%s393 + $0x4] sm:$0xf]
      %v396 = vld [vmem:[%s393 + $0x8] sm:$0xf]
      %v397 = vld [vmem:[%s393 + $0xc] sm:$0xf]
      %v399 = vunpack.c.l.b16 %v392
      %v400 = vpack.c.b16 %v399, %v191
      %vm401 = vsmask.f32 4352
      %v403 = vshrl.u32 %v347, 16
      %v405 = vrot.slane %v403, 3
      %v406 = vshll.u32 %v347, 16
      %v408 = vrot.slane %v406, 4
      %v409 = vor.u32 %v405, %v408
      %v411 = vshrl.u32 %v400, 16
      %v413 = vrot.slane %v411, 3
      %v414 = vshll.u32 %v400, 16
      %v416 = vrot.slane %v414, 4
      %v417 = vor.u32 %v413, %v416
      %v418 = vsel %vm401, %v409, %v417
      %v423 = vunpack.c.l.b16 %v394
      %v424 = vunpack.c.l.b16 %v395
      %v425 = vunpack.c.l.b16 %v396
      %v426 = vunpack.c.l.b16 %v397
      %v427 = vpack.c.b16 %v424, %v423
      %v428 = vpack.c.b16 %v426, %v425
      %v432 = vsel %vm223, %v418, 0
      %v435 = vsel %vm223, %v417, 0
      %437 = vmatpush.bf16.msra.mxu0 0
      %438 = vmatpush.bf16.msra.mxu0 0
      %439 = vmatpush.bf16.msra.mxu0 0
      %440 = vmatpush.bf16.msra.mxu0 0
      %441 = vmatpush.bf16.msra.mxu0 0
      %442 = vmatpush.bf16.msra.mxu0 0
      %443 = vmatpush.bf16.msra.mxu0 %v428
      %444 = vmatpush.bf16.msra.mxu0 %v427
      %445 = vmatmul.bf16.gmra.mxu0 %v432
      %v446 = vpop.f32.mrf.mxu0
      %v447 = vadd.f32 0.0, %v446
      %v448 = vpop.f32.mrf.mxu0
      %v449 = vadd.f32 0.0, %v448
      %450 = vmatmul.bf16.gmra.mxu0 %v435
      %v451 = vpop.f32.mrf.mxu0
      %v452 = vadd.f32 0.0, %v451
      %v453 = vpop.f32.mrf.mxu0
      %454 = vdwg.mxu0
      %v455 = vadd.f32 %v389, %v447
      %v456 = vadd.f32 %v390, %v449
      %v457 = vadd.f32 %v391, %v452
      %s458 = scalar_lea.vmem %s1, 80
      %v459 = vld [vmem:[%s458] sm:$0xf]
      %v460 = vld [vmem:[%s458 + $0x4] sm:$0xf]
      %v461 = vld [vmem:[%s458 + $0x8] sm:$0xf]
      %v462 = vld [vmem:[%s458 + $0xc] sm:$0xf]
      %v463 = vpack.c.b16 %v191, %v190
      %v464 = vpack.c.b16 %v399, %v399
      %v469 = vunpack.c.l.b16 %v459
      %v470 = vunpack.c.l.b16 %v460
      %v471 = vunpack.c.l.b16 %v461
      %v472 = vunpack.c.l.b16 %v462
      %v473 = vpack.c.b16 %v470, %v469
      %v474 = vpack.c.b16 %v472, %v471
      %v478 = vsel %vm223, %v463, 0
      %v481 = vsel %vm223, %v464, 0
      %483 = vmatpush.bf16.msra.mxu0 0
      %484 = vmatpush.bf16.msra.mxu0 0
      %485 = vmatpush.bf16.msra.mxu0 0
      %486 = vmatpush.bf16.msra.mxu0 0
      %487 = vmatpush.bf16.msra.mxu0 0
      %488 = vmatpush.bf16.msra.mxu0 0
      %489 = vmatpush.bf16.msra.mxu0 %v474
      %490 = vmatpush.bf16.msra.mxu0 %v473
      %491 = vmatmul.bf16.gmra.mxu0 %v478
      %v492 = vpop.f32.mrf.mxu0
      %v493 = vadd.f32 0.0, %v492
      %v494 = vpop.f32.mrf.mxu0
      %v495 = vadd.f32 0.0, %v494
      %496 = vmatmul.bf16.gmra.mxu0 %v481
      %v497 = vpop.f32.mrf.mxu0
      %v498 = vadd.f32 0.0, %v497
      %v499 = vpop.f32.mrf.mxu0
      %500 = vdwg.mxu0
      %v501 = vadd.f32 %v455, %v493
      %v502 = vadd.f32 %v456, %v495
      %v503 = vadd.f32 %v457, %v498
      %v504 = vld [vmem:[%s165 + $0x4] sm:$0xc]
      %v505 = vld [vmem:[%s165 + $0x8] sm:$0xf]
      %v506 = vld [vmem:[%s165 + $0xc] sm:$0xf]
      %v507 = vld [vmem:[%s165 + $0x10] sm:$0x3]
      %s508 = scalar_lea.vmem %s1, 96
      %v509 = vld [vmem:[%s508] sm:$0xf]
      %v510 = vld [vmem:[%s508 + $0x4] sm:$0xf]
      %v511 = vld [vmem:[%s508 + $0x8] sm:$0xf]
      %v512 = vld [vmem:[%s508 + $0xc] sm:$0xf]
      %v517 = vunpack.c.l.b16 %v504
      %v518 = vunpack.c.l.b16 %v505
      %v519 = vunpack.c.l.b16 %v506
      %v520 = vunpack.c.l.b16 %v507
      %v521 = vpack.c.b16 %v518, %v517
      %v522 = vpack.c.b16 %v520, %v519
      %vm523 = vcmask 1045504
      %v524 = vrot.slane %v521, 2
      %v525 = vrot.slane %v522, 2
      %v526 = vsel %vm523, %v524, %v525
      %v531 = vunpack.c.l.b16 %v509
      %v532 = vunpack.c.l.b16 %v510
      %v533 = vunpack.c.l.b16 %v511
      %v534 = vunpack.c.l.b16 %v512
      %v535 = vpack.c.b16 %v532, %v531
      %v536 = vpack.c.b16 %v534, %v533
      %v540 = vsel %vm223, %v526, 0
      %v543 = vsel %vm223, %v525, 0
      %545 = vmatpush.bf16.msra.mxu0 0
      %546 = vmatpush.bf16.msra.mxu0 0
      %547 = vmatpush.bf16.msra.mxu0 0
      %548 = vmatpush.bf16.msra.mxu0 0
      %549 = vmatpush.bf16.msra.mxu0 0
      %550 = vmatpush.bf16.msra.mxu0 0
      %551 = vmatpush.bf16.msra.mxu0 %v536
      %552 = vmatpush.bf16.msra.mxu0 %v535
      %553 = vmatmul.bf16.gmra.mxu0 %v540
      %v554 = vpop.f32.mrf.mxu0
      %v555 = vadd.f32 0.0, %v554
      %v556 = vpop.f32.mrf.mxu0
      %v557 = vadd.f32 0.0, %v556
      %558 = vmatmul.bf16.gmra.mxu0 %v543
      %v559 = vpop.f32.mrf.mxu0
      %v560 = vadd.f32 0.0, %v559
      %v561 = vpop.f32.mrf.mxu0
      %562 = vdwg.mxu0
      %v563 = vadd.f32 %v501, %v555
      %v564 = vadd.f32 %v502, %v557
      %v565 = vadd.f32 %v503, %v560
      %v566 = vld [vmem:[%s165 + $0x10] sm:$0x7]
      %s567 = scalar_lea.vmem %s1, 112
      %v568 = vld [vmem:[%s567] sm:$0xf]
      %v569 = vld [vmem:[%s567 + $0x4] sm:$0xf]
      %v570 = vld [vmem:[%s567 + $0x8] sm:$0xf]
      %v571 = vld [vmem:[%s567 + $0xc] sm:$0xf]
      %v573 = vunpack.c.l.b16 %v566
      %v574 = vpack.c.b16 %v573, %v519
      %vm575 = vsmask.f32 5376
      %v577 = vshrl.u32 %v521, 16
      %v579 = vrot.slane %v577, 2
      %v580 = vshll.u32 %v521, 16
      %v582 = vrot.slane %v580, 3
      %v583 = vor.u32 %v579, %v582
      %v585 = vshrl.u32 %v574, 16
      %v587 = vrot.slane %v585, 2
      %v588 = vshll.u32 %v574, 16
      %v590 = vrot.slane %v588, 3
      %v591 = vor.u32 %v587, %v590
      %v592 = vsel %vm575, %v583, %v591
      %v597 = vunpack.c.l.b16 %v568
      %v598 = vunpack.c.l.b16 %v569
      %v599 = vunpack.c.l.b16 %v570
      %v600 = vunpack.c.l.b16 %v571
      %v601 = vpack.c.b16 %v598, %v597
      %v602 = vpack.c.b16 %v600, %v599
      %v606 = vsel %vm223, %v592, 0
      %v609 = vsel %vm223, %v591, 0
      %611 = vmatpush.bf16.msra.mxu0 0
      %612 = vmatpush.bf16.msra.mxu0 0
      %613 = vmatpush.bf16.msra.mxu0 0
      %614 = vmatpush.bf16.msra.mxu0 0
      %615 = vmatpush.bf16.msra.mxu0 0
      %616 = vmatpush.bf16.msra.mxu0 0
      %617 = vmatpush.bf16.msra.mxu0 %v602
      %618 = vmatpush.bf16.msra.mxu0 %v601
      %619 = vmatmul.bf16.gmra.mxu0 %v606
      %v620 = vpop.f32.mrf.mxu0
      %v621 = vadd.f32 0.0, %v620
      %v622 = vpop.f32.mrf.mxu0
      %v623 = vadd.f32 0.0, %v622
      %624 = vmatmul.bf16.gmra.mxu0 %v609
      %v625 = vpop.f32.mrf.mxu0
      %v626 = vadd.f32 0.0, %v625
      %v627 = vpop.f32.mrf.mxu0
      %628 = vdwg.mxu0
      %v629 = vadd.f32 %v563, %v621
      %v630 = vadd.f32 %v564, %v623
      %v631 = vadd.f32 %v565, %v626
      %v632 = vld [vmem:[%s165 + $0x4] sm:$0x8]
      %s633 = scalar_lea.vmem %s1, 128
      %v634 = vld [vmem:[%s633] sm:$0xf]
      %v635 = vld [vmem:[%s633 + $0x4] sm:$0xf]
      %v636 = vld [vmem:[%s633 + $0x8] sm:$0xf]
      %v637 = vld [vmem:[%s633 + $0xc] sm:$0xf]
      %v639 = vunpack.c.l.b16 %v632
      %v640 = vpack.c.b16 %v518, %v639
      %v641 = vrot.slane %v640, 3
      %v642 = vrot.slane %v574, 3
      %v643 = vsel %vm349, %v641, %v642
      %v648 = vunpack.c.l.b16 %v634
      %v649 = vunpack.c.l.b16 %v635
      %v650 = vunpack.c.l.b16 %v636
      %v651 = vunpack.c.l.b16 %v637
      %v652 = vpack.c.b16 %v649, %v648
      %v653 = vpack.c.b16 %v651, %v650
      %v657 = vsel %vm223, %v643, 0
      %v660 = vsel %vm223, %v642, 0
      %662 = vmatpush.bf16.msra.mxu0 0
      %663 = vmatpush.bf16.msra.mxu0 0
      %664 = vmatpush.bf16.msra.mxu0 0
      %665 = vmatpush.bf16.msra.mxu0 0
      %666 = vmatpush.bf16.msra.mxu0 0
      %667 = vmatpush.bf16.msra.mxu0 0
      %668 = vmatpush.bf16.msra.mxu0 %v653
      %669 = vmatpush.bf16.msra.mxu0 %v652
      %670 = vmatmul.bf16.gmra.mxu0 %v657
      %v671 = vpop.f32.mrf.mxu0
      %v672 = vadd.f32 0.0, %v671
      %v673 = vpop.f32.mrf.mxu0
      %v674 = vadd.f32 0.0, %v673
      %675 = vmatmul.bf16.gmra.mxu0 %v660
      %v676 = vpop.f32.mrf.mxu0
      %v677 = vadd.f32 0.0, %v676
      %v678 = vpop.f32.mrf.mxu0
      %679 = vdwg.mxu0
      %v680 = vadd.f32 %v629, %v672
      %v681 = vadd.f32 %v630, %v674
      %v682 = vadd.f32 %v631, %v677
      %v683 = vld [vmem:[%s2] sm:$0x1]
      %v685 = vperm.slane %v683, 0
      %v687 = vadd.f32 %v680, %v685
      %v688 = vadd.f32 %v681, %v685
      %v689 = vadd.f32 %v682, %v685
      %690 = vst.msk [vmem:[%s170] sm:$0xff] %vm223, %v687
      %691 = vst.msk [vmem:[%s170 + $0x8] sm:$0xff] %vm223, %v688
      %692 = vst.msk [vmem:[%s170 + $0x10] sm:$0xff] %vm223, %v689
      %p693 = scmp.lt.s32.totalorder %s14, 1
      %s694 = scalar_select %p693, %s14, 1
      %s695 = smul.addr %s694, 3
      %s696 = smul.addr %s695, 8
      %s697 = scalar_lea.vmem %s3, %s696
      // Predicated region
      $region33: #{fpn_forward_pallas.11} parent=31 // pred_check
        %p698 = pneg %p100
      $region34: #{fpn_forward_pallas.11} parent=31 // pred_check_branch
        %700 = sbr.rel (%p698) target = $region36
      $region35: #{fpn_forward_pallas.11} parent=31 // pred_region
        _
      $region36: #{fpn_forward_pallas.11} parent=31 // pred_fallthru
        _
    $region32: #{fpn_forward_pallas.11} parent=5 // pred_fallthru
      _
    %p701 = scmp.le.s32.totalorder 2, %s9
    // Predicated region
    $region37: #{fpn_forward_pallas.11} parent=5 // pred_check
      %p702 = pneg %p701
    $region38: #{fpn_forward_pallas.11} parent=5 // pred_check_branch
      %704 = sbr.rel (%p702) target = $region40
    $region39: #{fpn_forward_pallas.11} parent=5 // pred_region
      %s705 = ssub.s32 %s9, 2
      // Predicated region
      $region41: #{fpn_forward_pallas.11} parent=39 // pred_check
        %p706 = pneg %p106
      $region42: #{fpn_forward_pallas.11} parent=39 // pred_check_branch
        %708 = sbr.rel (%p706) target = $region44
      $region43: #{fpn_forward_pallas.11} parent=39 // pred_region
        %p709 = scmp.lt.s32.totalorder %s15, 1
        %s710 = scalar_select %p709, %s15, 1
        %s711 = smul.addr %s710, 3
        %s712 = smul.addr %s711, 8
        %s713 = scalar_lea.vmem %s3, %s712
      $region44: #{fpn_forward_pallas.11} parent=39 // pred_fallthru
        _
    $region40: #{fpn_forward_pallas.11} parent=5 // pred_fallthru
      _
  $region6: #{fpn_forward_pallas.11} parent=0 // loop_footer
    %s13 = sadd.s32 1, %s9
  $region7: #{fpn_forward_pallas.11} parent=0 // loop_footer_branch
    %8 = sbr.rel target = $region3
  $region8: #{fpn_forward_pallas.11} parent=0 // loop_exit
    _

// kernel: fpn_forward_pallas.12
$region0: #{fpn_forward_pallas.12}
  #allocation0 [shape = 'u32[]', space=smem, size = 0x4, offset = 0x4, fixed_abs, tag = 'smem constant byte address 0x4 - core index']
  #allocation1 [shape = 'u32[72,128]{1,0:T(1,128)}', space=vmem, size = 0x9000, scoped, tag = 'internal scratch']
  %s0 = inlined_call_operand.vmem [shape: bf16[2,110,32], index: 0, kind: input, shape index: {}]
  %s1 = inlined_call_operand.vmem [shape: bf16[9,32,32], index: 1, kind: input, shape index: {}]
  %s2 = inlined_call_operand.vmem [shape: f32[1,32], index: 2, kind: input, shape index: {}]
  %s3 = inlined_call_operand.vmem [shape: f32[2,80,32], index: 3, kind: output, shape index: {}]
  %s4 = sld [smem:[#allocation0]]
  $region45: #{fpn_forward_pallas.12} parent=0
    _
  %s6 = ssub.s32 1, %s4
  %s7 = scalar_select 0, %s6, %s4
  loop: start=0, step=1, limit=4
  $region2: #{fpn_forward_pallas.12} parent=0 // loop_pre_header
    _
  $region3: #{fpn_forward_pallas.12} parent=0 // loop_header
    %s9 = sphi 0, %s13
    %p10 = scmp.ge.s32.totalorder %s9, 4
    %s19 = sphi 0, %s21
    %s22 = sphi 0, %s19
    %s23 = sphi 0, %s22
    %s39 = sphi 0, %s23
    %s43 = sphi 0, %s43
    %s45 = sphi 0, %s43
    %s46 = sphi 0, %s45
    %s60 = sphi 0, %s46
    %s64 = sphi 0, %s64
    %s66 = sphi 0, %s64
    %s67 = sphi 0, %s66
    %s81 = sphi 0, %s67
    %s87 = sphi 0, %s89
    %s90 = sphi 0, %s87
    %s91 = sphi 0, %s90
    %s107 = sphi 0, %s91
  $region4: #{fpn_forward_pallas.12} parent=0 // loop_header_branch
    %12 = sbr.rel (%p10) target = $region8
  $region5: #{fpn_forward_pallas.12} parent=0 // loop_body
    %s14 = ssub.s32 %s9, 1
    %s15 = ssub.s32 %s9, 2
    %s16 = sadd.s32 %s9, 1
    %s17 = ssub.s32 %s9, %s16
    %p18 = scmp.eq.s32.totalorder %s17, 0
    %s20 = sadd.s32 %s19, 1
    %s21 = scalar_select %p18, %s19, %s20
    %p24 = pneg %p18
    %p25 = scmp.eq.s32.totalorder %s9, 1
    %p26 = por %p24, %p25
    %p27 = scmp.ne.s32.totalorder %s19, %s22
    %p28 = scmp.eq.s32.totalorder %s9, 0
    %p29 = por %p27, %p28
    %p30 = scmp.ne.s32.totalorder %s19, %s22
    %p31 = scmp.eq.s32.totalorder %s14, 1
    %p32 = por %p30, %p31
    %p33 = scmp.ne.s32.totalorder %s22, %s23
    %p34 = scmp.eq.s32.totalorder %s14, 0
    %p35 = por %p33, %p34
    %p36 = scmp.ne.s32.totalorder %s22, %s23
    %p37 = scmp.eq.s32.totalorder %s15, 1
    %p38 = por %p36, %p37
    %p40 = scmp.ne.s32.totalorder %s23, %s39
    %p41 = scmp.eq.s32.totalorder %s15, 0
    %p42 = por %p40, %p41
    %s44 = sadd.s32 %s43, 1
    %p47 = scmp.eq.s32.totalorder %s9, 1
    %p48 = scmp.ne.s32.totalorder %s43, %s45
    %p49 = scmp.eq.s32.totalorder %s9, 0
    %p50 = por %p48, %p49
    %p51 = scmp.ne.s32.totalorder %s43, %s45
    %p52 = scmp.eq.s32.totalorder %s14, 1
    %p53 = por %p51, %p52
    %p54 = scmp.ne.s32.totalorder %s45, %s46
    %p55 = scmp.eq.s32.totalorder %s14, 0
    %p56 = por %p54, %p55
    %p57 = scmp.ne.s32.totalorder %s45, %s46
    %p58 = scmp.eq.s32.totalorder %s15, 1
    %p59 = por %p57, %p58
    %p61 = scmp.ne.s32.totalorder %s46, %s60
    %p62 = scmp.eq.s32.totalorder %s15, 0
    %p63 = por %p61, %p62
    %s65 = sadd.s32 %s64, 1
    %p68 = scmp.eq.s32.totalorder %s9, 1
    %p69 = scmp.ne.s32.totalorder %s64, %s66
    %p70 = scmp.eq.s32.totalorder %s9, 0
    %p71 = por %p69, %p70
    %p72 = scmp.ne.s32.totalorder %s64, %s66
    %p73 = scmp.eq.s32.totalorder %s14, 1
    %p74 = por %p72, %p73
    %p75 = scmp.ne.s32.totalorder %s66, %s67
    %p76 = scmp.eq.s32.totalorder %s14, 0
    %p77 = por %p75, %p76
    %p78 = scmp.ne.s32.totalorder %s66, %s67
    %p79 = scmp.eq.s32.totalorder %s15, 1
    %p80 = por %p78, %p79
    %p82 = scmp.ne.s32.totalorder %s67, %s81
    %p83 = scmp.eq.s32.totalorder %s15, 0
    %p84 = por %p82, %p83
    %s85 = ssub.s32 %s9, %s16
    %p86 = scmp.eq.s32.totalorder %s85, 0
    %s88 = sadd.s32 %s87, 1
    %s89 = scalar_select %p86, %s87, %s88
    %p92 = pneg %p86
    %p93 = scmp.eq.s32.totalorder %s9, 1
    %p94 = por %p92, %p93
    %p95 = scmp.ne.s32.totalorder %s87, %s90
    %p96 = scmp.eq.s32.totalorder %s9, 0
    %p97 = por %p95, %p96
    %p98 = scmp.ne.s32.totalorder %s87, %s90
    %p99 = scmp.eq.s32.totalorder %s14, 1
    %p100 = por %p98, %p99
    %p101 = scmp.ne.s32.totalorder %s90, %s91
    %p102 = scmp.eq.s32.totalorder %s14, 0
    %p103 = por %p101, %p102
    %p104 = scmp.ne.s32.totalorder %s90, %s91
    %p105 = scmp.eq.s32.totalorder %s15, 1
    %p106 = por %p104, %p105
    %p108 = scmp.ne.s32.totalorder %s91, %s107
    %p109 = scmp.eq.s32.totalorder %s15, 0
    %p110 = por %p108, %p109
    %p111 = scmp.le.s32.totalorder 1, %s9
    %p112 = scmp.lt.s32.totalorder %s9, 3
    %p113 = pnand %p111, %p112
    %p114 = pneg %p113
    // Predicated region
    $region9: #{fpn_forward_pallas.12} parent=5 // pred_check
      _
    $region10: #{fpn_forward_pallas.12} parent=5 // pred_check_branch
      %116 = sbr.rel (%p113) target = $region12
    $region11: #{fpn_forward_pallas.12} parent=5 // pred_region
      %s117 = ssub.s32 %s9, 1
      // Predicated region
      $region13: #{fpn_forward_pallas.12} parent=11 // pred_check
        %p118 = pneg %p56
      $region14: #{fpn_forward_pallas.12} parent=11 // pred_check_branch
        %120 = sbr.rel (%p118) target = $region16
      $region15: #{fpn_forward_pallas.12} parent=11 // pred_region
        _
      $region16: #{fpn_forward_pallas.12} parent=11 // pred_fallthru
        _
      // Predicated region
      $region17: #{fpn_forward_pallas.12} parent=11 // pred_check
        %p121 = pneg %p77
      $region18: #{fpn_forward_pallas.12} parent=11 // pred_check_branch
        %123 = sbr.rel (%p121) target = $region20
      $region19: #{fpn_forward_pallas.12} parent=11 // pred_region
        _
      $region20: #{fpn_forward_pallas.12} parent=11 // pred_fallthru
        _
    $region12: #{fpn_forward_pallas.12} parent=5 // pred_fallthru
      _
    %p124 = scmp.lt.s32.totalorder %s9, 2
    // Predicated region
    $region21: #{fpn_forward_pallas.12} parent=5 // pred_check
      %p125 = pneg %p124
    $region22: #{fpn_forward_pallas.12} parent=5 // pred_check_branch
      %127 = sbr.rel (%p125) target = $region24
    $region23: #{fpn_forward_pallas.12} parent=5 // pred_region
      // Predicated region
      $region25: #{fpn_forward_pallas.12} parent=23 // pred_check
        %p128 = pneg %p29
      $region26: #{fpn_forward_pallas.12} parent=23 // pred_check_branch
        %130 = sbr.rel (%p128) target = $region28
      $region27: #{fpn_forward_pallas.12} parent=23 // pred_region
        %p131 = scmp.lt.s32.totalorder %s9, 1
        %s132 = scalar_select %p131, %s9, 1
        %s133 = smul.addr %s132, 14
        %s134 = smul.addr %s133, 4
        %s135 = scalar_lea.vmem %s0, %s134
      $region28: #{fpn_forward_pallas.12} parent=23 // pred_fallthru
        _
    $region24: #{fpn_forward_pallas.12} parent=5 // pred_fallthru
      _
    %p136 = scmp.le.s32.totalorder 1, %s9
    %p137 = scmp.lt.s32.totalorder %s9, 3
    %p138 = pnand %p136, %p137
    %p139 = pneg %p138
    // Predicated region
    $region29: #{fpn_forward_pallas.12} parent=5 // pred_check
      _
    $region30: #{fpn_forward_pallas.12} parent=5 // pred_check_branch
      %141 = sbr.rel (%p138) target = $region32
    $region31: #{fpn_forward_pallas.12} parent=5 // pred_region
      %s142 = ssub.s32 %s9, 1
      %p143 = scmp.lt.s32.totalorder %s14, 1
      %s144 = scalar_select %p143, %s14, 1
      %s145 = smul.addr %s144, 14
      %s146 = smul.addr %s145, 4
      %s147 = scalar_lea.vmem %s0, %s146
      %p148 = pneg %p35
      %p149 = pneg %p32
      %p150 = pneg %p56
      %p151 = pneg %p53
      %p152 = pneg %p77
      %p153 = pneg %p74
      %p154 = pneg %p103
      %p155 = pneg %p100
      %p156 = scmp.lt.s32.totalorder %s14, 1
      %s157 = scalar_select %p156, %s14, 1
      %s158 = smul.addr %s157, 10
      %s159 = smul.addr %s158, 8
      %s160 = scalar_lea.vmem %s3, %s159
      %p161 = scmp.lt.s32.totalorder %s14, 1
      %s162 = scalar_select %p161, %s14, 1
      %s163 = smul.addr %s162, 14
      %s164 = smul.addr %s163, 4
      %s165 = scalar_lea.vmem %s0, %s164
      %p166 = scmp.lt.s32.totalorder %s14, 1
      %s167 = scalar_select %p166, %s14, 1
      %s168 = smul.addr %s167, 10
      %s169 = smul.addr %s168, 8
      %s170 = scalar_lea.vmem %s3, %s169
      %v172 = vld [vmem:[%s165] sm:$0xf]
      %v173 = vld [vmem:[%s165 + $0x4] sm:$0xf]
      %v174 = vld [vmem:[%s165 + $0x8] sm:$0xf]
      %v175 = vld [vmem:[%s165 + $0xc] sm:$0xf]
      %v176 = vld [vmem:[%s165 + $0x10] sm:$0xf]
      %v177 = vld [vmem:[%s165 + $0x14] sm:$0xf]
      %v178 = vld [vmem:[%s165 + $0x18] sm:$0xf]
      %v179 = vld [vmem:[%s165 + $0x1c] sm:$0xf]
      %v180 = vld [vmem:[%s165 + $0x20] sm:$0xf]
      %v181 = vld [vmem:[%s165 + $0x24] sm:$0xf]
      %v182 = vld [vmem:[%s1] sm:$0xf]
      %v183 = vld [vmem:[%s1 + $0x4] sm:$0xf]
      %v184 = vld [vmem:[%s1 + $0x8] sm:$0xf]
      %v185 = vld [vmem:[%s1 + $0xc] sm:$0xf]
      %v186 = vld [vmem:[%s165 + $0x28] sm:$0x1]
      %s187 = scalar_lea.vmem %s1, 16
      %v188 = vld [vmem:[%s187] sm:$0xf]
      %v189 = vld [vmem:[%s187 + $0x4] sm:$0xf]
      %v190 = vld [vmem:[%s187 + $0x8] sm:$0xf]
      %v191 = vld [vmem:[%s187 + $0xc] sm:$0xf]
      %v203 = vunpack.c.l.b16 %v172
      %v204 = vunpack.c.l.b16 %v173
      %v205 = vunpack.c.l.b16 %v174
      %v206 = vunpack.c.l.b16 %v175
      %v207 = vunpack.c.l.b16 %v176
      %v208 = vunpack.c.l.b16 %v177
      %v209 = vunpack.c.l.b16 %v178
      %v210 = vunpack.c.l.b16 %v179
      %v211 = vunpack.c.l.b16 %v180
      %v212 = vunpack.c.l.b16 %v181
      %v213 = vunpack.c.l.b16 %v186
      %v214 = vpack.c.b16 %v204, %v203
      %v215 = vpack.c.b16 %v206, %v205
      %v216 = vpack.c.b16 %v208, %v207
      %v217 = vpack.c.b16 %v210, %v209
      %v218 = vpack.c.b16 %v212, %v211
      %v219 = vpack.c.b16 %v213, %v213
      %vm220 = vsmask.f32 7424
      %v222 = vshrl.u32 %v214, 16
      %v224 = vshll.u32 %v214, 16
      %v226 = vrot.slane %v224, 1
      %v227 = vor.u32 %v222, %v226
      %v229 = vshll.u32 %v215, 16
      %v231 = vrot.slane %v229, 1
      %v232 = vsel %vm220, %v227, %v231
      %v233 = vshrl.u32 %v215, 16
      %v235 = vor.u32 %v233, %v231
      %v237 = vshll.u32 %v216, 16
      %v239 = vrot.slane %v237, 1
      %v240 = vsel %vm220, %v235, %v239
      %v241 = vshrl.u32 %v216, 16
      %v243 = vor.u32 %v241, %v239
      %v245 = vshll.u32 %v217, 16
      %v247 = vrot.slane %v245, 1
      %v248 = vsel %vm220, %v243, %v247
      %v249 = vshrl.u32 %v217, 16
      %v251 = vor.u32 %v249, %v247
      %v253 = vshll.u32 %v218, 16
      %v255 = vrot.slane %v253, 1
      %v256 = vsel %vm220, %v251, %v255
      %v257 = vshrl.u32 %v218, 16
      %v259 = vor.u32 %v257, %v255
      %v261 = vshll.u32 %v219, 16
      %v263 = vrot.slane %v261, 1
      %v264 = vsel %vm220, %v259, %v263
      %v269 = vunpack.c.l.b16 %v188
      %v270 = vunpack.c.l.b16 %v189
      %v271 = vunpack.c.l.b16 %v190
      %v272 = vunpack.c.l.b16 %v191
      %v273 = vpack.c.b16 %v270, %v269
      %v274 = vpack.c.b16 %v272, %v271
      %vm277 = vcmask 261120
      %v279 = vsel %vm277, %v232, 0
      %v282 = vsel %vm277, %v240, 0
      %v285 = vsel %vm277, %v248, 0
      %v288 = vsel %vm277, %v256, 0
      %v291 = vsel %vm277, %v264, 0
      %293 = vmatpush.bf16.msra.mxu0 0
      %294 = vmatpush.bf16.msra.mxu0 0
      %295 = vmatpush.bf16.msra.mxu0 0
      %296 = vmatpush.bf16.msra.mxu0 0
      %297 = vmatpush.bf16.msra.mxu0 0
      %298 = vmatpush.bf16.msra.mxu0 0
      %299 = vmatpush.bf16.msra.mxu0 %v274
      %300 = vmatpush.bf16.msra.mxu0 %v273
      %301 = vmatmul.bf16.gmra.mxu0 %v279
      %v302 = vpop.f32.mrf.mxu0
      %v303 = vadd.f32 0.0, %v302
      %v304 = vpop.f32.mrf.mxu0
      %v305 = vadd.f32 0.0, %v304
      %306 = vmatmul.bf16.gmra.mxu0 %v282
      %v307 = vpop.f32.mrf.mxu0
      %v308 = vadd.f32 0.0, %v307
      %v309 = vpop.f32.mrf.mxu0
      %v310 = vadd.f32 0.0, %v309
      %311 = vmatmul.bf16.gmra.mxu0 %v285
      %v312 = vpop.f32.mrf.mxu0
      %v313 = vadd.f32 0.0, %v312
      %v314 = vpop.f32.mrf.mxu0
      %v315 = vadd.f32 0.0, %v314
      %316 = vmatmul.bf16.gmra.mxu0 %v288
      %v317 = vpop.f32.mrf.mxu0
      %v318 = vadd.f32 0.0, %v317
      %v319 = vpop.f32.mrf.mxu0
      %v320 = vadd.f32 0.0, %v319
      %321 = vmatmul.bf16.gmra.mxu0 %v291
      %v322 = vpop.f32.mrf.mxu0
      %v323 = vadd.f32 0.0, %v322
      %v324 = vpop.f32.mrf.mxu0
      %v325 = vadd.f32 0.0, %v324
      %326 = vdwg.mxu0
      %v331 = vunpack.c.l.b16 %v182
      %v332 = vunpack.c.l.b16 %v183
      %v333 = vunpack.c.l.b16 %v184
      %v334 = vunpack.c.l.b16 %v185
      %v335 = vpack.c.b16 %v332, %v331
      %v336 = vpack.c.b16 %v334, %v333
      %v339 = vsel %vm277, %v214, 0
      %v341 = vsel %vm277, %v215, 0
      %v343 = vsel %vm277, %v216, 0
      %v345 = vsel %vm277, %v217, 0
      %v347 = vsel %vm277, %v218, 0
      %349 = vmatpush.bf16.msra.mxu0 0
      %350 = vmatpush.bf16.msra.mxu0 0
      %351 = vmatpush.bf16.msra.mxu0 0
      %352 = vmatpush.bf16.msra.mxu0 0
      %353 = vmatpush.bf16.msra.mxu0 0
      %354 = vmatpush.bf16.msra.mxu0 0
      %355 = vmatpush.bf16.msra.mxu0 %v336
      %356 = vmatpush.bf16.msra.mxu0 %v335
      %357 = vmatmul.bf16.gmra.mxu0 %v339
      %v358 = vpop.f32.mrf.mxu0
      %v359 = vadd.f32 %v303, %v358
      %v360 = vpop.f32.mrf.mxu0
      %v361 = vadd.f32 %v305, %v360
      %362 = vmatmul.bf16.gmra.mxu0 %v341
      %v363 = vpop.f32.mrf.mxu0
      %v364 = vadd.f32 %v308, %v363
      %v365 = vpop.f32.mrf.mxu0
      %v366 = vadd.f32 %v310, %v365
      %367 = vmatmul.bf16.gmra.mxu0 %v343
      %v368 = vpop.f32.mrf.mxu0
      %v369 = vadd.f32 %v313, %v368
      %v370 = vpop.f32.mrf.mxu0
      %v371 = vadd.f32 %v315, %v370
      %372 = vmatmul.bf16.gmra.mxu0 %v345
      %v373 = vpop.f32.mrf.mxu0
      %v374 = vadd.f32 %v318, %v373
      %v375 = vpop.f32.mrf.mxu0
      %v376 = vadd.f32 %v320, %v375
      %377 = vmatmul.bf16.gmra.mxu0 %v347
      %v378 = vpop.f32.mrf.mxu0
      %v379 = vadd.f32 %v323, %v378
      %v380 = vpop.f32.mrf.mxu0
      %v381 = vadd.f32 %v325, %v380
      %382 = vdwg.mxu0
      %v383 = vld [vmem:[%s165] sm:$0xe]
      %s384 = scalar_lea.vmem %s1, 32
      %v385 = vld [vmem:[%s384] sm:$0xf]
      %v386 = vld [vmem:[%s384 + $0x4] sm:$0xf]
      %v387 = vld [vmem:[%s384 + $0x8] sm:$0xf]
      %v388 = vld [vmem:[%s384 + $0xc] sm:$0xf]
      %v390 = vunpack.c.l.b16 %v383
      %v391 = vpack.c.b16 %v204, %v390
      %vm392 = vcmask 1046528
      %v393 = vrot.slane %v391, 1
      %v394 = vrot.slane %v215, 1
      %v395 = vsel %vm392, %v393, %v394
      %v396 = vrot.slane %v216, 1
      %v397 = vsel %vm392, %v394, %v396
      %v398 = vrot.slane %v217, 1
      %v399 = vsel %vm392, %v396, %v398
      %v400 = vrot.slane %v218, 1
      %v401 = vsel %vm392, %v398, %v400
      %v402 = vrot.slane %v219, 1
      %v403 = vsel %vm392, %v400, %v402
      %v408 = vunpack.c.l.b16 %v385
      %v409 = vunpack.c.l.b16 %v386
      %v410 = vunpack.c.l.b16 %v387
      %v411 = vunpack.c.l.b16 %v388
      %v412 = vpack.c.b16 %v409, %v408
      %v413 = vpack.c.b16 %v411, %v410
      %v417 = vsel %vm277, %v395, 0
      %v420 = vsel %vm277, %v397, 0
      %v423 = vsel %vm277, %v399, 0
      %v426 = vsel %vm277, %v401, 0
      %v429 = vsel %vm277, %v403, 0
      %431 = vmatpush.bf16.msra.mxu0 0
      %432 = vmatpush.bf16.msra.mxu0 0
      %433 = vmatpush.bf16.msra.mxu0 0
      %434 = vmatpush.bf16.msra.mxu0 0
      %435 = vmatpush.bf16.msra.mxu0 0
      %436 = vmatpush.bf16.msra.mxu0 0
      %437 = vmatpush.bf16.msra.mxu0 %v413
      %438 = vmatpush.bf16.msra.mxu0 %v412
      %439 = vmatmul.bf16.gmra.mxu0 %v417
      %v440 = vpop.f32.mrf.mxu0
      %v441 = vadd.f32 0.0, %v440
      %v442 = vpop.f32.mrf.mxu0
      %v443 = vadd.f32 0.0, %v442
      %444 = vmatmul.bf16.gmra.mxu0 %v420
      %v445 = vpop.f32.mrf.mxu0
      %v446 = vadd.f32 0.0, %v445
      %v447 = vpop.f32.mrf.mxu0
      %v448 = vadd.f32 0.0, %v447
      %449 = vmatmul.bf16.gmra.mxu0 %v423
      %v450 = vpop.f32.mrf.mxu0
      %v451 = vadd.f32 0.0, %v450
      %v452 = vpop.f32.mrf.mxu0
      %v453 = vadd.f32 0.0, %v452
      %454 = vmatmul.bf16.gmra.mxu0 %v426
      %v455 = vpop.f32.mrf.mxu0
      %v456 = vadd.f32 0.0, %v455
      %v457 = vpop.f32.mrf.mxu0
      %v458 = vadd.f32 0.0, %v457
      %459 = vmatmul.bf16.gmra.mxu0 %v429
      %v460 = vpop.f32.mrf.mxu0
      %v461 = vadd.f32 0.0, %v460
      %v462 = vpop.f32.mrf.mxu0
      %v463 = vadd.f32 0.0, %v462
      %464 = vdwg.mxu0
      %v465 = vadd.f32 %v359, %v441
      %v466 = vadd.f32 %v361, %v443
      %v467 = vadd.f32 %v364, %v446
      %v468 = vadd.f32 %v366, %v448
      %v469 = vadd.f32 %v369, %v451
      %v470 = vadd.f32 %v371, %v453
      %v471 = vadd.f32 %v374, %v456
      %v472 = vadd.f32 %v376, %v458
      %v473 = vadd.f32 %v379, %v461
      %v474 = vadd.f32 %v381, %v463
      %v475 = vld [vmem:[%s165 + $0x4] sm:$0xe]
      %v476 = vld [vmem:[%s165 + $0x8] sm:$0xf]
      %v477 = vld [vmem:[%s165 + $0xc] sm:$0xf]
      %v478 = vld [vmem:[%s165 + $0x10] sm:$0xf]
      %v479 = vld [vmem:[%s165 + $0x14] sm:$0xf]
      %v480 = vld [vmem:[%s165 + $0x18] sm:$0xf]
      %v481 = vld [vmem:[%s165 + $0x1c] sm:$0xf]
      %v482 = vld [vmem:[%s165 + $0x20] sm:$0xf]
      %v483 = vld [vmem:[%s165 + $0x24] sm:$0xf]
      %v484 = vld [vmem:[%s165 + $0x28] sm:$0xf]
      %v485 = vld [vmem:[%s165 + $0x2c] sm:$0x1]
      %s486 = scalar_lea.vmem %s1, 48
      %v487 = vld [vmem:[%s486] sm:$0xf]
      %v488 = vld [vmem:[%s486 + $0x4] sm:$0xf]
      %v489 = vld [vmem:[%s486 + $0x8] sm:$0xf]
      %v490 = vld [vmem:[%s486 + $0xc] sm:$0xf]
      %v502 = vunpack.c.l.b16 %v475
      %v503 = vunpack.c.l.b16 %v476
      %v504 = vunpack.c.l.b16 %v477
      %v505 = vunpack.c.l.b16 %v478
      %v506 = vunpack.c.l.b16 %v479
      %v507 = vunpack.c.l.b16 %v480
      %v508 = vunpack.c.l.b16 %v481
      %v509 = vunpack.c.l.b16 %v482
      %v510 = vunpack.c.l.b16 %v483
      %v511 = vunpack.c.l.b16 %v484
      %v512 = vunpack.c.l.b16 %v485
      %v513 = vpack.c.b16 %v503, %v502
      %v514 = vpack.c.b16 %v505, %v504
      %v515 = vpack.c.b16 %v507, %v506
      %v516 = vpack.c.b16 %v509, %v508
      %v517 = vpack.c.b16 %v511, %v510
      %v518 = vpack.c.b16 %v512, %v512
      %v519 = vrot.slane %v513, 1
      %v520 = vrot.slane %v514, 1
      %v521 = vsel %vm392, %v519, %v520
      %v522 = vrot.slane %v515, 1
      %v523 = vsel %vm392, %v520, %v522
      %v524 = vrot.slane %v516, 1
      %v525 = vsel %vm392, %v522, %v524
      %v526 = vrot.slane %v517, 1
      %v527 = vsel %vm392, %v524, %v526
      %v528 = vrot.slane %v518, 1
      %v529 = vsel %vm392, %v526, %v528
      %v534 = vunpack.c.l.b16 %v487
      %v535 = vunpack.c.l.b16 %v488
      %v536 = vunpack.c.l.b16 %v489
      %v537 = vunpack.c.l.b16 %v490
      %v538 = vpack.c.b16 %v535, %v534
      %v539 = vpack.c.b16 %v537, %v536
      %v543 = vsel %vm277, %v521, 0
      %v546 = vsel %vm277, %v523, 0
      %v549 = vsel %vm277, %v525, 0
      %v552 = vsel %vm277, %v527, 0
      %v555 = vsel %vm277, %v529, 0
      %557 = vmatpush.bf16.msra.mxu0 0
      %558 = vmatpush.bf16.msra.mxu0 0
      %559 = vmatpush.bf16.msra.mxu0 0
      %560 = vmatpush.bf16.msra.mxu0 0
      %561 = vmatpush.bf16.msra.mxu0 0
      %562 = vmatpush.bf16.msra.mxu0 0
      %563 = vmatpush.bf16.msra.mxu0 %v539
      %564 = vmatpush.bf16.msra.mxu0 %v538
      %565 = vmatmul.bf16.gmra.mxu0 %v543
      %v566 = vpop.f32.mrf.mxu0
      %v567 = vadd.f32 0.0, %v566
      %v568 = vpop.f32.mrf.mxu0
      %v569 = vadd.f32 0.0, %v568
      %570 = vmatmul.bf16.gmra.mxu0 %v546
      %v571 = vpop.f32.mrf.mxu0
      %v572 = vadd.f32 0.0, %v571
      %v573 = vpop.f32.mrf.mxu0
      %v574 = vadd.f32 0.0, %v573
      %575 = vmatmul.bf16.gmra.mxu0 %v549
      %v576 = vpop.f32.mrf.mxu0
      %v577 = vadd.f32 0.0, %v576
      %v578 = vpop.f32.mrf.mxu0
      %v579 = vadd.f32 0.0, %v578
      %580 = vmatmul.bf16.gmra.mxu0 %v552
      %v581 = vpop.f32.mrf.mxu0
      %v582 = vadd.f32 0.0, %v581
      %v583 = vpop.f32.mrf.mxu0
      %v584 = vadd.f32 0.0, %v583
      %585 = vmatmul.bf16.gmra.mxu0 %v555
      %v586 = vpop.f32.mrf.mxu0
      %v587 = vadd.f32 0.0, %v586
      %v588 = vpop.f32.mrf.mxu0
      %v589 = vadd.f32 0.0, %v588
      %590 = vdwg.mxu0
      %v591 = vadd.f32 %v465, %v567
      %v592 = vadd.f32 %v466, %v569
      %v593 = vadd.f32 %v467, %v572
      %v594 = vadd.f32 %v468, %v574
      %v595 = vadd.f32 %v469, %v577
      %v596 = vadd.f32 %v470, %v579
      %v597 = vadd.f32 %v471, %v582
      %v598 = vadd.f32 %v472, %v584
      %v599 = vadd.f32 %v473, %v587
      %v600 = vadd.f32 %v474, %v589
      %v601 = vld [vmem:[%s165 + $0x2c] sm:$0x3]
      %s602 = scalar_lea.vmem %s1, 64
      %v603 = vld [vmem:[%s602] sm:$0xf]
      %v604 = vld [vmem:[%s602 + $0x4] sm:$0xf]
      %v605 = vld [vmem:[%s602 + $0x8] sm:$0xf]
      %v606 = vld [vmem:[%s602 + $0xc] sm:$0xf]
      %v608 = vunpack.c.l.b16 %v601
      %v609 = vpack.c.b16 %v608, %v608
      %vm610 = vsmask.f32 6400
      %v612 = vshrl.u32 %v513, 16
      %v614 = vrot.slane %v612, 1
      %v615 = vshll.u32 %v513, 16
      %v617 = vrot.slane %v615, 2
      %v618 = vor.u32 %v614, %v617
      %v620 = vshrl.u32 %v514, 16
      %v622 = vrot.slane %v620, 1
      %v623 = vshll.u32 %v514, 16
      %v625 = vrot.slane %v623, 2
      %v626 = vor.u32 %v622, %v625
      %v627 = vsel %vm610, %v618, %v626
      %v629 = vshrl.u32 %v515, 16
      %v631 = vrot.slane %v629, 1
      %v632 = vshll.u32 %v515, 16
      %v634 = vrot.slane %v632, 2
      %v635 = vor.u32 %v631, %v634
      %v636 = vsel %vm610, %v626, %v635
      %v638 = vshrl.u32 %v516, 16
      %v640 = vrot.slane %v638, 1
      %v641 = vshll.u32 %v516, 16
      %v643 = vrot.slane %v641, 2
      %v644 = vor.u32 %v640, %v643
      %v645 = vsel %vm610, %v635, %v644
      %v647 = vshrl.u32 %v517, 16
      %v649 = vrot.slane %v647, 1
      %v650 = vshll.u32 %v517, 16
      %v652 = vrot.slane %v650, 2
      %v653 = vor.u32 %v649, %v652
      %v654 = vsel %vm610, %v644, %v653
      %v656 = vshrl.u32 %v609, 16
      %v658 = vrot.slane %v656, 1
      %v659 = vshll.u32 %v609, 16
      %v661 = vrot.slane %v659, 2
      %v662 = vor.u32 %v658, %v661
      %v663 = vsel %vm610, %v653, %v662
      %v668 = vunpack.c.l.b16 %v603
      %v669 = vunpack.c.l.b16 %v604
      %v670 = vunpack.c.l.b16 %v605
      %v671 = vunpack.c.l.b16 %v606
      %v672 = vpack.c.b16 %v669, %v668
      %v673 = vpack.c.b16 %v671, %v670
      %v677 = vsel %vm277, %v627, 0
      %v680 = vsel %vm277, %v636, 0
      %v683 = vsel %vm277, %v645, 0
      %v686 = vsel %vm277, %v654, 0
      %v689 = vsel %vm277, %v663, 0
      %691 = vmatpush.bf16.msra.mxu0 0
      %692 = vmatpush.bf16.msra.mxu0 0
      %693 = vmatpush.bf16.msra.mxu0 0
      %694 = vmatpush.bf16.msra.mxu0 0
      %695 = vmatpush.bf16.msra.mxu0 0
      %696 = vmatpush.bf16.msra.mxu0 0
      %697 = vmatpush.bf16.msra.mxu0 %v673
      %698 = vmatpush.bf16.msra.mxu0 %v672
      %699 = vmatmul.bf16.gmra.mxu0 %v677
      %v700 = vpop.f32.mrf.mxu0
      %v701 = vadd.f32 0.0, %v700
      %v702 = vpop.f32.mrf.mxu0
      %v703 = vadd.f32 0.0, %v702
      %704 = vmatmul.bf16.gmra.mxu0 %v680
      %v705 = vpop.f32.mrf.mxu0
      %v706 = vadd.f32 0.0, %v705
      %v707 = vpop.f32.mrf.mxu0
      %v708 = vadd.f32 0.0, %v707
      %709 = vmatmul.bf16.gmra.mxu0 %v683
      %v710 = vpop.f32.mrf.mxu0
      %v711 = vadd.f32 0.0, %v710
      %v712 = vpop.f32.mrf.mxu0
      %v713 = vadd.f32 0.0, %v712
      %714 = vmatmul.bf16.gmra.mxu0 %v686
      %v715 = vpop.f32.mrf.mxu0
      %v716 = vadd.f32 0.0, %v715
      %v717 = vpop.f32.mrf.mxu0
      %v718 = vadd.f32 0.0, %v717
      %719 = vmatmul.bf16.gmra.mxu0 %v689
      %v720 = vpop.f32.mrf.mxu0
      %v721 = vadd.f32 0.0, %v720
      %v722 = vpop.f32.mrf.mxu0
      %v723 = vadd.f32 0.0, %v722
      %724 = vdwg.mxu0
      %v725 = vadd.f32 %v591, %v701
      %v726 = vadd.f32 %v592, %v703
      %v727 = vadd.f32 %v593, %v706
      %v728 = vadd.f32 %v594, %v708
      %v729 = vadd.f32 %v595, %v711
      %v730 = vadd.f32 %v596, %v713
      %v731 = vadd.f32 %v597, %v716
      %v732 = vadd.f32 %v598, %v718
      %v733 = vadd.f32 %v599, %v721
      %v734 = vadd.f32 %v600, %v723
      %v735 = vld [vmem:[%s165 + $0x4] sm:$0xc]
      %s736 = scalar_lea.vmem %s1, 80
      %v737 = vld [vmem:[%s736] sm:$0xf]
      %v738 = vld [vmem:[%s736 + $0x4] sm:$0xf]
      %v739 = vld [vmem:[%s736 + $0x8] sm:$0xf]
      %v740 = vld [vmem:[%s736 + $0xc] sm:$0xf]
      %v742 = vunpack.c.l.b16 %v735
      %v743 = vpack.c.b16 %v503, %v742
      %vm744 = vcmask 1045504
      %v745 = vrot.slane %v743, 2
      %v746 = vrot.slane %v514, 2
      %v747 = vsel %vm744, %v745, %v746
      %v748 = vrot.slane %v515, 2
      %v749 = vsel %vm744, %v746, %v748
      %v750 = vrot.slane %v516, 2
      %v751 = vsel %vm744, %v748, %v750
      %v752 = vrot.slane %v517, 2
      %v753 = vsel %vm744, %v750, %v752
      %v754 = vrot.slane %v609, 2
      %v755 = vsel %vm744, %v752, %v754
      %v760 = vunpack.c.l.b16 %v737
      %v761 = vunpack.c.l.b16 %v738
      %v762 = vunpack.c.l.b16 %v739
      %v763 = vunpack.c.l.b16 %v740
      %v764 = vpack.c.b16 %v761, %v760
      %v765 = vpack.c.b16 %v763, %v762
      %v769 = vsel %vm277, %v747, 0
      %v772 = vsel %vm277, %v749, 0
      %v775 = vsel %vm277, %v751, 0
      %v778 = vsel %vm277, %v753, 0
      %v781 = vsel %vm277, %v755, 0
      %783 = vmatpush.bf16.msra.mxu0 0
      %784 = vmatpush.bf16.msra.mxu0 0
      %785 = vmatpush.bf16.msra.mxu0 0
      %786 = vmatpush.bf16.msra.mxu0 0
      %787 = vmatpush.bf16.msra.mxu0 0
      %788 = vmatpush.bf16.msra.mxu0 0
      %789 = vmatpush.bf16.msra.mxu0 %v765
      %790 = vmatpush.bf16.msra.mxu0 %v764
      %791 = vmatmul.bf16.gmra.mxu0 %v769
      %v792 = vpop.f32.mrf.mxu0
      %v793 = vadd.f32 0.0, %v792
      %v794 = vpop.f32.mrf.mxu0
      %v795 = vadd.f32 0.0, %v794
      %796 = vmatmul.bf16.gmra.mxu0 %v772
      %v797 = vpop.f32.mrf.mxu0
      %v798 = vadd.f32 0.0, %v797
      %v799 = vpop.f32.mrf.mxu0
      %v800 = vadd.f32 0.0, %v799
      %801 = vmatmul.bf16.gmra.mxu0 %v775
      %v802 = vpop.f32.mrf.mxu0
      %v803 = vadd.f32 0.0, %v802
      %v804 = vpop.f32.mrf.mxu0
      %v805 = vadd.f32 0.0, %v804
      %806 = vmatmul.bf16.gmra.mxu0 %v778
      %v807 = vpop.f32.mrf.mxu0
      %v808 = vadd.f32 0.0, %v807
      %v809 = vpop.f32.mrf.mxu0
      %v810 = vadd.f32 0.0, %v809
      %811 = vmatmul.bf16.gmra.mxu0 %v781
      %v812 = vpop.f32.mrf.mxu0
      %v813 = vadd.f32 0.0, %v812
      %v814 = vpop.f32.mrf.mxu0
      %v815 = vadd.f32 0.0, %v814
      %816 = vdwg.mxu0
      %v817 = vadd.f32 %v725, %v793
      %v818 = vadd.f32 %v726, %v795
      %v819 = vadd.f32 %v727, %v798
      %v820 = vadd.f32 %v728, %v800
      %v821 = vadd.f32 %v729, %v803
      %v822 = vadd.f32 %v730, %v805
      %v823 = vadd.f32 %v731, %v808
      %v824 = vadd.f32 %v732, %v810
      %v825 = vadd.f32 %v733, %v813
      %v826 = vadd.f32 %v734, %v815
      %v827 = vld [vmem:[%s165 + $0x8] sm:$0xc]
      %v828 = vld [vmem:[%s165 + $0xc] sm:$0xf]
      %v829 = vld [vmem:[%s165 + $0x10] sm:$0xf]
      %v830 = vld [vmem:[%s165 + $0x14] sm:$0xf]
      %v831 = vld [vmem:[%s165 + $0x18] sm:$0xf]
      %v832 = vld [vmem:[%s165 + $0x1c] sm:$0xf]
      %v833 = vld [vmem:[%s165 + $0x20] sm:$0xf]
      %v834 = vld [vmem:[%s165 + $0x24] sm:$0xf]
      %v835 = vld [vmem:[%s165 + $0x28] sm:$0xf]
      %v836 = vld [vmem:[%s165 + $0x2c] sm:$0xf]
      %v837 = vld [vmem:[%s165 + $0x30] sm:$0x3]
      %s838 = scalar_lea.vmem %s1, 96
      %v839 = vld [vmem:[%s838] sm:$0xf]
      %v840 = vld [vmem:[%s838 + $0x4] sm:$0xf]
      %v841 = vld [vmem:[%s838 + $0x8] sm:$0xf]
      %v842 = vld [vmem:[%s838 + $0xc] sm:$0xf]
      %v854 = vunpack.c.l.b16 %v827
      %v855 = vunpack.c.l.b16 %v828
      %v856 = vunpack.c.l.b16 %v829
      %v857 = vunpack.c.l.b16 %v830
      %v858 = vunpack.c.l.b16 %v831
      %v859 = vunpack.c.l.b16 %v832
      %v860 = vunpack.c.l.b16 %v833
      %v861 = vunpack.c.l.b16 %v834
      %v862 = vunpack.c.l.b16 %v835
      %v863 = vunpack.c.l.b16 %v836
      %v864 = vunpack.c.l.b16 %v837
      %v865 = vpack.c.b16 %v855, %v854
      %v866 = vpack.c.b16 %v857, %v856
      %v867 = vpack.c.b16 %v859, %v858
      %v868 = vpack.c.b16 %v861, %v860
      %v869 = vpack.c.b16 %v863, %v862
      %v870 = vpack.c.b16 %v864, %v864
      %v871 = vrot.slane %v865, 2
      %v872 = vrot.slane %v866, 2
      %v873 = vsel %vm744, %v871, %v872
      %v874 = vrot.slane %v867, 2
      %v875 = vsel %vm744, %v872, %v874
      %v876 = vrot.slane %v868, 2
      %v877 = vsel %vm744, %v874, %v876
      %v878 = vrot.slane %v869, 2
      %v879 = vsel %vm744, %v876, %v878
      %v880 = vrot.slane %v870, 2
      %v881 = vsel %vm744, %v878, %v880
      %v886 = vunpack.c.l.b16 %v839
      %v887 = vunpack.c.l.b16 %v840
      %v888 = vunpack.c.l.b16 %v841
      %v889 = vunpack.c.l.b16 %v842
      %v890 = vpack.c.b16 %v887, %v886
      %v891 = vpack.c.b16 %v889, %v888
      %v895 = vsel %vm277, %v873, 0
      %v898 = vsel %vm277, %v875, 0
      %v901 = vsel %vm277, %v877, 0
      %v904 = vsel %vm277, %v879, 0
      %v907 = vsel %vm277, %v881, 0
      %909 = vmatpush.bf16.msra.mxu0 0
      %910 = vmatpush.bf16.msra.mxu0 0
      %911 = vmatpush.bf16.msra.mxu0 0
      %912 = vmatpush.bf16.msra.mxu0 0
      %913 = vmatpush.bf16.msra.mxu0 0
      %914 = vmatpush.bf16.msra.mxu0 0
      %915 = vmatpush.bf16.msra.mxu0 %v891
      %916 = vmatpush.bf16.msra.mxu0 %v890
      %917 = vmatmul.bf16.gmra.mxu0 %v895
      %v918 = vpop.f32.mrf.mxu0
      %v919 = vadd.f32 0.0, %v918
      %v920 = vpop.f32.mrf.mxu0
      %v921 = vadd.f32 0.0, %v920
      %922 = vmatmul.bf16.gmra.mxu0 %v898
      %v923 = vpop.f32.mrf.mxu0
      %v924 = vadd.f32 0.0, %v923
      %v925 = vpop.f32.mrf.mxu0
      %v926 = vadd.f32 0.0, %v925
      %927 = vmatmul.bf16.gmra.mxu0 %v901
      %v928 = vpop.f32.mrf.mxu0
      %v929 = vadd.f32 0.0, %v928
      %v930 = vpop.f32.mrf.mxu0
      %v931 = vadd.f32 0.0, %v930
      %932 = vmatmul.bf16.gmra.mxu0 %v904
      %v933 = vpop.f32.mrf.mxu0
      %v934 = vadd.f32 0.0, %v933
      %v935 = vpop.f32.mrf.mxu0
      %v936 = vadd.f32 0.0, %v935
      %937 = vmatmul.bf16.gmra.mxu0 %v907
      %v938 = vpop.f32.mrf.mxu0
      %v939 = vadd.f32 0.0, %v938
      %v940 = vpop.f32.mrf.mxu0
      %v941 = vadd.f32 0.0, %v940
      %942 = vdwg.mxu0
      %v943 = vadd.f32 %v817, %v919
      %v944 = vadd.f32 %v818, %v921
      %v945 = vadd.f32 %v819, %v924
      %v946 = vadd.f32 %v820, %v926
      %v947 = vadd.f32 %v821, %v929
      %v948 = vadd.f32 %v822, %v931
      %v949 = vadd.f32 %v823, %v934
      %v950 = vadd.f32 %v824, %v936
      %v951 = vadd.f32 %v825, %v939
      %v952 = vadd.f32 %v826, %v941
      %v953 = vld [vmem:[%s165 + $0x30] sm:$0x7]
      %s954 = scalar_lea.vmem %s1, 112
      %v955 = vld [vmem:[%s954] sm:$0xf]
      %v956 = vld [vmem:[%s954 + $0x4] sm:$0xf]
      %v957 = vld [vmem:[%s954 + $0x8] sm:$0xf]
      %v958 = vld [vmem:[%s954 + $0xc] sm:$0xf]
      %v960 = vunpack.c.l.b16 %v953
      %v961 = vpack.c.b16 %v960, %v960
      %vm962 = vsmask.f32 5376
      %v964 = vshrl.u32 %v865, 16
      %v966 = vrot.slane %v964, 2
      %v967 = vshll.u32 %v865, 16
      %v969 = vrot.slane %v967, 3
      %v970 = vor.u32 %v966, %v969
      %v972 = vshrl.u32 %v866, 16
      %v974 = vrot.slane %v972, 2
      %v975 = vshll.u32 %v866, 16
      %v977 = vrot.slane %v975, 3
      %v978 = vor.u32 %v974, %v977
      %v979 = vsel %vm962, %v970, %v978
      %v981 = vshrl.u32 %v867, 16
      %v983 = vrot.slane %v981, 2
      %v984 = vshll.u32 %v867, 16
      %v986 = vrot.slane %v984, 3
      %v987 = vor.u32 %v983, %v986
      %v988 = vsel %vm962, %v978, %v987
      %v990 = vshrl.u32 %v868, 16
      %v992 = vrot.slane %v990, 2
      %v993 = vshll.u32 %v868, 16
      %v995 = vrot.slane %v993, 3
      %v996 = vor.u32 %v992, %v995
      %v997 = vsel %vm962, %v987, %v996
      %v999 = vshrl.u32 %v869, 16
      %v1001 = vrot.slane %v999, 2
      %v1002 = vshll.u32 %v869, 16
      %v1004 = vrot.slane %v1002, 3
      %v1005 = vor.u32 %v1001, %v1004
      %v1006 = vsel %vm962, %v996, %v1005
      %v1008 = vshrl.u32 %v961, 16
      %v1010 = vrot.slane %v1008, 2
      %v1011 = vshll.u32 %v961, 16
      %v1013 = vrot.slane %v1011, 3
      %v1014 = vor.u32 %v1010, %v1013
      %v1015 = vsel %vm962, %v1005, %v1014
      %v1020 = vunpack.c.l.b16 %v955
      %v1021 = vunpack.c.l.b16 %v956
      %v1022 = vunpack.c.l.b16 %v957
      %v1023 = vunpack.c.l.b16 %v958
      %v1024 = vpack.c.b16 %v1021, %v1020
      %v1025 = vpack.c.b16 %v1023, %v1022
      %v1029 = vsel %vm277, %v979, 0
      %v1032 = vsel %vm277, %v988, 0
      %v1035 = vsel %vm277, %v997, 0
      %v1038 = vsel %vm277, %v1006, 0
      %v1041 = vsel %vm277, %v1015, 0
      %1043 = vmatpush.bf16.msra.mxu0 0
      %1044 = vmatpush.bf16.msra.mxu0 0
      %1045 = vmatpush.bf16.msra.mxu0 0
      %1046 = vmatpush.bf16.msra.mxu0 0
      %1047 = vmatpush.bf16.msra.mxu0 0
      %1048 = vmatpush.bf16.msra.mxu0 0
      %1049 = vmatpush.bf16.msra.mxu0 %v1025
      %1050 = vmatpush.bf16.msra.mxu0 %v1024
      %1051 = vmatmul.bf16.gmra.mxu0 %v1029
      %v1052 = vpop.f32.mrf.mxu0
      %v1053 = vadd.f32 0.0, %v1052
      %v1054 = vpop.f32.mrf.mxu0
      %v1055 = vadd.f32 0.0, %v1054
      %1056 = vmatmul.bf16.gmra.mxu0 %v1032
      %v1057 = vpop.f32.mrf.mxu0
      %v1058 = vadd.f32 0.0, %v1057
      %v1059 = vpop.f32.mrf.mxu0
      %v1060 = vadd.f32 0.0, %v1059
      %1061 = vmatmul.bf16.gmra.mxu0 %v1035
      %v1062 = vpop.f32.mrf.mxu0
      %v1063 = vadd.f32 0.0, %v1062
      %v1064 = vpop.f32.mrf.mxu0
      %v1065 = vadd.f32 0.0, %v1064
      %1066 = vmatmul.bf16.gmra.mxu0 %v1038
      %v1067 = vpop.f32.mrf.mxu0
      %v1068 = vadd.f32 0.0, %v1067
      %v1069 = vpop.f32.mrf.mxu0
      %v1070 = vadd.f32 0.0, %v1069
      %1071 = vmatmul.bf16.gmra.mxu0 %v1041
      %v1072 = vpop.f32.mrf.mxu0
      %v1073 = vadd.f32 0.0, %v1072
      %v1074 = vpop.f32.mrf.mxu0
      %v1075 = vadd.f32 0.0, %v1074
      %1076 = vdwg.mxu0
      %v1077 = vadd.f32 %v943, %v1053
      %v1078 = vadd.f32 %v944, %v1055
      %v1079 = vadd.f32 %v945, %v1058
      %v1080 = vadd.f32 %v946, %v1060
      %v1081 = vadd.f32 %v947, %v1063
      %v1082 = vadd.f32 %v948, %v1065
      %v1083 = vadd.f32 %v949, %v1068
      %v1084 = vadd.f32 %v950, %v1070
      %v1085 = vadd.f32 %v951, %v1073
      %v1086 = vadd.f32 %v952, %v1075
      %v1087 = vld [vmem:[%s165 + $0x8] sm:$0x8]
      %s1088 = scalar_lea.vmem %s1, 128
      %v1089 = vld [vmem:[%s1088] sm:$0xf]
      %v1090 = vld [vmem:[%s1088 + $0x4] sm:$0xf]
      %v1091 = vld [vmem:[%s1088 + $0x8] sm:$0xf]
      %v1092 = vld [vmem:[%s1088 + $0xc] sm:$0xf]
      %v1094 = vunpack.c.l.b16 %v1087
      %v1095 = vpack.c.b16 %v855, %v1094
      %vm1096 = vcmask 1044480
      %v1097 = vrot.slane %v1095, 3
      %v1098 = vrot.slane %v866, 3
      %v1099 = vsel %vm1096, %v1097, %v1098
      %v1100 = vrot.slane %v867, 3
      %v1101 = vsel %vm1096, %v1098, %v1100
      %v1102 = vrot.slane %v868, 3
      %v1103 = vsel %vm1096, %v1100, %v1102
      %v1104 = vrot.slane %v869, 3
      %v1105 = vsel %vm1096, %v1102, %v1104
      %v1106 = vrot.slane %v961, 3
      %v1107 = vsel %vm1096, %v1104, %v1106
      %v1112 = vunpack.c.l.b16 %v1089
      %v1113 = vunpack.c.l.b16 %v1090
      %v1114 = vunpack.c.l.b16 %v1091
      %v1115 = vunpack.c.l.b16 %v1092
      %v1116 = vpack.c.b16 %v1113, %v1112
      %v1117 = vpack.c.b16 %v1115, %v1114
      %v1121 = vsel %vm277, %v1099, 0
      %v1124 = vsel %vm277, %v1101, 0
      %v1127 = vsel %vm277, %v1103, 0
      %v1130 = vsel %vm277, %v1105, 0
      %v1133 = vsel %vm277, %v1107, 0
      %1135 = vmatpush.bf16.msra.mxu0 0
      %1136 = vmatpush.bf16.msra.mxu0 0
      %1137 = vmatpush.bf16.msra.mxu0 0
      %1138 = vmatpush.bf16.msra.mxu0 0
      %1139 = vmatpush.bf16.msra.mxu0 0
      %1140 = vmatpush.bf16.msra.mxu0 0
      %1141 = vmatpush.bf16.msra.mxu0 %v1117
      %1142 = vmatpush.bf16.msra.mxu0 %v1116
      %1143 = vmatmul.bf16.gmra.mxu0 %v1121
      %v1144 = vpop.f32.mrf.mxu0
      %v1145 = vadd.f32 0.0, %v1144
      %v1146 = vpop.f32.mrf.mxu0
      %v1147 = vadd.f32 0.0, %v1146
      %1148 = vmatmul.bf16.gmra.mxu0 %v1124
      %v1149 = vpop.f32.mrf.mxu0
      %v1150 = vadd.f32 0.0, %v1149
      %v1151 = vpop.f32.mrf.mxu0
      %v1152 = vadd.f32 0.0, %v1151
      %1153 = vmatmul.bf16.gmra.mxu0 %v1127
      %v1154 = vpop.f32.mrf.mxu0
      %v1155 = vadd.f32 0.0, %v1154
      %v1156 = vpop.f32.mrf.mxu0
      %v1157 = vadd.f32 0.0, %v1156
      %1158 = vmatmul.bf16.gmra.mxu0 %v1130
      %v1159 = vpop.f32.mrf.mxu0
      %v1160 = vadd.f32 0.0, %v1159
      %v1161 = vpop.f32.mrf.mxu0
      %v1162 = vadd.f32 0.0, %v1161
      %1163 = vmatmul.bf16.gmra.mxu0 %v1133
      %v1164 = vpop.f32.mrf.mxu0
      %v1165 = vadd.f32 0.0, %v1164
      %v1166 = vpop.f32.mrf.mxu0
      %v1167 = vadd.f32 0.0, %v1166
      %1168 = vdwg.mxu0
      %v1169 = vadd.f32 %v1077, %v1145
      %v1170 = vadd.f32 %v1078, %v1147
      %v1171 = vadd.f32 %v1079, %v1150
      %v1172 = vadd.f32 %v1080, %v1152
      %v1173 = vadd.f32 %v1081, %v1155
      %v1174 = vadd.f32 %v1082, %v1157
      %v1175 = vadd.f32 %v1083, %v1160
      %v1176 = vadd.f32 %v1084, %v1162
      %v1177 = vadd.f32 %v1085, %v1165
      %v1178 = vadd.f32 %v1086, %v1167
      %v1179 = vld [vmem:[%s2] sm:$0x1]
      %v1181 = vperm.slane %v1179, 0
      %v1183 = vadd.f32 %v1169, %v1181
      %v1184 = vadd.f32 %v1170, %v1181
      %v1185 = vadd.f32 %v1171, %v1181
      %v1186 = vadd.f32 %v1172, %v1181
      %v1187 = vadd.f32 %v1173, %v1181
      %v1188 = vadd.f32 %v1174, %v1181
      %v1189 = vadd.f32 %v1175, %v1181
      %v1190 = vadd.f32 %v1176, %v1181
      %v1191 = vadd.f32 %v1177, %v1181
      %v1192 = vadd.f32 %v1178, %v1181
      %1193 = vst.msk [vmem:[%s170] sm:$0xff] %vm277, %v1183
      %1194 = vst.msk [vmem:[%s170 + $0x8] sm:$0xff] %vm277, %v1184
      %1195 = vst.msk [vmem:[%s170 + $0x10] sm:$0xff] %vm277, %v1185
      %1196 = vst.msk [vmem:[%s170 + $0x18] sm:$0xff] %vm277, %v1186
      %1197 = vst.msk [vmem:[%s170 + $0x20] sm:$0xff] %vm277, %v1187
      %1198 = vst.msk [vmem:[%s170 + $0x28] sm:$0xff] %vm277, %v1188
      %1199 = vst.msk [vmem:[%s170 + $0x30] sm:$0xff] %vm277, %v1189
      %1200 = vst.msk [vmem:[%s170 + $0x38] sm:$0xff] %vm277, %v1190
      %1201 = vst.msk [vmem:[%s170 + $0x40] sm:$0xff] %vm277, %v1191
      %1202 = vst.msk [vmem:[%s170 + $0x48] sm:$0xff] %vm277, %v1192
      %p1203 = scmp.lt.s32.totalorder %s14, 1
      %s1204 = scalar_select %p1203, %s14, 1
      %s1205 = smul.addr %s1204, 10
      %s1206 = smul.addr %s1205, 8
      %s1207 = scalar_lea.vmem %s3, %s1206
      // Predicated region
      $region33: #{fpn_forward_pallas.12} parent=31 // pred_check
        %p1208 = pneg %p100
      $region34: #{fpn_forward_pallas.12} parent=31 // pred_check_branch
        %1210 = sbr.rel (%p1208) target = $region36
      $region35: #{fpn_forward_pallas.12} parent=31 // pred_region
        _
      $region36: #{fpn_forward_pallas.12} parent=31 // pred_fallthru
        _
    $region32: #{fpn_forward_pallas.12} parent=5 // pred_fallthru
      _
    %p1211 = scmp.le.s32.totalorder 2, %s9
    // Predicated region
    $region37: #{fpn_forward_pallas.12} parent=5 // pred_check
      %p1212 = pneg %p1211
    $region38: #{fpn_forward_pallas.12} parent=5 // pred_check_branch
      %1214 = sbr.rel (%p1212) target = $region40
    $region39: #{fpn_forward_pallas.12} parent=5 // pred_region
      %s1215 = ssub.s32 %s9, 2
      // Predicated region
      $region41: #{fpn_forward_pallas.12} parent=39 // pred_check
        %p1216 = pneg %p106
      $region42: #{fpn_forward_pallas.12} parent=39 // pred_check_branch
        %1218 = sbr.rel (%p1216) target = $region44
      $region43: #{fpn_forward_pallas.12} parent=39 // pred_region
        %p1219 = scmp.lt.s32.totalorder %s15, 1
        %s1220 = scalar_select %p1219, %s15, 1
        %s1221 = smul.addr %s1220, 10
        %s1222 = smul.addr %s1221, 8
        %s1223 = scalar_lea.vmem %s3, %s1222
      $region44: #{fpn_forward_pallas.12} parent=39 // pred_fallthru
        _
    $region40: #{fpn_forward_pallas.12} parent=5 // pred_fallthru
      _
  $region6: #{fpn_forward_pallas.12} parent=0 // loop_footer
    %s13 = sadd.s32 1, %s9
  $region7: #{fpn_forward_pallas.12} parent=0 // loop_footer_branch
    %8 = sbr.rel target = $region3
  $region8: #{fpn_forward_pallas.12} parent=0 // loop_exit
    _

// kernel: fpn_forward_pallas.10
$region0: #{fpn_forward_pallas.10}
  #allocation0 [shape = 'u32[]', space=smem, size = 0x4, offset = 0x4, fixed_abs, tag = 'smem constant byte address 0x4 - core index']
  #allocation1 [shape = 'u32[72,128]{1,0:T(1,128)}', space=vmem, size = 0x9000, scoped, tag = 'internal scratch']
  %s0 = inlined_call_operand.vmem [shape: f32[2,8,8,32], index: 0, kind: input, shape index: {}]
  %s1 = inlined_call_operand.vmem [shape: bf16[16,8], index: 1, kind: input, shape index: {}]
  %s2 = inlined_call_operand.vmem [shape: bf16[2,256,32], index: 2, kind: input, shape index: {}]
  %s3 = inlined_call_operand.vmem [shape: bf16[32,32], index: 3, kind: input, shape index: {}]
  %s4 = inlined_call_operand.vmem [shape: f32[1,32], index: 4, kind: input, shape index: {}]
  %s5 = inlined_call_operand.vmem [shape: f32[2,256,32], index: 5, kind: output, shape index: {}]
  %s6 = sld [smem:[#allocation0]]
  $region53: #{fpn_forward_pallas.10} parent=0
    _
  %s8 = ssub.s32 1, %s6
  %s9 = scalar_select 0, %s8, %s6
  loop: start=0, step=1, limit=4
  $region2: #{fpn_forward_pallas.10} parent=0 // loop_pre_header
    _
  $region3: #{fpn_forward_pallas.10} parent=0 // loop_header
    %s11 = sphi 0, %s15
    %p12 = scmp.ge.s32.totalorder %s11, 4
    %s21 = sphi 0, %s23
    %s24 = sphi 0, %s21
    %s25 = sphi 0, %s24
    %s41 = sphi 0, %s25
    %s45 = sphi 0, %s45
    %s47 = sphi 0, %s45
    %s48 = sphi 0, %s47
    %s62 = sphi 0, %s48
    %s68 = sphi 0, %s70
    %s71 = sphi 0, %s68
    %s72 = sphi 0, %s71
    %s88 = sphi 0, %s72
    %s92 = sphi 0, %s92
    %s94 = sphi 0, %s92
    %s95 = sphi 0, %s94
    %s109 = sphi 0, %s95
    %s113 = sphi 0, %s113
    %s115 = sphi 0, %s113
    %s116 = sphi 0, %s115
    %s130 = sphi 0, %s116
    %s136 = sphi 0, %s138
    %s139 = sphi 0, %s136
    %s140 = sphi 0, %s139
    %s156 = sphi 0, %s140
  $region4: #{fpn_forward_pallas.10} parent=0 // loop_header_branch
    %14 = sbr.rel (%p12) target = $region8
  $region5: #{fpn_forward_pallas.10} parent=0 // loop_body
    %s16 = ssub.s32 %s11, 1
    %s17 = ssub.s32 %s11, 2
    %s18 = sadd.s32 %s11, 1
    %s19 = ssub.s32 %s11, %s18
    %p20 = scmp.eq.s32.totalorder %s19, 0
    %s22 = sadd.s32 %s21, 1
    %s23 = scalar_select %p20, %s21, %s22
    %p26 = pneg %p20
    %p27 = scmp.eq.s32.totalorder %s11, 1
    %p28 = por %p26, %p27
    %p29 = scmp.ne.s32.totalorder %s21, %s24
    %p30 = scmp.eq.s32.totalorder %s11, 0
    %p31 = por %p29, %p30
    %p32 = scmp.ne.s32.totalorder %s21, %s24
    %p33 = scmp.eq.s32.totalorder %s16, 1
    %p34 = por %p32, %p33
    %p35 = scmp.ne.s32.totalorder %s24, %s25
    %p36 = scmp.eq.s32.totalorder %s16, 0
    %p37 = por %p35, %p36
    %p38 = scmp.ne.s32.totalorder %s24, %s25
    %p39 = scmp.eq.s32.totalorder %s17, 1
    %p40 = por %p38, %p39
    %p42 = scmp.ne.s32.totalorder %s25, %s41
    %p43 = scmp.eq.s32.totalorder %s17, 0
    %p44 = por %p42, %p43
    %s46 = sadd.s32 %s45, 1
    %p49 = scmp.eq.s32.totalorder %s11, 1
    %p50 = scmp.ne.s32.totalorder %s45, %s47
    %p51 = scmp.eq.s32.totalorder %s11, 0
    %p52 = por %p50, %p51
    %p53 = scmp.ne.s32.totalorder %s45, %s47
    %p54 = scmp.eq.s32.totalorder %s16, 1
    %p55 = por %p53, %p54
    %p56 = scmp.ne.s32.totalorder %s47, %s48
    %p57 = scmp.eq.s32.totalorder %s16, 0
    %p58 = por %p56, %p57
    %p59 = scmp.ne.s32.totalorder %s47, %s48
    %p60 = scmp.eq.s32.totalorder %s17, 1
    %p61 = por %p59, %p60
    %p63 = scmp.ne.s32.totalorder %s48, %s62
    %p64 = scmp.eq.s32.totalorder %s17, 0
    %p65 = por %p63, %p64
    %s66 = ssub.s32 %s11, %s18
    %p67 = scmp.eq.s32.totalorder %s66, 0
    %s69 = sadd.s32 %s68, 1
    %s70 = scalar_select %p67, %s68, %s69
    %p73 = pneg %p67
    %p74 = scmp.eq.s32.totalorder %s11, 1
    %p75 = por %p73, %p74
    %p76 = scmp.ne.s32.totalorder %s68, %s71
    %p77 = scmp.eq.s32.totalorder %s11, 0
    %p78 = por %p76, %p77
    %p79 = scmp.ne.s32.totalorder %s68, %s71
    %p80 = scmp.eq.s32.totalorder %s16, 1
    %p81 = por %p79, %p80
    %p82 = scmp.ne.s32.totalorder %s71, %s72
    %p83 = scmp.eq.s32.totalorder %s16, 0
    %p84 = por %p82, %p83
    %p85 = scmp.ne.s32.totalorder %s71, %s72
    %p86 = scmp.eq.s32.totalorder %s17, 1
    %p87 = por %p85, %p86
    %p89 = scmp.ne.s32.totalorder %s72, %s88
    %p90 = scmp.eq.s32.totalorder %s17, 0
    %p91 = por %p89, %p90
    %s93 = sadd.s32 %s92, 1
    %p96 = scmp.eq.s32.totalorder %s11, 1
    %p97 = scmp.ne.s32.totalorder %s92, %s94
    %p98 = scmp.eq.s32.totalorder %s11, 0
    %p99 = por %p97, %p98
    %p100 = scmp.ne.s32.totalorder %s92, %s94
    %p101 = scmp.eq.s32.totalorder %s16, 1
    %p102 = por %p100, %p101
    %p103 = scmp.ne.s32.totalorder %s94, %s95
    %p104 = scmp.eq.s32.totalorder %s16, 0
    %p105 = por %p103, %p104
    %p106 = scmp.ne.s32.totalorder %s94, %s95
    %p107 = scmp.eq.s32.totalorder %s17, 1
    %p108 = por %p106, %p107
    %p110 = scmp.ne.s32.totalorder %s95, %s109
    %p111 = scmp.eq.s32.totalorder %s17, 0
    %p112 = por %p110, %p111
    %s114 = sadd.s32 %s113, 1
    %p117 = scmp.eq.s32.totalorder %s11, 1
    %p118 = scmp.ne.s32.totalorder %s113, %s115
    %p119 = scmp.eq.s32.totalorder %s11, 0
    %p120 = por %p118, %p119
    %p121 = scmp.ne.s32.totalorder %s113, %s115
    %p122 = scmp.eq.s32.totalorder %s16, 1
    %p123 = por %p121, %p122
    %p124 = scmp.ne.s32.totalorder %s115, %s116
    %p125 = scmp.eq.s32.totalorder %s16, 0
    %p126 = por %p124, %p125
    %p127 = scmp.ne.s32.totalorder %s115, %s116
    %p128 = scmp.eq.s32.totalorder %s17, 1
    %p129 = por %p127, %p128
    %p131 = scmp.ne.s32.totalorder %s116, %s130
    %p132 = scmp.eq.s32.totalorder %s17, 0
    %p133 = por %p131, %p132
    %s134 = ssub.s32 %s11, %s18
    %p135 = scmp.eq.s32.totalorder %s134, 0
    %s137 = sadd.s32 %s136, 1
    %s138 = scalar_select %p135, %s136, %s137
    %p141 = pneg %p135
    %p142 = scmp.eq.s32.totalorder %s11, 1
    %p143 = por %p141, %p142
    %p144 = scmp.ne.s32.totalorder %s136, %s139
    %p145 = scmp.eq.s32.totalorder %s11, 0
    %p146 = por %p144, %p145
    %p147 = scmp.ne.s32.totalorder %s136, %s139
    %p148 = scmp.eq.s32.totalorder %s16, 1
    %p149 = por %p147, %p148
    %p150 = scmp.ne.s32.totalorder %s139, %s140
    %p151 = scmp.eq.s32.totalorder %s16, 0
    %p152 = por %p150, %p151
    %p153 = scmp.ne.s32.totalorder %s139, %s140
    %p154 = scmp.eq.s32.totalorder %s17, 1
    %p155 = por %p153, %p154
    %p157 = scmp.ne.s32.totalorder %s140, %s156
    %p158 = scmp.eq.s32.totalorder %s17, 0
    %p159 = por %p157, %p158
    %p160 = scmp.le.s32.totalorder 1, %s11
    %p161 = scmp.lt.s32.totalorder %s11, 3
    %p162 = pnand %p160, %p161
    %p163 = pneg %p162
    // Predicated region
    $region9: #{fpn_forward_pallas.10} parent=5 // pred_check
      _
    $region10: #{fpn_forward_pallas.10} parent=5 // pred_check_branch
      %165 = sbr.rel (%p162) target = $region12
    $region11: #{fpn_forward_pallas.10} parent=5 // pred_region
      %s166 = ssub.s32 %s11, 1
      // Predicated region
      $region13: #{fpn_forward_pallas.10} parent=11 // pred_check
        %p167 = pneg %p58
      $region14: #{fpn_forward_pallas.10} parent=11 // pred_check_branch
        %169 = sbr.rel (%p167) target = $region16
      $region15: #{fpn_forward_pallas.10} parent=11 // pred_region
        _
      $region16: #{fpn_forward_pallas.10} parent=11 // pred_fallthru
        _
      // Predicated region
      $region17: #{fpn_forward_pallas.10} parent=11 // pred_check
        %p170 = pneg %p105
      $region18: #{fpn_forward_pallas.10} parent=11 // pred_check_branch
        %172 = sbr.rel (%p170) target = $region20
      $region19: #{fpn_forward_pallas.10} parent=11 // pred_region
        _
      $region20: #{fpn_forward_pallas.10} parent=11 // pred_fallthru
        _
      // Predicated region
      $region21: #{fpn_forward_pallas.10} parent=11 // pred_check
        %p173 = pneg %p126
      $region22: #{fpn_forward_pallas.10} parent=11 // pred_check_branch
        %175 = sbr.rel (%p173) target = $region24
      $region23: #{fpn_forward_pallas.10} parent=11 // pred_region
        _
      $region24: #{fpn_forward_pallas.10} parent=11 // pred_fallthru
        _
    $region12: #{fpn_forward_pallas.10} parent=5 // pred_fallthru
      _
    %p176 = scmp.lt.s32.totalorder %s11, 2
    // Predicated region
    $region25: #{fpn_forward_pallas.10} parent=5 // pred_check
      %p177 = pneg %p176
    $region26: #{fpn_forward_pallas.10} parent=5 // pred_check_branch
      %179 = sbr.rel (%p177) target = $region28
    $region27: #{fpn_forward_pallas.10} parent=5 // pred_region
      // Predicated region
      $region29: #{fpn_forward_pallas.10} parent=27 // pred_check
        %p180 = pneg %p31
      $region30: #{fpn_forward_pallas.10} parent=27 // pred_check_branch
        %182 = sbr.rel (%p180) target = $region32
      $region31: #{fpn_forward_pallas.10} parent=27 // pred_region
        %p183 = scmp.lt.s32.totalorder %s11, 1
        %s184 = scalar_select %p183, %s11, 1
        %s185 = smul.addr %s184, 8
        %s186 = smul.addr %s185, 8
        %s187 = scalar_lea.vmem %s0, %s186
      $region32: #{fpn_forward_pallas.10} parent=27 // pred_fallthru
        _
      // Predicated region
      $region33: #{fpn_forward_pallas.10} parent=27 // pred_check
        %p188 = pneg %p78
      $region34: #{fpn_forward_pallas.10} parent=27 // pred_check_branch
        %190 = sbr.rel (%p188) target = $region36
      $region35: #{fpn_forward_pallas.10} parent=27 // pred_region
        %p191 = scmp.lt.s32.totalorder %s11, 1
        %s192 = scalar_select %p191, %s11, 1
        %s193 = smul.addr %s192, 32
        %s194 = smul.addr %s193, 4
        %s195 = scalar_lea.vmem %s2, %s194
      $region36: #{fpn_forward_pallas.10} parent=27 // pred_fallthru
        _
    $region28: #{fpn_forward_pallas.10} parent=5 // pred_fallthru
      _
    %p196 = scmp.le.s32.totalorder 1, %s11
    %p197 = scmp.lt.s32.totalorder %s11, 3
    %p198 = pnand %p196, %p197
    %p199 = pneg %p198
    // Predicated region
    $region37: #{fpn_forward_pallas.10} parent=5 // pred_check
      _
    $region38: #{fpn_forward_pallas.10} parent=5 // pred_check_branch
      %201 = sbr.rel (%p198) target = $region40
    $region39: #{fpn_forward_pallas.10} parent=5 // pred_region
      %s202 = ssub.s32 %s11, 1
      %p203 = scmp.lt.s32.totalorder %s16, 1
      %s204 = scalar_select %p203, %s16, 1
      %s205 = smul.addr %s204, 8
      %s206 = smul.addr %s205, 8
      %s207 = scalar_lea.vmem %s0, %s206
      %p208 = pneg %p37
      %p209 = pneg %p34
      %p210 = pneg %p58
      %p211 = pneg %p55
      %p212 = scmp.lt.s32.totalorder %s16, 1
      %s213 = scalar_select %p212, %s16, 1
      %s214 = smul.addr %s213, 32
      %s215 = smul.addr %s214, 4
      %s216 = scalar_lea.vmem %s2, %s215
      %p217 = pneg %p84
      %p218 = pneg %p81
      %p219 = pneg %p105
      %p220 = pneg %p102
      %p221 = pneg %p126
      %p222 = pneg %p123
      %p223 = pneg %p152
      %p224 = pneg %p149
      %p225 = scmp.lt.s32.totalorder %s16, 1
      %s226 = scalar_select %p225, %s16, 1
      %s227 = smul.addr %s226, 32
      %s228 = smul.addr %s227, 8
      %s229 = scalar_lea.vmem %s5, %s228
      %p230 = scmp.lt.s32.totalorder %s16, 1
      %s231 = scalar_select %p230, %s16, 1
      %s232 = smul.addr %s231, 8
      %s233 = smul.addr %s232, 8
      %s234 = scalar_lea.vmem %s0, %s233
      %p235 = scmp.lt.s32.totalorder %s16, 1
      %s236 = scalar_select %p235, %s16, 1
      %s237 = smul.addr %s236, 32
      %s238 = smul.addr %s237, 4
      %s239 = scalar_lea.vmem %s2, %s238
      %p240 = scmp.lt.s32.totalorder %s16, 1
      %s241 = scalar_select %p240, %s16, 1
      %s242 = smul.addr %s241, 32
      %s243 = smul.addr %s242, 8
      %s244 = scalar_lea.vmem %s5, %s243
      %v246 = vld [vmem:[%s239] sm:$0xf]
      %v247 = vld [vmem:[%s239 + $0x4] sm:$0xf]
      %v248 = vld [vmem:[%s239 + $0x8] sm:$0xf]
      %v249 = vld [vmem:[%s239 + $0xc] sm:$0xf]
      %v250 = vld [vmem:[%s239 + $0x10] sm:$0xf]
      %v251 = vld [vmem:[%s239 + $0x14] sm:$0xf]
      %v252 = vld [vmem:[%s239 + $0x18] sm:$0xf]
      %v253 = vld [vmem:[%s239 + $0x1c] sm:$0xf]
      %v254 = vld [vmem:[%s239 + $0x20] sm:$0xf]
      %v255 = vld [vmem:[%s239 + $0x24] sm:$0xf]
      %v256 = vld [vmem:[%s239 + $0x28] sm:$0xf]
      %v257 = vld [vmem:[%s239 + $0x2c] sm:$0xf]
      %v258 = vld [vmem:[%s239 + $0x30] sm:$0xf]
      %v259 = vld [vmem:[%s239 + $0x34] sm:$0xf]
      %v260 = vld [vmem:[%s239 + $0x38] sm:$0xf]
      %v261 = vld [vmem:[%s239 + $0x3c] sm:$0xf]
      %v262 = vld [vmem:[%s239 + $0x40] sm:$0xf]
      %v263 = vld [vmem:[%s239 + $0x44] sm:$0xf]
      %v264 = vld [vmem:[%s239 + $0x48] sm:$0xf]
      %v265 = vld [vmem:[%s239 + $0x4c] sm:$0xf]
      %v266 = vld [vmem:[%s239 + $0x50] sm:$0xf]
      %v267 = vld [vmem:[%s239 + $0x54] sm:$0xf]
      %v268 = vld [vmem:[%s239 + $0x58] sm:$0xf]
      %v269 = vld [vmem:[%s239 + $0x5c] sm:$0xf]
      %v270 = vld [vmem:[%s239 + $0x60] sm:$0xf]
      %v271 = vld [vmem:[%s239 + $0x64] sm:$0xf]
      %v272 = vld [vmem:[%s239 + $0x68] sm:$0xf]
      %v273 = vld [vmem:[%s239 + $0x6c] sm:$0xf]
      %v274 = vld [vmem:[%s239 + $0x70] sm:$0xf]
      %v275 = vld [vmem:[%s239 + $0x74] sm:$0xf]
      %v276 = vld [vmem:[%s239 + $0x78] sm:$0xf]
      %v277 = vld [vmem:[%s239 + $0x7c] sm:$0xf]
      %v278 = vld [vmem:[%s3] sm:$0xf]
      %v279 = vld [vmem:[%s3 + $0x4] sm:$0xf]
      %v280 = vld [vmem:[%s3 + $0x8] sm:$0xf]
      %v281 = vld [vmem:[%s3 + $0xc] sm:$0xf]
      %v282 = vld [vmem:[%s4] sm:$0x1]
      %v284 = vperm.slane %v282, 0
      %v318 = vunpack.c.l.b16 %v246
      %v319 = vunpack.c.l.b16 %v247
      %v320 = vunpack.c.l.b16 %v248
      %v321 = vunpack.c.l.b16 %v249
      %v322 = vunpack.c.l.b16 %v250
      %v323 = vunpack.c.l.b16 %v251
      %v324 = vunpack.c.l.b16 %v252
      %v325 = vunpack.c.l.b16 %v253
      %v326 = vunpack.c.l.b16 %v254
      %v327 = vunpack.c.l.b16 %v255
      %v328 = vunpack.c.l.b16 %v256
      %v329 = vunpack.c.l.b16 %v257
      %v330 = vunpack.c.l.b16 %v258
      %v331 = vunpack.c.l.b16 %v259
      %v332 = vunpack.c.l.b16 %v260
      %v333 = vunpack.c.l.b16 %v261
      %v334 = vunpack.c.l.b16 %v262
      %v335 = vunpack.c.l.b16 %v263
      %v336 = vunpack.c.l.b16 %v264
      %v337 = vunpack.c.l.b16 %v265
      %v338 = vunpack.c.l.b16 %v266
      %v339 = vunpack.c.l.b16 %v267
      %v340 = vunpack.c.l.b16 %v268
      %v341 = vunpack.c.l.b16 %v269
      %v342 = vunpack.c.l.b16 %v270
      %v343 = vunpack.c.l.b16 %v271
      %v344 = vunpack.c.l.b16 %v272
      %v345 = vunpack.c.l.b16 %v273
      %v346 = vunpack.c.l.b16 %v274
      %v347 = vunpack.c.l.b16 %v275
      %v348 = vunpack.c.l.b16 %v276
      %v349 = vunpack.c.l.b16 %v277
      %v350 = vpack.c.b16 %v319, %v318
      %v351 = vpack.c.b16 %v321, %v320
      %v352 = vpack.c.b16 %v323, %v322
      %v353 = vpack.c.b16 %v325, %v324
      %v354 = vpack.c.b16 %v327, %v326
      %v355 = vpack.c.b16 %v329, %v328
      %v356 = vpack.c.b16 %v331, %v330
      %v357 = vpack.c.b16 %v333, %v332
      %v358 = vpack.c.b16 %v335, %v334
      %v359 = vpack.c.b16 %v337, %v336
      %v360 = vpack.c.b16 %v339, %v338
      %v361 = vpack.c.b16 %v341, %v340
      %v362 = vpack.c.b16 %v343, %v342
      %v363 = vpack.c.b16 %v345, %v344
      %v364 = vpack.c.b16 %v347, %v346
      %v365 = vpack.c.b16 %v349, %v348
      %v370 = vunpack.c.l.b16 %v278
      %v371 = vunpack.c.l.b16 %v279
      %v372 = vunpack.c.l.b16 %v280
      %v373 = vunpack.c.l.b16 %v281
      %v374 = vpack.c.b16 %v371, %v370
      %v375 = vpack.c.b16 %v373, %v372
      %vm378 = vcmask 261120
      %v380 = vsel %vm378, %v350, 0
      %v383 = vsel %vm378, %v351, 0
      %v386 = vsel %vm378, %v352, 0
      %v389 = vsel %vm378, %v353, 0
      %v392 = vsel %vm378, %v354, 0
      %v395 = vsel %vm378, %v355, 0
      %v398 = vsel %vm378, %v356, 0
      %v401 = vsel %vm378, %v357, 0
      %v404 = vsel %vm378, %v358, 0
      %v407 = vsel %vm378, %v359, 0
      %v410 = vsel %vm378, %v360, 0
      %v413 = vsel %vm378, %v361, 0
      %v416 = vsel %vm378, %v362, 0
      %v419 = vsel %vm378, %v363, 0
      %v422 = vsel %vm378, %v364, 0
      %v425 = vsel %vm378, %v365, 0
      %427 = vmatpush.bf16.msra.mxu0 0
      %428 = vmatpush.bf16.msra.mxu0 0
      %429 = vmatpush.bf16.msra.mxu0 0
      %430 = vmatpush.bf16.msra.mxu0 0
      %431 = vmatpush.bf16.msra.mxu0 0
      %432 = vmatpush.bf16.msra.mxu0 0
      %433 = vmatpush.bf16.msra.mxu0 %v375
      %434 = vmatpush.bf16.msra.mxu0 %v374
      %435 = vmatmul.bf16.gmra.mxu0 %v380
      %v436 = vpop.f32.mrf.mxu0
      %v437 = vadd.f32 %v284, %v436
      %v438 = vpop.f32.mrf.mxu0
      %v439 = vadd.f32 %v284, %v438
      %440 = vmatmul.bf16.gmra.mxu0 %v383
      %v441 = vpop.f32.mrf.mxu0
      %v442 = vadd.f32 %v284, %v441
      %v443 = vpop.f32.mrf.mxu0
      %v444 = vadd.f32 %v284, %v443
      %445 = vmatmul.bf16.gmra.mxu0 %v386
      %v446 = vpop.f32.mrf.mxu0
      %v447 = vadd.f32 %v284, %v446
      %v448 = vpop.f32.mrf.mxu0
      %v449 = vadd.f32 %v284, %v448
      %450 = vmatmul.bf16.gmra.mxu0 %v389
      %v451 = vpop.f32.mrf.mxu0
      %v452 = vadd.f32 %v284, %v451
      %v453 = vpop.f32.mrf.mxu0
      %v454 = vadd.f32 %v284, %v453
      %455 = vmatmul.bf16.gmra.mxu0 %v392
      %v456 = vpop.f32.mrf.mxu0
      %v457 = vadd.f32 %v284, %v456
      %v458 = vpop.f32.mrf.mxu0
      %v459 = vadd.f32 %v284, %v458
      %460 = vmatmul.bf16.gmra.mxu0 %v395
      %v461 = vpop.f32.mrf.mxu0
      %v462 = vadd.f32 %v284, %v461
      %v463 = vpop.f32.mrf.mxu0
      %v464 = vadd.f32 %v284, %v463
      %465 = vmatmul.bf16.gmra.mxu0 %v398
      %v466 = vpop.f32.mrf.mxu0
      %v467 = vadd.f32 %v284, %v466
      %v468 = vpop.f32.mrf.mxu0
      %v469 = vadd.f32 %v284, %v468
      %470 = vmatmul.bf16.gmra.mxu0 %v401
      %v471 = vpop.f32.mrf.mxu0
      %v472 = vadd.f32 %v284, %v471
      %v473 = vpop.f32.mrf.mxu0
      %v474 = vadd.f32 %v284, %v473
      %475 = vmatmul.bf16.gmra.mxu0 %v404
      %v476 = vpop.f32.mrf.mxu0
      %v477 = vadd.f32 %v284, %v476
      %v478 = vpop.f32.mrf.mxu0
      %v479 = vadd.f32 %v284, %v478
      %480 = vmatmul.bf16.gmra.mxu0 %v407
      %v481 = vpop.f32.mrf.mxu0
      %v482 = vadd.f32 %v284, %v481
      %v483 = vpop.f32.mrf.mxu0
      %v484 = vadd.f32 %v284, %v483
      %485 = vmatmul.bf16.gmra.mxu0 %v410
      %v486 = vpop.f32.mrf.mxu0
      %v487 = vadd.f32 %v284, %v486
      %v488 = vpop.f32.mrf.mxu0
      %v489 = vadd.f32 %v284, %v488
      %490 = vmatmul.bf16.gmra.mxu0 %v413
      %v491 = vpop.f32.mrf.mxu0
      %v492 = vadd.f32 %v284, %v491
      %v493 = vpop.f32.mrf.mxu0
      %v494 = vadd.f32 %v284, %v493
      %495 = vmatmul.bf16.gmra.mxu0 %v416
      %v496 = vpop.f32.mrf.mxu0
      %v497 = vadd.f32 %v284, %v496
      %v498 = vpop.f32.mrf.mxu0
      %v499 = vadd.f32 %v284, %v498
      %500 = vmatmul.bf16.gmra.mxu0 %v419
      %v501 = vpop.f32.mrf.mxu0
      %v502 = vadd.f32 %v284, %v501
      %v503 = vpop.f32.mrf.mxu0
      %v504 = vadd.f32 %v284, %v503
      %505 = vmatmul.bf16.gmra.mxu0 %v422
      %v506 = vpop.f32.mrf.mxu0
      %v507 = vadd.f32 %v284, %v506
      %v508 = vpop.f32.mrf.mxu0
      %v509 = vadd.f32 %v284, %v508
      %510 = vmatmul.bf16.gmra.mxu0 %v425
      %v511 = vpop.f32.mrf.mxu0
      %v512 = vadd.f32 %v284, %v511
      %v513 = vpop.f32.mrf.mxu0
      %v514 = vadd.f32 %v284, %v513
      %515 = vdwg.mxu0
      %516 = vst.msk [vmem:[%s244] sm:$0xff] %vm378, %v437
      %517 = vst.msk [vmem:[%s244 + $0x8] sm:$0xff] %vm378, %v439
      %518 = vst.msk [vmem:[%s244 + $0x10] sm:$0xff] %vm378, %v442
      %519 = vst.msk [vmem:[%s244 + $0x18] sm:$0xff] %vm378, %v444
      %520 = vst.msk [vmem:[%s244 + $0x20] sm:$0xff] %vm378, %v447
      %521 = vst.msk [vmem:[%s244 + $0x28] sm:$0xff] %vm378, %v449
      %522 = vst.msk [vmem:[%s244 + $0x30] sm:$0xff] %vm378, %v452
      %523 = vst.msk [vmem:[%s244 + $0x38] sm:$0xff] %vm378, %v454
      %524 = vst.msk [vmem:[%s244 + $0x40] sm:$0xff] %vm378, %v457
      %525 = vst.msk [vmem:[%s244 + $0x48] sm:$0xff] %vm378, %v459
      %526 = vst.msk [vmem:[%s244 + $0x50] sm:$0xff] %vm378, %v462
      %527 = vst.msk [vmem:[%s244 + $0x58] sm:$0xff] %vm378, %v464
      %528 = vst.msk [vmem:[%s244 + $0x60] sm:$0xff] %vm378, %v467
      %529 = vst.msk [vmem:[%s244 + $0x68] sm:$0xff] %vm378, %v469
      %530 = vst.msk [vmem:[%s244 + $0x70] sm:$0xff] %vm378, %v472
      %531 = vst.msk [vmem:[%s244 + $0x78] sm:$0xff] %vm378, %v474
      %532 = vst.msk [vmem:[%s244 + $0x80] sm:$0xff] %vm378, %v477
      %533 = vst.msk [vmem:[%s244 + $0x88] sm:$0xff] %vm378, %v479
      %534 = vst.msk [vmem:[%s244 + $0x90] sm:$0xff] %vm378, %v482
      %535 = vst.msk [vmem:[%s244 + $0x98] sm:$0xff] %vm378, %v484
      %536 = vst.msk [vmem:[%s244 + $0xa0] sm:$0xff] %vm378, %v487
      %537 = vst.msk [vmem:[%s244 + $0xa8] sm:$0xff] %vm378, %v489
      %538 = vst.msk [vmem:[%s244 + $0xb0] sm:$0xff] %vm378, %v492
      %539 = vst.msk [vmem:[%s244 + $0xb8] sm:$0xff] %vm378, %v494
      %540 = vst.msk [vmem:[%s244 + $0xc0] sm:$0xff] %vm378, %v497
      %541 = vst.msk [vmem:[%s244 + $0xc8] sm:$0xff] %vm378, %v499
      %542 = vst.msk [vmem:[%s244 + $0xd0] sm:$0xff] %vm378, %v502
      %543 = vst.msk [vmem:[%s244 + $0xd8] sm:$0xff] %vm378, %v504
      %544 = vst.msk [vmem:[%s244 + $0xe0] sm:$0xff] %vm378, %v507
      %545 = vst.msk [vmem:[%s244 + $0xe8] sm:$0xff] %vm378, %v509
      %546 = vst.msk [vmem:[%s244 + $0xf0] sm:$0xff] %vm378, %v512
      %547 = vst.msk [vmem:[%s244 + $0xf8] sm:$0xff] %vm378, %v514
      %v548 = vld [vmem:[%s1] sm:$0xf]
      %v549 = vld [vmem:[%s1 + $0x4] sm:$0xf]
      %v550 = vld [vmem:[%s234] sm:$0xff]
      %v551 = vpack.c.bf16 %v550, %v550
      %v554 = vunpack.c.l.b16 %v548
      %v555 = vunpack.c.l.b16 %v549
      %v556 = vpack.c.b16 %v555, %v554
      %vm557 = vcmask 64512
      %v559 = vsel %vm557, %v556, 0
      %vm561 = vcmask 1043456
      %v563 = vsel %vm561, %v551, 0
      %565 = vmatpush.bf16.msra.mxu0 0
      %566 = vmatpush.bf16.msra.mxu0 0
      %567 = vmatpush.bf16.msra.mxu0 0
      %568 = vmatpush.bf16.msra.mxu0 0
      %569 = vmatpush.bf16.msra.mxu0 0
      %570 = vmatpush.bf16.msra.mxu0 0
      %571 = vmatpush.bf16.msra.mxu0 0
      %572 = vmatpush.bf16.msra.mxu0 %v563
      %573 = vmatmul.bf16.gmra.mxu0 %v559
      %v574 = vpop.f32.mrf.mxu0
      %v575 = vadd.f32 0.0, %v574
      %v576 = vpop.f32.mrf.mxu0
      %v577 = vadd.f32 0.0, %v576
      %578 = vdwg.mxu0
      %s579 = scalar_lea.vmem %s234, 8
      %v580 = vld [vmem:[%s579] sm:$0xff]
      %v581 = vpack.c.bf16 %v580, %v580
      %v583 = vsel %vm561, %v581, 0
      %585 = vmatpush.bf16.msra.mxu0 0
      %586 = vmatpush.bf16.msra.mxu0 0
      %587 = vmatpush.bf16.msra.mxu0 0
      %588 = vmatpush.bf16.msra.mxu0 0
      %589 = vmatpush.bf16.msra.mxu0 0
      %590 = vmatpush.bf16.msra.mxu0 0
      %591 = vmatpush.bf16.msra.mxu0 0
      %592 = vmatpush.bf16.msra.mxu0 %v583
      %593 = vmatmul.bf16.gmra.mxu0 %v559
      %v594 = vpop.f32.mrf.mxu0
      %v595 = vadd.f32 0.0, %v594
      %v596 = vpop.f32.mrf.mxu0
      %v597 = vadd.f32 0.0, %v596
      %598 = vdwg.mxu0
      %s599 = scalar_lea.vmem %s234, 16
      %v600 = vld [vmem:[%s599] sm:$0xff]
      %v601 = vpack.c.bf16 %v600, %v600
      %v603 = vsel %vm561, %v601, 0
      %605 = vmatpush.bf16.msra.mxu0 0
      %606 = vmatpush.bf16.msra.mxu0 0
      %607 = vmatpush.bf16.msra.mxu0 0
      %608 = vmatpush.bf16.msra.mxu0 0
      %609 = vmatpush.bf16.msra.mxu0 0
      %610 = vmatpush.bf16.msra.mxu0 0
      %611 = vmatpush.bf16.msra.mxu0 0
      %612 = vmatpush.bf16.msra.mxu0 %v603
      %613 = vmatmul.bf16.gmra.mxu0 %v559
      %v614 = vpop.f32.mrf.mxu0
      %v615 = vadd.f32 0.0, %v614
      %v616 = vpop.f32.mrf.mxu0
      %v617 = vadd.f32 0.0, %v616
      %618 = vdwg.mxu0
      %s619 = scalar_lea.vmem %s234, 24
      %v620 = vld [vmem:[%s619] sm:$0xff]
      %v621 = vpack.c.bf16 %v620, %v620
      %v623 = vsel %vm561, %v621, 0
      %625 = vmatpush.bf16.msra.mxu0 0
      %626 = vmatpush.bf16.msra.mxu0 0
      %627 = vmatpush.bf16.msra.mxu0 0
      %628 = vmatpush.bf16.msra.mxu0 0
      %629 = vmatpush.bf16.msra.mxu0 0
      %630 = vmatpush.bf16.msra.mxu0 0
      %631 = vmatpush.bf16.msra.mxu0 0
      %632 = vmatpush.bf16.msra.mxu0 %v623
      %633 = vmatmul.bf16.gmra.mxu0 %v559
      %v634 = vpop.f32.mrf.mxu0
      %v635 = vadd.f32 0.0, %v634
      %v636 = vpop.f32.mrf.mxu0
      %v637 = vadd.f32 0.0, %v636
      %638 = vdwg.mxu0
      %s639 = scalar_lea.vmem %s234, 32
      %v640 = vld [vmem:[%s639] sm:$0xff]
      %v641 = vpack.c.bf16 %v640, %v640
      %v643 = vsel %vm561, %v641, 0
      %645 = vmatpush.bf16.msra.mxu0 0
      %646 = vmatpush.bf16.msra.mxu0 0
      %647 = vmatpush.bf16.msra.mxu0 0
      %648 = vmatpush.bf16.msra.mxu0 0
      %649 = vmatpush.bf16.msra.mxu0 0
      %650 = vmatpush.bf16.msra.mxu0 0
      %651 = vmatpush.bf16.msra.mxu0 0
      %652 = vmatpush.bf16.msra.mxu0 %v643
      %653 = vmatmul.bf16.gmra.mxu0 %v559
      %v654 = vpop.f32.mrf.mxu0
      %v655 = vadd.f32 0.0, %v654
      %v656 = vpop.f32.mrf.mxu0
      %v657 = vadd.f32 0.0, %v656
      %658 = vdwg.mxu0
      %s659 = scalar_lea.vmem %s234, 40
      %v660 = vld [vmem:[%s659] sm:$0xff]
      %v661 = vpack.c.bf16 %v660, %v660
      %v663 = vsel %vm561, %v661, 0
      %665 = vmatpush.bf16.msra.mxu0 0
      %666 = vmatpush.bf16.msra.mxu0 0
      %667 = vmatpush.bf16.msra.mxu0 0
      %668 = vmatpush.bf16.msra.mxu0 0
      %669 = vmatpush.bf16.msra.mxu0 0
      %670 = vmatpush.bf16.msra.mxu0 0
      %671 = vmatpush.bf16.msra.mxu0 0
      %672 = vmatpush.bf16.msra.mxu0 %v663
      %673 = vmatmul.bf16.gmra.mxu0 %v559
      %v674 = vpop.f32.mrf.mxu0
      %v675 = vadd.f32 0.0, %v674
      %v676 = vpop.f32.mrf.mxu0
      %v677 = vadd.f32 0.0, %v676
      %678 = vdwg.mxu0
      %s679 = scalar_lea.vmem %s234, 48
      %v680 = vld [vmem:[%s679] sm:$0xff]
      %v681 = vpack.c.bf16 %v680, %v680
      %v683 = vsel %vm561, %v681, 0
      %685 = vmatpush.bf16.msra.mxu0 0
      %686 = vmatpush.bf16.msra.mxu0 0
      %687 = vmatpush.bf16.msra.mxu0 0
      %688 = vmatpush.bf16.msra.mxu0 0
      %689 = vmatpush.bf16.msra.mxu0 0
      %690 = vmatpush.bf16.msra.mxu0 0
      %691 = vmatpush.bf16.msra.mxu0 0
      %692 = vmatpush.bf16.msra.mxu0 %v683
      %693 = vmatmul.bf16.gmra.mxu0 %v559
      %v694 = vpop.f32.mrf.mxu0
      %v695 = vadd.f32 0.0, %v694
      %v696 = vpop.f32.mrf.mxu0
      %v697 = vadd.f32 0.0, %v696
      %698 = vdwg.mxu0
      %s699 = scalar_lea.vmem %s234, 56
      %v700 = vld [vmem:[%s699] sm:$0xff]
      %v701 = vpack.c.bf16 %v700, %v700
      %v703 = vsel %vm561, %v701, 0
      %705 = vmatpush.bf16.msra.mxu0 0
      %706 = vmatpush.bf16.msra.mxu0 0
      %707 = vmatpush.bf16.msra.mxu0 0
      %708 = vmatpush.bf16.msra.mxu0 0
      %709 = vmatpush.bf16.msra.mxu0 0
      %710 = vmatpush.bf16.msra.mxu0 0
      %711 = vmatpush.bf16.msra.mxu0 0
      %712 = vmatpush.bf16.msra.mxu0 %v703
      %713 = vmatmul.bf16.gmra.mxu0 %v559
      %v714 = vpop.f32.mrf.mxu0
      %v715 = vadd.f32 0.0, %v714
      %v716 = vpop.f32.mrf.mxu0
      %v717 = vadd.f32 0.0, %v716
      %718 = vdwg.mxu0
      %v719 = vld [vmem:[%s244] sm:$0xff]
      %v720 = vld [vmem:[%s244 + $0x8] sm:$0xff]
      %v721 = vadd.f32 %v719, %v575
      %v722 = vadd.f32 %v720, %v577
      %723 = vst.msk [vmem:[%s244] sm:$0xff] %vm378, %v721
      %724 = vst.msk [vmem:[%s244 + $0x8] sm:$0xff] %vm378, %v722
      %v725 = vmul.f32 %v575, 0.75
      %v726 = vmul.f32 %v577, 0.75
      %v727 = vmul.f32 %v595, 0.25
      %v728 = vmul.f32 %v597, 0.25
      %v729 = vadd.f32 %v725, %v727
      %v730 = vadd.f32 %v726, %v728
      %v731 = vld [vmem:[%s244 + $0x10] sm:$0xff]
      %v732 = vld [vmem:[%s244 + $0x18] sm:$0xff]
      %v733 = vadd.f32 %v731, %v729
      %v734 = vadd.f32 %v732, %v730
      %735 = vst.msk [vmem:[%s244 + $0x10] sm:$0xff] %vm378, %v733
      %736 = vst.msk [vmem:[%s244 + $0x18] sm:$0xff] %vm378, %v734
      %v737 = vmul.f32 %v575, 0.25
      %v738 = vmul.f32 %v577, 0.25
      %v739 = vmul.f32 %v595, 0.75
      %v740 = vmul.f32 %v597, 0.75
      %v741 = vadd.f32 %v737, %v739
      %v742 = vadd.f32 %v738, %v740
      %v743 = vld [vmem:[%s244 + $0x20] sm:$0xff]
      %v744 = vld [vmem:[%s244 + $0x28] sm:$0xff]
      %v745 = vadd.f32 %v743, %v741
      %v746 = vadd.f32 %v744, %v742
      %747 = vst.msk [vmem:[%s244 + $0x20] sm:$0xff] %vm378, %v745
      %748 = vst.msk [vmem:[%s244 + $0x28] sm:$0xff] %vm378, %v746
      %v749 = vmul.f32 %v615, 0.25
      %v750 = vmul.f32 %v617, 0.25
      %v751 = vadd.f32 %v739, %v749
      %v752 = vadd.f32 %v740, %v750
      %v753 = vld [vmem:[%s244 + $0x30] sm:$0xff]
      %v754 = vld [vmem:[%s244 + $0x38] sm:$0xff]
      %v755 = vadd.f32 %v753, %v751
      %v756 = vadd.f32 %v754, %v752
      %757 = vst.msk [vmem:[%s244 + $0x30] sm:$0xff] %vm378, %v755
      %758 = vst.msk [vmem:[%s244 + $0x38] sm:$0xff] %vm378, %v756
      %v759 = vmul.f32 %v615, 0.75
      %v760 = vmul.f32 %v617, 0.75
      %v761 = vadd.f32 %v727, %v759
      %v762 = vadd.f32 %v728, %v760
      %v763 = vld [vmem:[%s244 + $0x40] sm:$0xff]
      %v764 = vld [vmem:[%s244 + $0x48] sm:$0xff]
      %v765 = vadd.f32 %v763, %v761
      %v766 = vadd.f32 %v764, %v762
      %767 = vst.msk [vmem:[%s244 + $0x40] sm:$0xff] %vm378, %v765
      %768 = vst.msk [vmem:[%s244 + $0x48] sm:$0xff] %vm378, %v766
      %v769 = vmul.f32 %v635, 0.25
      %v770 = vmul.f32 %v637, 0.25
      %v771 = vadd.f32 %v759, %v769
      %v772 = vadd.f32 %v760, %v770
      %v773 = vld [vmem:[%s244 + $0x50] sm:$0xff]
      %v774 = vld [vmem:[%s244 + $0x58] sm:$0xff]
      %v775 = vadd.f32 %v773, %v771
      %v776 = vadd.f32 %v774, %v772
      %777 = vst.msk [vmem:[%s244 + $0x50] sm:$0xff] %vm378, %v775
      %778 = vst.msk [vmem:[%s244 + $0x58] sm:$0xff] %vm378, %v776
      %v779 = vmul.f32 %v635, 0.75
      %v780 = vmul.f32 %v637, 0.75
      %v781 = vadd.f32 %v749, %v779
      %v782 = vadd.f32 %v750, %v780
      %v783 = vld [vmem:[%s244 + $0x60] sm:$0xff]
      %v784 = vld [vmem:[%s244 + $0x68] sm:$0xff]
      %v785 = vadd.f32 %v783, %v781
      %v786 = vadd.f32 %v784, %v782
      %787 = vst.msk [vmem:[%s244 + $0x60] sm:$0xff] %vm378, %v785
      %788 = vst.msk [vmem:[%s244 + $0x68] sm:$0xff] %vm378, %v786
      %v789 = vmul.f32 %v655, 0.25
      %v790 = vmul.f32 %v657, 0.25
      %v791 = vadd.f32 %v779, %v789
      %v792 = vadd.f32 %v780, %v790
      %v793 = vld [vmem:[%s244 + $0x70] sm:$0xff]
      %v794 = vld [vmem:[%s244 + $0x78] sm:$0xff]
      %v795 = vadd.f32 %v793, %v791
      %v796 = vadd.f32 %v794, %v792
      %797 = vst.msk [vmem:[%s244 + $0x70] sm:$0xff] %vm378, %v795
      %798 = vst.msk [vmem:[%s244 + $0x78] sm:$0xff] %vm378, %v796
      %v799 = vmul.f32 %v655, 0.75
      %v800 = vmul.f32 %v657, 0.75
      %v801 = vadd.f32 %v769, %v799
      %v802 = vadd.f32 %v770, %v800
      %v803 = vld [vmem:[%s244 + $0x80] sm:$0xff]
      %v804 = vld [vmem:[%s244 + $0x88] sm:$0xff]
      %v805 = vadd.f32 %v803, %v801
      %v806 = vadd.f32 %v804, %v802
      %807 = vst.msk [vmem:[%s244 + $0x80] sm:$0xff] %vm378, %v805
      %808 = vst.msk [vmem:[%s244 + $0x88] sm:$0xff] %vm378, %v806
      %v809 = vmul.f32 %v675, 0.25
      %v810 = vmul.f32 %v677, 0.25
      %v811 = vadd.f32 %v799, %v809
      %v812 = vadd.f32 %v800, %v810
      %v813 = vld [vmem:[%s244 + $0x90] sm:$0xff]
      %v814 = vld [vmem:[%s244 + $0x98] sm:$0xff]
      %v815 = vadd.f32 %v813, %v811
      %v816 = vadd.f32 %v814, %v812
      %817 = vst.msk [vmem:[%s244 + $0x90] sm:$0xff] %vm378, %v815
      %818 = vst.msk [vmem:[%s244 + $0x98] sm:$0xff] %vm378, %v816
      %v819 = vmul.f32 %v675, 0.75
      %v820 = vmul.f32 %v677, 0.75
      %v821 = vadd.f32 %v789, %v819
      %v822 = vadd.f32 %v790, %v820
      %v823 = vld [vmem:[%s244 + $0xa0] sm:$0xff]
      %v824 = vld [vmem:[%s244 + $0xa8] sm:$0xff]
      %v825 = vadd.f32 %v823, %v821
      %v826 = vadd.f32 %v824, %v822
      %827 = vst.msk [vmem:[%s244 + $0xa0] sm:$0xff] %vm378, %v825
      %828 = vst.msk [vmem:[%s244 + $0xa8] sm:$0xff] %vm378, %v826
      %v829 = vmul.f32 %v695, 0.25
      %v830 = vmul.f32 %v697, 0.25
      %v831 = vadd.f32 %v819, %v829
      %v832 = vadd.f32 %v820, %v830
      %v833 = vld [vmem:[%s244 + $0xb0] sm:$0xff]
      %v834 = vld [vmem:[%s244 + $0xb8] sm:$0xff]
      %v835 = vadd.f32 %v833, %v831
      %v836 = vadd.f32 %v834, %v832
      %837 = vst.msk [vmem:[%s244 + $0xb0] sm:$0xff] %vm378, %v835
      %838 = vst.msk [vmem:[%s244 + $0xb8] sm:$0xff] %vm378, %v836
      %v839 = vmul.f32 %v695, 0.75
      %v840 = vmul.f32 %v697, 0.75
      %v841 = vadd.f32 %v809, %v839
      %v842 = vadd.f32 %v810, %v840
      %v843 = vld [vmem:[%s244 + $0xc0] sm:$0xff]
      %v844 = vld [vmem:[%s244 + $0xc8] sm:$0xff]
      %v845 = vadd.f32 %v843, %v841
      %v846 = vadd.f32 %v844, %v842
      %847 = vst.msk [vmem:[%s244 + $0xc0] sm:$0xff] %vm378, %v845
      %848 = vst.msk [vmem:[%s244 + $0xc8] sm:$0xff] %vm378, %v846
      %v849 = vmul.f32 %v715, 0.25
      %v850 = vmul.f32 %v717, 0.25
      %v851 = vadd.f32 %v839, %v849
      %v852 = vadd.f32 %v840, %v850
      %v853 = vld [vmem:[%s244 + $0xd0] sm:$0xff]
      %v854 = vld [vmem:[%s244 + $0xd8] sm:$0xff]
      %v855 = vadd.f32 %v853, %v851
      %v856 = vadd.f32 %v854, %v852
      %857 = vst.msk [vmem:[%s244 + $0xd0] sm:$0xff] %vm378, %v855
      %858 = vst.msk [vmem:[%s244 + $0xd8] sm:$0xff] %vm378, %v856
      %v859 = vmul.f32 %v715, 0.75
      %v860 = vmul.f32 %v717, 0.75
      %v861 = vadd.f32 %v829, %v859
      %v862 = vadd.f32 %v830, %v860
      %v863 = vld [vmem:[%s244 + $0xe0] sm:$0xff]
      %v864 = vld [vmem:[%s244 + $0xe8] sm:$0xff]
      %v865 = vadd.f32 %v863, %v861
      %v866 = vadd.f32 %v864, %v862
      %867 = vst.msk [vmem:[%s244 + $0xe0] sm:$0xff] %vm378, %v865
      %868 = vst.msk [vmem:[%s244 + $0xe8] sm:$0xff] %vm378, %v866
      %v869 = vld [vmem:[%s244 + $0xf0] sm:$0xff]
      %v870 = vld [vmem:[%s244 + $0xf8] sm:$0xff]
      %v871 = vadd.f32 %v869, %v715
      %v872 = vadd.f32 %v870, %v717
      %873 = vst.msk [vmem:[%s244 + $0xf0] sm:$0xff] %vm378, %v871
      %874 = vst.msk [vmem:[%s244 + $0xf8] sm:$0xff] %vm378, %v872
      %p875 = scmp.lt.s32.totalorder %s16, 1
      %s876 = scalar_select %p875, %s16, 1
      %s877 = smul.addr %s876, 32
      %s878 = smul.addr %s877, 8
      %s879 = scalar_lea.vmem %s5, %s878
      // Predicated region
      $region41: #{fpn_forward_pallas.10} parent=39 // pred_check
        %p880 = pneg %p149
      $region42: #{fpn_forward_pallas.10} parent=39 // pred_check_branch
        %882 = sbr.rel (%p880) target = $region44
      $region43: #{fpn_forward_pallas.10} parent=39 // pred_region
        _
      $region44: #{fpn_forward_pallas.10} parent=39 // pred_fallthru
        _
    $region40: #{fpn_forward_pallas.10} parent=5 // pred_fallthru
      _
    %p883 = scmp.le.s32.totalorder 2, %s11
    // Predicated region
    $region45: #{fpn_forward_pallas.10} parent=5 // pred_check
      %p884 = pneg %p883
    $region46: #{fpn_forward_pallas.10} parent=5 // pred_check_branch
      %886 = sbr.rel (%p884) target = $region48
    $region47: #{fpn_forward_pallas.10} parent=5 // pred_region
      %s887 = ssub.s32 %s11, 2
      // Predicated region
      $region49: #{fpn_forward_pallas.10} parent=47 // pred_check
        %p888 = pneg %p155
      $region50: #{fpn_forward_pallas.10} parent=47 // pred_check_branch
        %890 = sbr.rel (%p888) target = $region52
      $region51: #{fpn_forward_pallas.10} parent=47 // pred_region
        %p891 = scmp.lt.s32.totalorder %s17, 1
        %s892 = scalar_select %p891, %s17, 1
        %s893 = smul.addr %s892, 32
        %s894 = smul.addr %s893, 8
        %s895 = scalar_lea.vmem %s5, %s894
      $region52: #{fpn_forward_pallas.10} parent=47 // pred_fallthru
        _
    $region48: #{fpn_forward_pallas.10} parent=5 // pred_fallthru
      _
  $region6: #{fpn_forward_pallas.10} parent=0 // loop_footer
    %s15 = sadd.s32 1, %s11
  $region7: #{fpn_forward_pallas.10} parent=0 // loop_footer_branch
    %10 = sbr.rel target = $region3
  $region8: #{fpn_forward_pallas.10} parent=0 // loop_exit
    _

// kernel: fpn_forward_pallas.13
$region0: #{fpn_forward_pallas.13}
  #allocation0 [shape = 'u32[]', space=smem, size = 0x4, offset = 0x4, fixed_abs, tag = 'smem constant byte address 0x4 - core index']
  #allocation1 [shape = 'u32[72,128]{1,0:T(1,128)}', space=vmem, size = 0x9000, scoped, tag = 'internal scratch']
  %s0 = inlined_call_operand.vmem [shape: bf16[2,342,32], index: 0, kind: input, shape index: {}]
  %s1 = inlined_call_operand.vmem [shape: bf16[9,32,32], index: 1, kind: input, shape index: {}]
  %s2 = inlined_call_operand.vmem [shape: f32[1,32], index: 2, kind: input, shape index: {}]
  %s3 = inlined_call_operand.vmem [shape: f32[2,288,32], index: 3, kind: output, shape index: {}]
  %s4 = sld [smem:[#allocation0]]
  $region45: #{fpn_forward_pallas.13} parent=0
    _
  %s6 = ssub.s32 1, %s4
  %s7 = scalar_select 0, %s6, %s4
  loop: start=0, step=1, limit=4
  $region2: #{fpn_forward_pallas.13} parent=0 // loop_pre_header
    _
  $region3: #{fpn_forward_pallas.13} parent=0 // loop_header
    %s9 = sphi 0, %s13
    %p10 = scmp.ge.s32.totalorder %s9, 4
    %s19 = sphi 0, %s21
    %s22 = sphi 0, %s19
    %s23 = sphi 0, %s22
    %s39 = sphi 0, %s23
    %s43 = sphi 0, %s43
    %s45 = sphi 0, %s43
    %s46 = sphi 0, %s45
    %s60 = sphi 0, %s46
    %s64 = sphi 0, %s64
    %s66 = sphi 0, %s64
    %s67 = sphi 0, %s66
    %s81 = sphi 0, %s67
    %s87 = sphi 0, %s89
    %s90 = sphi 0, %s87
    %s91 = sphi 0, %s90
    %s107 = sphi 0, %s91
  $region4: #{fpn_forward_pallas.13} parent=0 // loop_header_branch
    %12 = sbr.rel (%p10) target = $region8
  $region5: #{fpn_forward_pallas.13} parent=0 // loop_body
    %s14 = ssub.s32 %s9, 1
    %s15 = ssub.s32 %s9, 2
    %s16 = sadd.s32 %s9, 1
    %s17 = ssub.s32 %s9, %s16
    %p18 = scmp.eq.s32.totalorder %s17, 0
    %s20 = sadd.s32 %s19, 1
    %s21 = scalar_select %p18, %s19, %s20
    %p24 = pneg %p18
    %p25 = scmp.eq.s32.totalorder %s9, 1
    %p26 = por %p24, %p25
    %p27 = scmp.ne.s32.totalorder %s19, %s22
    %p28 = scmp.eq.s32.totalorder %s9, 0
    %p29 = por %p27, %p28
    %p30 = scmp.ne.s32.totalorder %s19, %s22
    %p31 = scmp.eq.s32.totalorder %s14, 1
    %p32 = por %p30, %p31
    %p33 = scmp.ne.s32.totalorder %s22, %s23
    %p34 = scmp.eq.s32.totalorder %s14, 0
    %p35 = por %p33, %p34
    %p36 = scmp.ne.s32.totalorder %s22, %s23
    %p37 = scmp.eq.s32.totalorder %s15, 1
    %p38 = por %p36, %p37
    %p40 = scmp.ne.s32.totalorder %s23, %s39
    %p41 = scmp.eq.s32.totalorder %s15, 0
    %p42 = por %p40, %p41
    %s44 = sadd.s32 %s43, 1
    %p47 = scmp.eq.s32.totalorder %s9, 1
    %p48 = scmp.ne.s32.totalorder %s43, %s45
    %p49 = scmp.eq.s32.totalorder %s9, 0
    %p50 = por %p48, %p49
    %p51 = scmp.ne.s32.totalorder %s43, %s45
    %p52 = scmp.eq.s32.totalorder %s14, 1
    %p53 = por %p51, %p52
    %p54 = scmp.ne.s32.totalorder %s45, %s46
    %p55 = scmp.eq.s32.totalorder %s14, 0
    %p56 = por %p54, %p55
    %p57 = scmp.ne.s32.totalorder %s45, %s46
    %p58 = scmp.eq.s32.totalorder %s15, 1
    %p59 = por %p57, %p58
    %p61 = scmp.ne.s32.totalorder %s46, %s60
    %p62 = scmp.eq.s32.totalorder %s15, 0
    %p63 = por %p61, %p62
    %s65 = sadd.s32 %s64, 1
    %p68 = scmp.eq.s32.totalorder %s9, 1
    %p69 = scmp.ne.s32.totalorder %s64, %s66
    %p70 = scmp.eq.s32.totalorder %s9, 0
    %p71 = por %p69, %p70
    %p72 = scmp.ne.s32.totalorder %s64, %s66
    %p73 = scmp.eq.s32.totalorder %s14, 1
    %p74 = por %p72, %p73
    %p75 = scmp.ne.s32.totalorder %s66, %s67
    %p76 = scmp.eq.s32.totalorder %s14, 0
    %p77 = por %p75, %p76
    %p78 = scmp.ne.s32.totalorder %s66, %s67
    %p79 = scmp.eq.s32.totalorder %s15, 1
    %p80 = por %p78, %p79
    %p82 = scmp.ne.s32.totalorder %s67, %s81
    %p83 = scmp.eq.s32.totalorder %s15, 0
    %p84 = por %p82, %p83
    %s85 = ssub.s32 %s9, %s16
    %p86 = scmp.eq.s32.totalorder %s85, 0
    %s88 = sadd.s32 %s87, 1
    %s89 = scalar_select %p86, %s87, %s88
    %p92 = pneg %p86
    %p93 = scmp.eq.s32.totalorder %s9, 1
    %p94 = por %p92, %p93
    %p95 = scmp.ne.s32.totalorder %s87, %s90
    %p96 = scmp.eq.s32.totalorder %s9, 0
    %p97 = por %p95, %p96
    %p98 = scmp.ne.s32.totalorder %s87, %s90
    %p99 = scmp.eq.s32.totalorder %s14, 1
    %p100 = por %p98, %p99
    %p101 = scmp.ne.s32.totalorder %s90, %s91
    %p102 = scmp.eq.s32.totalorder %s14, 0
    %p103 = por %p101, %p102
    %p104 = scmp.ne.s32.totalorder %s90, %s91
    %p105 = scmp.eq.s32.totalorder %s15, 1
    %p106 = por %p104, %p105
    %p108 = scmp.ne.s32.totalorder %s91, %s107
    %p109 = scmp.eq.s32.totalorder %s15, 0
    %p110 = por %p108, %p109
    %p111 = scmp.le.s32.totalorder 1, %s9
    %p112 = scmp.lt.s32.totalorder %s9, 3
    %p113 = pnand %p111, %p112
    %p114 = pneg %p113
    // Predicated region
    $region9: #{fpn_forward_pallas.13} parent=5 // pred_check
      _
    $region10: #{fpn_forward_pallas.13} parent=5 // pred_check_branch
      %116 = sbr.rel (%p113) target = $region12
    $region11: #{fpn_forward_pallas.13} parent=5 // pred_region
      %s117 = ssub.s32 %s9, 1
      // Predicated region
      $region13: #{fpn_forward_pallas.13} parent=11 // pred_check
        %p118 = pneg %p56
      $region14: #{fpn_forward_pallas.13} parent=11 // pred_check_branch
        %120 = sbr.rel (%p118) target = $region16
      $region15: #{fpn_forward_pallas.13} parent=11 // pred_region
        _
      $region16: #{fpn_forward_pallas.13} parent=11 // pred_fallthru
        _
      // Predicated region
      $region17: #{fpn_forward_pallas.13} parent=11 // pred_check
        %p121 = pneg %p77
      $region18: #{fpn_forward_pallas.13} parent=11 // pred_check_branch
        %123 = sbr.rel (%p121) target = $region20
      $region19: #{fpn_forward_pallas.13} parent=11 // pred_region
        _
      $region20: #{fpn_forward_pallas.13} parent=11 // pred_fallthru
        _
    $region12: #{fpn_forward_pallas.13} parent=5 // pred_fallthru
      _
    %p124 = scmp.lt.s32.totalorder %s9, 2
    // Predicated region
    $region21: #{fpn_forward_pallas.13} parent=5 // pred_check
      %p125 = pneg %p124
    $region22: #{fpn_forward_pallas.13} parent=5 // pred_check_branch
      %127 = sbr.rel (%p125) target = $region24
    $region23: #{fpn_forward_pallas.13} parent=5 // pred_region
      // Predicated region
      $region25: #{fpn_forward_pallas.13} parent=23 // pred_check
        %p128 = pneg %p29
      $region26: #{fpn_forward_pallas.13} parent=23 // pred_check_branch
        %130 = sbr.rel (%p128) target = $region28
      $region27: #{fpn_forward_pallas.13} parent=23 // pred_region
        %p131 = scmp.lt.s32.totalorder %s9, 1
        %s132 = scalar_select %p131, %s9, 1
        %s133 = smul.addr %s132, 43
        %s134 = smul.addr %s133, 4
        %s135 = scalar_lea.vmem %s0, %s134
      $region28: #{fpn_forward_pallas.13} parent=23 // pred_fallthru
        _
    $region24: #{fpn_forward_pallas.13} parent=5 // pred_fallthru
      _
    %p136 = scmp.le.s32.totalorder 1, %s9
    %p137 = scmp.lt.s32.totalorder %s9, 3
    %p138 = pnand %p136, %p137
    %p139 = pneg %p138
    // Predicated region
    $region29: #{fpn_forward_pallas.13} parent=5 // pred_check
      _
    $region30: #{fpn_forward_pallas.13} parent=5 // pred_check_branch
      %141 = sbr.rel (%p138) target = $region32
    $region31: #{fpn_forward_pallas.13} parent=5 // pred_region
      %s142 = ssub.s32 %s9, 1
      %p143 = scmp.lt.s32.totalorder %s14, 1
      %s144 = scalar_select %p143, %s14, 1
      %s145 = smul.addr %s144, 43
      %s146 = smul.addr %s145, 4
      %s147 = scalar_lea.vmem %s0, %s146
      %p148 = pneg %p35
      %p149 = pneg %p32
      %p150 = pneg %p56
      %p151 = pneg %p53
      %p152 = pneg %p77
      %p153 = pneg %p74
      %p154 = pneg %p103
      %p155 = pneg %p100
      %p156 = scmp.lt.s32.totalorder %s14, 1
      %s157 = scalar_select %p156, %s14, 1
      %s158 = smul.addr %s157, 36
      %s159 = smul.addr %s158, 8
      %s160 = scalar_lea.vmem %s3, %s159
      %p161 = scmp.lt.s32.totalorder %s14, 1
      %s162 = scalar_select %p161, %s14, 1
      %s163 = smul.addr %s162, 43
      %s164 = smul.addr %s163, 4
      %s165 = scalar_lea.vmem %s0, %s164
      %p166 = scmp.lt.s32.totalorder %s14, 1
      %s167 = scalar_select %p166, %s14, 1
      %s168 = smul.addr %s167, 36
      %s169 = smul.addr %s168, 8
      %s170 = scalar_lea.vmem %s3, %s169
      %v172 = vld [vmem:[%s165] sm:$0xf]
      %v173 = vld [vmem:[%s165 + $0x4] sm:$0xf]
      %v174 = vld [vmem:[%s165 + $0x8] sm:$0xf]
      %v175 = vld [vmem:[%s165 + $0xc] sm:$0xf]
      %v176 = vld [vmem:[%s165 + $0x10] sm:$0xf]
      %v177 = vld [vmem:[%s165 + $0x14] sm:$0xf]
      %v178 = vld [vmem:[%s165 + $0x18] sm:$0xf]
      %v179 = vld [vmem:[%s165 + $0x1c] sm:$0xf]
      %v180 = vld [vmem:[%s165 + $0x20] sm:$0xf]
      %v181 = vld [vmem:[%s165 + $0x24] sm:$0xf]
      %v182 = vld [vmem:[%s165 + $0x28] sm:$0xf]
      %v183 = vld [vmem:[%s165 + $0x2c] sm:$0xf]
      %v184 = vld [vmem:[%s165 + $0x30] sm:$0xf]
      %v185 = vld [vmem:[%s165 + $0x34] sm:$0xf]
      %v186 = vld [vmem:[%s165 + $0x38] sm:$0xf]
      %v187 = vld [vmem:[%s165 + $0x3c] sm:$0xf]
      %v188 = vld [vmem:[%s165 + $0x40] sm:$0xf]
      %v189 = vld [vmem:[%s165 + $0x44] sm:$0xf]
      %v190 = vld [vmem:[%s165 + $0x48] sm:$0xf]
      %v191 = vld [vmem:[%s165 + $0x4c] sm:$0xf]
      %v192 = vld [vmem:[%s165 + $0x50] sm:$0xf]
      %v193 = vld [vmem:[%s165 + $0x54] sm:$0xf]
      %v194 = vld [vmem:[%s165 + $0x58] sm:$0xf]
      %v195 = vld [vmem:[%s165 + $0x5c] sm:$0xf]
      %v196 = vld [vmem:[%s165 + $0x60] sm:$0xf]
      %v197 = vld [vmem:[%s165 + $0x64] sm:$0xf]
      %v198 = vld [vmem:[%s165 + $0x68] sm:$0xf]
      %v199 = vld [vmem:[%s165 + $0x6c] sm:$0xf]
      %v200 = vld [vmem:[%s165 + $0x70] sm:$0xf]
      %v201 = vld [vmem:[%s165 + $0x74] sm:$0xf]
      %v202 = vld [vmem:[%s165 + $0x78] sm:$0xf]
      %v203 = vld [vmem:[%s165 + $0x7c] sm:$0xf]
      %v204 = vld [vmem:[%s165 + $0x80] sm:$0xf]
      %v205 = vld [vmem:[%s165 + $0x84] sm:$0xf]
      %v206 = vld [vmem:[%s165 + $0x88] sm:$0xf]
      %v207 = vld [vmem:[%s165 + $0x8c] sm:$0xf]
      %v208 = vld [vmem:[%s1] sm:$0xf]
      %v209 = vld [vmem:[%s1 + $0x4] sm:$0xf]
      %v210 = vld [vmem:[%s1 + $0x8] sm:$0xf]
      %v211 = vld [vmem:[%s1 + $0xc] sm:$0xf]
      %v212 = vld [vmem:[%s165 + $0x90] sm:$0x1]
      %s213 = scalar_lea.vmem %s1, 16
      %v214 = vld [vmem:[%s213] sm:$0xf]
      %v215 = vld [vmem:[%s213 + $0x4] sm:$0xf]
      %v216 = vld [vmem:[%s213 + $0x8] sm:$0xf]
      %v217 = vld [vmem:[%s213 + $0xc] sm:$0xf]
      %v255 = vunpack.c.l.b16 %v172
      %v256 = vunpack.c.l.b16 %v173
      %v257 = vunpack.c.l.b16 %v174
      %v258 = vunpack.c.l.b16 %v175
      %v259 = vunpack.c.l.b16 %v176
      %v260 = vunpack.c.l.b16 %v177
      %v261 = vunpack.c.l.b16 %v178
      %v262 = vunpack.c.l.b16 %v179
      %v263 = vunpack.c.l.b16 %v180
      %v264 = vunpack.c.l.b16 %v181
      %v265 = vunpack.c.l.b16 %v182
      %v266 = vunpack.c.l.b16 %v183
      %v267 = vunpack.c.l.b16 %v184
      %v268 = vunpack.c.l.b16 %v185
      %v269 = vunpack.c.l.b16 %v186
      %v270 = vunpack.c.l.b16 %v187
      %v271 = vunpack.c.l.b16 %v188
      %v272 = vunpack.c.l.b16 %v189
      %v273 = vunpack.c.l.b16 %v190
      %v274 = vunpack.c.l.b16 %v191
      %v275 = vunpack.c.l.b16 %v192
      %v276 = vunpack.c.l.b16 %v193
      %v277 = vunpack.c.l.b16 %v194
      %v278 = vunpack.c.l.b16 %v195
      %v279 = vunpack.c.l.b16 %v196
      %v280 = vunpack.c.l.b16 %v197
      %v281 = vunpack.c.l.b16 %v198
      %v282 = vunpack.c.l.b16 %v199
      %v283 = vunpack.c.l.b16 %v200
      %v284 = vunpack.c.l.b16 %v201
      %v285 = vunpack.c.l.b16 %v202
      %v286 = vunpack.c.l.b16 %v203
      %v287 = vunpack.c.l.b16 %v204
      %v288 = vunpack.c.l.b16 %v205
      %v289 = vunpack.c.l.b16 %v206
      %v290 = vunpack.c.l.b16 %v207
      %v291 = vunpack.c.l.b16 %v212
      %v292 = vpack.c.b16 %v256, %v255
      %v293 = vpack.c.b16 %v258, %v257
      %v294 = vpack.c.b16 %v260, %v259
      %v295 = vpack.c.b16 %v262, %v261
      %v296 = vpack.c.b16 %v264, %v263
      %v297 = vpack.c.b16 %v266, %v265
      %v298 = vpack.c.b16 %v268, %v267
      %v299 = vpack.c.b16 %v270, %v269
      %v300 = vpack.c.b16 %v272, %v271
      %v301 = vpack.c.b16 %v274, %v273
      %v302 = vpack.c.b16 %v276, %v275
      %v303 = vpack.c.b16 %v278, %v277
      %v304 = vpack.c.b16 %v280, %v279
      %v305 = vpack.c.b16 %v282, %v281
      %v306 = vpack.c.b16 %v284, %v283
      %v307 = vpack.c.b16 %v286, %v285
      %v308 = vpack.c.b16 %v288, %v287
      %v309 = vpack.c.b16 %v290, %v289
      %v310 = vpack.c.b16 %v291, %v291
      %vm311 = vsmask.f32 7424
      %v313 = vshrl.u32 %v292, 16
      %v315 = vshll.u32 %v292, 16
      %v317 = vrot.slane %v315, 1
      %v318 = vor.u32 %v313, %v317
      %v320 = vshll.u32 %v293, 16
      %v322 = vrot.slane %v320, 1
      %v323 = vsel %vm311, %v318, %v322
      %v324 = vshrl.u32 %v293, 16
      %v326 = vor.u32 %v324, %v322
      %v328 = vshll.u32 %v294, 16
      %v330 = vrot.slane %v328, 1
      %v331 = vsel %vm311, %v326, %v330
      %v332 = vshrl.u32 %v294, 16
      %v334 = vor.u32 %v332, %v330
      %v336 = vshll.u32 %v295, 16
      %v338 = vrot.slane %v336, 1
      %v339 = vsel %vm311, %v334, %v338
      %v340 = vshrl.u32 %v295, 16
      %v342 = vor.u32 %v340, %v338
      %v344 = vshll.u32 %v296, 16
      %v346 = vrot.slane %v344, 1
      %v347 = vsel %vm311, %v342, %v346
      %v348 = vshrl.u32 %v296, 16
      %v350 = vor.u32 %v348, %v346
      %v352 = vshll.u32 %v297, 16
      %v354 = vrot.slane %v352, 1
      %v355 = vsel %vm311, %v350, %v354
      %v356 = vshrl.u32 %v297, 16
      %v358 = vor.u32 %v356, %v354
      %v360 = vshll.u32 %v298, 16
      %v362 = vrot.slane %v360, 1
      %v363 = vsel %vm311, %v358, %v362
      %v364 = vshrl.u32 %v298, 16
      %v366 = vor.u32 %v364, %v362
      %v368 = vshll.u32 %v299, 16
      %v370 = vrot.slane %v368, 1
      %v371 = vsel %vm311, %v366, %v370
      %v372 = vshrl.u32 %v299, 16
      %v374 = vor.u32 %v372, %v370
      %v376 = vshll.u32 %v300, 16
      %v378 = vrot.slane %v376, 1
      %v379 = vsel %vm311, %v374, %v378
      %v380 = vshrl.u32 %v300, 16
      %v382 = vor.u32 %v380, %v378
      %v384 = vshll.u32 %v301, 16
      %v386 = vrot.slane %v384, 1
      %v387 = vsel %vm311, %v382, %v386
      %v388 = vshrl.u32 %v301, 16
      %v390 = vor.u32 %v388, %v386
      %v392 = vshll.u32 %v302, 16
      %v394 = vrot.slane %v392, 1
      %v395 = vsel %vm311, %v390, %v394
      %v396 = vshrl.u32 %v302, 16
      %v398 = vor.u32 %v396, %v394
      %v400 = vshll.u32 %v303, 16
      %v402 = vrot.slane %v400, 1
      %v403 = vsel %vm311, %v398, %v402
      %v404 = vshrl.u32 %v303, 16
      %v406 = vor.u32 %v404, %v402
      %v408 = vshll.u32 %v304, 16
      %v410 = vrot.slane %v408, 1
      %v411 = vsel %vm311, %v406, %v410
      %v412 = vshrl.u32 %v304, 16
      %v414 = vor.u32 %v412, %v410
      %v416 = vshll.u32 %v305, 16
      %v418 = vrot.slane %v416, 1
      %v419 = vsel %vm311, %v414, %v418
      %v420 = vshrl.u32 %v305, 16
      %v422 = vor.u32 %v420, %v418
      %v424 = vshll.u32 %v306, 16
      %v426 = vrot.slane %v424, 1
      %v427 = vsel %vm311, %v422, %v426
      %v428 = vshrl.u32 %v306, 16
      %v430 = vor.u32 %v428, %v426
      %v432 = vshll.u32 %v307, 16
      %v434 = vrot.slane %v432, 1
      %v435 = vsel %vm311, %v430, %v434
      %v436 = vshrl.u32 %v307, 16
      %v438 = vor.u32 %v436, %v434
      %v440 = vshll.u32 %v308, 16
      %v442 = vrot.slane %v440, 1
      %v443 = vsel %vm311, %v438, %v442
      %v444 = vshrl.u32 %v308, 16
      %v446 = vor.u32 %v444, %v442
      %v448 = vshll.u32 %v309, 16
      %v450 = vrot.slane %v448, 1
      %v451 = vsel %vm311, %v446, %v450
      %v452 = vshrl.u32 %v309, 16
      %v454 = vor.u32 %v452, %v450
      %v456 = vshll.u32 %v310, 16
      %v458 = vrot.slane %v456, 1
      %v459 = vsel %vm311, %v454, %v458
      %v464 = vunpack.c.l.b16 %v214
      %v465 = vunpack.c.l.b16 %v215
      %v466 = vunpack.c.l.b16 %v216
      %v467 = vunpack.c.l.b16 %v217
      %v468 = vpack.c.b16 %v465, %v464
      %v469 = vpack.c.b16 %v467, %v466
      %vm472 = vcmask 261120
      %v474 = vsel %vm472, %v323, 0
      %v477 = vsel %vm472, %v331, 0
      %v480 = vsel %vm472, %v339, 0
      %v483 = vsel %vm472, %v347, 0
      %v486 = vsel %vm472, %v355, 0
      %v489 = vsel %vm472, %v363, 0
      %v492 = vsel %vm472, %v371, 0
      %v495 = vsel %vm472, %v379, 0
      %v498 = vsel %vm472, %v387, 0
      %v501 = vsel %vm472, %v395, 0
      %v504 = vsel %vm472, %v403, 0
      %v507 = vsel %vm472, %v411, 0
      %v510 = vsel %vm472, %v419, 0
      %v513 = vsel %vm472, %v427, 0
      %v516 = vsel %vm472, %v435, 0
      %v519 = vsel %vm472, %v443, 0
      %v522 = vsel %vm472, %v451, 0
      %v525 = vsel %vm472, %v459, 0
      %527 = vmatpush.bf16.msra.mxu0 0
      %528 = vmatpush.bf16.msra.mxu0 0
      %529 = vmatpush.bf16.msra.mxu0 0
      %530 = vmatpush.bf16.msra.mxu0 0
      %531 = vmatpush.bf16.msra.mxu0 0
      %532 = vmatpush.bf16.msra.mxu0 0
      %533 = vmatpush.bf16.msra.mxu0 %v469
      %534 = vmatpush.bf16.msra.mxu0 %v468
      %535 = vmatmul.bf16.gmra.mxu0 %v474
      %v536 = vpop.f32.mrf.mxu0
      %v537 = vadd.f32 0.0, %v536
      %v538 = vpop.f32.mrf.mxu0
      %v539 = vadd.f32 0.0, %v538
      %540 = vmatmul.bf16.gmra.mxu0 %v477
      %v541 = vpop.f32.mrf.mxu0
      %v542 = vadd.f32 0.0, %v541
      %v543 = vpop.f32.mrf.mxu0
      %v544 = vadd.f32 0.0, %v543
      %545 = vmatmul.bf16.gmra.mxu0 %v480
      %v546 = vpop.f32.mrf.mxu0
      %v547 = vadd.f32 0.0, %v546
      %v548 = vpop.f32.mrf.mxu0
      %v549 = vadd.f32 0.0, %v548
      %550 = vmatmul.bf16.gmra.mxu0 %v483
      %v551 = vpop.f32.mrf.mxu0
      %v552 = vadd.f32 0.0, %v551
      %v553 = vpop.f32.mrf.mxu0
      %v554 = vadd.f32 0.0, %v553
      %555 = vmatmul.bf16.gmra.mxu0 %v486
      %v556 = vpop.f32.mrf.mxu0
      %v557 = vadd.f32 0.0, %v556
      %v558 = vpop.f32.mrf.mxu0
      %v559 = vadd.f32 0.0, %v558
      %560 = vmatmul.bf16.gmra.mxu0 %v489
      %v561 = vpop.f32.mrf.mxu0
      %v562 = vadd.f32 0.0, %v561
      %v563 = vpop.f32.mrf.mxu0
      %v564 = vadd.f32 0.0, %v563
      %565 = vmatmul.bf16.gmra.mxu0 %v492
      %v566 = vpop.f32.mrf.mxu0
      %v567 = vadd.f32 0.0, %v566
      %v568 = vpop.f32.mrf.mxu0
      %v569 = vadd.f32 0.0, %v568
      %570 = vmatmul.bf16.gmra.mxu0 %v495
      %v571 = vpop.f32.mrf.mxu0
      %v572 = vadd.f32 0.0, %v571
      %v573 = vpop.f32.mrf.mxu0
      %v574 = vadd.f32 0.0, %v573
      %575 = vmatmul.bf16.gmra.mxu0 %v498
      %v576 = vpop.f32.mrf.mxu0
      %v577 = vadd.f32 0.0, %v576
      %v578 = vpop.f32.mrf.mxu0
      %v579 = vadd.f32 0.0, %v578
      %580 = vmatmul.bf16.gmra.mxu0 %v501
      %v581 = vpop.f32.mrf.mxu0
      %v582 = vadd.f32 0.0, %v581
      %v583 = vpop.f32.mrf.mxu0
      %v584 = vadd.f32 0.0, %v583
      %585 = vmatmul.bf16.gmra.mxu0 %v504
      %v586 = vpop.f32.mrf.mxu0
      %v587 = vadd.f32 0.0, %v586
      %v588 = vpop.f32.mrf.mxu0
      %v589 = vadd.f32 0.0, %v588
      %590 = vmatmul.bf16.gmra.mxu0 %v507
      %v591 = vpop.f32.mrf.mxu0
      %v592 = vadd.f32 0.0, %v591
      %v593 = vpop.f32.mrf.mxu0
      %v594 = vadd.f32 0.0, %v593
      %595 = vmatmul.bf16.gmra.mxu0 %v510
      %v596 = vpop.f32.mrf.mxu0
      %v597 = vadd.f32 0.0, %v596
      %v598 = vpop.f32.mrf.mxu0
      %v599 = vadd.f32 0.0, %v598
      %600 = vmatmul.bf16.gmra.mxu0 %v513
      %v601 = vpop.f32.mrf.mxu0
      %v602 = vadd.f32 0.0, %v601
      %v603 = vpop.f32.mrf.mxu0
      %v604 = vadd.f32 0.0, %v603
      %605 = vmatmul.bf16.gmra.mxu0 %v516
      %v606 = vpop.f32.mrf.mxu0
      %v607 = vadd.f32 0.0, %v606
      %v608 = vpop.f32.mrf.mxu0
      %v609 = vadd.f32 0.0, %v608
      %610 = vmatmul.bf16.gmra.mxu0 %v519
      %v611 = vpop.f32.mrf.mxu0
      %v612 = vadd.f32 0.0, %v611
      %v613 = vpop.f32.mrf.mxu0
      %v614 = vadd.f32 0.0, %v613
      %615 = vmatmul.bf16.gmra.mxu0 %v522
      %v616 = vpop.f32.mrf.mxu0
      %v617 = vadd.f32 0.0, %v616
      %v618 = vpop.f32.mrf.mxu0
      %v619 = vadd.f32 0.0, %v618
      %620 = vmatmul.bf16.gmra.mxu0 %v525
      %v621 = vpop.f32.mrf.mxu0
      %v622 = vadd.f32 0.0, %v621
      %v623 = vpop.f32.mrf.mxu0
      %v624 = vadd.f32 0.0, %v623
      %625 = vdwg.mxu0
      %v630 = vunpack.c.l.b16 %v208
      %v631 = vunpack.c.l.b16 %v209
      %v632 = vunpack.c.l.b16 %v210
      %v633 = vunpack.c.l.b16 %v211
      %v634 = vpack.c.b16 %v631, %v630
      %v635 = vpack.c.b16 %v633, %v632
      %v638 = vsel %vm472, %v292, 0
      %v640 = vsel %vm472, %v293, 0
      %v642 = vsel %vm472, %v294, 0
      %v644 = vsel %vm472, %v295, 0
      %v646 = vsel %vm472, %v296, 0
      %v648 = vsel %vm472, %v297, 0
      %v650 = vsel %vm472, %v298, 0
      %v652 = vsel %vm472, %v299, 0
      %v654 = vsel %vm472, %v300, 0
      %v656 = vsel %vm472, %v301, 0
      %v658 = vsel %vm472, %v302, 0
      %v660 = vsel %vm472, %v303, 0
      %v662 = vsel %vm472, %v304, 0
      %v664 = vsel %vm472, %v305, 0
      %v666 = vsel %vm472, %v306, 0
      %v668 = vsel %vm472, %v307, 0
      %v670 = vsel %vm472, %v308, 0
      %v672 = vsel %vm472, %v309, 0
      %674 = vmatpush.bf16.msra.mxu0 0
      %675 = vmatpush.bf16.msra.mxu0 0
      %676 = vmatpush.bf16.msra.mxu0 0
      %677 = vmatpush.bf16.msra.mxu0 0
      %678 = vmatpush.bf16.msra.mxu0 0
      %679 = vmatpush.bf16.msra.mxu0 0
      %680 = vmatpush.bf16.msra.mxu0 %v635
      %681 = vmatpush.bf16.msra.mxu0 %v634
      %682 = vmatmul.bf16.gmra.mxu0 %v638
      %v683 = vpop.f32.mrf.mxu0
      %v684 = vadd.f32 %v537, %v683
      %v685 = vpop.f32.mrf.mxu0
      %v686 = vadd.f32 %v539, %v685
      %687 = vmatmul.bf16.gmra.mxu0 %v640
      %v688 = vpop.f32.mrf.mxu0
      %v689 = vadd.f32 %v542, %v688
      %v690 = vpop.f32.mrf.mxu0
      %v691 = vadd.f32 %v544, %v690
      %692 = vmatmul.bf16.gmra.mxu0 %v642
      %v693 = vpop.f32.mrf.mxu0
      %v694 = vadd.f32 %v547, %v693
      %v695 = vpop.f32.mrf.mxu0
      %v696 = vadd.f32 %v549, %v695
      %697 = vmatmul.bf16.gmra.mxu0 %v644
      %v698 = vpop.f32.mrf.mxu0
      %v699 = vadd.f32 %v552, %v698
      %v700 = vpop.f32.mrf.mxu0
      %v701 = vadd.f32 %v554, %v700
      %702 = vmatmul.bf16.gmra.mxu0 %v646
      %v703 = vpop.f32.mrf.mxu0
      %v704 = vadd.f32 %v557, %v703
      %v705 = vpop.f32.mrf.mxu0
      %v706 = vadd.f32 %v559, %v705
      %707 = vmatmul.bf16.gmra.mxu0 %v648
      %v708 = vpop.f32.mrf.mxu0
      %v709 = vadd.f32 %v562, %v708
      %v710 = vpop.f32.mrf.mxu0
      %v711 = vadd.f32 %v564, %v710
      %712 = vmatmul.bf16.gmra.mxu0 %v650
      %v713 = vpop.f32.mrf.mxu0
      %v714 = vadd.f32 %v567, %v713
      %v715 = vpop.f32.mrf.mxu0
      %v716 = vadd.f32 %v569, %v715
      %717 = vmatmul.bf16.gmra.mxu0 %v652
      %v718 = vpop.f32.mrf.mxu0
      %v719 = vadd.f32 %v572, %v718
      %v720 = vpop.f32.mrf.mxu0
      %v721 = vadd.f32 %v574, %v720
      %722 = vmatmul.bf16.gmra.mxu0 %v654
      %v723 = vpop.f32.mrf.mxu0
      %v724 = vadd.f32 %v577, %v723
      %v725 = vpop.f32.mrf.mxu0
      %v726 = vadd.f32 %v579, %v725
      %727 = vmatmul.bf16.gmra.mxu0 %v656
      %v728 = vpop.f32.mrf.mxu0
      %v729 = vadd.f32 %v582, %v728
      %v730 = vpop.f32.mrf.mxu0
      %v731 = vadd.f32 %v584, %v730
      %732 = vmatmul.bf16.gmra.mxu0 %v658
      %v733 = vpop.f32.mrf.mxu0
      %v734 = vadd.f32 %v587, %v733
      %v735 = vpop.f32.mrf.mxu0
      %v736 = vadd.f32 %v589, %v735
      %737 = vmatmul.bf16.gmra.mxu0 %v660
      %v738 = vpop.f32.mrf.mxu0
      %v739 = vadd.f32 %v592, %v738
      %v740 = vpop.f32.mrf.mxu0
      %v741 = vadd.f32 %v594, %v740
      %742 = vmatmul.bf16.gmra.mxu0 %v662
      %v743 = vpop.f32.mrf.mxu0
      %v744 = vadd.f32 %v597, %v743
      %v745 = vpop.f32.mrf.mxu0
      %v746 = vadd.f32 %v599, %v745
      %747 = vmatmul.bf16.gmra.mxu0 %v664
      %v748 = vpop.f32.mrf.mxu0
      %v749 = vadd.f32 %v602, %v748
      %v750 = vpop.f32.mrf.mxu0
      %v751 = vadd.f32 %v604, %v750
      %752 = vmatmul.bf16.gmra.mxu0 %v666
      %v753 = vpop.f32.mrf.mxu0
      %v754 = vadd.f32 %v607, %v753
      %v755 = vpop.f32.mrf.mxu0
      %v756 = vadd.f32 %v609, %v755
      %757 = vmatmul.bf16.gmra.mxu0 %v668
      %v758 = vpop.f32.mrf.mxu0
      %v759 = vadd.f32 %v612, %v758
      %v760 = vpop.f32.mrf.mxu0
      %v761 = vadd.f32 %v614, %v760
      %762 = vmatmul.bf16.gmra.mxu0 %v670
      %v763 = vpop.f32.mrf.mxu0
      %v764 = vadd.f32 %v617, %v763
      %v765 = vpop.f32.mrf.mxu0
      %v766 = vadd.f32 %v619, %v765
      %767 = vmatmul.bf16.gmra.mxu0 %v672
      %v768 = vpop.f32.mrf.mxu0
      %v769 = vadd.f32 %v622, %v768
      %v770 = vpop.f32.mrf.mxu0
      %v771 = vadd.f32 %v624, %v770
      %772 = vdwg.mxu0
      %v773 = vld [vmem:[%s165] sm:$0xe]
      %s774 = scalar_lea.vmem %s1, 32
      %v775 = vld [vmem:[%s774] sm:$0xf]
      %v776 = vld [vmem:[%s774 + $0x4] sm:$0xf]
      %v777 = vld [vmem:[%s774 + $0x8] sm:$0xf]
      %v778 = vld [vmem:[%s774 + $0xc] sm:$0xf]
      %v780 = vunpack.c.l.b16 %v773
      %v781 = vpack.c.b16 %v256, %v780
      %vm782 = vcmask 1046528
      %v783 = vrot.slane %v781, 1
      %v784 = vrot.slane %v293, 1
      %v785 = vsel %vm782, %v783, %v784
      %v786 = vrot.slane %v294, 1
      %v787 = vsel %vm782, %v784, %v786
      %v788 = vrot.slane %v295, 1
      %v789 = vsel %vm782, %v786, %v788
      %v790 = vrot.slane %v296, 1
      %v791 = vsel %vm782, %v788, %v790
      %v792 = vrot.slane %v297, 1
      %v793 = vsel %vm782, %v790, %v792
      %v794 = vrot.slane %v298, 1
      %v795 = vsel %vm782, %v792, %v794
      %v796 = vrot.slane %v299, 1
      %v797 = vsel %vm782, %v794, %v796
      %v798 = vrot.slane %v300, 1
      %v799 = vsel %vm782, %v796, %v798
      %v800 = vrot.slane %v301, 1
      %v801 = vsel %vm782, %v798, %v800
      %v802 = vrot.slane %v302, 1
      %v803 = vsel %vm782, %v800, %v802
      %v804 = vrot.slane %v303, 1
      %v805 = vsel %vm782, %v802, %v804
      %v806 = vrot.slane %v304, 1
      %v807 = vsel %vm782, %v804, %v806
      %v808 = vrot.slane %v305, 1
      %v809 = vsel %vm782, %v806, %v808
      %v810 = vrot.slane %v306, 1
      %v811 = vsel %vm782, %v808, %v810
      %v812 = vrot.slane %v307, 1
      %v813 = vsel %vm782, %v810, %v812
      %v814 = vrot.slane %v308, 1
      %v815 = vsel %vm782, %v812, %v814
      %v816 = vrot.slane %v309, 1
      %v817 = vsel %vm782, %v814, %v816
      %v818 = vrot.slane %v310, 1
      %v819 = vsel %vm782, %v816, %v818
      %v824 = vunpack.c.l.b16 %v775
      %v825 = vunpack.c.l.b16 %v776
      %v826 = vunpack.c.l.b16 %v777
      %v827 = vunpack.c.l.b16 %v778
      %v828 = vpack.c.b16 %v825, %v824
      %v829 = vpack.c.b16 %v827, %v826
      %v833 = vsel %vm472, %v785, 0
      %v836 = vsel %vm472, %v787, 0
      %v839 = vsel %vm472, %v789, 0
      %v842 = vsel %vm472, %v791, 0
      %v845 = vsel %vm472, %v793, 0
      %v848 = vsel %vm472, %v795, 0
      %v851 = vsel %vm472, %v797, 0
      %v854 = vsel %vm472, %v799, 0
      %v857 = vsel %vm472, %v801, 0
      %v860 = vsel %vm472, %v803, 0
      %v863 = vsel %vm472, %v805, 0
      %v866 = vsel %vm472, %v807, 0
      %v869 = vsel %vm472, %v809, 0
      %v872 = vsel %vm472, %v811, 0
      %v875 = vsel %vm472, %v813, 0
      %v878 = vsel %vm472, %v815, 0
      %v881 = vsel %vm472, %v817, 0
      %v884 = vsel %vm472, %v819, 0
      %886 = vmatpush.bf16.msra.mxu0 0
      %887 = vmatpush.bf16.msra.mxu0 0
      %888 = vmatpush.bf16.msra.mxu0 0
      %889 = vmatpush.bf16.msra.mxu0 0
      %890 = vmatpush.bf16.msra.mxu0 0
      %891 = vmatpush.bf16.msra.mxu0 0
      %892 = vmatpush.bf16.msra.mxu0 %v829
      %893 = vmatpush.bf16.msra.mxu0 %v828
      %894 = vmatmul.bf16.gmra.mxu0 %v833
      %v895 = vpop.f32.mrf.mxu0
      %v896 = vadd.f32 0.0, %v895
      %v897 = vpop.f32.mrf.mxu0
      %v898 = vadd.f32 0.0, %v897
      %899 = vmatmul.bf16.gmra.mxu0 %v836
      %v900 = vpop.f32.mrf.mxu0
      %v901 = vadd.f32 0.0, %v900
      %v902 = vpop.f32.mrf.mxu0
      %v903 = vadd.f32 0.0, %v902
      %904 = vmatmul.bf16.gmra.mxu0 %v839
      %v905 = vpop.f32.mrf.mxu0
      %v906 = vadd.f32 0.0, %v905
      %v907 = vpop.f32.mrf.mxu0
      %v908 = vadd.f32 0.0, %v907
      %909 = vmatmul.bf16.gmra.mxu0 %v842
      %v910 = vpop.f32.mrf.mxu0
      %v911 = vadd.f32 0.0, %v910
      %v912 = vpop.f32.mrf.mxu0
      %v913 = vadd.f32 0.0, %v912
      %914 = vmatmul.bf16.gmra.mxu0 %v845
      %v915 = vpop.f32.mrf.mxu0
      %v916 = vadd.f32 0.0, %v915
      %v917 = vpop.f32.mrf.mxu0
      %v918 = vadd.f32 0.0, %v917
      %919 = vmatmul.bf16.gmra.mxu0 %v848
      %v920 = vpop.f32.mrf.mxu0
      %v921 = vadd.f32 0.0, %v920
      %v922 = vpop.f32.mrf.mxu0
      %v923 = vadd.f32 0.0, %v922
      %924 = vmatmul.bf16.gmra.mxu0 %v851
      %v925 = vpop.f32.mrf.mxu0
      %v926 = vadd.f32 0.0, %v925
      %v927 = vpop.f32.mrf.mxu0
      %v928 = vadd.f32 0.0, %v927
      %929 = vmatmul.bf16.gmra.mxu0 %v854
      %v930 = vpop.f32.mrf.mxu0
      %v931 = vadd.f32 0.0, %v930
      %v932 = vpop.f32.mrf.mxu0
      %v933 = vadd.f32 0.0, %v932
      %934 = vmatmul.bf16.gmra.mxu0 %v857
      %v935 = vpop.f32.mrf.mxu0
      %v936 = vadd.f32 0.0, %v935
      %v937 = vpop.f32.mrf.mxu0
      %v938 = vadd.f32 0.0, %v937
      %939 = vmatmul.bf16.gmra.mxu0 %v860
      %v940 = vpop.f32.mrf.mxu0
      %v941 = vadd.f32 0.0, %v940
      %v942 = vpop.f32.mrf.mxu0
      %v943 = vadd.f32 0.0, %v942
      %944 = vmatmul.bf16.gmra.mxu0 %v863
      %v945 = vpop.f32.mrf.mxu0
      %v946 = vadd.f32 0.0, %v945
      %v947 = vpop.f32.mrf.mxu0
      %v948 = vadd.f32 0.0, %v947
      %949 = vmatmul.bf16.gmra.mxu0 %v866
      %v950 = vpop.f32.mrf.mxu0
      %v951 = vadd.f32 0.0, %v950
      %v952 = vpop.f32.mrf.mxu0
      %v953 = vadd.f32 0.0, %v952
      %954 = vmatmul.bf16.gmra.mxu0 %v869
      %v955 = vpop.f32.mrf.mxu0
      %v956 = vadd.f32 0.0, %v955
      %v957 = vpop.f32.mrf.mxu0
      %v958 = vadd.f32 0.0, %v957
      %959 = vmatmul.bf16.gmra.mxu0 %v872
      %v960 = vpop.f32.mrf.mxu0
      %v961 = vadd.f32 0.0, %v960
      %v962 = vpop.f32.mrf.mxu0
      %v963 = vadd.f32 0.0, %v962
      %964 = vmatmul.bf16.gmra.mxu0 %v875
      %v965 = vpop.f32.mrf.mxu0
      %v966 = vadd.f32 0.0, %v965
      %v967 = vpop.f32.mrf.mxu0
      %v968 = vadd.f32 0.0, %v967
      %969 = vmatmul.bf16.gmra.mxu0 %v878
      %v970 = vpop.f32.mrf.mxu0
      %v971 = vadd.f32 0.0, %v970
      %v972 = vpop.f32.mrf.mxu0
      %v973 = vadd.f32 0.0, %v972
      %974 = vmatmul.bf16.gmra.mxu0 %v881
      %v975 = vpop.f32.mrf.mxu0
      %v976 = vadd.f32 0.0, %v975
      %v977 = vpop.f32.mrf.mxu0
      %v978 = vadd.f32 0.0, %v977
      %979 = vmatmul.bf16.gmra.mxu0 %v884
      %v980 = vpop.f32.mrf.mxu0
      %v981 = vadd.f32 0.0, %v980
      %v982 = vpop.f32.mrf.mxu0
      %v983 = vadd.f32 0.0, %v982
      %984 = vdwg.mxu0
      %v985 = vadd.f32 %v684, %v896
      %v986 = vadd.f32 %v686, %v898
      %v987 = vadd.f32 %v689, %v901
      %v988 = vadd.f32 %v691, %v903
      %v989 = vadd.f32 %v694, %v906
      %v990 = vadd.f32 %v696, %v908
      %v991 = vadd.f32 %v699, %v911
      %v992 = vadd.f32 %v701, %v913
      %v993 = vadd.f32 %v704, %v916
      %v994 = vadd.f32 %v706, %v918
      %v995 = vadd.f32 %v709, %v921
      %v996 = vadd.f32 %v711, %v923
      %v997 = vadd.f32 %v714, %v926
      %v998 = vadd.f32 %v716, %v928
      %v999 = vadd.f32 %v719, %v931
      %v1000 = vadd.f32 %v721, %v933
      %v1001 = vadd.f32 %v724, %v936
      %v1002 = vadd.f32 %v726, %v938
      %v1003 = vadd.f32 %v729, %v941
      %v1004 = vadd.f32 %v731, %v943
      %v1005 = vadd.f32 %v734, %v946
      %v1006 = vadd.f32 %v736, %v948
      %v1007 = vadd.f32 %v739, %v951
      %v1008 = vadd.f32 %v741, %v953
      %v1009 = vadd.f32 %v744, %v956
      %v1010 = vadd.f32 %v746, %v958
      %v1011 = vadd.f32 %v749, %v961
      %v1012 = vadd.f32 %v751, %v963
      %v1013 = vadd.f32 %v754, %v966
      %v1014 = vadd.f32 %v756, %v968
      %v1015 = vadd.f32 %v759, %v971
      %v1016 = vadd.f32 %v761, %v973
      %v1017 = vadd.f32 %v764, %v976
      %v1018 = vadd.f32 %v766, %v978
      %v1019 = vadd.f32 %v769, %v981
      %v1020 = vadd.f32 %v771, %v983
      %v1021 = vld [vmem:[%s165 + $0x8] sm:$0xe]
      %v1022 = vld [vmem:[%s165 + $0xc] sm:$0xf]
      %v1023 = vld [vmem:[%s165 + $0x10] sm:$0xf]
      %v1024 = vld [vmem:[%s165 + $0x14] sm:$0xf]
      %v1025 = vld [vmem:[%s165 + $0x18] sm:$0xf]
      %v1026 = vld [vmem:[%s165 + $0x1c] sm:$0xf]
      %v1027 = vld [vmem:[%s165 + $0x20] sm:$0xf]
      %v1028 = vld [vmem:[%s165 + $0x24] sm:$0xf]
      %v1029 = vld [vmem:[%s165 + $0x28] sm:$0xf]
      %v1030 = vld [vmem:[%s165 + $0x2c] sm:$0xf]
      %v1031 = vld [vmem:[%s165 + $0x30] sm:$0xf]
      %v1032 = vld [vmem:[%s165 + $0x34] sm:$0xf]
      %v1033 = vld [vmem:[%s165 + $0x38] sm:$0xf]
      %v1034 = vld [vmem:[%s165 + $0x3c] sm:$0xf]
      %v1035 = vld [vmem:[%s165 + $0x40] sm:$0xf]
      %v1036 = vld [vmem:[%s165 + $0x44] sm:$0xf]
      %v1037 = vld [vmem:[%s165 + $0x48] sm:$0xf]
      %v1038 = vld [vmem:[%s165 + $0x4c] sm:$0xf]
      %v1039 = vld [vmem:[%s165 + $0x50] sm:$0xf]
      %v1040 = vld [vmem:[%s165 + $0x54] sm:$0xf]
      %v1041 = vld [vmem:[%s165 + $0x58] sm:$0xf]
      %v1042 = vld [vmem:[%s165 + $0x5c] sm:$0xf]
      %v1043 = vld [vmem:[%s165 + $0x60] sm:$0xf]
      %v1044 = vld [vmem:[%s165 + $0x64] sm:$0xf]
      %v1045 = vld [vmem:[%s165 + $0x68] sm:$0xf]
      %v1046 = vld [vmem:[%s165 + $0x6c] sm:$0xf]
      %v1047 = vld [vmem:[%s165 + $0x70] sm:$0xf]
      %v1048 = vld [vmem:[%s165 + $0x74] sm:$0xf]
      %v1049 = vld [vmem:[%s165 + $0x78] sm:$0xf]
      %v1050 = vld [vmem:[%s165 + $0x7c] sm:$0xf]
      %v1051 = vld [vmem:[%s165 + $0x80] sm:$0xf]
      %v1052 = vld [vmem:[%s165 + $0x84] sm:$0xf]
      %v1053 = vld [vmem:[%s165 + $0x88] sm:$0xf]
      %v1054 = vld [vmem:[%s165 + $0x8c] sm:$0xf]
      %v1055 = vld [vmem:[%s165 + $0x90] sm:$0xf]
      %v1056 = vld [vmem:[%s165 + $0x94] sm:$0xf]
      %v1057 = vld [vmem:[%s165 + $0x98] sm:$0x1]
      %s1058 = scalar_lea.vmem %s1, 48
      %v1059 = vld [vmem:[%s1058] sm:$0xf]
      %v1060 = vld [vmem:[%s1058 + $0x4] sm:$0xf]
      %v1061 = vld [vmem:[%s1058 + $0x8] sm:$0xf]
      %v1062 = vld [vmem:[%s1058 + $0xc] sm:$0xf]
      %v1100 = vunpack.c.l.b16 %v1021
      %v1101 = vunpack.c.l.b16 %v1022
      %v1102 = vunpack.c.l.b16 %v1023
      %v1103 = vunpack.c.l.b16 %v1024
      %v1104 = vunpack.c.l.b16 %v1025
      %v1105 = vunpack.c.l.b16 %v1026
      %v1106 = vunpack.c.l.b16 %v1027
      %v1107 = vunpack.c.l.b16 %v1028
      %v1108 = vunpack.c.l.b16 %v1029
      %v1109 = vunpack.c.l.b16 %v1030
      %v1110 = vunpack.c.l.b16 %v1031
      %v1111 = vunpack.c.l.b16 %v1032
      %v1112 = vunpack.c.l.b16 %v1033
      %v1113 = vunpack.c.l.b16 %v1034
      %v1114 = vunpack.c.l.b16 %v1035
      %v1115 = vunpack.c.l.b16 %v1036
      %v1116 = vunpack.c.l.b16 %v1037
      %v1117 = vunpack.c.l.b16 %v1038
      %v1118 = vunpack.c.l.b16 %v1039
      %v1119 = vunpack.c.l.b16 %v1040
      %v1120 = vunpack.c.l.b16 %v1041
      %v1121 = vunpack.c.l.b16 %v1042
      %v1122 = vunpack.c.l.b16 %v1043
      %v1123 = vunpack.c.l.b16 %v1044
      %v1124 = vunpack.c.l.b16 %v1045
      %v1125 = vunpack.c.l.b16 %v1046
      %v1126 = vunpack.c.l.b16 %v1047
      %v1127 = vunpack.c.l.b16 %v1048
      %v1128 = vunpack.c.l.b16 %v1049
      %v1129 = vunpack.c.l.b16 %v1050
      %v1130 = vunpack.c.l.b16 %v1051
      %v1131 = vunpack.c.l.b16 %v1052
      %v1132 = vunpack.c.l.b16 %v1053
      %v1133 = vunpack.c.l.b16 %v1054
      %v1134 = vunpack.c.l.b16 %v1055
      %v1135 = vunpack.c.l.b16 %v1056
      %v1136 = vunpack.c.l.b16 %v1057
      %v1137 = vpack.c.b16 %v1101, %v1100
      %v1138 = vpack.c.b16 %v1103, %v1102
      %v1139 = vpack.c.b16 %v1105, %v1104
      %v1140 = vpack.c.b16 %v1107, %v1106
      %v1141 = vpack.c.b16 %v1109, %v1108
      %v1142 = vpack.c.b16 %v1111, %v1110
      %v1143 = vpack.c.b16 %v1113, %v1112
      %v1144 = vpack.c.b16 %v1115, %v1114
      %v1145 = vpack.c.b16 %v1117, %v1116
      %v1146 = vpack.c.b16 %v1119, %v1118
      %v1147 = vpack.c.b16 %v1121, %v1120
      %v1148 = vpack.c.b16 %v1123, %v1122
      %v1149 = vpack.c.b16 %v1125, %v1124
      %v1150 = vpack.c.b16 %v1127, %v1126
      %v1151 = vpack.c.b16 %v1129, %v1128
      %v1152 = vpack.c.b16 %v1131, %v1130
      %v1153 = vpack.c.b16 %v1133, %v1132
      %v1154 = vpack.c.b16 %v1135, %v1134
      %v1155 = vpack.c.b16 %v1136, %v1136
      %v1156 = vrot.slane %v1137, 1
      %v1157 = vrot.slane %v1138, 1
      %v1158 = vsel %vm782, %v1156, %v1157
      %v1159 = vrot.slane %v1139, 1
      %v1160 = vsel %vm782, %v1157, %v1159
      %v1161 = vrot.slane %v1140, 1
      %v1162 = vsel %vm782, %v1159, %v1161
      %v1163 = vrot.slane %v1141, 1
      %v1164 = vsel %vm782, %v1161, %v1163
      %v1165 = vrot.slane %v1142, 1
      %v1166 = vsel %vm782, %v1163, %v1165
      %v1167 = vrot.slane %v1143, 1
      %v1168 = vsel %vm782, %v1165, %v1167
      %v1169 = vrot.slane %v1144, 1
      %v1170 = vsel %vm782, %v1167, %v1169
      %v1171 = vrot.slane %v1145, 1
      %v1172 = vsel %vm782, %v1169, %v1171
      %v1173 = vrot.slane %v1146, 1
      %v1174 = vsel %vm782, %v1171, %v1173
      %v1175 = vrot.slane %v1147, 1
      %v1176 = vsel %vm782, %v1173, %v1175
      %v1177 = vrot.slane %v1148, 1
      %v1178 = vsel %vm782, %v1175, %v1177
      %v1179 = vrot.slane %v1149, 1
      %v1180 = vsel %vm782, %v1177, %v1179
      %v1181 = vrot.slane %v1150, 1
      %v1182 = vsel %vm782, %v1179, %v1181
      %v1183 = vrot.slane %v1151, 1
      %v1184 = vsel %vm782, %v1181, %v1183
      %v1185 = vrot.slane %v1152, 1
      %v1186 = vsel %vm782, %v1183, %v1185
      %v1187 = vrot.slane %v1153, 1
      %v1188 = vsel %vm782, %v1185, %v1187
      %v1189 = vrot.slane %v1154, 1
      %v1190 = vsel %vm782, %v1187, %v1189
      %v1191 = vrot.slane %v1155, 1
      %v1192 = vsel %vm782, %v1189, %v1191
      %v1197 = vunpack.c.l.b16 %v1059
      %v1198 = vunpack.c.l.b16 %v1060
      %v1199 = vunpack.c.l.b16 %v1061
      %v1200 = vunpack.c.l.b16 %v1062
      %v1201 = vpack.c.b16 %v1198, %v1197
      %v1202 = vpack.c.b16 %v1200, %v1199
      %v1206 = vsel %vm472, %v1158, 0
      %v1209 = vsel %vm472, %v1160, 0
      %v1212 = vsel %vm472, %v1162, 0
      %v1215 = vsel %vm472, %v1164, 0
      %v1218 = vsel %vm472, %v1166, 0
      %v1221 = vsel %vm472, %v1168, 0
      %v1224 = vsel %vm472, %v1170, 0
      %v1227 = vsel %vm472, %v1172, 0
      %v1230 = vsel %vm472, %v1174, 0
      %v1233 = vsel %vm472, %v1176, 0
      %v1236 = vsel %vm472, %v1178, 0
      %v1239 = vsel %vm472, %v1180, 0
      %v1242 = vsel %vm472, %v1182, 0
      %v1245 = vsel %vm472, %v1184, 0
      %v1248 = vsel %vm472, %v1186, 0
      %v1251 = vsel %vm472, %v1188, 0
      %v1254 = vsel %vm472, %v1190, 0
      %v1257 = vsel %vm472, %v1192, 0
      %1259 = vmatpush.bf16.msra.mxu0 0
      %1260 = vmatpush.bf16.msra.mxu0 0
      %1261 = vmatpush.bf16.msra.mxu0 0
      %1262 = vmatpush.bf16.msra.mxu0 0
      %1263 = vmatpush.bf16.msra.mxu0 0
      %1264 = vmatpush.bf16.msra.mxu0 0
      %1265 = vmatpush.bf16.msra.mxu0 %v1202
      %1266 = vmatpush.bf16.msra.mxu0 %v1201
      %1267 = vmatmul.bf16.gmra.mxu0 %v1206
      %v1268 = vpop.f32.mrf.mxu0
      %v1269 = vadd.f32 0.0, %v1268
      %v1270 = vpop.f32.mrf.mxu0
      %v1271 = vadd.f32 0.0, %v1270
      %1272 = vmatmul.bf16.gmra.mxu0 %v1209
      %v1273 = vpop.f32.mrf.mxu0
      %v1274 = vadd.f32 0.0, %v1273
      %v1275 = vpop.f32.mrf.mxu0
      %v1276 = vadd.f32 0.0, %v1275
      %1277 = vmatmul.bf16.gmra.mxu0 %v1212
      %v1278 = vpop.f32.mrf.mxu0
      %v1279 = vadd.f32 0.0, %v1278
      %v1280 = vpop.f32.mrf.mxu0
      %v1281 = vadd.f32 0.0, %v1280
      %1282 = vmatmul.bf16.gmra.mxu0 %v1215
      %v1283 = vpop.f32.mrf.mxu0
      %v1284 = vadd.f32 0.0, %v1283
      %v1285 = vpop.f32.mrf.mxu0
      %v1286 = vadd.f32 0.0, %v1285
      %1287 = vmatmul.bf16.gmra.mxu0 %v1218
      %v1288 = vpop.f32.mrf.mxu0
      %v1289 = vadd.f32 0.0, %v1288
      %v1290 = vpop.f32.mrf.mxu0
      %v1291 = vadd.f32 0.0, %v1290
      %1292 = vmatmul.bf16.gmra.mxu0 %v1221
      %v1293 = vpop.f32.mrf.mxu0
      %v1294 = vadd.f32 0.0, %v1293
      %v1295 = vpop.f32.mrf.mxu0
      %v1296 = vadd.f32 0.0, %v1295
      %1297 = vmatmul.bf16.gmra.mxu0 %v1224
      %v1298 = vpop.f32.mrf.mxu0
      %v1299 = vadd.f32 0.0, %v1298
      %v1300 = vpop.f32.mrf.mxu0
      %v1301 = vadd.f32 0.0, %v1300
      %1302 = vmatmul.bf16.gmra.mxu0 %v1227
      %v1303 = vpop.f32.mrf.mxu0
      %v1304 = vadd.f32 0.0, %v1303
      %v1305 = vpop.f32.mrf.mxu0
      %v1306 = vadd.f32 0.0, %v1305
      %1307 = vmatmul.bf16.gmra.mxu0 %v1230
      %v1308 = vpop.f32.mrf.mxu0
      %v1309 = vadd.f32 0.0, %v1308
      %v1310 = vpop.f32.mrf.mxu0
      %v1311 = vadd.f32 0.0, %v1310
      %1312 = vmatmul.bf16.gmra.mxu0 %v1233
      %v1313 = vpop.f32.mrf.mxu0
      %v1314 = vadd.f32 0.0, %v1313
      %v1315 = vpop.f32.mrf.mxu0
      %v1316 = vadd.f32 0.0, %v1315
      %1317 = vmatmul.bf16.gmra.mxu0 %v1236
      %v1318 = vpop.f32.mrf.mxu0
      %v1319 = vadd.f32 0.0, %v1318
      %v1320 = vpop.f32.mrf.mxu0
      %v1321 = vadd.f32 0.0, %v1320
      %1322 = vmatmul.bf16.gmra.mxu0 %v1239
      %v1323 = vpop.f32.mrf.mxu0
      %v1324 = vadd.f32 0.0, %v1323
      %v1325 = vpop.f32.mrf.mxu0
      %v1326 = vadd.f32 0.0, %v1325
      %1327 = vmatmul.bf16.gmra.mxu0 %v1242
      %v1328 = vpop.f32.mrf.mxu0
      %v1329 = vadd.f32 0.0, %v1328
      %v1330 = vpop.f32.mrf.mxu0
      %v1331 = vadd.f32 0.0, %v1330
      %1332 = vmatmul.bf16.gmra.mxu0 %v1245
      %v1333 = vpop.f32.mrf.mxu0
      %v1334 = vadd.f32 0.0, %v1333
      %v1335 = vpop.f32.mrf.mxu0
      %v1336 = vadd.f32 0.0, %v1335
      %1337 = vmatmul.bf16.gmra.mxu0 %v1248
      %v1338 = vpop.f32.mrf.mxu0
      %v1339 = vadd.f32 0.0, %v1338
      %v1340 = vpop.f32.mrf.mxu0
      %v1341 = vadd.f32 0.0, %v1340
      %1342 = vmatmul.bf16.gmra.mxu0 %v1251
      %v1343 = vpop.f32.mrf.mxu0
      %v1344 = vadd.f32 0.0, %v1343
      %v1345 = vpop.f32.mrf.mxu0
      %v1346 = vadd.f32 0.0, %v1345
      %1347 = vmatmul.bf16.gmra.mxu0 %v1254
      %v1348 = vpop.f32.mrf.mxu0
      %v1349 = vadd.f32 0.0, %v1348
      %v1350 = vpop.f32.mrf.mxu0
      %v1351 = vadd.f32 0.0, %v1350
      %1352 = vmatmul.bf16.gmra.mxu0 %v1257
      %v1353 = vpop.f32.mrf.mxu0
      %v1354 = vadd.f32 0.0, %v1353
      %v1355 = vpop.f32.mrf.mxu0
      %v1356 = vadd.f32 0.0, %v1355
      %1357 = vdwg.mxu0
      %v1358 = vadd.f32 %v985, %v1269
      %v1359 = vadd.f32 %v986, %v1271
      %v1360 = vadd.f32 %v987, %v1274
      %v1361 = vadd.f32 %v988, %v1276
      %v1362 = vadd.f32 %v989, %v1279
      %v1363 = vadd.f32 %v990, %v1281
      %v1364 = vadd.f32 %v991, %v1284
      %v1365 = vadd.f32 %v992, %v1286
      %v1366 = vadd.f32 %v993, %v1289
      %v1367 = vadd.f32 %v994, %v1291
      %v1368 = vadd.f32 %v995, %v1294
      %v1369 = vadd.f32 %v996, %v1296
      %v1370 = vadd.f32 %v997, %v1299
      %v1371 = vadd.f32 %v998, %v1301
      %v1372 = vadd.f32 %v999, %v1304
      %v1373 = vadd.f32 %v1000, %v1306
      %v1374 = vadd.f32 %v1001, %v1309
      %v1375 = vadd.f32 %v1002, %v1311
      %v1376 = vadd.f32 %v1003, %v1314
      %v1377 = vadd.f32 %v1004, %v1316
      %v1378 = vadd.f32 %v1005, %v1319
      %v1379 = vadd.f32 %v1006, %v1321
      %v1380 = vadd.f32 %v1007, %v1324
      %v1381 = vadd.f32 %v1008, %v1326
      %v1382 = vadd.f32 %v1009, %v1329
      %v1383 = vadd.f32 %v1010, %v1331
      %v1384 = vadd.f32 %v1011, %v1334
      %v1385 = vadd.f32 %v1012, %v1336
      %v1386 = vadd.f32 %v1013, %v1339
      %v1387 = vadd.f32 %v1014, %v1341
      %v1388 = vadd.f32 %v1015, %v1344
      %v1389 = vadd.f32 %v1016, %v1346
      %v1390 = vadd.f32 %v1017, %v1349
      %v1391 = vadd.f32 %v1018, %v1351
      %v1392 = vadd.f32 %v1019, %v1354
      %v1393 = vadd.f32 %v1020, %v1356
      %v1394 = vld [vmem:[%s165 + $0x98] sm:$0x3]
      %s1395 = scalar_lea.vmem %s1, 64
      %v1396 = vld [vmem:[%s1395] sm:$0xf]
      %v1397 = vld [vmem:[%s1395 + $0x4] sm:$0xf]
      %v1398 = vld [vmem:[%s1395 + $0x8] sm:$0xf]
      %v1399 = vld [vmem:[%s1395 + $0xc] sm:$0xf]
      %v1401 = vunpack.c.l.b16 %v1394
      %v1402 = vpack.c.b16 %v1401, %v1401
      %vm1403 = vsmask.f32 6400
      %v1405 = vshrl.u32 %v1137, 16
      %v1407 = vrot.slane %v1405, 1
      %v1408 = vshll.u32 %v1137, 16
      %v1410 = vrot.slane %v1408, 2
      %v1411 = vor.u32 %v1407, %v1410
      %v1413 = vshrl.u32 %v1138, 16
      %v1415 = vrot.slane %v1413, 1
      %v1416 = vshll.u32 %v1138, 16
      %v1418 = vrot.slane %v1416, 2
      %v1419 = vor.u32 %v1415, %v1418
      %v1420 = vsel %vm1403, %v1411, %v1419
      %v1422 = vshrl.u32 %v1139, 16
      %v1424 = vrot.slane %v1422, 1
      %v1425 = vshll.u32 %v1139, 16
      %v1427 = vrot.slane %v1425, 2
      %v1428 = vor.u32 %v1424, %v1427
      %v1429 = vsel %vm1403, %v1419, %v1428
      %v1431 = vshrl.u32 %v1140, 16
      %v1433 = vrot.slane %v1431, 1
      %v1434 = vshll.u32 %v1140, 16
      %v1436 = vrot.slane %v1434, 2
      %v1437 = vor.u32 %v1433, %v1436
      %v1438 = vsel %vm1403, %v1428, %v1437
      %v1440 = vshrl.u32 %v1141, 16
      %v1442 = vrot.slane %v1440, 1
      %v1443 = vshll.u32 %v1141, 16
      %v1445 = vrot.slane %v1443, 2
      %v1446 = vor.u32 %v1442, %v1445
      %v1447 = vsel %vm1403, %v1437, %v1446
      %v1449 = vshrl.u32 %v1142, 16
      %v1451 = vrot.slane %v1449, 1
      %v1452 = vshll.u32 %v1142, 16
      %v1454 = vrot.slane %v1452, 2
      %v1455 = vor.u32 %v1451, %v1454
      %v1456 = vsel %vm1403, %v1446, %v1455
      %v1458 = vshrl.u32 %v1143, 16
      %v1460 = vrot.slane %v1458, 1
      %v1461 = vshll.u32 %v1143, 16
      %v1463 = vrot.slane %v1461, 2
      %v1464 = vor.u32 %v1460, %v1463
      %v1465 = vsel %vm1403, %v1455, %v1464
      %v1467 = vshrl.u32 %v1144, 16
      %v1469 = vrot.slane %v1467, 1
      %v1470 = vshll.u32 %v1144, 16
      %v1472 = vrot.slane %v1470, 2
      %v1473 = vor.u32 %v1469, %v1472
      %v1474 = vsel %vm1403, %v1464, %v1473
      %v1476 = vshrl.u32 %v1145, 16
      %v1478 = vrot.slane %v1476, 1
      %v1479 = vshll.u32 %v1145, 16
      %v1481 = vrot.slane %v1479, 2
      %v1482 = vor.u32 %v1478, %v1481
      %v1483 = vsel %vm1403, %v1473, %v1482
      %v1485 = vshrl.u32 %v1146, 16
      %v1487 = vrot.slane %v1485, 1
      %v1488 = vshll.u32 %v1146, 16
      %v1490 = vrot.slane %v1488, 2
      %v1491 = vor.u32 %v1487, %v1490
      %v1492 = vsel %vm1403, %v1482, %v1491
      %v1494 = vshrl.u32 %v1147, 16
      %v1496 = vrot.slane %v1494, 1
      %v1497 = vshll.u32 %v1147, 16
      %v1499 = vrot.slane %v1497, 2
      %v1500 = vor.u32 %v1496, %v1499
      %v1501 = vsel %vm1403, %v1491, %v1500
      %v1503 = vshrl.u32 %v1148, 16
      %v1505 = vrot.slane %v1503, 1
      %v1506 = vshll.u32 %v1148, 16
      %v1508 = vrot.slane %v1506, 2
      %v1509 = vor.u32 %v1505, %v1508
      %v1510 = vsel %vm1403, %v1500, %v1509
      %v1512 = vshrl.u32 %v1149, 16
      %v1514 = vrot.slane %v1512, 1
      %v1515 = vshll.u32 %v1149, 16
      %v1517 = vrot.slane %v1515, 2
      %v1518 = vor.u32 %v1514, %v1517
      %v1519 = vsel %vm1403, %v1509, %v1518
      %v1521 = vshrl.u32 %v1150, 16
      %v1523 = vrot.slane %v1521, 1
      %v1524 = vshll.u32 %v1150, 16
      %v1526 = vrot.slane %v1524, 2
      %v1527 = vor.u32 %v1523, %v1526
      %v1528 = vsel %vm1403, %v1518, %v1527
      %v1530 = vshrl.u32 %v1151, 16
      %v1532 = vrot.slane %v1530, 1
      %v1533 = vshll.u32 %v1151, 16
      %v1535 = vrot.slane %v1533, 2
      %v1536 = vor.u32 %v1532, %v1535
      %v1537 = vsel %vm1403, %v1527, %v1536
      %v1539 = vshrl.u32 %v1152, 16
      %v1541 = vrot.slane %v1539, 1
      %v1542 = vshll.u32 %v1152, 16
      %v1544 = vrot.slane %v1542, 2
      %v1545 = vor.u32 %v1541, %v1544
      %v1546 = vsel %vm1403, %v1536, %v1545
      %v1548 = vshrl.u32 %v1153, 16
      %v1550 = vrot.slane %v1548, 1
      %v1551 = vshll.u32 %v1153, 16
      %v1553 = vrot.slane %v1551, 2
      %v1554 = vor.u32 %v1550, %v1553
      %v1555 = vsel %vm1403, %v1545, %v1554
      %v1557 = vshrl.u32 %v1154, 16
      %v1559 = vrot.slane %v1557, 1
      %v1560 = vshll.u32 %v1154, 16
      %v1562 = vrot.slane %v1560, 2
      %v1563 = vor.u32 %v1559, %v1562
      %v1564 = vsel %vm1403, %v1554, %v1563
      %v1566 = vshrl.u32 %v1402, 16
      %v1568 = vrot.slane %v1566, 1
      %v1569 = vshll.u32 %v1402, 16
      %v1571 = vrot.slane %v1569, 2
      %v1572 = vor.u32 %v1568, %v1571
      %v1573 = vsel %vm1403, %v1563, %v1572
      %v1578 = vunpack.c.l.b16 %v1396
      %v1579 = vunpack.c.l.b16 %v1397
      %v1580 = vunpack.c.l.b16 %v1398
      %v1581 = vunpack.c.l.b16 %v1399
      %v1582 = vpack.c.b16 %v1579, %v1578
      %v1583 = vpack.c.b16 %v1581, %v1580
      %v1587 = vsel %vm472, %v1420, 0
      %v1590 = vsel %vm472, %v1429, 0
      %v1593 = vsel %vm472, %v1438, 0
      %v1596 = vsel %vm472, %v1447, 0
      %v1599 = vsel %vm472, %v1456, 0
      %v1602 = vsel %vm472, %v1465, 0
      %v1605 = vsel %vm472, %v1474, 0
      %v1608 = vsel %vm472, %v1483, 0
      %v1611 = vsel %vm472, %v1492, 0
      %v1614 = vsel %vm472, %v1501, 0
      %v1617 = vsel %vm472, %v1510, 0
      %v1620 = vsel %vm472, %v1519, 0
      %v1623 = vsel %vm472, %v1528, 0
      %v1626 = vsel %vm472, %v1537, 0
      %v1629 = vsel %vm472, %v1546, 0
      %v1632 = vsel %vm472, %v1555, 0
      %v1635 = vsel %vm472, %v1564, 0
      %v1638 = vsel %vm472, %v1573, 0
      %1640 = vmatpush.bf16.msra.mxu0 0
      %1641 = vmatpush.bf16.msra.mxu0 0
      %1642 = vmatpush.bf16.msra.mxu0 0
      %1643 = vmatpush.bf16.msra.mxu0 0
      %1644 = vmatpush.bf16.msra.mxu0 0
      %1645 = vmatpush.bf16.msra.mxu0 0
      %1646 = vmatpush.bf16.msra.mxu0 %v1583
      %1647 = vmatpush.bf16.msra.mxu0 %v1582
      %1648 = vmatmul.bf16.gmra.mxu0 %v1587
      %v1649 = vpop.f32.mrf.mxu0
      %v1650 = vadd.f32 0.0, %v1649
      %v1651 = vpop.f32.mrf.mxu0
      %v1652 = vadd.f32 0.0, %v1651
      %1653 = vmatmul.bf16.gmra.mxu0 %v1590
      %v1654 = vpop.f32.mrf.mxu0
      %v1655 = vadd.f32 0.0, %v1654
      %v1656 = vpop.f32.mrf.mxu0
      %v1657 = vadd.f32 0.0, %v1656
      %1658 = vmatmul.bf16.gmra.mxu0 %v1593
      %v1659 = vpop.f32.mrf.mxu0
      %v1660 = vadd.f32 0.0, %v1659
      %v1661 = vpop.f32.mrf.mxu0
      %v1662 = vadd.f32 0.0, %v1661
      %1663 = vmatmul.bf16.gmra.mxu0 %v1596
      %v1664 = vpop.f32.mrf.mxu0
      %v1665 = vadd.f32 0.0, %v1664
      %v1666 = vpop.f32.mrf.mxu0
      %v1667 = vadd.f32 0.0, %v1666
      %1668 = vmatmul.bf16.gmra.mxu0 %v1599
      %v1669 = vpop.f32.mrf.mxu0
      %v1670 = vadd.f32 0.0, %v1669
      %v1671 = vpop.f32.mrf.mxu0
      %v1672 = vadd.f32 0.0, %v1671
      %1673 = vmatmul.bf16.gmra.mxu0 %v1602
      %v1674 = vpop.f32.mrf.mxu0
      %v1675 = vadd.f32 0.0, %v1674
      %v1676 = vpop.f32.mrf.mxu0
      %v1677 = vadd.f32 0.0, %v1676
      %1678 = vmatmul.bf16.gmra.mxu0 %v1605
      %v1679 = vpop.f32.mrf.mxu0
      %v1680 = vadd.f32 0.0, %v1679
      %v1681 = vpop.f32.mrf.mxu0
      %v1682 = vadd.f32 0.0, %v1681
      %1683 = vmatmul.bf16.gmra.mxu0 %v1608
      %v1684 = vpop.f32.mrf.mxu0
      %v1685 = vadd.f32 0.0, %v1684
      %v1686 = vpop.f32.mrf.mxu0
      %v1687 = vadd.f32 0.0, %v1686
      %1688 = vmatmul.bf16.gmra.mxu0 %v1611
      %v1689 = vpop.f32.mrf.mxu0
      %v1690 = vadd.f32 0.0, %v1689
      %v1691 = vpop.f32.mrf.mxu0
      %v1692 = vadd.f32 0.0, %v1691
      %1693 = vmatmul.bf16.gmra.mxu0 %v1614
      %v1694 = vpop.f32.mrf.mxu0
      %v1695 = vadd.f32 0.0, %v1694
      %v1696 = vpop.f32.mrf.mxu0
      %v1697 = vadd.f32 0.0, %v1696
      %1698 = vmatmul.bf16.gmra.mxu0 %v1617
      %v1699 = vpop.f32.mrf.mxu0
      %v1700 = vadd.f32 0.0, %v1699
      %v1701 = vpop.f32.mrf.mxu0
      %v1702 = vadd.f32 0.0, %v1701
      %1703 = vmatmul.bf16.gmra.mxu0 %v1620
      %v1704 = vpop.f32.mrf.mxu0
      %v1705 = vadd.f32 0.0, %v1704
      %v1706 = vpop.f32.mrf.mxu0
      %v1707 = vadd.f32 0.0, %v1706
      %1708 = vmatmul.bf16.gmra.mxu0 %v1623
      %v1709 = vpop.f32.mrf.mxu0
      %v1710 = vadd.f32 0.0, %v1709
      %v1711 = vpop.f32.mrf.mxu0
      %v1712 = vadd.f32 0.0, %v1711
      %1713 = vmatmul.bf16.gmra.mxu0 %v1626
      %v1714 = vpop.f32.mrf.mxu0
      %v1715 = vadd.f32 0.0, %v1714
      %v1716 = vpop.f32.mrf.mxu0
      %v1717 = vadd.f32 0.0, %v1716
      %1718 = vmatmul.bf16.gmra.mxu0 %v1629
      %v1719 = vpop.f32.mrf.mxu0
      %v1720 = vadd.f32 0.0, %v1719
      %v1721 = vpop.f32.mrf.mxu0
      %v1722 = vadd.f32 0.0, %v1721
      %1723 = vmatmul.bf16.gmra.mxu0 %v1632
      %v1724 = vpop.f32.mrf.mxu0
      %v1725 = vadd.f32 0.0, %v1724
      %v1726 = vpop.f32.mrf.mxu0
      %v1727 = vadd.f32 0.0, %v1726
      %1728 = vmatmul.bf16.gmra.mxu0 %v1635
      %v1729 = vpop.f32.mrf.mxu0
      %v1730 = vadd.f32 0.0, %v1729
      %v1731 = vpop.f32.mrf.mxu0
      %v1732 = vadd.f32 0.0, %v1731
      %1733 = vmatmul.bf16.gmra.mxu0 %v1638
      %v1734 = vpop.f32.mrf.mxu0
      %v1735 = vadd.f32 0.0, %v1734
      %v1736 = vpop.f32.mrf.mxu0
      %v1737 = vadd.f32 0.0, %v1736
      %1738 = vdwg.mxu0
      %v1739 = vadd.f32 %v1358, %v1650
      %v1740 = vadd.f32 %v1359, %v1652
      %v1741 = vadd.f32 %v1360, %v1655
      %v1742 = vadd.f32 %v1361, %v1657
      %v1743 = vadd.f32 %v1362, %v1660
      %v1744 = vadd.f32 %v1363, %v1662
      %v1745 = vadd.f32 %v1364, %v1665
      %v1746 = vadd.f32 %v1365, %v1667
      %v1747 = vadd.f32 %v1366, %v1670
      %v1748 = vadd.f32 %v1367, %v1672
      %v1749 = vadd.f32 %v1368, %v1675
      %v1750 = vadd.f32 %v1369, %v1677
      %v1751 = vadd.f32 %v1370, %v1680
      %v1752 = vadd.f32 %v1371, %v1682
      %v1753 = vadd.f32 %v1372, %v1685
      %v1754 = vadd.f32 %v1373, %v1687
      %v1755 = vadd.f32 %v1374, %v1690
      %v1756 = vadd.f32 %v1375, %v1692
      %v1757 = vadd.f32 %v1376, %v1695
      %v1758 = vadd.f32 %v1377, %v1697
      %v1759 = vadd.f32 %v1378, %v1700
      %v1760 = vadd.f32 %v1379, %v1702
      %v1761 = vadd.f32 %v1380, %v1705
      %v1762 = vadd.f32 %v1381, %v1707
      %v1763 = vadd.f32 %v1382, %v1710
      %v1764 = vadd.f32 %v1383, %v1712
      %v1765 = vadd.f32 %v1384, %v1715
      %v1766 = vadd.f32 %v1385, %v1717
      %v1767 = vadd.f32 %v1386, %v1720
      %v1768 = vadd.f32 %v1387, %v1722
      %v1769 = vadd.f32 %v1388, %v1725
      %v1770 = vadd.f32 %v1389, %v1727
      %v1771 = vadd.f32 %v1390, %v1730
      %v1772 = vadd.f32 %v1391, %v1732
      %v1773 = vadd.f32 %v1392, %v1735
      %v1774 = vadd.f32 %v1393, %v1737
      %v1775 = vld [vmem:[%s165 + $0x8] sm:$0xc]
      %s1776 = scalar_lea.vmem %s1, 80
      %v1777 = vld [vmem:[%s1776] sm:$0xf]
      %v1778 = vld [vmem:[%s1776 + $0x4] sm:$0xf]
      %v1779 = vld [vmem:[%s1776 + $0x8] sm:$0xf]
      %v1780 = vld [vmem:[%s1776 + $0xc] sm:$0xf]
      %v1782 = vunpack.c.l.b16 %v1775
      %v1783 = vpack.c.b16 %v1101, %v1782
      %vm1784 = vcmask 1045504
      %v1785 = vrot.slane %v1783, 2
      %v1786 = vrot.slane %v1138, 2
      %v1787 = vsel %vm1784, %v1785, %v1786
      %v1788 = vrot.slane %v1139, 2
      %v1789 = vsel %vm1784, %v1786, %v1788
      %v1790 = vrot.slane %v1140, 2
      %v1791 = vsel %vm1784, %v1788, %v1790
      %v1792 = vrot.slane %v1141, 2
      %v1793 = vsel %vm1784, %v1790, %v1792
      %v1794 = vrot.slane %v1142, 2
      %v1795 = vsel %vm1784, %v1792, %v1794
      %v1796 = vrot.slane %v1143, 2
      %v1797 = vsel %vm1784, %v1794, %v1796
      %v1798 = vrot.slane %v1144, 2
      %v1799 = vsel %vm1784, %v1796, %v1798
      %v1800 = vrot.slane %v1145, 2
      %v1801 = vsel %vm1784, %v1798, %v1800
      %v1802 = vrot.slane %v1146, 2
      %v1803 = vsel %vm1784, %v1800, %v1802
      %v1804 = vrot.slane %v1147, 2
      %v1805 = vsel %vm1784, %v1802, %v1804
      %v1806 = vrot.slane %v1148, 2
      %v1807 = vsel %vm1784, %v1804, %v1806
      %v1808 = vrot.slane %v1149, 2
      %v1809 = vsel %vm1784, %v1806, %v1808
      %v1810 = vrot.slane %v1150, 2
      %v1811 = vsel %vm1784, %v1808, %v1810
      %v1812 = vrot.slane %v1151, 2
      %v1813 = vsel %vm1784, %v1810, %v1812
      %v1814 = vrot.slane %v1152, 2
      %v1815 = vsel %vm1784, %v1812, %v1814
      %v1816 = vrot.slane %v1153, 2
      %v1817 = vsel %vm1784, %v1814, %v1816
      %v1818 = vrot.slane %v1154, 2
      %v1819 = vsel %vm1784, %v1816, %v1818
      %v1820 = vrot.slane %v1402, 2
      %v1821 = vsel %vm1784, %v1818, %v1820
      %v1826 = vunpack.c.l.b16 %v1777
      %v1827 = vunpack.c.l.b16 %v1778
      %v1828 = vunpack.c.l.b16 %v1779
      %v1829 = vunpack.c.l.b16 %v1780
      %v1830 = vpack.c.b16 %v1827, %v1826
      %v1831 = vpack.c.b16 %v1829, %v1828
      %v1835 = vsel %vm472, %v1787, 0
      %v1838 = vsel %vm472, %v1789, 0
      %v1841 = vsel %vm472, %v1791, 0
      %v1844 = vsel %vm472, %v1793, 0
      %v1847 = vsel %vm472, %v1795, 0
      %v1850 = vsel %vm472, %v1797, 0
      %v1853 = vsel %vm472, %v1799, 0
      %v1856 = vsel %vm472, %v1801, 0
      %v1859 = vsel %vm472, %v1803, 0
      %v1862 = vsel %vm472, %v1805, 0
      %v1865 = vsel %vm472, %v1807, 0
      %v1868 = vsel %vm472, %v1809, 0
      %v1871 = vsel %vm472, %v1811, 0
      %v1874 = vsel %vm472, %v1813, 0
      %v1877 = vsel %vm472, %v1815, 0
      %v1880 = vsel %vm472, %v1817, 0
      %v1883 = vsel %vm472, %v1819, 0
      %v1886 = vsel %vm472, %v1821, 0
      %1888 = vmatpush.bf16.msra.mxu0 0
      %1889 = vmatpush.bf16.msra.mxu0 0
      %1890 = vmatpush.bf16.msra.mxu0 0
      %1891 = vmatpush.bf16.msra.mxu0 0
      %1892 = vmatpush.bf16.msra.mxu0 0
      %1893 = vmatpush.bf16.msra.mxu0 0
      %1894 = vmatpush.bf16.msra.mxu0 %v1831
      %1895 = vmatpush.bf16.msra.mxu0 %v1830
      %1896 = vmatmul.bf16.gmra.mxu0 %v1835
      %v1897 = vpop.f32.mrf.mxu0
      %v1898 = vadd.f32 0.0, %v1897
      %v1899 = vpop.f32.mrf.mxu0
      %v1900 = vadd.f32 0.0, %v1899
      %1901 = vmatmul.bf16.gmra.mxu0 %v1838
      %v1902 = vpop.f32.mrf.mxu0
      %v1903 = vadd.f32 0.0, %v1902
      %v1904 = vpop.f32.mrf.mxu0
      %v1905 = vadd.f32 0.0, %v1904
      %1906 = vmatmul.bf16.gmra.mxu0 %v1841
      %v1907 = vpop.f32.mrf.mxu0
      %v1908 = vadd.f32 0.0, %v1907
      %v1909 = vpop.f32.mrf.mxu0
      %v1910 = vadd.f32 0.0, %v1909
      %1911 = vmatmul.bf16.gmra.mxu0 %v1844
      %v1912 = vpop.f32.mrf.mxu0
      %v1913 = vadd.f32 0.0, %v1912
      %v1914 = vpop.f32.mrf.mxu0
      %v1915 = vadd.f32 0.0, %v1914
      %1916 = vmatmul.bf16.gmra.mxu0 %v1847
      %v1917 = vpop.f32.mrf.mxu0
      %v1918 = vadd.f32 0.0, %v1917
      %v1919 = vpop.f32.mrf.mxu0
      %v1920 = vadd.f32 0.0, %v1919
      %1921 = vmatmul.bf16.gmra.mxu0 %v1850
      %v1922 = vpop.f32.mrf.mxu0
      %v1923 = vadd.f32 0.0, %v1922
      %v1924 = vpop.f32.mrf.mxu0
      %v1925 = vadd.f32 0.0, %v1924
      %1926 = vmatmul.bf16.gmra.mxu0 %v1853
      %v1927 = vpop.f32.mrf.mxu0
      %v1928 = vadd.f32 0.0, %v1927
      %v1929 = vpop.f32.mrf.mxu0
      %v1930 = vadd.f32 0.0, %v1929
      %1931 = vmatmul.bf16.gmra.mxu0 %v1856
      %v1932 = vpop.f32.mrf.mxu0
      %v1933 = vadd.f32 0.0, %v1932
      %v1934 = vpop.f32.mrf.mxu0
      %v1935 = vadd.f32 0.0, %v1934
      %1936 = vmatmul.bf16.gmra.mxu0 %v1859
      %v1937 = vpop.f32.mrf.mxu0
      %v1938 = vadd.f32 0.0, %v1937
      %v1939 = vpop.f32.mrf.mxu0
      %v1940 = vadd.f32 0.0, %v1939
      %1941 = vmatmul.bf16.gmra.mxu0 %v1862
      %v1942 = vpop.f32.mrf.mxu0
      %v1943 = vadd.f32 0.0, %v1942
      %v1944 = vpop.f32.mrf.mxu0
      %v1945 = vadd.f32 0.0, %v1944
      %1946 = vmatmul.bf16.gmra.mxu0 %v1865
      %v1947 = vpop.f32.mrf.mxu0
      %v1948 = vadd.f32 0.0, %v1947
      %v1949 = vpop.f32.mrf.mxu0
      %v1950 = vadd.f32 0.0, %v1949
      %1951 = vmatmul.bf16.gmra.mxu0 %v1868
      %v1952 = vpop.f32.mrf.mxu0
      %v1953 = vadd.f32 0.0, %v1952
      %v1954 = vpop.f32.mrf.mxu0
      %v1955 = vadd.f32 0.0, %v1954
      %1956 = vmatmul.bf16.gmra.mxu0 %v1871
      %v1957 = vpop.f32.mrf.mxu0
      %v1958 = vadd.f32 0.0, %v1957
      %v1959 = vpop.f32.mrf.mxu0
      %v1960 = vadd.f32 0.0, %v1959
      %1961 = vmatmul.bf16.gmra.mxu0 %v1874
      %v1962 = vpop.f32.mrf.mxu0
      %v1963 = vadd.f32 0.0, %v1962
      %v1964 = vpop.f32.mrf.mxu0
      %v1965 = vadd.f32 0.0, %v1964
      %1966 = vmatmul.bf16.gmra.mxu0 %v1877
      %v1967 = vpop.f32.mrf.mxu0
      %v1968 = vadd.f32 0.0, %v1967
      %v1969 = vpop.f32.mrf.mxu0
      %v1970 = vadd.f32 0.0, %v1969
      %1971 = vmatmul.bf16.gmra.mxu0 %v1880
      %v1972 = vpop.f32.mrf.mxu0
      %v1973 = vadd.f32 0.0, %v1972
      %v1974 = vpop.f32.mrf.mxu0
      %v1975 = vadd.f32 0.0, %v1974
      %1976 = vmatmul.bf16.gmra.mxu0 %v1883
      %v1977 = vpop.f32.mrf.mxu0
      %v1978 = vadd.f32 0.0, %v1977
      %v1979 = vpop.f32.mrf.mxu0
      %v1980 = vadd.f32 0.0, %v1979
      %1981 = vmatmul.bf16.gmra.mxu0 %v1886
      %v1982 = vpop.f32.mrf.mxu0
      %v1983 = vadd.f32 0.0, %v1982
      %v1984 = vpop.f32.mrf.mxu0
      %v1985 = vadd.f32 0.0, %v1984
      %1986 = vdwg.mxu0
      %v1987 = vadd.f32 %v1739, %v1898
      %v1988 = vadd.f32 %v1740, %v1900
      %v1989 = vadd.f32 %v1741, %v1903
      %v1990 = vadd.f32 %v1742, %v1905
      %v1991 = vadd.f32 %v1743, %v1908
      %v1992 = vadd.f32 %v1744, %v1910
      %v1993 = vadd.f32 %v1745, %v1913
      %v1994 = vadd.f32 %v1746, %v1915
      %v1995 = vadd.f32 %v1747, %v1918
      %v1996 = vadd.f32 %v1748, %v1920
      %v1997 = vadd.f32 %v1749, %v1923
      %v1998 = vadd.f32 %v1750, %v1925
      %v1999 = vadd.f32 %v1751, %v1928
      %v2000 = vadd.f32 %v1752, %v1930
      %v2001 = vadd.f32 %v1753, %v1933
      %v2002 = vadd.f32 %v1754, %v1935
      %v2003 = vadd.f32 %v1755, %v1938
      %v2004 = vadd.f32 %v1756, %v1940
      %v2005 = vadd.f32 %v1757, %v1943
      %v2006 = vadd.f32 %v1758, %v1945
      %v2007 = vadd.f32 %v1759, %v1948
      %v2008 = vadd.f32 %v1760, %v1950
      %v2009 = vadd.f32 %v1761, %v1953
      %v2010 = vadd.f32 %v1762, %v1955
      %v2011 = vadd.f32 %v1763, %v1958
      %v2012 = vadd.f32 %v1764, %v1960
      %v2013 = vadd.f32 %v1765, %v1963
      %v2014 = vadd.f32 %v1766, %v1965
      %v2015 = vadd.f32 %v1767, %v1968
      %v2016 = vadd.f32 %v1768, %v1970
      %v2017 = vadd.f32 %v1769, %v1973
      %v2018 = vadd.f32 %v1770, %v1975
      %v2019 = vadd.f32 %v1771, %v1978
      %v2020 = vadd.f32 %v1772, %v1980
      %v2021 = vadd.f32 %v1773, %v1983
      %v2022 = vadd.f32 %v1774, %v1985
      %v2023 = vld [vmem:[%s165 + $0x10] sm:$0xc]
      %v2024 = vld [vmem:[%s165 + $0x14] sm:$0xf]
      %v2025 = vld [vmem:[%s165 + $0x18] sm:$0xf]
      %v2026 = vld [vmem:[%s165 + $0x1c] sm:$0xf]
      %v2027 = vld [vmem:[%s165 + $0x20] sm:$0xf]
      %v2028 = vld [vmem:[%s165 + $0x24] sm:$0xf]
      %v2029 = vld [vmem:[%s165 + $0x28] sm:$0xf]
      %v2030 = vld [vmem:[%s165 + $0x2c] sm:$0xf]
      %v2031 = vld [vmem:[%s165 + $0x30] sm:$0xf]
      %v2032 = vld [vmem:[%s165 + $0x34] sm:$0xf]
      %v2033 = vld [vmem:[%s165 + $0x38] sm:$0xf]
      %v2034 = vld [vmem:[%s165 + $0x3c] sm:$0xf]
      %v2035 = vld [vmem:[%s165 + $0x40] sm:$0xf]
      %v2036 = vld [vmem:[%s165 + $0x44] sm:$0xf]
      %v2037 = vld [vmem:[%s165 + $0x48] sm:$0xf]
      %v2038 = vld [vmem:[%s165 + $0x4c] sm:$0xf]
      %v2039 = vld [vmem:[%s165 + $0x50] sm:$0xf]
      %v2040 = vld [vmem:[%s165 + $0x54] sm:$0xf]
      %v2041 = vld [vmem:[%s165 + $0x58] sm:$0xf]
      %v2042 = vld [vmem:[%s165 + $0x5c] sm:$0xf]
      %v2043 = vld [vmem:[%s165 + $0x60] sm:$0xf]
      %v2044 = vld [vmem:[%s165 + $0x64] sm:$0xf]
      %v2045 = vld [vmem:[%s165 + $0x68] sm:$0xf]
      %v2046 = vld [vmem:[%s165 + $0x6c] sm:$0xf]
      %v2047 = vld [vmem:[%s165 + $0x70] sm:$0xf]
      %v2048 = vld [vmem:[%s165 + $0x74] sm:$0xf]
      %v2049 = vld [vmem:[%s165 + $0x78] sm:$0xf]
      %v2050 = vld [vmem:[%s165 + $0x7c] sm:$0xf]
      %v2051 = vld [vmem:[%s165 + $0x80] sm:$0xf]
      %v2052 = vld [vmem:[%s165 + $0x84] sm:$0xf]
      %v2053 = vld [vmem:[%s165 + $0x88] sm:$0xf]
      %v2054 = vld [vmem:[%s165 + $0x8c] sm:$0xf]
      %v2055 = vld [vmem:[%s165 + $0x90] sm:$0xf]
      %v2056 = vld [vmem:[%s165 + $0x94] sm:$0xf]
      %v2057 = vld [vmem:[%s165 + $0x98] sm:$0xf]
      %v2058 = vld [vmem:[%s165 + $0x9c] sm:$0xf]
      %v2059 = vld [vmem:[%s165 + $0xa0] sm:$0x3]
      %s2060 = scalar_lea.vmem %s1, 96
      %v2061 = vld [vmem:[%s2060] sm:$0xf]
      %v2062 = vld [vmem:[%s2060 + $0x4] sm:$0xf]
      %v2063 = vld [vmem:[%s2060 + $0x8] sm:$0xf]
      %v2064 = vld [vmem:[%s2060 + $0xc] sm:$0xf]
      %v2102 = vunpack.c.l.b16 %v2023
      %v2103 = vunpack.c.l.b16 %v2024
      %v2104 = vunpack.c.l.b16 %v2025
      %v2105 = vunpack.c.l.b16 %v2026
      %v2106 = vunpack.c.l.b16 %v2027
      %v2107 = vunpack.c.l.b16 %v2028
      %v2108 = vunpack.c.l.b16 %v2029
      %v2109 = vunpack.c.l.b16 %v2030
      %v2110 = vunpack.c.l.b16 %v2031
      %v2111 = vunpack.c.l.b16 %v2032
      %v2112 = vunpack.c.l.b16 %v2033
      %v2113 = vunpack.c.l.b16 %v2034
      %v2114 = vunpack.c.l.b16 %v2035
      %v2115 = vunpack.c.l.b16 %v2036
      %v2116 = vunpack.c.l.b16 %v2037
      %v2117 = vunpack.c.l.b16 %v2038
      %v2118 = vunpack.c.l.b16 %v2039
      %v2119 = vunpack.c.l.b16 %v2040
      %v2120 = vunpack.c.l.b16 %v2041
      %v2121 = vunpack.c.l.b16 %v2042
      %v2122 = vunpack.c.l.b16 %v2043
      %v2123 = vunpack.c.l.b16 %v2044
      %v2124 = vunpack.c.l.b16 %v2045
      %v2125 = vunpack.c.l.b16 %v2046
      %v2126 = vunpack.c.l.b16 %v2047
      %v2127 = vunpack.c.l.b16 %v2048
      %v2128 = vunpack.c.l.b16 %v2049
      %v2129 = vunpack.c.l.b16 %v2050
      %v2130 = vunpack.c.l.b16 %v2051
      %v2131 = vunpack.c.l.b16 %v2052
      %v2132 = vunpack.c.l.b16 %v2053
      %v2133 = vunpack.c.l.b16 %v2054
      %v2134 = vunpack.c.l.b16 %v2055
      %v2135 = vunpack.c.l.b16 %v2056
      %v2136 = vunpack.c.l.b16 %v2057
      %v2137 = vunpack.c.l.b16 %v2058
      %v2138 = vunpack.c.l.b16 %v2059
      %v2139 = vpack.c.b16 %v2103, %v2102
      %v2140 = vpack.c.b16 %v2105, %v2104
      %v2141 = vpack.c.b16 %v2107, %v2106
      %v2142 = vpack.c.b16 %v2109, %v2108
      %v2143 = vpack.c.b16 %v2111, %v2110
      %v2144 = vpack.c.b16 %v2113, %v2112
      %v2145 = vpack.c.b16 %v2115, %v2114
      %v2146 = vpack.c.b16 %v2117, %v2116
      %v2147 = vpack.c.b16 %v2119, %v2118
      %v2148 = vpack.c.b16 %v2121, %v2120
      %v2149 = vpack.c.b16 %v2123, %v2122
      %v2150 = vpack.c.b16 %v2125, %v2124
      %v2151 = vpack.c.b16 %v2127, %v2126
      %v2152 = vpack.c.b16 %v2129, %v2128
      %v2153 = vpack.c.b16 %v2131, %v2130
      %v2154 = vpack.c.b16 %v2133, %v2132
      %v2155 = vpack.c.b16 %v2135, %v2134
      %v2156 = vpack.c.b16 %v2137, %v2136
      %v2157 = vpack.c.b16 %v2138, %v2138
      %v2158 = vrot.slane %v2139, 2
      %v2159 = vrot.slane %v2140, 2
      %v2160 = vsel %vm1784, %v2158, %v2159
      %v2161 = vrot.slane %v2141, 2
      %v2162 = vsel %vm1784, %v2159, %v2161
      %v2163 = vrot.slane %v2142, 2
      %v2164 = vsel %vm1784, %v2161, %v2163
      %v2165 = vrot.slane %v2143, 2
      %v2166 = vsel %vm1784, %v2163, %v2165
      %v2167 = vrot.slane %v2144, 2
      %v2168 = vsel %vm1784, %v2165, %v2167
      %v2169 = vrot.slane %v2145, 2
      %v2170 = vsel %vm1784, %v2167, %v2169
      %v2171 = vrot.slane %v2146, 2
      %v2172 = vsel %vm1784, %v2169, %v2171
      %v2173 = vrot.slane %v2147, 2
      %v2174 = vsel %vm1784, %v2171, %v2173
      %v2175 = vrot.slane %v2148, 2
      %v2176 = vsel %vm1784, %v2173, %v2175
      %v2177 = vrot.slane %v2149, 2
      %v2178 = vsel %vm1784, %v2175, %v2177
      %v2179 = vrot.slane %v2150, 2
      %v2180 = vsel %vm1784, %v2177, %v2179
      %v2181 = vrot.slane %v2151, 2
      %v2182 = vsel %vm1784, %v2179, %v2181
      %v2183 = vrot.slane %v2152, 2
      %v2184 = vsel %vm1784, %v2181, %v2183
      %v2185 = vrot.slane %v2153, 2
      %v2186 = vsel %vm1784, %v2183, %v2185
      %v2187 = vrot.slane %v2154, 2
      %v2188 = vsel %vm1784, %v2185, %v2187
      %v2189 = vrot.slane %v2155, 2
      %v2190 = vsel %vm1784, %v2187, %v2189
      %v2191 = vrot.slane %v2156, 2
      %v2192 = vsel %vm1784, %v2189, %v2191
      %v2193 = vrot.slane %v2157, 2
      %v2194 = vsel %vm1784, %v2191, %v2193
      %v2199 = vunpack.c.l.b16 %v2061
      %v2200 = vunpack.c.l.b16 %v2062
      %v2201 = vunpack.c.l.b16 %v2063
      %v2202 = vunpack.c.l.b16 %v2064
      %v2203 = vpack.c.b16 %v2200, %v2199
      %v2204 = vpack.c.b16 %v2202, %v2201
      %v2208 = vsel %vm472, %v2160, 0
      %v2211 = vsel %vm472, %v2162, 0
      %v2214 = vsel %vm472, %v2164, 0
      %v2217 = vsel %vm472, %v2166, 0
      %v2220 = vsel %vm472, %v2168, 0
      %v2223 = vsel %vm472, %v2170, 0
      %v2226 = vsel %vm472, %v2172, 0
      %v2229 = vsel %vm472, %v2174, 0
      %v2232 = vsel %vm472, %v2176, 0
      %v2235 = vsel %vm472, %v2178, 0
      %v2238 = vsel %vm472, %v2180, 0
      %v2241 = vsel %vm472, %v2182, 0
      %v2244 = vsel %vm472, %v2184, 0
      %v2247 = vsel %vm472, %v2186, 0
      %v2250 = vsel %vm472, %v2188, 0
      %v2253 = vsel %vm472, %v2190, 0
      %v2256 = vsel %vm472, %v2192, 0
      %v2259 = vsel %vm472, %v2194, 0
      %2261 = vmatpush.bf16.msra.mxu0 0
      %2262 = vmatpush.bf16.msra.mxu0 0
      %2263 = vmatpush.bf16.msra.mxu0 0
      %2264 = vmatpush.bf16.msra.mxu0 0
      %2265 = vmatpush.bf16.msra.mxu0 0
      %2266 = vmatpush.bf16.msra.mxu0 0
      %2267 = vmatpush.bf16.msra.mxu0 %v2204
      %2268 = vmatpush.bf16.msra.mxu0 %v2203
      %2269 = vmatmul.bf16.gmra.mxu0 %v2208
      %v2270 = vpop.f32.mrf.mxu0
      %v2271 = vadd.f32 0.0, %v2270
      %v2272 = vpop.f32.mrf.mxu0
      %v2273 = vadd.f32 0.0, %v2272
      %2274 = vmatmul.bf16.gmra.mxu0 %v2211
      %v2275 = vpop.f32.mrf.mxu0
      %v2276 = vadd.f32 0.0, %v2275
      %v2277 = vpop.f32.mrf.mxu0
      %v2278 = vadd.f32 0.0, %v2277
      %2279 = vmatmul.bf16.gmra.mxu0 %v2214
      %v2280 = vpop.f32.mrf.mxu0
      %v2281 = vadd.f32 0.0, %v2280
      %v2282 = vpop.f32.mrf.mxu0
      %v2283 = vadd.f32 0.0, %v2282
      %2284 = vmatmul.bf16.gmra.mxu0 %v2217
      %v2285 = vpop.f32.mrf.mxu0
      %v2286 = vadd.f32 0.0, %v2285
      %v2287 = vpop.f32.mrf.mxu0
      %v2288 = vadd.f32 0.0, %v2287
      %2289 = vmatmul.bf16.gmra.mxu0 %v2220
      %v2290 = vpop.f32.mrf.mxu0
      %v2291 = vadd.f32 0.0, %v2290
      %v2292 = vpop.f32.mrf.mxu0
      %v2293 = vadd.f32 0.0, %v2292
      %2294 = vmatmul.bf16.gmra.mxu0 %v2223
      %v2295 = vpop.f32.mrf.mxu0
      %v2296 = vadd.f32 0.0, %v2295
      %v2297 = vpop.f32.mrf.mxu0
      %v2298 = vadd.f32 0.0, %v2297
      %2299 = vmatmul.bf16.gmra.mxu0 %v2226
      %v2300 = vpop.f32.mrf.mxu0
      %v2301 = vadd.f32 0.0, %v2300
      %v2302 = vpop.f32.mrf.mxu0
      %v2303 = vadd.f32 0.0, %v2302
      %2304 = vmatmul.bf16.gmra.mxu0 %v2229
      %v2305 = vpop.f32.mrf.mxu0
      %v2306 = vadd.f32 0.0, %v2305
      %v2307 = vpop.f32.mrf.mxu0
      %v2308 = vadd.f32 0.0, %v2307
      %2309 = vmatmul.bf16.gmra.mxu0 %v2232
      %v2310 = vpop.f32.mrf.mxu0
      %v2311 = vadd.f32 0.0, %v2310
      %v2312 = vpop.f32.mrf.mxu0
      %v2313 = vadd.f32 0.0, %v2312
      %2314 = vmatmul.bf16.gmra.mxu0 %v2235
      %v2315 = vpop.f32.mrf.mxu0
      %v2316 = vadd.f32 0.0, %v2315
      %v2317 = vpop.f32.mrf.mxu0
      %v2318 = vadd.f32 0.0, %v2317
      %2319 = vmatmul.bf16.gmra.mxu0 %v2238
      %v2320 = vpop.f32.mrf.mxu0
      %v2321 = vadd.f32 0.0, %v2320
      %v2322 = vpop.f32.mrf.mxu0
      %v2323 = vadd.f32 0.0, %v2322
      %2324 = vmatmul.bf16.gmra.mxu0 %v2241
      %v2325 = vpop.f32.mrf.mxu0
      %v2326 = vadd.f32 0.0, %v2325
      %v2327 = vpop.f32.mrf.mxu0
      %v2328 = vadd.f32 0.0, %v2327
      %2329 = vmatmul.bf16.gmra.mxu0 %v2244
      %v2330 = vpop.f32.mrf.mxu0
      %v2331 = vadd.f32 0.0, %v2330
      %v2332 = vpop.f32.mrf.mxu0
      %v2333 = vadd.f32 0.0, %v2332
      %2334 = vmatmul.bf16.gmra.mxu0 %v2247
      %v2335 = vpop.f32.mrf.mxu0
      %v2336 = vadd.f32 0.0, %v2335
      %v2337 = vpop.f32.mrf.mxu0
      %v2338 = vadd.f32 0.0, %v2337
      %2339 = vmatmul.bf16.gmra.mxu0 %v2250
      %v2340 = vpop.f32.mrf.mxu0
      %v2341 = vadd.f32 0.0, %v2340
      %v2342 = vpop.f32.mrf.mxu0
      %v2343 = vadd.f32 0.0, %v2342
      %2344 = vmatmul.bf16.gmra.mxu0 %v2253
      %v2345 = vpop.f32.mrf.mxu0
      %v2346 = vadd.f32 0.0, %v2345
      %v2347 = vpop.f32.mrf.mxu0
      %v2348 = vadd.f32 0.0, %v2347
      %2349 = vmatmul.bf16.gmra.mxu0 %v2256
      %v2350 = vpop.f32.mrf.mxu0
      %v2351 = vadd.f32 0.0, %v2350
      %v2352 = vpop.f32.mrf.mxu0
      %v2353 = vadd.f32 0.0, %v2352
      %2354 = vmatmul.bf16.gmra.mxu0 %v2259
      %v2355 = vpop.f32.mrf.mxu0
      %v2356 = vadd.f32 0.0, %v2355
      %v2357 = vpop.f32.mrf.mxu0
      %v2358 = vadd.f32 0.0, %v2357
      %2359 = vdwg.mxu0
      %v2360 = vadd.f32 %v1987, %v2271
      %v2361 = vadd.f32 %v1988, %v2273
      %v2362 = vadd.f32 %v1989, %v2276
      %v2363 = vadd.f32 %v1990, %v2278
      %v2364 = vadd.f32 %v1991, %v2281
      %v2365 = vadd.f32 %v1992, %v2283
      %v2366 = vadd.f32 %v1993, %v2286
      %v2367 = vadd.f32 %v1994, %v2288
      %v2368 = vadd.f32 %v1995, %v2291
      %v2369 = vadd.f32 %v1996, %v2293
      %v2370 = vadd.f32 %v1997, %v2296
      %v2371 = vadd.f32 %v1998, %v2298
      %v2372 = vadd.f32 %v1999, %v2301
      %v2373 = vadd.f32 %v2000, %v2303
      %v2374 = vadd.f32 %v2001, %v2306
      %v2375 = vadd.f32 %v2002, %v2308
      %v2376 = vadd.f32 %v2003, %v2311
      %v2377 = vadd.f32 %v2004, %v2313
      %v2378 = vadd.f32 %v2005, %v2316
      %v2379 = vadd.f32 %v2006, %v2318
      %v2380 = vadd.f32 %v2007, %v2321
      %v2381 = vadd.f32 %v2008, %v2323
      %v2382 = vadd.f32 %v2009, %v2326
      %v2383 = vadd.f32 %v2010, %v2328
      %v2384 = vadd.f32 %v2011, %v2331
      %v2385 = vadd.f32 %v2012, %v2333
      %v2386 = vadd.f32 %v2013, %v2336
      %v2387 = vadd.f32 %v2014, %v2338
      %v2388 = vadd.f32 %v2015, %v2341
      %v2389 = vadd.f32 %v2016, %v2343
      %v2390 = vadd.f32 %v2017, %v2346
      %v2391 = vadd.f32 %v2018, %v2348
      %v2392 = vadd.f32 %v2019, %v2351
      %v2393 = vadd.f32 %v2020, %v2353
      %v2394 = vadd.f32 %v2021, %v2356
      %v2395 = vadd.f32 %v2022, %v2358
      %v2396 = vld [vmem:[%s165 + $0xa0] sm:$0x7]
      %s2397 = scalar_lea.vmem %s1, 112
      %v2398 = vld [vmem:[%s2397] sm:$0xf]
      %v2399 = vld [vmem:[%s2397 + $0x4] sm:$0xf]
      %v2400 = vld [vmem:[%s2397 + $0x8] sm:$0xf]
      %v2401 = vld [vmem:[%s2397 + $0xc] sm:$0xf]
      %v2403 = vunpack.c.l.b16 %v2396
      %v2404 = vpack.c.b16 %v2403, %v2403
      %vm2405 = vsmask.f32 5376
      %v2407 = vshrl.u32 %v2139, 16
      %v2409 = vrot.slane %v2407, 2
      %v2410 = vshll.u32 %v2139, 16
      %v2412 = vrot.slane %v2410, 3
      %v2413 = vor.u32 %v2409, %v2412
      %v2415 = vshrl.u32 %v2140, 16
      %v2417 = vrot.slane %v2415, 2
      %v2418 = vshll.u32 %v2140, 16
      %v2420 = vrot.slane %v2418, 3
      %v2421 = vor.u32 %v2417, %v2420
      %v2422 = vsel %vm2405, %v2413, %v2421
      %v2424 = vshrl.u32 %v2141, 16
      %v2426 = vrot.slane %v2424, 2
      %v2427 = vshll.u32 %v2141, 16
      %v2429 = vrot.slane %v2427, 3
      %v2430 = vor.u32 %v2426, %v2429
      %v2431 = vsel %vm2405, %v2421, %v2430
      %v2433 = vshrl.u32 %v2142, 16
      %v2435 = vrot.slane %v2433, 2
      %v2436 = vshll.u32 %v2142, 16
      %v2438 = vrot.slane %v2436, 3
      %v2439 = vor.u32 %v2435, %v2438
      %v2440 = vsel %vm2405, %v2430, %v2439
      %v2442 = vshrl.u32 %v2143, 16
      %v2444 = vrot.slane %v2442, 2
      %v2445 = vshll.u32 %v2143, 16
      %v2447 = vrot.slane %v2445, 3
      %v2448 = vor.u32 %v2444, %v2447
      %v2449 = vsel %vm2405, %v2439, %v2448
      %v2451 = vshrl.u32 %v2144, 16
      %v2453 = vrot.slane %v2451, 2
      %v2454 = vshll.u32 %v2144, 16
      %v2456 = vrot.slane %v2454, 3
      %v2457 = vor.u32 %v2453, %v2456
      %v2458 = vsel %vm2405, %v2448, %v2457
      %v2460 = vshrl.u32 %v2145, 16
      %v2462 = vrot.slane %v2460, 2
      %v2463 = vshll.u32 %v2145, 16
      %v2465 = vrot.slane %v2463, 3
      %v2466 = vor.u32 %v2462, %v2465
      %v2467 = vsel %vm2405, %v2457, %v2466
      %v2469 = vshrl.u32 %v2146, 16
      %v2471 = vrot.slane %v2469, 2
      %v2472 = vshll.u32 %v2146, 16
      %v2474 = vrot.slane %v2472, 3
      %v2475 = vor.u32 %v2471, %v2474
      %v2476 = vsel %vm2405, %v2466, %v2475
      %v2478 = vshrl.u32 %v2147, 16
      %v2480 = vrot.slane %v2478, 2
      %v2481 = vshll.u32 %v2147, 16
      %v2483 = vrot.slane %v2481, 3
      %v2484 = vor.u32 %v2480, %v2483
      %v2485 = vsel %vm2405, %v2475, %v2484
      %v2487 = vshrl.u32 %v2148, 16
      %v2489 = vrot.slane %v2487, 2
      %v2490 = vshll.u32 %v2148, 16
      %v2492 = vrot.slane %v2490, 3
      %v2493 = vor.u32 %v2489, %v2492
      %v2494 = vsel %vm2405, %v2484, %v2493
      %v2496 = vshrl.u32 %v2149, 16
      %v2498 = vrot.slane %v2496, 2
      %v2499 = vshll.u32 %v2149, 16
      %v2501 = vrot.slane %v2499, 3
      %v2502 = vor.u32 %v2498, %v2501
      %v2503 = vsel %vm2405, %v2493, %v2502
      %v2505 = vshrl.u32 %v2150, 16
      %v2507 = vrot.slane %v2505, 2
      %v2508 = vshll.u32 %v2150, 16
      %v2510 = vrot.slane %v2508, 3
      %v2511 = vor.u32 %v2507, %v2510
      %v2512 = vsel %vm2405, %v2502, %v2511
      %v2514 = vshrl.u32 %v2151, 16
      %v2516 = vrot.slane %v2514, 2
      %v2517 = vshll.u32 %v2151, 16
      %v2519 = vrot.slane %v2517, 3
      %v2520 = vor.u32 %v2516, %v2519
      %v2521 = vsel %vm2405, %v2511, %v2520
      %v2523 = vshrl.u32 %v2152, 16
      %v2525 = vrot.slane %v2523, 2
      %v2526 = vshll.u32 %v2152, 16
      %v2528 = vrot.slane %v2526, 3
      %v2529 = vor.u32 %v2525, %v2528
      %v2530 = vsel %vm2405, %v2520, %v2529
      %v2532 = vshrl.u32 %v2153, 16
      %v2534 = vrot.slane %v2532, 2
      %v2535 = vshll.u32 %v2153, 16
      %v2537 = vrot.slane %v2535, 3
      %v2538 = vor.u32 %v2534, %v2537
      %v2539 = vsel %vm2405, %v2529, %v2538
      %v2541 = vshrl.u32 %v2154, 16
      %v2543 = vrot.slane %v2541, 2
      %v2544 = vshll.u32 %v2154, 16
      %v2546 = vrot.slane %v2544, 3
      %v2547 = vor.u32 %v2543, %v2546
      %v2548 = vsel %vm2405, %v2538, %v2547
      %v2550 = vshrl.u32 %v2155, 16
      %v2552 = vrot.slane %v2550, 2
      %v2553 = vshll.u32 %v2155, 16
      %v2555 = vrot.slane %v2553, 3
      %v2556 = vor.u32 %v2552, %v2555
      %v2557 = vsel %vm2405, %v2547, %v2556
      %v2559 = vshrl.u32 %v2156, 16
      %v2561 = vrot.slane %v2559, 2
      %v2562 = vshll.u32 %v2156, 16
      %v2564 = vrot.slane %v2562, 3
      %v2565 = vor.u32 %v2561, %v2564
      %v2566 = vsel %vm2405, %v2556, %v2565
      %v2568 = vshrl.u32 %v2404, 16
      %v2570 = vrot.slane %v2568, 2
      %v2571 = vshll.u32 %v2404, 16
      %v2573 = vrot.slane %v2571, 3
      %v2574 = vor.u32 %v2570, %v2573
      %v2575 = vsel %vm2405, %v2565, %v2574
      %v2580 = vunpack.c.l.b16 %v2398
      %v2581 = vunpack.c.l.b16 %v2399
      %v2582 = vunpack.c.l.b16 %v2400
      %v2583 = vunpack.c.l.b16 %v2401
      %v2584 = vpack.c.b16 %v2581, %v2580
      %v2585 = vpack.c.b16 %v2583, %v2582
      %v2589 = vsel %vm472, %v2422, 0
      %v2592 = vsel %vm472, %v2431, 0
      %v2595 = vsel %vm472, %v2440, 0
      %v2598 = vsel %vm472, %v2449, 0
      %v2601 = vsel %vm472, %v2458, 0
      %v2604 = vsel %vm472, %v2467, 0
      %v2607 = vsel %vm472, %v2476, 0
      %v2610 = vsel %vm472, %v2485, 0
      %v2613 = vsel %vm472, %v2494, 0
      %v2616 = vsel %vm472, %v2503, 0
      %v2619 = vsel %vm472, %v2512, 0
      %v2622 = vsel %vm472, %v2521, 0
      %v2625 = vsel %vm472, %v2530, 0
      %v2628 = vsel %vm472, %v2539, 0
      %v2631 = vsel %vm472, %v2548, 0
      %v2634 = vsel %vm472, %v2557, 0
      %v2637 = vsel %vm472, %v2566, 0
      %v2640 = vsel %vm472, %v2575, 0
      %2642 = vmatpush.bf16.msra.mxu0 0
      %2643 = vmatpush.bf16.msra.mxu0 0
      %2644 = vmatpush.bf16.msra.mxu0 0
      %2645 = vmatpush.bf16.msra.mxu0 0
      %2646 = vmatpush.bf16.msra.mxu0 0
      %2647 = vmatpush.bf16.msra.mxu0 0
      %2648 = vmatpush.bf16.msra.mxu0 %v2585
      %2649 = vmatpush.bf16.msra.mxu0 %v2584
      %2650 = vmatmul.bf16.gmra.mxu0 %v2589
      %v2651 = vpop.f32.mrf.mxu0
      %v2652 = vadd.f32 0.0, %v2651
      %v2653 = vpop.f32.mrf.mxu0
      %v2654 = vadd.f32 0.0, %v2653
      %2655 = vmatmul.bf16.gmra.mxu0 %v2592
      %v2656 = vpop.f32.mrf.mxu0
      %v2657 = vadd.f32 0.0, %v2656
      %v2658 = vpop.f32.mrf.mxu0
      %v2659 = vadd.f32 0.0, %v2658
      %2660 = vmatmul.bf16.gmra.mxu0 %v2595
      %v2661 = vpop.f32.mrf.mxu0
      %v2662 = vadd.f32 0.0, %v2661
      %v2663 = vpop.f32.mrf.mxu0
      %v2664 = vadd.f32 0.0, %v2663
      %2665 = vmatmul.bf16.gmra.mxu0 %v2598
      %v2666 = vpop.f32.mrf.mxu0
      %v2667 = vadd.f32 0.0, %v2666
      %v2668 = vpop.f32.mrf.mxu0
      %v2669 = vadd.f32 0.0, %v2668
      %2670 = vmatmul.bf16.gmra.mxu0 %v2601
      %v2671 = vpop.f32.mrf.mxu0
      %v2672 = vadd.f32 0.0, %v2671
      %v2673 = vpop.f32.mrf.mxu0
      %v2674 = vadd.f32 0.0, %v2673
      %2675 = vmatmul.bf16.gmra.mxu0 %v2604
      %v2676 = vpop.f32.mrf.mxu0
      %v2677 = vadd.f32 0.0, %v2676
      %v2678 = vpop.f32.mrf.mxu0
      %v2679 = vadd.f32 0.0, %v2678
      %2680 = vmatmul.bf16.gmra.mxu0 %v2607
      %v2681 = vpop.f32.mrf.mxu0
      %v2682 = vadd.f32 0.0, %v2681
      %v2683 = vpop.f32.mrf.mxu0
      %v2684 = vadd.f32 0.0, %v2683
      %2685 = vmatmul.bf16.gmra.mxu0 %v2610
      %v2686 = vpop.f32.mrf.mxu0
      %v2687 = vadd.f32 0.0, %v2686
      %v2688 = vpop.f32.mrf.mxu0
      %v2689 = vadd.f32 0.0, %v2688
      %2690 = vmatmul.bf16.gmra.mxu0 %v2613
      %v2691 = vpop.f32.mrf.mxu0
      %v2692 = vadd.f32 0.0, %v2691
      %v2693 = vpop.f32.mrf.mxu0
      %v2694 = vadd.f32 0.0, %v2693
      %2695 = vmatmul.bf16.gmra.mxu0 %v2616
      %v2696 = vpop.f32.mrf.mxu0
      %v2697 = vadd.f32 0.0, %v2696
      %v2698 = vpop.f32.mrf.mxu0
      %v2699 = vadd.f32 0.0, %v2698
      %2700 = vmatmul.bf16.gmra.mxu0 %v2619
      %v2701 = vpop.f32.mrf.mxu0
      %v2702 = vadd.f32 0.0, %v2701
      %v2703 = vpop.f32.mrf.mxu0
      %v2704 = vadd.f32 0.0, %v2703
      %2705 = vmatmul.bf16.gmra.mxu0 %v2622
      %v2706 = vpop.f32.mrf.mxu0
      %v2707 = vadd.f32 0.0, %v2706
      %v2708 = vpop.f32.mrf.mxu0
      %v2709 = vadd.f32 0.0, %v2708
      %2710 = vmatmul.bf16.gmra.mxu0 %v2625
      %v2711 = vpop.f32.mrf.mxu0
      %v2712 = vadd.f32 0.0, %v2711
      %v2713 = vpop.f32.mrf.mxu0
      %v2714 = vadd.f32 0.0, %v2713
      %2715 = vmatmul.bf16.gmra.mxu0 %v2628
      %v2716 = vpop.f32.mrf.mxu0
      %v2717 = vadd.f32 0.0, %v2716
      %v2718 = vpop.f32.mrf.mxu0
      %v2719 = vadd.f32 0.0, %v2718
      %2720 = vmatmul.bf16.gmra.mxu0 %v2631
      %v2721 = vpop.f32.mrf.mxu0
      %v2722 = vadd.f32 0.0, %v2721
      %v2723 = vpop.f32.mrf.mxu0
      %v2724 = vadd.f32 0.0, %v2723
      %2725 = vmatmul.bf16.gmra.mxu0 %v2634
      %v2726 = vpop.f32.mrf.mxu0
      %v2727 = vadd.f32 0.0, %v2726
      %v2728 = vpop.f32.mrf.mxu0
      %v2729 = vadd.f32 0.0, %v2728
      %2730 = vmatmul.bf16.gmra.mxu0 %v2637
      %v2731 = vpop.f32.mrf.mxu0
      %v2732 = vadd.f32 0.0, %v2731
      %v2733 = vpop.f32.mrf.mxu0
      %v2734 = vadd.f32 0.0, %v2733
      %2735 = vmatmul.bf16.gmra.mxu0 %v2640
      %v2736 = vpop.f32.mrf.mxu0
      %v2737 = vadd.f32 0.0, %v2736
      %v2738 = vpop.f32.mrf.mxu0
      %v2739 = vadd.f32 0.0, %v2738
      %2740 = vdwg.mxu0
      %v2741 = vadd.f32 %v2360, %v2652
      %v2742 = vadd.f32 %v2361, %v2654
      %v2743 = vadd.f32 %v2362, %v2657
      %v2744 = vadd.f32 %v2363, %v2659
      %v2745 = vadd.f32 %v2364, %v2662
      %v2746 = vadd.f32 %v2365, %v2664
      %v2747 = vadd.f32 %v2366, %v2667
      %v2748 = vadd.f32 %v2367, %v2669
      %v2749 = vadd.f32 %v2368, %v2672
      %v2750 = vadd.f32 %v2369, %v2674
      %v2751 = vadd.f32 %v2370, %v2677
      %v2752 = vadd.f32 %v2371, %v2679
      %v2753 = vadd.f32 %v2372, %v2682
      %v2754 = vadd.f32 %v2373, %v2684
      %v2755 = vadd.f32 %v2374, %v2687
      %v2756 = vadd.f32 %v2375, %v2689
      %v2757 = vadd.f32 %v2376, %v2692
      %v2758 = vadd.f32 %v2377, %v2694
      %v2759 = vadd.f32 %v2378, %v2697
      %v2760 = vadd.f32 %v2379, %v2699
      %v2761 = vadd.f32 %v2380, %v2702
      %v2762 = vadd.f32 %v2381, %v2704
      %v2763 = vadd.f32 %v2382, %v2707
      %v2764 = vadd.f32 %v2383, %v2709
      %v2765 = vadd.f32 %v2384, %v2712
      %v2766 = vadd.f32 %v2385, %v2714
      %v2767 = vadd.f32 %v2386, %v2717
      %v2768 = vadd.f32 %v2387, %v2719
      %v2769 = vadd.f32 %v2388, %v2722
      %v2770 = vadd.f32 %v2389, %v2724
      %v2771 = vadd.f32 %v2390, %v2727
      %v2772 = vadd.f32 %v2391, %v2729
      %v2773 = vadd.f32 %v2392, %v2732
      %v2774 = vadd.f32 %v2393, %v2734
      %v2775 = vadd.f32 %v2394, %v2737
      %v2776 = vadd.f32 %v2395, %v2739
      %v2777 = vld [vmem:[%s165 + $0x10] sm:$0x8]
      %s2778 = scalar_lea.vmem %s1, 128
      %v2779 = vld [vmem:[%s2778] sm:$0xf]
      %v2780 = vld [vmem:[%s2778 + $0x4] sm:$0xf]
      %v2781 = vld [vmem:[%s2778 + $0x8] sm:$0xf]
      %v2782 = vld [vmem:[%s2778 + $0xc] sm:$0xf]
      %v2784 = vunpack.c.l.b16 %v2777
      %v2785 = vpack.c.b16 %v2103, %v2784
      %vm2786 = vcmask 1044480
      %v2787 = vrot.slane %v2785, 3
      %v2788 = vrot.slane %v2140, 3
      %v2789 = vsel %vm2786, %v2787, %v2788
      %v2790 = vrot.slane %v2141, 3
      %v2791 = vsel %vm2786, %v2788, %v2790
      %v2792 = vrot.slane %v2142, 3
      %v2793 = vsel %vm2786, %v2790, %v2792
      %v2794 = vrot.slane %v2143, 3
      %v2795 = vsel %vm2786, %v2792, %v2794
      %v2796 = vrot.slane %v2144, 3
      %v2797 = vsel %vm2786, %v2794, %v2796
      %v2798 = vrot.slane %v2145, 3
      %v2799 = vsel %vm2786, %v2796, %v2798
      %v2800 = vrot.slane %v2146, 3
      %v2801 = vsel %vm2786, %v2798, %v2800
      %v2802 = vrot.slane %v2147, 3
      %v2803 = vsel %vm2786, %v2800, %v2802
      %v2804 = vrot.slane %v2148, 3
      %v2805 = vsel %vm2786, %v2802, %v2804
      %v2806 = vrot.slane %v2149, 3
      %v2807 = vsel %vm2786, %v2804, %v2806
      %v2808 = vrot.slane %v2150, 3
      %v2809 = vsel %vm2786, %v2806, %v2808
      %v2810 = vrot.slane %v2151, 3
      %v2811 = vsel %vm2786, %v2808, %v2810
      %v2812 = vrot.slane %v2152, 3
      %v2813 = vsel %vm2786, %v2810, %v2812
      %v2814 = vrot.slane %v2153, 3
      %v2815 = vsel %vm2786, %v2812, %v2814
      %v2816 = vrot.slane %v2154, 3
      %v2817 = vsel %vm2786, %v2814, %v2816
      %v2818 = vrot.slane %v2155, 3
      %v2819 = vsel %vm2786, %v2816, %v2818
      %v2820 = vrot.slane %v2156, 3
      %v2821 = vsel %vm2786, %v2818, %v2820
      %v2822 = vrot.slane %v2404, 3
      %v2823 = vsel %vm2786, %v2820, %v2822
      %v2828 = vunpack.c.l.b16 %v2779
      %v2829 = vunpack.c.l.b16 %v2780
      %v2830 = vunpack.c.l.b16 %v2781
      %v2831 = vunpack.c.l.b16 %v2782
      %v2832 = vpack.c.b16 %v2829, %v2828
      %v2833 = vpack.c.b16 %v2831, %v2830
      %v2837 = vsel %vm472, %v2789, 0
      %v2840 = vsel %vm472, %v2791, 0
      %v2843 = vsel %vm472, %v2793, 0
      %v2846 = vsel %vm472, %v2795, 0
      %v2849 = vsel %vm472, %v2797, 0
      %v2852 = vsel %vm472, %v2799, 0
      %v2855 = vsel %vm472, %v2801, 0
      %v2858 = vsel %vm472, %v2803, 0
      %v2861 = vsel %vm472, %v2805, 0
      %v2864 = vsel %vm472, %v2807, 0
      %v2867 = vsel %vm472, %v2809, 0
      %v2870 = vsel %vm472, %v2811, 0
      %v2873 = vsel %vm472, %v2813, 0
      %v2876 = vsel %vm472, %v2815, 0
      %v2879 = vsel %vm472, %v2817, 0
      %v2882 = vsel %vm472, %v2819, 0
      %v2885 = vsel %vm472, %v2821, 0
      %v2888 = vsel %vm472, %v2823, 0
      %2890 = vmatpush.bf16.msra.mxu0 0
      %2891 = vmatpush.bf16.msra.mxu0 0
      %2892 = vmatpush.bf16.msra.mxu0 0
      %2893 = vmatpush.bf16.msra.mxu0 0
      %2894 = vmatpush.bf16.msra.mxu0 0
      %2895 = vmatpush.bf16.msra.mxu0 0
      %2896 = vmatpush.bf16.msra.mxu0 %v2833
      %2897 = vmatpush.bf16.msra.mxu0 %v2832
      %2898 = vmatmul.bf16.gmra.mxu0 %v2837
      %v2899 = vpop.f32.mrf.mxu0
      %v2900 = vadd.f32 0.0, %v2899
      %v2901 = vpop.f32.mrf.mxu0
      %v2902 = vadd.f32 0.0, %v2901
      %2903 = vmatmul.bf16.gmra.mxu0 %v2840
      %v2904 = vpop.f32.mrf.mxu0
      %v2905 = vadd.f32 0.0, %v2904
      %v2906 = vpop.f32.mrf.mxu0
      %v2907 = vadd.f32 0.0, %v2906
      %2908 = vmatmul.bf16.gmra.mxu0 %v2843
      %v2909 = vpop.f32.mrf.mxu0
      %v2910 = vadd.f32 0.0, %v2909
      %v2911 = vpop.f32.mrf.mxu0
      %v2912 = vadd.f32 0.0, %v2911
      %2913 = vmatmul.bf16.gmra.mxu0 %v2846
      %v2914 = vpop.f32.mrf.mxu0
      %v2915 = vadd.f32 0.0, %v2914
      %v2916 = vpop.f32.mrf.mxu0
      %v2917 = vadd.f32 0.0, %v2916
      %2918 = vmatmul.bf16.gmra.mxu0 %v2849
      %v2919 = vpop.f32.mrf.mxu0
      %v2920 = vadd.f32 0.0, %v2919
      %v2921 = vpop.f32.mrf.mxu0
      %v2922 = vadd.f32 0.0, %v2921
      %2923 = vmatmul.bf16.gmra.mxu0 %v2852
      %v2924 = vpop.f32.mrf.mxu0
      %v2925 = vadd.f32 0.0, %v2924
      %v2926 = vpop.f32.mrf.mxu0
      %v2927 = vadd.f32 0.0, %v2926
      %2928 = vmatmul.bf16.gmra.mxu0 %v2855
      %v2929 = vpop.f32.mrf.mxu0
      %v2930 = vadd.f32 0.0, %v2929
      %v2931 = vpop.f32.mrf.mxu0
      %v2932 = vadd.f32 0.0, %v2931
      %2933 = vmatmul.bf16.gmra.mxu0 %v2858
      %v2934 = vpop.f32.mrf.mxu0
      %v2935 = vadd.f32 0.0, %v2934
      %v2936 = vpop.f32.mrf.mxu0
      %v2937 = vadd.f32 0.0, %v2936
      %2938 = vmatmul.bf16.gmra.mxu0 %v2861
      %v2939 = vpop.f32.mrf.mxu0
      %v2940 = vadd.f32 0.0, %v2939
      %v2941 = vpop.f32.mrf.mxu0
      %v2942 = vadd.f32 0.0, %v2941
      %2943 = vmatmul.bf16.gmra.mxu0 %v2864
      %v2944 = vpop.f32.mrf.mxu0
      %v2945 = vadd.f32 0.0, %v2944
      %v2946 = vpop.f32.mrf.mxu0
      %v2947 = vadd.f32 0.0, %v2946
      %2948 = vmatmul.bf16.gmra.mxu0 %v2867
      %v2949 = vpop.f32.mrf.mxu0
      %v2950 = vadd.f32 0.0, %v2949
      %v2951 = vpop.f32.mrf.mxu0
      %v2952 = vadd.f32 0.0, %v2951
      %2953 = vmatmul.bf16.gmra.mxu0 %v2870
      %v2954 = vpop.f32.mrf.mxu0
      %v2955 = vadd.f32 0.0, %v2954
      %v2956 = vpop.f32.mrf.mxu0
      %v2957 = vadd.f32 0.0, %v2956
      %2958 = vmatmul.bf16.gmra.mxu0 %v2873
      %v2959 = vpop.f32.mrf.mxu0
      %v2960 = vadd.f32 0.0, %v2959
      %v2961 = vpop.f32.mrf.mxu0
      %v2962 = vadd.f32 0.0, %v2961
      %2963 = vmatmul.bf16.gmra.mxu0 %v2876
      %v2964 = vpop.f32.mrf.mxu0
      %v2965 = vadd.f32 0.0, %v2964
      %v2966 = vpop.f32.mrf.mxu0
      %v2967 = vadd.f32 0.0, %v2966
      %2968 = vmatmul.bf16.gmra.mxu0 %v2879
      %v2969 = vpop.f32.mrf.mxu0
      %v2970 = vadd.f32 0.0, %v2969
      %v2971 = vpop.f32.mrf.mxu0
      %v2972 = vadd.f32 0.0, %v2971
      %2973 = vmatmul.bf16.gmra.mxu0 %v2882
      %v2974 = vpop.f32.mrf.mxu0
      %v2975 = vadd.f32 0.0, %v2974
      %v2976 = vpop.f32.mrf.mxu0
      %v2977 = vadd.f32 0.0, %v2976
      %2978 = vmatmul.bf16.gmra.mxu0 %v2885
      %v2979 = vpop.f32.mrf.mxu0
      %v2980 = vadd.f32 0.0, %v2979
      %v2981 = vpop.f32.mrf.mxu0
      %v2982 = vadd.f32 0.0, %v2981
      %2983 = vmatmul.bf16.gmra.mxu0 %v2888
      %v2984 = vpop.f32.mrf.mxu0
      %v2985 = vadd.f32 0.0, %v2984
      %v2986 = vpop.f32.mrf.mxu0
      %v2987 = vadd.f32 0.0, %v2986
      %2988 = vdwg.mxu0
      %v2989 = vadd.f32 %v2741, %v2900
      %v2990 = vadd.f32 %v2742, %v2902
      %v2991 = vadd.f32 %v2743, %v2905
      %v2992 = vadd.f32 %v2744, %v2907
      %v2993 = vadd.f32 %v2745, %v2910
      %v2994 = vadd.f32 %v2746, %v2912
      %v2995 = vadd.f32 %v2747, %v2915
      %v2996 = vadd.f32 %v2748, %v2917
      %v2997 = vadd.f32 %v2749, %v2920
      %v2998 = vadd.f32 %v2750, %v2922
      %v2999 = vadd.f32 %v2751, %v2925
      %v3000 = vadd.f32 %v2752, %v2927
      %v3001 = vadd.f32 %v2753, %v2930
      %v3002 = vadd.f32 %v2754, %v2932
      %v3003 = vadd.f32 %v2755, %v2935
      %v3004 = vadd.f32 %v2756, %v2937
      %v3005 = vadd.f32 %v2757, %v2940
      %v3006 = vadd.f32 %v2758, %v2942
      %v3007 = vadd.f32 %v2759, %v2945
      %v3008 = vadd.f32 %v2760, %v2947
      %v3009 = vadd.f32 %v2761, %v2950
      %v3010 = vadd.f32 %v2762, %v2952
      %v3011 = vadd.f32 %v2763, %v2955
      %v3012 = vadd.f32 %v2764, %v2957
      %v3013 = vadd.f32 %v2765, %v2960
      %v3014 = vadd.f32 %v2766, %v2962
      %v3015 = vadd.f32 %v2767, %v2965
      %v3016 = vadd.f32 %v2768, %v2967
      %v3017 = vadd.f32 %v2769, %v2970
      %v3018 = vadd.f32 %v2770, %v2972
      %v3019 = vadd.f32 %v2771, %v2975
      %v3020 = vadd.f32 %v2772, %v2977
      %v3021 = vadd.f32 %v2773, %v2980
      %v3022 = vadd.f32 %v2774, %v2982
      %v3023 = vadd.f32 %v2775, %v2985
      %v3024 = vadd.f32 %v2776, %v2987
      %v3025 = vld [vmem:[%s2] sm:$0x1]
      %v3027 = vperm.slane %v3025, 0
      %v3029 = vadd.f32 %v2989, %v3027
      %v3030 = vadd.f32 %v2990, %v3027
      %v3031 = vadd.f32 %v2991, %v3027
      %v3032 = vadd.f32 %v2992, %v3027
      %v3033 = vadd.f32 %v2993, %v3027
      %v3034 = vadd.f32 %v2994, %v3027
      %v3035 = vadd.f32 %v2995, %v3027
      %v3036 = vadd.f32 %v2996, %v3027
      %v3037 = vadd.f32 %v2997, %v3027
      %v3038 = vadd.f32 %v2998, %v3027
      %v3039 = vadd.f32 %v2999, %v3027
      %v3040 = vadd.f32 %v3000, %v3027
      %v3041 = vadd.f32 %v3001, %v3027
      %v3042 = vadd.f32 %v3002, %v3027
      %v3043 = vadd.f32 %v3003, %v3027
      %v3044 = vadd.f32 %v3004, %v3027
      %v3045 = vadd.f32 %v3005, %v3027
      %v3046 = vadd.f32 %v3006, %v3027
      %v3047 = vadd.f32 %v3007, %v3027
      %v3048 = vadd.f32 %v3008, %v3027
      %v3049 = vadd.f32 %v3009, %v3027
      %v3050 = vadd.f32 %v3010, %v3027
      %v3051 = vadd.f32 %v3011, %v3027
      %v3052 = vadd.f32 %v3012, %v3027
      %v3053 = vadd.f32 %v3013, %v3027
      %v3054 = vadd.f32 %v3014, %v3027
      %v3055 = vadd.f32 %v3015, %v3027
      %v3056 = vadd.f32 %v3016, %v3027
      %v3057 = vadd.f32 %v3017, %v3027
      %v3058 = vadd.f32 %v3018, %v3027
      %v3059 = vadd.f32 %v3019, %v3027
      %v3060 = vadd.f32 %v3020, %v3027
      %v3061 = vadd.f32 %v3021, %v3027
      %v3062 = vadd.f32 %v3022, %v3027
      %v3063 = vadd.f32 %v3023, %v3027
      %v3064 = vadd.f32 %v3024, %v3027
      %3065 = vst.msk [vmem:[%s170] sm:$0xff] %vm472, %v3029
      %3066 = vst.msk [vmem:[%s170 + $0x8] sm:$0xff] %vm472, %v3030
      %3067 = vst.msk [vmem:[%s170 + $0x10] sm:$0xff] %vm472, %v3031
      %3068 = vst.msk [vmem:[%s170 + $0x18] sm:$0xff] %vm472, %v3032
      %3069 = vst.msk [vmem:[%s170 + $0x20] sm:$0xff] %vm472, %v3033
      %3070 = vst.msk [vmem:[%s170 + $0x28] sm:$0xff] %vm472, %v3034
      %3071 = vst.msk [vmem:[%s170 + $0x30] sm:$0xff] %vm472, %v3035
      %3072 = vst.msk [vmem:[%s170 + $0x38] sm:$0xff] %vm472, %v3036
      %3073 = vst.msk [vmem:[%s170 + $0x40] sm:$0xff] %vm472, %v3037
      %3074 = vst.msk [vmem:[%s170 + $0x48] sm:$0xff] %vm472, %v3038
      %3075 = vst.msk [vmem:[%s170 + $0x50] sm:$0xff] %vm472, %v3039
      %3076 = vst.msk [vmem:[%s170 + $0x58] sm:$0xff] %vm472, %v3040
      %3077 = vst.msk [vmem:[%s170 + $0x60] sm:$0xff] %vm472, %v3041
      %3078 = vst.msk [vmem:[%s170 + $0x68] sm:$0xff] %vm472, %v3042
      %3079 = vst.msk [vmem:[%s170 + $0x70] sm:$0xff] %vm472, %v3043
      %3080 = vst.msk [vmem:[%s170 + $0x78] sm:$0xff] %vm472, %v3044
      %3081 = vst.msk [vmem:[%s170 + $0x80] sm:$0xff] %vm472, %v3045
      %3082 = vst.msk [vmem:[%s170 + $0x88] sm:$0xff] %vm472, %v3046
      %3083 = vst.msk [vmem:[%s170 + $0x90] sm:$0xff] %vm472, %v3047
      %3084 = vst.msk [vmem:[%s170 + $0x98] sm:$0xff] %vm472, %v3048
      %3085 = vst.msk [vmem:[%s170 + $0xa0] sm:$0xff] %vm472, %v3049
      %3086 = vst.msk [vmem:[%s170 + $0xa8] sm:$0xff] %vm472, %v3050
      %3087 = vst.msk [vmem:[%s170 + $0xb0] sm:$0xff] %vm472, %v3051
      %3088 = vst.msk [vmem:[%s170 + $0xb8] sm:$0xff] %vm472, %v3052
      %3089 = vst.msk [vmem:[%s170 + $0xc0] sm:$0xff] %vm472, %v3053
      %3090 = vst.msk [vmem:[%s170 + $0xc8] sm:$0xff] %vm472, %v3054
      %3091 = vst.msk [vmem:[%s170 + $0xd0] sm:$0xff] %vm472, %v3055
      %3092 = vst.msk [vmem:[%s170 + $0xd8] sm:$0xff] %vm472, %v3056
      %3093 = vst.msk [vmem:[%s170 + $0xe0] sm:$0xff] %vm472, %v3057
      %3094 = vst.msk [vmem:[%s170 + $0xe8] sm:$0xff] %vm472, %v3058
      %3095 = vst.msk [vmem:[%s170 + $0xf0] sm:$0xff] %vm472, %v3059
      %3096 = vst.msk [vmem:[%s170 + $0xf8] sm:$0xff] %vm472, %v3060
      %3097 = vst.msk [vmem:[%s170 + $0x100] sm:$0xff] %vm472, %v3061
      %3098 = vst.msk [vmem:[%s170 + $0x108] sm:$0xff] %vm472, %v3062
      %3099 = vst.msk [vmem:[%s170 + $0x110] sm:$0xff] %vm472, %v3063
      %3100 = vst.msk [vmem:[%s170 + $0x118] sm:$0xff] %vm472, %v3064
      %p3101 = scmp.lt.s32.totalorder %s14, 1
      %s3102 = scalar_select %p3101, %s14, 1
      %s3103 = smul.addr %s3102, 36
      %s3104 = smul.addr %s3103, 8
      %s3105 = scalar_lea.vmem %s3, %s3104
      // Predicated region
      $region33: #{fpn_forward_pallas.13} parent=31 // pred_check
        %p3106 = pneg %p100
      $region34: #{fpn_forward_pallas.13} parent=31 // pred_check_branch
        %3108 = sbr.rel (%p3106) target = $region36
      $region35: #{fpn_forward_pallas.13} parent=31 // pred_region
        _
      $region36: #{fpn_forward_pallas.13} parent=31 // pred_fallthru
        _
    $region32: #{fpn_forward_pallas.13} parent=5 // pred_fallthru
      _
    %p3109 = scmp.le.s32.totalorder 2, %s9
    // Predicated region
    $region37: #{fpn_forward_pallas.13} parent=5 // pred_check
      %p3110 = pneg %p3109
    $region38: #{fpn_forward_pallas.13} parent=5 // pred_check_branch
      %3112 = sbr.rel (%p3110) target = $region40
    $region39: #{fpn_forward_pallas.13} parent=5 // pred_region
      %s3113 = ssub.s32 %s9, 2
      // Predicated region
      $region41: #{fpn_forward_pallas.13} parent=39 // pred_check
        %p3114 = pneg %p106
      $region42: #{fpn_forward_pallas.13} parent=39 // pred_check_branch
        %3116 = sbr.rel (%p3114) target = $region44
      $region43: #{fpn_forward_pallas.13} parent=39 // pred_region
        %p3117 = scmp.lt.s32.totalorder %s15, 1
        %s3118 = scalar_select %p3117, %s15, 1
        %s3119 = smul.addr %s3118, 36
        %s3120 = smul.addr %s3119, 8
        %s3121 = scalar_lea.vmem %s3, %s3120
      $region44: #{fpn_forward_pallas.13} parent=39 // pred_fallthru
        _
    $region40: #{fpn_forward_pallas.13} parent=5 // pred_fallthru
      _
  $region6: #{fpn_forward_pallas.13} parent=0 // loop_footer
    %s13 = sadd.s32 1, %s9
  $region7: #{fpn_forward_pallas.13} parent=0 // loop_footer_branch
    %8 = sbr.rel target = $region3
  $region8: #{fpn_forward_pallas.13} parent=0 // loop_exit
    _

</llo_original>
